<compile_context>
chip_gen: v7x
topology: tpu7x:2x2x1
jax: 0.10.0
libtpu: 0.0.40
codegen_flags: <defaults>
</compile_context>

<pallas_src>
import functools

import jax
import jax.numpy as jnp
from jax import lax
from jax.experimental import pallas as pl
from jax.experimental.pallas import tpu as pltpu


def _round_up(x, m):
    return (x + m - 1) // m * m


def _pad2(w, rows, cols):
    return jnp.pad(w, ((0, rows - w.shape[0]), (0, cols - w.shape[1])))


# ----------------------------------------------------------------------------
# Parameter construction (deterministic, mirrors nn.Linear shapes).
# nn.Linear(in, out): weight (out, in), y = x @ W.T + b.  We store W.T (in, out)
# so everything is plain x @ W.  The single bias per gate is the Wh linear's
# bias (the Wx linears are bias-free in the PyTorch module).
# ----------------------------------------------------------------------------
def init_params(key, in_dim, h_dim, out_dim, n_layers):
    params = []
    cur = in_dim
    for _ in range(n_layers):
        layer = {}
        for gate in ("z", "r", "g"):
            key, k1, k2, k3 = jax.random.split(key, 4)
            layer[f"Wx{gate}"] = jax.random.normal(k1, (cur, h_dim), jnp.float32) * 0.1
            layer[f"Wh{gate}"] = jax.random.normal(k2, (h_dim, h_dim), jnp.float32) * 0.1
            layer[f"b{gate}"] = jax.random.normal(k3, (1, h_dim), jnp.float32) * 0.1
        params.append(layer)
        cur = h_dim
    key, k1, k2 = jax.random.split(key, 3)
    Why = jax.random.normal(k1, (h_dim, out_dim), jnp.float32) * 0.1
    by = jax.random.normal(k2, (1, out_dim), jnp.float32) * 0.1
    return params, Why, by


# ----------------------------------------------------------------------------
# Pack per-layer weights into fused, padded, stacked arrays (kernel operands).
#   wxh  : (L-1, h_pad, 3*h_pad)  layers>=1 [z|r|g] input projections (L>1 only)
#   whzr : (L,   h_pad, 2*h_pad)  [z|r] hidden projections
#   whg  : (L,   h_pad,   h_pad)  g hidden projection (applied to r*h)
#   b    : (L-1, 1, 3*h_pad)      [bz|br|bg] for layers>=1 (layer-0 bias is
#                                 folded into the pre-projected input)
#   why  : (h_pad, out_pad), by : (1, out_pad)
# Zero padding keeps padded hidden units exactly zero through the recurrence.
# ----------------------------------------------------------------------------
def pack_params(layer_params, Why, by, h_pad, out_pad, n_layers, w_dtype):
    hp = h_pad

    def fuse3(p):
        return jnp.concatenate(
            [_pad2(p["Wxz"], hp, hp), _pad2(p["Wxr"], hp, hp),
             _pad2(p["Wxg"], hp, hp)], axis=1)

    whzr = jnp.stack([
        jnp.concatenate([_pad2(p["Whz"], hp, hp), _pad2(p["Whr"], hp, hp)], axis=1)
        for p in layer_params
    ]).astype(w_dtype)
    whg = jnp.stack([_pad2(p["Whg"], hp, hp) for p in layer_params]).astype(w_dtype)
    why = _pad2(Why, hp, out_pad).astype(w_dtype)
    by_p = _pad2(by, 1, out_pad).astype(jnp.float32)

    if n_layers > 1:
        wxh = jnp.stack([fuse3(p) for p in layer_params[1:]]).astype(w_dtype)
        b = jnp.stack([
            jnp.concatenate(
                [_pad2(p["bz"], 1, hp), _pad2(p["br"], 1, hp), _pad2(p["bg"], 1, hp)],
                axis=1)
            for p in layer_params[1:]
        ]).astype(jnp.float32)
        return (wxh, whzr, whg, b, why, by_p)
    return (whzr, whg, why, by_p)


# ----------------------------------------------------------------------------
# Pallas kernel: one grid step == one (batch_tile, time_chunk).
# ----------------------------------------------------------------------------
def _gru_kernel(n_layers, t_chunk, h_pad, s_total, needs_mask, *refs):
    L = n_layers
    H = h_pad
    if L > 1:
        (xg_ref, h0_ref, wxh_ref, whzr_ref, whg_ref, b_ref,
         why_ref, by_ref, y_ref, hstate_ref, hlast_ref) = refs
    else:
        (xg_ref, h0_ref, whzr_ref, whg_ref,
         why_ref, by_ref, y_ref, hstate_ref, hlast_ref) = refs
        wxh_ref = None
        b_ref = None

    w_dtype = whzr_ref.dtype
    bt = hlast_ref.shape[1]
    tc = pl.program_id(1)

    # Initialize the resident hidden-state carry at the first time chunk of
    # each batch tile.
    @pl.when(tc == 0)
    def _():
        hstate_ref[...] = h0_ref[...]

    # Hidden state lives in the fori carry (registers) for the whole chunk;
    # hstate VMEM is touched once on entry and once on exit per chunk.
    h_init = tuple(hstate_ref[l] for l in range(L))

    # Hoisted per-layer bias broadcasts for layers >= 1 (layer 0's bias is
    # folded into the pre-projected input outside the kernel).
    b_bc = [jnp.broadcast_to(b_ref[i], (bt, 3 * H)) for i in range(L - 1)]

    def step(ti, carry):
        hs = list(carry)
        if needs_mask:
            valid = (tc * t_chunk + ti) < s_total
        x = xg_ref[ti]                       # (bt, 3H): layer-0 gates, bias folded
        for l in range(L):
            h = hs[l]
            if l == 0:
                xp = x
            else:
                xp = jnp.dot(x.astype(w_dtype), wxh_ref[l - 1],
                             preferred_element_type=jnp.float32) + b_bc[l - 1]
            h_proj = jnp.dot(h.astype(w_dtype), whzr_ref[l],
                             preferred_element_type=jnp.float32)      # (bt, 2H)
            z = jax.nn.sigmoid(xp[:, :H] + h_proj[:, :H])
            r = jax.nn.sigmoid(xp[:, H:2 * H] + h_proj[:, H:])
            g = jnp.tanh(
                xp[:, 2 * H:]
                + jnp.dot((r * h).astype(w_dtype), whg_ref[l],
                          preferred_element_type=jnp.float32))
            h_new = z * h + (1.0 - z) * g    # f32 gate math (v5e-safe)
            if needs_mask:
                h_new = jnp.where(valid, h_new, h)
            hs[l] = h_new
            x = h_new
        # Stash final-layer state; consumed by the chunk-level output
        # projection after the loop (off the recurrence critical path).
        hlast_ref[ti] = hs[L - 1]
        return tuple(hs)

    h_fin = lax.fori_loop(0, t_chunk, step, h_init, unroll=True)
    for l in range(L):
        hstate_ref[l] = h_fin[l]

    # Hoisted output projection: one (t_chunk*bt, H) x (H, O) MXU op and one
    # large lane-dense store per chunk (replaces t_chunk tiny matmuls/stores).
    h2d = hlast_ref[...].reshape(t_chunk * bt, H)
    y2d = jnp.dot(h2d.astype(w_dtype), why_ref[...],
                  preferred_element_type=jnp.float32) + by_ref[...]
    y_ref[...] = y2d.reshape(y_ref.shape).astype(y_ref.dtype)


# ----------------------------------------------------------------------------
# Wrapper: PyTorch-convention (B, S, I) in, (B, S, O) + (B, L, H) out.
# ----------------------------------------------------------------------------
def multilayer_gru_forward(x_bsi, hidden_state, layer_params, Why, by,
                           in_dim, h_dim, out_dim, n_layers,
                           t_chunk=16, b_tile=None, weight_dtype=jnp.bfloat16):
    B, S, _ = x_bsi.shape
    L = n_layers
    if hidden_state is None:
        hidden_state = jnp.zeros((B, L, h_dim), jnp.float32)

    h_pad = _round_up(h_dim, 128)
    out_pad = _round_up(out_dim, 128)

    # Batch tiling: feed as many rows as reasonable into the MXU M-dimension.
    b8 = _round_up(B, 8)
    if b_tile is None:
        b_tile = min(128, b8)
    b_tile = max(8, _round_up(min(b_tile, b8), 8))
    b_pad = _round_up(b8, b_tile)
    n_b = b_pad // b_tile

    # Time chunking with a zero-padded, masked tail (no t_chunk=1 fallback).
    t_chunk = max(1, min(t_chunk, S))
    s_pad = _round_up(S, t_chunk)
    n_tc = s_pad // t_chunk
    needs_mask = (s_pad != S)

    # Layer-0 input projection (+ bias) hoisted entirely into XLA: feed the
    # kernel pre-projected (S, B, 3*h_pad) gate activations.  Each gate segment
    # is padded to h_pad so the kernel can slice at multiples of 128.
    l0 = layer_params[0]
    wx0 = jnp.concatenate([_pad2(l0["Wxz"], in_dim, h_pad),
                           _pad2(l0["Wxr"], in_dim, h_pad),
                           _pad2(l0["Wxg"], in_dim, h_pad)], axis=1)
    b0 = jnp.concatenate([_pad2(l0["bz"], 1, h_pad),
                          _pad2(l0["br"], 1, h_pad),
                          _pad2(l0["bg"], 1, h_pad)], axis=1)
    xg = jnp.einsum("bsi,ig->bsg", x_bsi.astype(jnp.float32), wx0) + b0
    xg = jnp.transpose(xg, (1, 0, 2))                           # (S, B, 3*h_pad)
    xg = jnp.pad(xg, ((0, s_pad - S), (0, b_pad - B), (0, 0)))

    h0 = jnp.transpose(hidden_state, (1, 0, 2)).astype(jnp.float32)   # (L, B, H)
    h0 = jnp.pad(h0, ((0, 0), (0, b_pad - B), (0, h_pad - h_dim)))

    weights = pack_params(layer_params, Why, by, h_pad, out_pad, L, weight_dtype)

    kernel = functools.partial(_gru_kernel, L, t_chunk, h_pad, S, needs_mask)

    def _resident(arr):
        # Constant-index operand: single-buffer it (default double buffering
        # would hold an extra full copy of every resident weight in VMEM).
        nd = arr.ndim
        return pl.BlockSpec(arr.shape, lambda b, t: (0,) * nd,
                            pipeline_mode=pl.Buffered(1))

    in_specs = [
        pl.BlockSpec((t_chunk, b_tile, 3 * h_pad), lambda b, t: (t, b, 0)),
        pl.BlockSpec((L, b_tile, h_pad), lambda b, t: (0, b, 0),
                     pipeline_mode=pl.Buffered(1)),
    ] + [_resident(w) for w in weights]

    out_specs = (
        pl.BlockSpec((t_chunk, b_tile, out_pad), lambda b, t: (t, b, 0)),
        pl.BlockSpec((L, b_tile, h_pad), lambda b, t: (0, b, 0)),
    )
    out_shapes = (
        jax.ShapeDtypeStruct((s_pad, b_pad, out_pad), jnp.float32),
        jax.ShapeDtypeStruct((L, b_pad, h_pad), jnp.float32),
    )
    scratch_shapes = [pltpu.VMEM((t_chunk, b_tile, h_pad), jnp.float32)]

    # VMEM budget: single-buffered resident weights + pipelined chunk buffers.
    fsz = 4
    weight_bytes = sum(int(w.size) * w.dtype.itemsize for w in weights)
    stream_bytes = (2 * t_chunk * b_tile * 3 * h_pad * fsz     # xg (x2 buffers)
                    + 2 * t_chunk * b_tile * out_pad * fsz     # y  (x2 buffers)
                    + 1 * L * b_tile * h_pad * fsz             # h0 (single)
                    + 2 * L * b_tile * h_pad * fsz             # hstate out
                    + t_chunk * b_tile * h_pad * fsz)          # hlast scratch
    needed = weight_bytes + stream_bytes + (8 << 20)           # compiler headroom
    try:
        vmem_cap = int(pltpu.get_tpu_info().vmem_capacity_bytes)
    except Exception:
        vmem_cap = 128 << 20
    vmem_limit = min(max(needed, 32 << 20), int(vmem_cap * 0.85))

    y_p, h_p = pl.pallas_call(
        kernel,
        grid=(n_b, n_tc),
        in_specs=in_specs,
        out_specs=out_specs,
        out_shape=out_shapes,
        scratch_shapes=scratch_shapes,
        compiler_params=pltpu.CompilerParams(
            # Batch tiles are independent (megacore-parallel); time carries the
            # hidden state via the resident output block (sequential).
            dimension_semantics=("parallel", "arbitrary"),
            vmem_limit_bytes=vmem_limit,
        ),
    )(xg, h0, *weights)

    layer_output = jnp.transpose(y_p[:S, :B, :out_dim], (1, 0, 2))    # (B, S, O)

    # Reproduce the PyTorch module's torch.cat(layer_states).reshape(B, L, H)
    # semantics exactly (cat along dim 0 of the per-layer (B, H) states).
    h_lbh = h_p[:, :B, :h_dim]                                        # (L, B, H)
    hidden_out = h_lbh.reshape(L * B, h_dim).reshape(B, L, h_dim)
    return layer_output, hidden_out


# ----------------------------------------------------------------------------
# Pure-JAX reference (mirrors the PyTorch forward loop) for verification.
# ----------------------------------------------------------------------------
def reference_forward(x_bsi, hidden_state, layer_params, Why, by,
                      h_dim, out_dim, n_layers):
    B, S, _ = x_bsi.shape
    if hidden_state is None:
        states = [jnp.zeros((B, h_dim), jnp.float32) for _ in range(n_layers)]
    else:
        states = [hidden_state[:, i, :] for i in range(n_layers)]
    outs = []
    for t in range(S):
        x = x_bsi[:, t]
        for i in range(n_layers):
            p = layer_params[i]
            h = states[i]
            z = jax.nn.sigmoid(x @ p["Wxz"] + h @ p["Whz"] + p["bz"])
            r = jax.nn.sigmoid(x @ p["Wxr"] + h @ p["Whr"] + p["br"])
            g = jnp.tanh(x @ p["Wxg"] + (r * h) @ p["Whg"] + p["bg"])
            h = z * h + (1.0 - z) * g
            states[i] = h
            x = h
        outs.append(x @ Why + by)
    layer_output = jnp.stack(outs, axis=1)
    hidden_out = jnp.concatenate(states, axis=0).reshape(B, n_layers, h_dim)
    return layer_output, hidden_out


if __name__ == "__main__":
    # Small, deterministic example (dropout=0 -> no Dropout2d in the reference).
    B, S = 2, 8
    in_dim, h_dim, out_dim, n_layers = 16, 32, 16, 2

    key = jax.random.PRNGKey(0)
    kx, kp = jax.random.split(key)
    x = jax.random.normal(kx, (B, S, in_dim), jnp.float32)
    layer_params, Why, by = init_params(kp, in_dim, h_dim, out_dim, n_layers)

    # f32 weights for exact verification against the pure-JAX reference.
    y, h_final = multilayer_gru_forward(
        x, None, layer_params, Why, by, in_dim, h_dim, out_dim, n_layers,
        t_chunk=16, weight_dtype=jnp.float32)
    y = jax.block_until_ready(y)
    h_final = jax.block_until_ready(h_final)

    y_ref, h_ref = reference_forward(
        x, None, layer_params, Why, by, h_dim, out_dim, n_layers)

    assert y.shape == (B, S, out_dim)
    assert h_final.shape == (B, n_layers, h_dim)
    assert jnp.allclose(y, y_ref, atol=1e-5, rtol=1e-5)
    assert jnp.allclose(h_final, h_ref, atol=1e-5, rtol=1e-5)

    # Exercise the masked-tail path (t_chunk=3 does not divide S=8).
    y2, h2 = multilayer_gru_forward(
        x, None, layer_params, Why, by, in_dim, h_dim, out_dim, n_layers,
        t_chunk=3, weight_dtype=jnp.float32)
    y2 = jax.block_until_ready(y2)
    assert jnp.allclose(y2, y_ref, atol=1e-5, rtol=1e-5)
    assert jnp.allclose(h2, h_ref, atol=1e-5, rtol=1e-5)

    # Exercise the default bf16-weight path (f32 gate math / accumulation);
    # bf16 rounding drifts over timesteps, so only sanity-check it.
    y3, h3 = multilayer_gru_forward(
        x, None, layer_params, Why, by, in_dim, h_dim, out_dim, n_layers)
    y3 = jax.block_until_ready(y3)
    assert y3.shape == (B, S, out_dim)
    assert bool(jnp.all(jnp.isfinite(y3))) and bool(jnp.all(jnp.isfinite(h3)))

    print("KERNEL_OK")
</pallas_src>

<mosaic_0001>
module attributes {stable_mosaic.version = 11 : i64} {
  func.func @_gru_kernel(%arg0: i32, %arg1: i32, %arg2: memref<8x8x384xf32, #tpu.memory_space<vmem>>, %arg3: memref<2x8x128xf32, #tpu.memory_space<vmem>>, %arg4: memref<1x128x384xf32, #tpu.memory_space<vmem>>, %arg5: memref<2x128x256xf32, #tpu.memory_space<vmem>>, %arg6: memref<2x128x128xf32, #tpu.memory_space<vmem>>, %arg7: memref<1x1x384xf32, #tpu.memory_space<vmem>>, %arg8: memref<128x128xf32, #tpu.memory_space<vmem>>, %arg9: memref<1x128xf32, #tpu.memory_space<vmem>>, %arg10: memref<8x8x128xf32, #tpu.memory_space<vmem>>, %arg11: memref<2x8x128xf32, #tpu.memory_space<vmem>>, %arg12: memref<8x8x128xf32, #tpu.memory_space<vmem>>) attributes {dimension_semantics = [#tpu.dimension_semantics<parallel>, #tpu.dimension_semantics<arbitrary>], iteration_bounds = array<i64: 1, 1>, scalar_prefetch = 0 : i64, scratch_operands = 1 : i64, tpu.core_type = #tpu.core_type<tc>, window_params = [{transform_indices = @transform_0, window_bounds = array<i64: 8, 8, 384>}, {pipeline_mode = #tpu.pipeline_mode<synchronous>, transform_indices = @transform_1, window_bounds = array<i64: 2, 8, 128>}, {pipeline_mode = #tpu.pipeline_mode<synchronous>, transform_indices = @transform_2, window_bounds = array<i64: 1, 128, 384>}, {pipeline_mode = #tpu.pipeline_mode<synchronous>, transform_indices = @transform_3, window_bounds = array<i64: 2, 128, 256>}, {pipeline_mode = #tpu.pipeline_mode<synchronous>, transform_indices = @transform_4, window_bounds = array<i64: 2, 128, 128>}, {pipeline_mode = #tpu.pipeline_mode<synchronous>, transform_indices = @transform_5, window_bounds = array<i64: 1, 1, 384>}, {pipeline_mode = #tpu.pipeline_mode<synchronous>, transform_indices = @transform_6, window_bounds = array<i64: 128, 128>}, {pipeline_mode = #tpu.pipeline_mode<synchronous>, transform_indices = @transform_7, window_bounds = array<i64: 1, 128>}, {transform_indices = @transform_8, window_bounds = array<i64: 8, 8, 128>}, {transform_indices = @transform_9, window_bounds = array<i64: 2, 8, 128>}]} {
    %c0_i32 = arith.constant 0 : i32
    %0 = arith.cmpi eq, %arg1, %c0_i32 : i32
    %1 = arith.extui %0 : i1 to i32
    %c0_i32_0 = arith.constant 0 : i32
    %2 = arith.cmpi ne, %1, %c0_i32_0 : i32
    scf.if %2 {
      %c0_265 = arith.constant 0 : index
      %c0_266 = arith.constant 0 : index
      %c0_267 = arith.constant 0 : index
      %610 = vector.load %arg3[%c0_265, %c0_266, %c0_267] : memref<2x8x128xf32, #tpu.memory_space<vmem>>, vector<2x8x128xf32>
      %c0_268 = arith.constant 0 : index
      %c0_269 = arith.constant 0 : index
      %c0_270 = arith.constant 0 : index
      %611 = vector.load %arg11[%c0_268, %c0_269, %c0_270] : memref<2x8x128xf32, #tpu.memory_space<vmem>>, vector<2x8x128xf32>
      tpu.vector_store %arg11[%c0_268, %c0_269, %c0_270], %610 {strides = array<i32>} : memref<2x8x128xf32, #tpu.memory_space<vmem>>, vector<2x8x128xf32>,
    } else {
    }
    %c0 = arith.constant 0 : index
    %c0_1 = arith.constant 0 : index
    %c0_2 = arith.constant 0 : index
    %3 = vector.load %arg11[%c0, %c0_1, %c0_2] : memref<2x8x128xf32, #tpu.memory_space<vmem>>, vector<1x8x128xf32>
    %4 = vector.shape_cast %3 : vector<1x8x128xf32> to vector<8x128xf32>
    %c1 = arith.constant 1 : index
    %c0_3 = arith.constant 0 : index
    %c0_4 = arith.constant 0 : index
    %5 = vector.load %arg11[%c1, %c0_3, %c0_4] : memref<2x8x128xf32, #tpu.memory_space<vmem>>, vector<1x8x128xf32>
    %6 = vector.shape_cast %5 : vector<1x8x128xf32> to vector<8x128xf32>
    %c0_5 = arith.constant 0 : index
    %c0_6 = arith.constant 0 : index
    %c0_7 = arith.constant 0 : index
    %7 = vector.load %arg7[%c0_5, %c0_6, %c0_7] : memref<1x1x384xf32, #tpu.memory_space<vmem>>, vector<1x1x384xf32>
    %8 = vector.shape_cast %7 : vector<1x1x384xf32> to vector<1x384xf32>
    %9 = vector.shape_cast %8 : vector<1x384xf32> to vector<1x384xf32>
    %10 = vector.broadcast %9 : vector<1x384xf32> to vector<8x384xf32>
    %c0_i32_8 = arith.constant 0 : i32
    %11 = arith.index_cast %c0_i32_8 : i32 to index
    %c0_9 = arith.constant 0 : index
    %c0_10 = arith.constant 0 : index
    %12 = vector.load %arg2[%11, %c0_9, %c0_10] : memref<8x8x384xf32, #tpu.memory_space<vmem>>, vector<1x8x384xf32>
    %13 = vector.shape_cast %12 : vector<1x8x384xf32> to vector<8x384xf32>
    %c0_11 = arith.constant 0 : index
    %c0_12 = arith.constant 0 : index
    %c0_13 = arith.constant 0 : index
    %14 = vector.load %arg5[%c0_11, %c0_12, %c0_13] : memref<2x128x256xf32, #tpu.memory_space<vmem>>, vector<1x128x256xf32>
    %15 = vector.shape_cast %14 : vector<1x128x256xf32> to vector<128x256xf32>
    %cst = arith.constant dense<0.000000e+00> : vector<8x256xf32>
    %16 = tpu.matmul %4, %15, %cst {dimension_numbers = #tpu.dot_dimension_numbers<[1], [0], [0], [1], [0, 0, 1, 1], [], []>} : vector<8x128xf32>, vector<128x256xf32>, vector<8x256xf32> -> vector<8x256xf32>
    %17 = vector.extract_strided_slice %13 {offsets = [0, 0], sizes = [8, 128], strides = [1, 1]} : vector<8x384xf32> to vector<8x128xf32>
    %18 = vector.extract_strided_slice %16 {offsets = [0, 0], sizes = [8, 128], strides = [1, 1]} : vector<8x256xf32> to vector<8x128xf32>
    %19 = arith.addf %17, %18 : vector<8x128xf32>
    %20 = arith.negf %19 : vector<8x128xf32>
    %21 = math.exp %20 : vector<8x128xf32>
    %cst_14 = arith.constant 1.000000e+00 : f32
    %22 = vector.broadcast %cst_14 : f32 to vector<8x128xf32>
    %23 = arith.addf %22, %21 : vector<8x128xf32>
    %24 = arith.divf %22, %23 : vector<8x128xf32>
    %25 = vector.extract_strided_slice %13 {offsets = [0, 128], sizes = [8, 128], strides = [1, 1]} : vector<8x384xf32> to vector<8x128xf32>
    %26 = vector.extract_strided_slice %16 {offsets = [0, 128], sizes = [8, 128], strides = [1, 1]} : vector<8x256xf32> to vector<8x128xf32>
    %27 = arith.addf %25, %26 : vector<8x128xf32>
    %28 = arith.negf %27 : vector<8x128xf32>
    %29 = math.exp %28 : vector<8x128xf32>
    %cst_15 = arith.constant 1.000000e+00 : f32
    %30 = vector.broadcast %cst_15 : f32 to vector<8x128xf32>
    %31 = arith.addf %30, %29 : vector<8x128xf32>
    %32 = arith.divf %30, %31 : vector<8x128xf32>
    %33 = vector.extract_strided_slice %13 {offsets = [0, 256], sizes = [8, 128], strides = [1, 1]} : vector<8x384xf32> to vector<8x128xf32>
    %34 = arith.mulf %32, %4 : vector<8x128xf32>
    %c0_16 = arith.constant 0 : index
    %c0_17 = arith.constant 0 : index
    %c0_18 = arith.constant 0 : index
    %35 = vector.load %arg6[%c0_16, %c0_17, %c0_18] : memref<2x128x128xf32, #tpu.memory_space<vmem>>, vector<1x128x128xf32>
    %36 = vector.shape_cast %35 : vector<1x128x128xf32> to vector<128x128xf32>
    %cst_19 = arith.constant dense<0.000000e+00> : vector<8x128xf32>
    %37 = tpu.matmul %34, %36, %cst_19 {dimension_numbers = #tpu.dot_dimension_numbers<[1], [0], [0], [1], [0, 0, 1, 1], [], []>} : vector<8x128xf32>, vector<128x128xf32>, vector<8x128xf32> -> vector<8x128xf32>
    %38 = arith.addf %33, %37 : vector<8x128xf32>
    %39 = math.tanh %38 : vector<8x128xf32>
    %40 = arith.mulf %24, %4 : vector<8x128xf32>
    %cst_20 = arith.constant 1.000000e+00 : f32
    %41 = vector.broadcast %cst_20 : f32 to vector<8x128xf32>
    %42 = arith.subf %41, %24 : vector<8x128xf32>
    %43 = arith.mulf %42, %39 : vector<8x128xf32>
    %44 = arith.addf %40, %43 : vector<8x128xf32>
    %c0_21 = arith.constant 0 : index
    %c0_22 = arith.constant 0 : index
    %c0_23 = arith.constant 0 : index
    %45 = vector.load %arg4[%c0_21, %c0_22, %c0_23] : memref<1x128x384xf32, #tpu.memory_space<vmem>>, vector<1x128x384xf32>
    %46 = vector.shape_cast %45 : vector<1x128x384xf32> to vector<128x384xf32>
    %cst_24 = arith.constant dense<0.000000e+00> : vector<8x384xf32>
    %47 = tpu.matmul %44, %46, %cst_24 {dimension_numbers = #tpu.dot_dimension_numbers<[1], [0], [0], [1], [0, 0, 1, 1], [], []>} : vector<8x128xf32>, vector<128x384xf32>, vector<8x384xf32> -> vector<8x384xf32>
    %48 = arith.addf %47, %10 : vector<8x384xf32>
    %c1_25 = arith.constant 1 : index
    %c0_26 = arith.constant 0 : index
    %c0_27 = arith.constant 0 : index
    %49 = vector.load %arg5[%c1_25, %c0_26, %c0_27] : memref<2x128x256xf32, #tpu.memory_space<vmem>>, vector<1x128x256xf32>
    %50 = vector.shape_cast %49 : vector<1x128x256xf32> to vector<128x256xf32>
    %cst_28 = arith.constant dense<0.000000e+00> : vector<8x256xf32>
    %51 = tpu.matmul %6, %50, %cst_28 {dimension_numbers = #tpu.dot_dimension_numbers<[1], [0], [0], [1], [0, 0, 1, 1], [], []>} : vector<8x128xf32>, vector<128x256xf32>, vector<8x256xf32> -> vector<8x256xf32>
    %52 = vector.extract_strided_slice %48 {offsets = [0, 0], sizes = [8, 128], strides = [1, 1]} : vector<8x384xf32> to vector<8x128xf32>
    %53 = vector.extract_strided_slice %51 {offsets = [0, 0], sizes = [8, 128], strides = [1, 1]} : vector<8x256xf32> to vector<8x128xf32>
    %54 = arith.addf %52, %53 : vector<8x128xf32>
    %55 = arith.negf %54 : vector<8x128xf32>
    %56 = math.exp %55 : vector<8x128xf32>
    %cst_29 = arith.constant 1.000000e+00 : f32
    %57 = vector.broadcast %cst_29 : f32 to vector<8x128xf32>
    %58 = arith.addf %57, %56 : vector<8x128xf32>
    %59 = arith.divf %57, %58 : vector<8x128xf32>
    %60 = vector.extract_strided_slice %48 {offsets = [0, 128], sizes = [8, 128], strides = [1, 1]} : vector<8x384xf32> to vector<8x128xf32>
    %61 = vector.extract_strided_slice %51 {offsets = [0, 128], sizes = [8, 128], strides = [1, 1]} : vector<8x256xf32> to vector<8x128xf32>
    %62 = arith.addf %60, %61 : vector<8x128xf32>
    %63 = arith.negf %62 : vector<8x128xf32>
    %64 = math.exp %63 : vector<8x128xf32>
    %cst_30 = arith.constant 1.000000e+00 : f32
    %65 = vector.broadcast %cst_30 : f32 to vector<8x128xf32>
    %66 = arith.addf %65, %64 : vector<8x128xf32>
    %67 = arith.divf %65, %66 : vector<8x128xf32>
    %68 = vector.extract_strided_slice %48 {offsets = [0, 256], sizes = [8, 128], strides = [1, 1]} : vector<8x384xf32> to vector<8x128xf32>
    %69 = arith.mulf %67, %6 : vector<8x128xf32>
    %c1_31 = arith.constant 1 : index
    %c0_32 = arith.constant 0 : index
    %c0_33 = arith.constant 0 : index
    %70 = vector.load %arg6[%c1_31, %c0_32, %c0_33] : memref<2x128x128xf32, #tpu.memory_space<vmem>>, vector<1x128x128xf32>
    %71 = vector.shape_cast %70 : vector<1x128x128xf32> to vector<128x128xf32>
    %cst_34 = arith.constant dense<0.000000e+00> : vector<8x128xf32>
    %72 = tpu.matmul %69, %71, %cst_34 {dimension_numbers = #tpu.dot_dimension_numbers<[1], [0], [0], [1], [0, 0, 1, 1], [], []>} : vector<8x128xf32>, vector<128x128xf32>, vector<8x128xf32> -> vector<8x128xf32>
    %73 = arith.addf %68, %72 : vector<8x128xf32>
    %74 = math.tanh %73 : vector<8x128xf32>
    %75 = arith.mulf %59, %6 : vector<8x128xf32>
    %cst_35 = arith.constant 1.000000e+00 : f32
    %76 = vector.broadcast %cst_35 : f32 to vector<8x128xf32>
    %77 = arith.subf %76, %59 : vector<8x128xf32>
    %78 = arith.mulf %77, %74 : vector<8x128xf32>
    %79 = arith.addf %75, %78 : vector<8x128xf32>
    %80 = arith.index_cast %c0_i32_8 : i32 to index
    %c0_36 = arith.constant 0 : index
    %c0_37 = arith.constant 0 : index
    %81 = vector.load %arg12[%80, %c0_36, %c0_37] : memref<8x8x128xf32, #tpu.memory_space<vmem>>, vector<1x8x128xf32>
    %82 = vector.shape_cast %81 : vector<1x8x128xf32> to vector<8x128xf32>
    %83 = vector.shape_cast %79 : vector<8x128xf32> to vector<1x8x128xf32>
    tpu.vector_store %arg12[%80, %c0_36, %c0_37], %83 {strides = array<i32>} : memref<8x8x128xf32, #tpu.memory_space<vmem>>, vector<1x8x128xf32>,
    %c1_i32 = arith.constant 1 : i32
    %84 = arith.index_cast %c1_i32 : i32 to index
    %c0_38 = arith.constant 0 : index
    %c0_39 = arith.constant 0 : index
    %85 = vector.load %arg2[%84, %c0_38, %c0_39] : memref<8x8x384xf32, #tpu.memory_space<vmem>>, vector<1x8x384xf32>
    %86 = vector.shape_cast %85 : vector<1x8x384xf32> to vector<8x384xf32>
    %c0_40 = arith.constant 0 : index
    %c0_41 = arith.constant 0 : index
    %c0_42 = arith.constant 0 : index
    %87 = vector.load %arg5[%c0_40, %c0_41, %c0_42] : memref<2x128x256xf32, #tpu.memory_space<vmem>>, vector<1x128x256xf32>
    %88 = vector.shape_cast %87 : vector<1x128x256xf32> to vector<128x256xf32>
    %cst_43 = arith.constant dense<0.000000e+00> : vector<8x256xf32>
    %89 = tpu.matmul %44, %88, %cst_43 {dimension_numbers = #tpu.dot_dimension_numbers<[1], [0], [0], [1], [0, 0, 1, 1], [], []>} : vector<8x128xf32>, vector<128x256xf32>, vector<8x256xf32> -> vector<8x256xf32>
    %90 = vector.extract_strided_slice %86 {offsets = [0, 0], sizes = [8, 128], strides = [1, 1]} : vector<8x384xf32> to vector<8x128xf32>
    %91 = vector.extract_strided_slice %89 {offsets = [0, 0], sizes = [8, 128], strides = [1, 1]} : vector<8x256xf32> to vector<8x128xf32>
    %92 = arith.addf %90, %91 : vector<8x128xf32>
    %93 = arith.negf %92 : vector<8x128xf32>
    %94 = math.exp %93 : vector<8x128xf32>
    %cst_44 = arith.constant 1.000000e+00 : f32
    %95 = vector.broadcast %cst_44 : f32 to vector<8x128xf32>
    %96 = arith.addf %95, %94 : vector<8x128xf32>
    %97 = arith.divf %95, %96 : vector<8x128xf32>
    %98 = vector.extract_strided_slice %86 {offsets = [0, 128], sizes = [8, 128], strides = [1, 1]} : vector<8x384xf32> to vector<8x128xf32>
    %99 = vector.extract_strided_slice %89 {offsets = [0, 128], sizes = [8, 128], strides = [1, 1]} : vector<8x256xf32> to vector<8x128xf32>
    %100 = arith.addf %98, %99 : vector<8x128xf32>
    %101 = arith.negf %100 : vector<8x128xf32>
    %102 = math.exp %101 : vector<8x128xf32>
    %cst_45 = arith.constant 1.000000e+00 : f32
    %103 = vector.broadcast %cst_45 : f32 to vector<8x128xf32>
    %104 = arith.addf %103, %102 : vector<8x128xf32>
    %105 = arith.divf %103, %104 : vector<8x128xf32>
    %106 = vector.extract_strided_slice %86 {offsets = [0, 256], sizes = [8, 128], strides = [1, 1]} : vector<8x384xf32> to vector<8x128xf32>
    %107 = arith.mulf %105, %44 : vector<8x128xf32>
    %c0_46 = arith.constant 0 : index
    %c0_47 = arith.constant 0 : index
    %c0_48 = arith.constant 0 : index
    %108 = vector.load %arg6[%c0_46, %c0_47, %c0_48] : memref<2x128x128xf32, #tpu.memory_space<vmem>>, vector<1x128x128xf32>
    %109 = vector.shape_cast %108 : vector<1x128x128xf32> to vector<128x128xf32>
    %cst_49 = arith.constant dense<0.000000e+00> : vector<8x128xf32>
    %110 = tpu.matmul %107, %109, %cst_49 {dimension_numbers = #tpu.dot_dimension_numbers<[1], [0], [0], [1], [0, 0, 1, 1], [], []>} : vector<8x128xf32>, vector<128x128xf32>, vector<8x128xf32> -> vector<8x128xf32>
    %111 = arith.addf %106, %110 : vector<8x128xf32>
    %112 = math.tanh %111 : vector<8x128xf32>
    %113 = arith.mulf %97, %44 : vector<8x128xf32>
    %cst_50 = arith.constant 1.000000e+00 : f32
    %114 = vector.broadcast %cst_50 : f32 to vector<8x128xf32>
    %115 = arith.subf %114, %97 : vector<8x128xf32>
    %116 = arith.mulf %115, %112 : vector<8x128xf32>
    %117 = arith.addf %113, %116 : vector<8x128xf32>
    %c0_51 = arith.constant 0 : index
    %c0_52 = arith.constant 0 : index
    %c0_53 = arith.constant 0 : index
    %118 = vector.load %arg4[%c0_51, %c0_52, %c0_53] : memref<1x128x384xf32, #tpu.memory_space<vmem>>, vector<1x128x384xf32>
    %119 = vector.shape_cast %118 : vector<1x128x384xf32> to vector<128x384xf32>
    %cst_54 = arith.constant dense<0.000000e+00> : vector<8x384xf32>
    %120 = tpu.matmul %117, %119, %cst_54 {dimension_numbers = #tpu.dot_dimension_numbers<[1], [0], [0], [1], [0, 0, 1, 1], [], []>} : vector<8x128xf32>, vector<128x384xf32>, vector<8x384xf32> -> vector<8x384xf32>
    %121 = arith.addf %120, %10 : vector<8x384xf32>
    %c1_55 = arith.constant 1 : index
    %c0_56 = arith.constant 0 : index
    %c0_57 = arith.constant 0 : index
    %122 = vector.load %arg5[%c1_55, %c0_56, %c0_57] : memref<2x128x256xf32, #tpu.memory_space<vmem>>, vector<1x128x256xf32>
    %123 = vector.shape_cast %122 : vector<1x128x256xf32> to vector<128x256xf32>
    %cst_58 = arith.constant dense<0.000000e+00> : vector<8x256xf32>
    %124 = tpu.matmul %79, %123, %cst_58 {dimension_numbers = #tpu.dot_dimension_numbers<[1], [0], [0], [1], [0, 0, 1, 1], [], []>} : vector<8x128xf32>, vector<128x256xf32>, vector<8x256xf32> -> vector<8x256xf32>
    %125 = vector.extract_strided_slice %121 {offsets = [0, 0], sizes = [8, 128], strides = [1, 1]} : vector<8x384xf32> to vector<8x128xf32>
    %126 = vector.extract_strided_slice %124 {offsets = [0, 0], sizes = [8, 128], strides = [1, 1]} : vector<8x256xf32> to vector<8x128xf32>
    %127 = arith.addf %125, %126 : vector<8x128xf32>
    %128 = arith.negf %127 : vector<8x128xf32>
    %129 = math.exp %128 : vector<8x128xf32>
    %cst_59 = arith.constant 1.000000e+00 : f32
    %130 = vector.broadcast %cst_59 : f32 to vector<8x128xf32>
    %131 = arith.addf %130, %129 : vector<8x128xf32>
    %132 = arith.divf %130, %131 : vector<8x128xf32>
    %133 = vector.extract_strided_slice %121 {offsets = [0, 128], sizes = [8, 128], strides = [1, 1]} : vector<8x384xf32> to vector<8x128xf32>
    %134 = vector.extract_strided_slice %124 {offsets = [0, 128], sizes = [8, 128], strides = [1, 1]} : vector<8x256xf32> to vector<8x128xf32>
    %135 = arith.addf %133, %134 : vector<8x128xf32>
    %136 = arith.negf %135 : vector<8x128xf32>
    %137 = math.exp %136 : vector<8x128xf32>
    %cst_60 = arith.constant 1.000000e+00 : f32
    %138 = vector.broadcast %cst_60 : f32 to vector<8x128xf32>
    %139 = arith.addf %138, %137 : vector<8x128xf32>
    %140 = arith.divf %138, %139 : vector<8x128xf32>
    %141 = vector.extract_strided_slice %121 {offsets = [0, 256], sizes = [8, 128], strides = [1, 1]} : vector<8x384xf32> to vector<8x128xf32>
    %142 = arith.mulf %140, %79 : vector<8x128xf32>
    %c1_61 = arith.constant 1 : index
    %c0_62 = arith.constant 0 : index
    %c0_63 = arith.constant 0 : index
    %143 = vector.load %arg6[%c1_61, %c0_62, %c0_63] : memref<2x128x128xf32, #tpu.memory_space<vmem>>, vector<1x128x128xf32>
    %144 = vector.shape_cast %143 : vector<1x128x128xf32> to vector<128x128xf32>
    %cst_64 = arith.constant dense<0.000000e+00> : vector<8x128xf32>
    %145 = tpu.matmul %142, %144, %cst_64 {dimension_numbers = #tpu.dot_dimension_numbers<[1], [0], [0], [1], [0, 0, 1, 1], [], []>} : vector<8x128xf32>, vector<128x128xf32>, vector<8x128xf32> -> vector<8x128xf32>
    %146 = arith.addf %141, %145 : vector<8x128xf32>
    %147 = math.tanh %146 : vector<8x128xf32>
    %148 = arith.mulf %132, %79 : vector<8x128xf32>
    %cst_65 = arith.constant 1.000000e+00 : f32
    %149 = vector.broadcast %cst_65 : f32 to vector<8x128xf32>
    %150 = arith.subf %149, %132 : vector<8x128xf32>
    %151 = arith.mulf %150, %147 : vector<8x128xf32>
    %152 = arith.addf %148, %151 : vector<8x128xf32>
    %153 = arith.index_cast %c1_i32 : i32 to index
    %c0_66 = arith.constant 0 : index
    %c0_67 = arith.constant 0 : index
    %154 = vector.load %arg12[%153, %c0_66, %c0_67] : memref<8x8x128xf32, #tpu.memory_space<vmem>>, vector<1x8x128xf32>
    %155 = vector.shape_cast %154 : vector<1x8x128xf32> to vector<8x128xf32>
    %156 = vector.shape_cast %152 : vector<8x128xf32> to vector<1x8x128xf32>
    tpu.vector_store %arg12[%153, %c0_66, %c0_67], %156 {strides = array<i32>} : memref<8x8x128xf32, #tpu.memory_space<vmem>>, vector<1x8x128xf32>,
    %c2_i32 = arith.constant 2 : i32
    %157 = arith.index_cast %c2_i32 : i32 to index
    %c0_68 = arith.constant 0 : index
    %c0_69 = arith.constant 0 : index
    %158 = vector.load %arg2[%157, %c0_68, %c0_69] : memref<8x8x384xf32, #tpu.memory_space<vmem>>, vector<1x8x384xf32>
    %159 = vector.shape_cast %158 : vector<1x8x384xf32> to vector<8x384xf32>
    %c0_70 = arith.constant 0 : index
    %c0_71 = arith.constant 0 : index
    %c0_72 = arith.constant 0 : index
    %160 = vector.load %arg5[%c0_70, %c0_71, %c0_72] : memref<2x128x256xf32, #tpu.memory_space<vmem>>, vector<1x128x256xf32>
    %161 = vector.shape_cast %160 : vector<1x128x256xf32> to vector<128x256xf32>
    %cst_73 = arith.constant dense<0.000000e+00> : vector<8x256xf32>
    %162 = tpu.matmul %117, %161, %cst_73 {dimension_numbers = #tpu.dot_dimension_numbers<[1], [0], [0], [1], [0, 0, 1, 1], [], []>} : vector<8x128xf32>, vector<128x256xf32>, vector<8x256xf32> -> vector<8x256xf32>
    %163 = vector.extract_strided_slice %159 {offsets = [0, 0], sizes = [8, 128], strides = [1, 1]} : vector<8x384xf32> to vector<8x128xf32>
    %164 = vector.extract_strided_slice %162 {offsets = [0, 0], sizes = [8, 128], strides = [1, 1]} : vector<8x256xf32> to vector<8x128xf32>
    %165 = arith.addf %163, %164 : vector<8x128xf32>
    %166 = arith.negf %165 : vector<8x128xf32>
    %167 = math.exp %166 : vector<8x128xf32>
    %cst_74 = arith.constant 1.000000e+00 : f32
    %168 = vector.broadcast %cst_74 : f32 to vector<8x128xf32>
    %169 = arith.addf %168, %167 : vector<8x128xf32>
    %170 = arith.divf %168, %169 : vector<8x128xf32>
    %171 = vector.extract_strided_slice %159 {offsets = [0, 128], sizes = [8, 128], strides = [1, 1]} : vector<8x384xf32> to vector<8x128xf32>
    %172 = vector.extract_strided_slice %162 {offsets = [0, 128], sizes = [8, 128], strides = [1, 1]} : vector<8x256xf32> to vector<8x128xf32>
    %173 = arith.addf %171, %172 : vector<8x128xf32>
    %174 = arith.negf %173 : vector<8x128xf32>
    %175 = math.exp %174 : vector<8x128xf32>
    %cst_75 = arith.constant 1.000000e+00 : f32
    %176 = vector.broadcast %cst_75 : f32 to vector<8x128xf32>
    %177 = arith.addf %176, %175 : vector<8x128xf32>
    %178 = arith.divf %176, %177 : vector<8x128xf32>
    %179 = vector.extract_strided_slice %159 {offsets = [0, 256], sizes = [8, 128], strides = [1, 1]} : vector<8x384xf32> to vector<8x128xf32>
    %180 = arith.mulf %178, %117 : vector<8x128xf32>
    %c0_76 = arith.constant 0 : index
    %c0_77 = arith.constant 0 : index
    %c0_78 = arith.constant 0 : index
    %181 = vector.load %arg6[%c0_76, %c0_77, %c0_78] : memref<2x128x128xf32, #tpu.memory_space<vmem>>, vector<1x128x128xf32>
    %182 = vector.shape_cast %181 : vector<1x128x128xf32> to vector<128x128xf32>
    %cst_79 = arith.constant dense<0.000000e+00> : vector<8x128xf32>
    %183 = tpu.matmul %180, %182, %cst_79 {dimension_numbers = #tpu.dot_dimension_numbers<[1], [0], [0], [1], [0, 0, 1, 1], [], []>} : vector<8x128xf32>, vector<128x128xf32>, vector<8x128xf32> -> vector<8x128xf32>
    %184 = arith.addf %179, %183 : vector<8x128xf32>
    %185 = math.tanh %184 : vector<8x128xf32>
    %186 = arith.mulf %170, %117 : vector<8x128xf32>
    %cst_80 = arith.constant 1.000000e+00 : f32
    %187 = vector.broadcast %cst_80 : f32 to vector<8x128xf32>
    %188 = arith.subf %187, %170 : vector<8x128xf32>
    %189 = arith.mulf %188, %185 : vector<8x128xf32>
    %190 = arith.addf %186, %189 : vector<8x128xf32>
    %c0_81 = arith.constant 0 : index
    %c0_82 = arith.constant 0 : index
    %c0_83 = arith.constant 0 : index
    %191 = vector.load %arg4[%c0_81, %c0_82, %c0_83] : memref<1x128x384xf32, #tpu.memory_space<vmem>>, vector<1x128x384xf32>
    %192 = vector.shape_cast %191 : vector<1x128x384xf32> to vector<128x384xf32>
    %cst_84 = arith.constant dense<0.000000e+00> : vector<8x384xf32>
    %193 = tpu.matmul %190, %192, %cst_84 {dimension_numbers = #tpu.dot_dimension_numbers<[1], [0], [0], [1], [0, 0, 1, 1], [], []>} : vector<8x128xf32>, vector<128x384xf32>, vector<8x384xf32> -> vector<8x384xf32>
    %194 = arith.addf %193, %10 : vector<8x384xf32>
    %c1_85 = arith.constant 1 : index
    %c0_86 = arith.constant 0 : index
    %c0_87 = arith.constant 0 : index
    %195 = vector.load %arg5[%c1_85, %c0_86, %c0_87] : memref<2x128x256xf32, #tpu.memory_space<vmem>>, vector<1x128x256xf32>
    %196 = vector.shape_cast %195 : vector<1x128x256xf32> to vector<128x256xf32>
    %cst_88 = arith.constant dense<0.000000e+00> : vector<8x256xf32>
    %197 = tpu.matmul %152, %196, %cst_88 {dimension_numbers = #tpu.dot_dimension_numbers<[1], [0], [0], [1], [0, 0, 1, 1], [], []>} : vector<8x128xf32>, vector<128x256xf32>, vector<8x256xf32> -> vector<8x256xf32>
    %198 = vector.extract_strided_slice %194 {offsets = [0, 0], sizes = [8, 128], strides = [1, 1]} : vector<8x384xf32> to vector<8x128xf32>
    %199 = vector.extract_strided_slice %197 {offsets = [0, 0], sizes = [8, 128], strides = [1, 1]} : vector<8x256xf32> to vector<8x128xf32>
    %200 = arith.addf %198, %199 : vector<8x128xf32>
    %201 = arith.negf %200 : vector<8x128xf32>
    %202 = math.exp %201 : vector<8x128xf32>
    %cst_89 = arith.constant 1.000000e+00 : f32
    %203 = vector.broadcast %cst_89 : f32 to vector<8x128xf32>
    %204 = arith.addf %203, %202 : vector<8x128xf32>
    %205 = arith.divf %203, %204 : vector<8x128xf32>
    %206 = vector.extract_strided_slice %194 {offsets = [0, 128], sizes = [8, 128], strides = [1, 1]} : vector<8x384xf32> to vector<8x128xf32>
    %207 = vector.extract_strided_slice %197 {offsets = [0, 128], sizes = [8, 128], strides = [1, 1]} : vector<8x256xf32> to vector<8x128xf32>
    %208 = arith.addf %206, %207 : vector<8x128xf32>
    %209 = arith.negf %208 : vector<8x128xf32>
    %210 = math.exp %209 : vector<8x128xf32>
    %cst_90 = arith.constant 1.000000e+00 : f32
    %211 = vector.broadcast %cst_90 : f32 to vector<8x128xf32>
    %212 = arith.addf %211, %210 : vector<8x128xf32>
    %213 = arith.divf %211, %212 : vector<8x128xf32>
    %214 = vector.extract_strided_slice %194 {offsets = [0, 256], sizes = [8, 128], strides = [1, 1]} : vector<8x384xf32> to vector<8x128xf32>
    %215 = arith.mulf %213, %152 : vector<8x128xf32>
    %c1_91 = arith.constant 1 : index
    %c0_92 = arith.constant 0 : index
    %c0_93 = arith.constant 0 : index
    %216 = vector.load %arg6[%c1_91, %c0_92, %c0_93] : memref<2x128x128xf32, #tpu.memory_space<vmem>>, vector<1x128x128xf32>
    %217 = vector.shape_cast %216 : vector<1x128x128xf32> to vector<128x128xf32>
    %cst_94 = arith.constant dense<0.000000e+00> : vector<8x128xf32>
    %218 = tpu.matmul %215, %217, %cst_94 {dimension_numbers = #tpu.dot_dimension_numbers<[1], [0], [0], [1], [0, 0, 1, 1], [], []>} : vector<8x128xf32>, vector<128x128xf32>, vector<8x128xf32> -> vector<8x128xf32>
    %219 = arith.addf %214, %218 : vector<8x128xf32>
    %220 = math.tanh %219 : vector<8x128xf32>
    %221 = arith.mulf %205, %152 : vector<8x128xf32>
    %cst_95 = arith.constant 1.000000e+00 : f32
    %222 = vector.broadcast %cst_95 : f32 to vector<8x128xf32>
    %223 = arith.subf %222, %205 : vector<8x128xf32>
    %224 = arith.mulf %223, %220 : vector<8x128xf32>
    %225 = arith.addf %221, %224 : vector<8x128xf32>
    %226 = arith.index_cast %c2_i32 : i32 to index
    %c0_96 = arith.constant 0 : index
    %c0_97 = arith.constant 0 : index
    %227 = vector.load %arg12[%226, %c0_96, %c0_97] : memref<8x8x128xf32, #tpu.memory_space<vmem>>, vector<1x8x128xf32>
    %228 = vector.shape_cast %227 : vector<1x8x128xf32> to vector<8x128xf32>
    %229 = vector.shape_cast %225 : vector<8x128xf32> to vector<1x8x128xf32>
    tpu.vector_store %arg12[%226, %c0_96, %c0_97], %229 {strides = array<i32>} : memref<8x8x128xf32, #tpu.memory_space<vmem>>, vector<1x8x128xf32>,
    %c3_i32 = arith.constant 3 : i32
    %230 = arith.index_cast %c3_i32 : i32 to index
    %c0_98 = arith.constant 0 : index
    %c0_99 = arith.constant 0 : index
    %231 = vector.load %arg2[%230, %c0_98, %c0_99] : memref<8x8x384xf32, #tpu.memory_space<vmem>>, vector<1x8x384xf32>
    %232 = vector.shape_cast %231 : vector<1x8x384xf32> to vector<8x384xf32>
    %c0_100 = arith.constant 0 : index
    %c0_101 = arith.constant 0 : index
    %c0_102 = arith.constant 0 : index
    %233 = vector.load %arg5[%c0_100, %c0_101, %c0_102] : memref<2x128x256xf32, #tpu.memory_space<vmem>>, vector<1x128x256xf32>
    %234 = vector.shape_cast %233 : vector<1x128x256xf32> to vector<128x256xf32>
    %cst_103 = arith.constant dense<0.000000e+00> : vector<8x256xf32>
    %235 = tpu.matmul %190, %234, %cst_103 {dimension_numbers = #tpu.dot_dimension_numbers<[1], [0], [0], [1], [0, 0, 1, 1], [], []>} : vector<8x128xf32>, vector<128x256xf32>, vector<8x256xf32> -> vector<8x256xf32>
    %236 = vector.extract_strided_slice %232 {offsets = [0, 0], sizes = [8, 128], strides = [1, 1]} : vector<8x384xf32> to vector<8x128xf32>
    %237 = vector.extract_strided_slice %235 {offsets = [0, 0], sizes = [8, 128], strides = [1, 1]} : vector<8x256xf32> to vector<8x128xf32>
    %238 = arith.addf %236, %237 : vector<8x128xf32>
    %239 = arith.negf %238 : vector<8x128xf32>
    %240 = math.exp %239 : vector<8x128xf32>
    %cst_104 = arith.constant 1.000000e+00 : f32
    %241 = vector.broadcast %cst_104 : f32 to vector<8x128xf32>
    %242 = arith.addf %241, %240 : vector<8x128xf32>
    %243 = arith.divf %241, %242 : vector<8x128xf32>
    %244 = vector.extract_strided_slice %232 {offsets = [0, 128], sizes = [8, 128], strides = [1, 1]} : vector<8x384xf32> to vector<8x128xf32>
    %245 = vector.extract_strided_slice %235 {offsets = [0, 128], sizes = [8, 128], strides = [1, 1]} : vector<8x256xf32> to vector<8x128xf32>
    %246 = arith.addf %244, %245 : vector<8x128xf32>
    %247 = arith.negf %246 : vector<8x128xf32>
    %248 = math.exp %247 : vector<8x128xf32>
    %cst_105 = arith.constant 1.000000e+00 : f32
    %249 = vector.broadcast %cst_105 : f32 to vector<8x128xf32>
    %250 = arith.addf %249, %248 : vector<8x128xf32>
    %251 = arith.divf %249, %250 : vector<8x128xf32>
    %252 = vector.extract_strided_slice %232 {offsets = [0, 256], sizes = [8, 128], strides = [1, 1]} : vector<8x384xf32> to vector<8x128xf32>
    %253 = arith.mulf %251, %190 : vector<8x128xf32>
    %c0_106 = arith.constant 0 : index
    %c0_107 = arith.constant 0 : index
    %c0_108 = arith.constant 0 : index
    %254 = vector.load %arg6[%c0_106, %c0_107, %c0_108] : memref<2x128x128xf32, #tpu.memory_space<vmem>>, vector<1x128x128xf32>
    %255 = vector.shape_cast %254 : vector<1x128x128xf32> to vector<128x128xf32>
    %cst_109 = arith.constant dense<0.000000e+00> : vector<8x128xf32>
    %256 = tpu.matmul %253, %255, %cst_109 {dimension_numbers = #tpu.dot_dimension_numbers<[1], [0], [0], [1], [0, 0, 1, 1], [], []>} : vector<8x128xf32>, vector<128x128xf32>, vector<8x128xf32> -> vector<8x128xf32>
    %257 = arith.addf %252, %256 : vector<8x128xf32>
    %258 = math.tanh %257 : vector<8x128xf32>
    %259 = arith.mulf %243, %190 : vector<8x128xf32>
    %cst_110 = arith.constant 1.000000e+00 : f32
    %260 = vector.broadcast %cst_110 : f32 to vector<8x128xf32>
    %261 = arith.subf %260, %243 : vector<8x128xf32>
    %262 = arith.mulf %261, %258 : vector<8x128xf32>
    %263 = arith.addf %259, %262 : vector<8x128xf32>
    %c0_111 = arith.constant 0 : index
    %c0_112 = arith.constant 0 : index
    %c0_113 = arith.constant 0 : index
    %264 = vector.load %arg4[%c0_111, %c0_112, %c0_113] : memref<1x128x384xf32, #tpu.memory_space<vmem>>, vector<1x128x384xf32>
    %265 = vector.shape_cast %264 : vector<1x128x384xf32> to vector<128x384xf32>
    %cst_114 = arith.constant dense<0.000000e+00> : vector<8x384xf32>
    %266 = tpu.matmul %263, %265, %cst_114 {dimension_numbers = #tpu.dot_dimension_numbers<[1], [0], [0], [1], [0, 0, 1, 1], [], []>} : vector<8x128xf32>, vector<128x384xf32>, vector<8x384xf32> -> vector<8x384xf32>
    %267 = arith.addf %266, %10 : vector<8x384xf32>
    %c1_115 = arith.constant 1 : index
    %c0_116 = arith.constant 0 : index
    %c0_117 = arith.constant 0 : index
    %268 = vector.load %arg5[%c1_115, %c0_116, %c0_117] : memref<2x128x256xf32, #tpu.memory_space<vmem>>, vector<1x128x256xf32>
    %269 = vector.shape_cast %268 : vector<1x128x256xf32> to vector<128x256xf32>
    %cst_118 = arith.constant dense<0.000000e+00> : vector<8x256xf32>
    %270 = tpu.matmul %225, %269, %cst_118 {dimension_numbers = #tpu.dot_dimension_numbers<[1], [0], [0], [1], [0, 0, 1, 1], [], []>} : vector<8x128xf32>, vector<128x256xf32>, vector<8x256xf32> -> vector<8x256xf32>
    %271 = vector.extract_strided_slice %267 {offsets = [0, 0], sizes = [8, 128], strides = [1, 1]} : vector<8x384xf32> to vector<8x128xf32>
    %272 = vector.extract_strided_slice %270 {offsets = [0, 0], sizes = [8, 128], strides = [1, 1]} : vector<8x256xf32> to vector<8x128xf32>
    %273 = arith.addf %271, %272 : vector<8x128xf32>
    %274 = arith.negf %273 : vector<8x128xf32>
    %275 = math.exp %274 : vector<8x128xf32>
    %cst_119 = arith.constant 1.000000e+00 : f32
    %276 = vector.broadcast %cst_119 : f32 to vector<8x128xf32>
    %277 = arith.addf %276, %275 : vector<8x128xf32>
    %278 = arith.divf %276, %277 : vector<8x128xf32>
    %279 = vector.extract_strided_slice %267 {offsets = [0, 128], sizes = [8, 128], strides = [1, 1]} : vector<8x384xf32> to vector<8x128xf32>
    %280 = vector.extract_strided_slice %270 {offsets = [0, 128], sizes = [8, 128], strides = [1, 1]} : vector<8x256xf32> to vector<8x128xf32>
    %281 = arith.addf %279, %280 : vector<8x128xf32>
    %282 = arith.negf %281 : vector<8x128xf32>
    %283 = math.exp %282 : vector<8x128xf32>
    %cst_120 = arith.constant 1.000000e+00 : f32
    %284 = vector.broadcast %cst_120 : f32 to vector<8x128xf32>
    %285 = arith.addf %284, %283 : vector<8x128xf32>
    %286 = arith.divf %284, %285 : vector<8x128xf32>
    %287 = vector.extract_strided_slice %267 {offsets = [0, 256], sizes = [8, 128], strides = [1, 1]} : vector<8x384xf32> to vector<8x128xf32>
    %288 = arith.mulf %286, %225 : vector<8x128xf32>
    %c1_121 = arith.constant 1 : index
    %c0_122 = arith.constant 0 : index
    %c0_123 = arith.constant 0 : index
    %289 = vector.load %arg6[%c1_121, %c0_122, %c0_123] : memref<2x128x128xf32, #tpu.memory_space<vmem>>, vector<1x128x128xf32>
    %290 = vector.shape_cast %289 : vector<1x128x128xf32> to vector<128x128xf32>
    %cst_124 = arith.constant dense<0.000000e+00> : vector<8x128xf32>
    %291 = tpu.matmul %288, %290, %cst_124 {dimension_numbers = #tpu.dot_dimension_numbers<[1], [0], [0], [1], [0, 0, 1, 1], [], []>} : vector<8x128xf32>, vector<128x128xf32>, vector<8x128xf32> -> vector<8x128xf32>
    %292 = arith.addf %287, %291 : vector<8x128xf32>
    %293 = math.tanh %292 : vector<8x128xf32>
    %294 = arith.mulf %278, %225 : vector<8x128xf32>
    %cst_125 = arith.constant 1.000000e+00 : f32
    %295 = vector.broadcast %cst_125 : f32 to vector<8x128xf32>
    %296 = arith.subf %295, %278 : vector<8x128xf32>
    %297 = arith.mulf %296, %293 : vector<8x128xf32>
    %298 = arith.addf %294, %297 : vector<8x128xf32>
    %299 = arith.index_cast %c3_i32 : i32 to index
    %c0_126 = arith.constant 0 : index
    %c0_127 = arith.constant 0 : index
    %300 = vector.load %arg12[%299, %c0_126, %c0_127] : memref<8x8x128xf32, #tpu.memory_space<vmem>>, vector<1x8x128xf32>
    %301 = vector.shape_cast %300 : vector<1x8x128xf32> to vector<8x128xf32>
    %302 = vector.shape_cast %298 : vector<8x128xf32> to vector<1x8x128xf32>
    tpu.vector_store %arg12[%299, %c0_126, %c0_127], %302 {strides = array<i32>} : memref<8x8x128xf32, #tpu.memory_space<vmem>>, vector<1x8x128xf32>,
    %c4_i32 = arith.constant 4 : i32
    %303 = arith.index_cast %c4_i32 : i32 to index
    %c0_128 = arith.constant 0 : index
    %c0_129 = arith.constant 0 : index
    %304 = vector.load %arg2[%303, %c0_128, %c0_129] : memref<8x8x384xf32, #tpu.memory_space<vmem>>, vector<1x8x384xf32>
    %305 = vector.shape_cast %304 : vector<1x8x384xf32> to vector<8x384xf32>
    %c0_130 = arith.constant 0 : index
    %c0_131 = arith.constant 0 : index
    %c0_132 = arith.constant 0 : index
    %306 = vector.load %arg5[%c0_130, %c0_131, %c0_132] : memref<2x128x256xf32, #tpu.memory_space<vmem>>, vector<1x128x256xf32>
    %307 = vector.shape_cast %306 : vector<1x128x256xf32> to vector<128x256xf32>
    %cst_133 = arith.constant dense<0.000000e+00> : vector<8x256xf32>
    %308 = tpu.matmul %263, %307, %cst_133 {dimension_numbers = #tpu.dot_dimension_numbers<[1], [0], [0], [1], [0, 0, 1, 1], [], []>} : vector<8x128xf32>, vector<128x256xf32>, vector<8x256xf32> -> vector<8x256xf32>
    %309 = vector.extract_strided_slice %305 {offsets = [0, 0], sizes = [8, 128], strides = [1, 1]} : vector<8x384xf32> to vector<8x128xf32>
    %310 = vector.extract_strided_slice %308 {offsets = [0, 0], sizes = [8, 128], strides = [1, 1]} : vector<8x256xf32> to vector<8x128xf32>
    %311 = arith.addf %309, %310 : vector<8x128xf32>
    %312 = arith.negf %311 : vector<8x128xf32>
    %313 = math.exp %312 : vector<8x128xf32>
    %cst_134 = arith.constant 1.000000e+00 : f32
    %314 = vector.broadcast %cst_134 : f32 to vector<8x128xf32>
    %315 = arith.addf %314, %313 : vector<8x128xf32>
    %316 = arith.divf %314, %315 : vector<8x128xf32>
    %317 = vector.extract_strided_slice %305 {offsets = [0, 128], sizes = [8, 128], strides = [1, 1]} : vector<8x384xf32> to vector<8x128xf32>
    %318 = vector.extract_strided_slice %308 {offsets = [0, 128], sizes = [8, 128], strides = [1, 1]} : vector<8x256xf32> to vector<8x128xf32>
    %319 = arith.addf %317, %318 : vector<8x128xf32>
    %320 = arith.negf %319 : vector<8x128xf32>
    %321 = math.exp %320 : vector<8x128xf32>
    %cst_135 = arith.constant 1.000000e+00 : f32
    %322 = vector.broadcast %cst_135 : f32 to vector<8x128xf32>
    %323 = arith.addf %322, %321 : vector<8x128xf32>
    %324 = arith.divf %322, %323 : vector<8x128xf32>
    %325 = vector.extract_strided_slice %305 {offsets = [0, 256], sizes = [8, 128], strides = [1, 1]} : vector<8x384xf32> to vector<8x128xf32>
    %326 = arith.mulf %324, %263 : vector<8x128xf32>
    %c0_136 = arith.constant 0 : index
    %c0_137 = arith.constant 0 : index
    %c0_138 = arith.constant 0 : index
    %327 = vector.load %arg6[%c0_136, %c0_137, %c0_138] : memref<2x128x128xf32, #tpu.memory_space<vmem>>, vector<1x128x128xf32>
    %328 = vector.shape_cast %327 : vector<1x128x128xf32> to vector<128x128xf32>
    %cst_139 = arith.constant dense<0.000000e+00> : vector<8x128xf32>
    %329 = tpu.matmul %326, %328, %cst_139 {dimension_numbers = #tpu.dot_dimension_numbers<[1], [0], [0], [1], [0, 0, 1, 1], [], []>} : vector<8x128xf32>, vector<128x128xf32>, vector<8x128xf32> -> vector<8x128xf32>
    %330 = arith.addf %325, %329 : vector<8x128xf32>
    %331 = math.tanh %330 : vector<8x128xf32>
    %332 = arith.mulf %316, %263 : vector<8x128xf32>
    %cst_140 = arith.constant 1.000000e+00 : f32
    %333 = vector.broadcast %cst_140 : f32 to vector<8x128xf32>
    %334 = arith.subf %333, %316 : vector<8x128xf32>
    %335 = arith.mulf %334, %331 : vector<8x128xf32>
    %336 = arith.addf %332, %335 : vector<8x128xf32>
    %c0_141 = arith.constant 0 : index
    %c0_142 = arith.constant 0 : index
    %c0_143 = arith.constant 0 : index
    %337 = vector.load %arg4[%c0_141, %c0_142, %c0_143] : memref<1x128x384xf32, #tpu.memory_space<vmem>>, vector<1x128x384xf32>
    %338 = vector.shape_cast %337 : vector<1x128x384xf32> to vector<128x384xf32>
    %cst_144 = arith.constant dense<0.000000e+00> : vector<8x384xf32>
    %339 = tpu.matmul %336, %338, %cst_144 {dimension_numbers = #tpu.dot_dimension_numbers<[1], [0], [0], [1], [0, 0, 1, 1], [], []>} : vector<8x128xf32>, vector<128x384xf32>, vector<8x384xf32> -> vector<8x384xf32>
    %340 = arith.addf %339, %10 : vector<8x384xf32>
    %c1_145 = arith.constant 1 : index
    %c0_146 = arith.constant 0 : index
    %c0_147 = arith.constant 0 : index
    %341 = vector.load %arg5[%c1_145, %c0_146, %c0_147] : memref<2x128x256xf32, #tpu.memory_space<vmem>>, vector<1x128x256xf32>
    %342 = vector.shape_cast %341 : vector<1x128x256xf32> to vector<128x256xf32>
    %cst_148 = arith.constant dense<0.000000e+00> : vector<8x256xf32>
    %343 = tpu.matmul %298, %342, %cst_148 {dimension_numbers = #tpu.dot_dimension_numbers<[1], [0], [0], [1], [0, 0, 1, 1], [], []>} : vector<8x128xf32>, vector<128x256xf32>, vector<8x256xf32> -> vector<8x256xf32>
    %344 = vector.extract_strided_slice %340 {offsets = [0, 0], sizes = [8, 128], strides = [1, 1]} : vector<8x384xf32> to vector<8x128xf32>
    %345 = vector.extract_strided_slice %343 {offsets = [0, 0], sizes = [8, 128], strides = [1, 1]} : vector<8x256xf32> to vector<8x128xf32>
    %346 = arith.addf %344, %345 : vector<8x128xf32>
    %347 = arith.negf %346 : vector<8x128xf32>
    %348 = math.exp %347 : vector<8x128xf32>
    %cst_149 = arith.constant 1.000000e+00 : f32
    %349 = vector.broadcast %cst_149 : f32 to vector<8x128xf32>
    %350 = arith.addf %349, %348 : vector<8x128xf32>
    %351 = arith.divf %349, %350 : vector<8x128xf32>
    %352 = vector.extract_strided_slice %340 {offsets = [0, 128], sizes = [8, 128], strides = [1, 1]} : vector<8x384xf32> to vector<8x128xf32>
    %353 = vector.extract_strided_slice %343 {offsets = [0, 128], sizes = [8, 128], strides = [1, 1]} : vector<8x256xf32> to vector<8x128xf32>
    %354 = arith.addf %352, %353 : vector<8x128xf32>
    %355 = arith.negf %354 : vector<8x128xf32>
    %356 = math.exp %355 : vector<8x128xf32>
    %cst_150 = arith.constant 1.000000e+00 : f32
    %357 = vector.broadcast %cst_150 : f32 to vector<8x128xf32>
    %358 = arith.addf %357, %356 : vector<8x128xf32>
    %359 = arith.divf %357, %358 : vector<8x128xf32>
    %360 = vector.extract_strided_slice %340 {offsets = [0, 256], sizes = [8, 128], strides = [1, 1]} : vector<8x384xf32> to vector<8x128xf32>
    %361 = arith.mulf %359, %298 : vector<8x128xf32>
    %c1_151 = arith.constant 1 : index
    %c0_152 = arith.constant 0 : index
    %c0_153 = arith.constant 0 : index
    %362 = vector.load %arg6[%c1_151, %c0_152, %c0_153] : memref<2x128x128xf32, #tpu.memory_space<vmem>>, vector<1x128x128xf32>
    %363 = vector.shape_cast %362 : vector<1x128x128xf32> to vector<128x128xf32>
    %cst_154 = arith.constant dense<0.000000e+00> : vector<8x128xf32>
    %364 = tpu.matmul %361, %363, %cst_154 {dimension_numbers = #tpu.dot_dimension_numbers<[1], [0], [0], [1], [0, 0, 1, 1], [], []>} : vector<8x128xf32>, vector<128x128xf32>, vector<8x128xf32> -> vector<8x128xf32>
    %365 = arith.addf %360, %364 : vector<8x128xf32>
    %366 = math.tanh %365 : vector<8x128xf32>
    %367 = arith.mulf %351, %298 : vector<8x128xf32>
    %cst_155 = arith.constant 1.000000e+00 : f32
    %368 = vector.broadcast %cst_155 : f32 to vector<8x128xf32>
    %369 = arith.subf %368, %351 : vector<8x128xf32>
    %370 = arith.mulf %369, %366 : vector<8x128xf32>
    %371 = arith.addf %367, %370 : vector<8x128xf32>
    %372 = arith.index_cast %c4_i32 : i32 to index
    %c0_156 = arith.constant 0 : index
    %c0_157 = arith.constant 0 : index
    %373 = vector.load %arg12[%372, %c0_156, %c0_157] : memref<8x8x128xf32, #tpu.memory_space<vmem>>, vector<1x8x128xf32>
    %374 = vector.shape_cast %373 : vector<1x8x128xf32> to vector<8x128xf32>
    %375 = vector.shape_cast %371 : vector<8x128xf32> to vector<1x8x128xf32>
    tpu.vector_store %arg12[%372, %c0_156, %c0_157], %375 {strides = array<i32>} : memref<8x8x128xf32, #tpu.memory_space<vmem>>, vector<1x8x128xf32>,
    %c5_i32 = arith.constant 5 : i32
    %376 = arith.index_cast %c5_i32 : i32 to index
    %c0_158 = arith.constant 0 : index
    %c0_159 = arith.constant 0 : index
    %377 = vector.load %arg2[%376, %c0_158, %c0_159] : memref<8x8x384xf32, #tpu.memory_space<vmem>>, vector<1x8x384xf32>
    %378 = vector.shape_cast %377 : vector<1x8x384xf32> to vector<8x384xf32>
    %c0_160 = arith.constant 0 : index
    %c0_161 = arith.constant 0 : index
    %c0_162 = arith.constant 0 : index
    %379 = vector.load %arg5[%c0_160, %c0_161, %c0_162] : memref<2x128x256xf32, #tpu.memory_space<vmem>>, vector<1x128x256xf32>
    %380 = vector.shape_cast %379 : vector<1x128x256xf32> to vector<128x256xf32>
    %cst_163 = arith.constant dense<0.000000e+00> : vector<8x256xf32>
    %381 = tpu.matmul %336, %380, %cst_163 {dimension_numbers = #tpu.dot_dimension_numbers<[1], [0], [0], [1], [0, 0, 1, 1], [], []>} : vector<8x128xf32>, vector<128x256xf32>, vector<8x256xf32> -> vector<8x256xf32>
    %382 = vector.extract_strided_slice %378 {offsets = [0, 0], sizes = [8, 128], strides = [1, 1]} : vector<8x384xf32> to vector<8x128xf32>
    %383 = vector.extract_strided_slice %381 {offsets = [0, 0], sizes = [8, 128], strides = [1, 1]} : vector<8x256xf32> to vector<8x128xf32>
    %384 = arith.addf %382, %383 : vector<8x128xf32>
    %385 = arith.negf %384 : vector<8x128xf32>
    %386 = math.exp %385 : vector<8x128xf32>
    %cst_164 = arith.constant 1.000000e+00 : f32
    %387 = vector.broadcast %cst_164 : f32 to vector<8x128xf32>
    %388 = arith.addf %387, %386 : vector<8x128xf32>
    %389 = arith.divf %387, %388 : vector<8x128xf32>
    %390 = vector.extract_strided_slice %378 {offsets = [0, 128], sizes = [8, 128], strides = [1, 1]} : vector<8x384xf32> to vector<8x128xf32>
    %391 = vector.extract_strided_slice %381 {offsets = [0, 128], sizes = [8, 128], strides = [1, 1]} : vector<8x256xf32> to vector<8x128xf32>
    %392 = arith.addf %390, %391 : vector<8x128xf32>
    %393 = arith.negf %392 : vector<8x128xf32>
    %394 = math.exp %393 : vector<8x128xf32>
    %cst_165 = arith.constant 1.000000e+00 : f32
    %395 = vector.broadcast %cst_165 : f32 to vector<8x128xf32>
    %396 = arith.addf %395, %394 : vector<8x128xf32>
    %397 = arith.divf %395, %396 : vector<8x128xf32>
    %398 = vector.extract_strided_slice %378 {offsets = [0, 256], sizes = [8, 128], strides = [1, 1]} : vector<8x384xf32> to vector<8x128xf32>
    %399 = arith.mulf %397, %336 : vector<8x128xf32>
    %c0_166 = arith.constant 0 : index
    %c0_167 = arith.constant 0 : index
    %c0_168 = arith.constant 0 : index
    %400 = vector.load %arg6[%c0_166, %c0_167, %c0_168] : memref<2x128x128xf32, #tpu.memory_space<vmem>>, vector<1x128x128xf32>
    %401 = vector.shape_cast %400 : vector<1x128x128xf32> to vector<128x128xf32>
    %cst_169 = arith.constant dense<0.000000e+00> : vector<8x128xf32>
    %402 = tpu.matmul %399, %401, %cst_169 {dimension_numbers = #tpu.dot_dimension_numbers<[1], [0], [0], [1], [0, 0, 1, 1], [], []>} : vector<8x128xf32>, vector<128x128xf32>, vector<8x128xf32> -> vector<8x128xf32>
    %403 = arith.addf %398, %402 : vector<8x128xf32>
    %404 = math.tanh %403 : vector<8x128xf32>
    %405 = arith.mulf %389, %336 : vector<8x128xf32>
    %cst_170 = arith.constant 1.000000e+00 : f32
    %406 = vector.broadcast %cst_170 : f32 to vector<8x128xf32>
    %407 = arith.subf %406, %389 : vector<8x128xf32>
    %408 = arith.mulf %407, %404 : vector<8x128xf32>
    %409 = arith.addf %405, %408 : vector<8x128xf32>
    %c0_171 = arith.constant 0 : index
    %c0_172 = arith.constant 0 : index
    %c0_173 = arith.constant 0 : index
    %410 = vector.load %arg4[%c0_171, %c0_172, %c0_173] : memref<1x128x384xf32, #tpu.memory_space<vmem>>, vector<1x128x384xf32>
    %411 = vector.shape_cast %410 : vector<1x128x384xf32> to vector<128x384xf32>
    %cst_174 = arith.constant dense<0.000000e+00> : vector<8x384xf32>
    %412 = tpu.matmul %409, %411, %cst_174 {dimension_numbers = #tpu.dot_dimension_numbers<[1], [0], [0], [1], [0, 0, 1, 1], [], []>} : vector<8x128xf32>, vector<128x384xf32>, vector<8x384xf32> -> vector<8x384xf32>
    %413 = arith.addf %412, %10 : vector<8x384xf32>
    %c1_175 = arith.constant 1 : index
    %c0_176 = arith.constant 0 : index
    %c0_177 = arith.constant 0 : index
    %414 = vector.load %arg5[%c1_175, %c0_176, %c0_177] : memref<2x128x256xf32, #tpu.memory_space<vmem>>, vector<1x128x256xf32>
    %415 = vector.shape_cast %414 : vector<1x128x256xf32> to vector<128x256xf32>
    %cst_178 = arith.constant dense<0.000000e+00> : vector<8x256xf32>
    %416 = tpu.matmul %371, %415, %cst_178 {dimension_numbers = #tpu.dot_dimension_numbers<[1], [0], [0], [1], [0, 0, 1, 1], [], []>} : vector<8x128xf32>, vector<128x256xf32>, vector<8x256xf32> -> vector<8x256xf32>
    %417 = vector.extract_strided_slice %413 {offsets = [0, 0], sizes = [8, 128], strides = [1, 1]} : vector<8x384xf32> to vector<8x128xf32>
    %418 = vector.extract_strided_slice %416 {offsets = [0, 0], sizes = [8, 128], strides = [1, 1]} : vector<8x256xf32> to vector<8x128xf32>
    %419 = arith.addf %417, %418 : vector<8x128xf32>
    %420 = arith.negf %419 : vector<8x128xf32>
    %421 = math.exp %420 : vector<8x128xf32>
    %cst_179 = arith.constant 1.000000e+00 : f32
    %422 = vector.broadcast %cst_179 : f32 to vector<8x128xf32>
    %423 = arith.addf %422, %421 : vector<8x128xf32>
    %424 = arith.divf %422, %423 : vector<8x128xf32>
    %425 = vector.extract_strided_slice %413 {offsets = [0, 128], sizes = [8, 128], strides = [1, 1]} : vector<8x384xf32> to vector<8x128xf32>
    %426 = vector.extract_strided_slice %416 {offsets = [0, 128], sizes = [8, 128], strides = [1, 1]} : vector<8x256xf32> to vector<8x128xf32>
    %427 = arith.addf %425, %426 : vector<8x128xf32>
    %428 = arith.negf %427 : vector<8x128xf32>
    %429 = math.exp %428 : vector<8x128xf32>
    %cst_180 = arith.constant 1.000000e+00 : f32
    %430 = vector.broadcast %cst_180 : f32 to vector<8x128xf32>
    %431 = arith.addf %430, %429 : vector<8x128xf32>
    %432 = arith.divf %430, %431 : vector<8x128xf32>
    %433 = vector.extract_strided_slice %413 {offsets = [0, 256], sizes = [8, 128], strides = [1, 1]} : vector<8x384xf32> to vector<8x128xf32>
    %434 = arith.mulf %432, %371 : vector<8x128xf32>
    %c1_181 = arith.constant 1 : index
    %c0_182 = arith.constant 0 : index
    %c0_183 = arith.constant 0 : index
    %435 = vector.load %arg6[%c1_181, %c0_182, %c0_183] : memref<2x128x128xf32, #tpu.memory_space<vmem>>, vector<1x128x128xf32>
    %436 = vector.shape_cast %435 : vector<1x128x128xf32> to vector<128x128xf32>
    %cst_184 = arith.constant dense<0.000000e+00> : vector<8x128xf32>
    %437 = tpu.matmul %434, %436, %cst_184 {dimension_numbers = #tpu.dot_dimension_numbers<[1], [0], [0], [1], [0, 0, 1, 1], [], []>} : vector<8x128xf32>, vector<128x128xf32>, vector<8x128xf32> -> vector<8x128xf32>
    %438 = arith.addf %433, %437 : vector<8x128xf32>
    %439 = math.tanh %438 : vector<8x128xf32>
    %440 = arith.mulf %424, %371 : vector<8x128xf32>
    %cst_185 = arith.constant 1.000000e+00 : f32
    %441 = vector.broadcast %cst_185 : f32 to vector<8x128xf32>
    %442 = arith.subf %441, %424 : vector<8x128xf32>
    %443 = arith.mulf %442, %439 : vector<8x128xf32>
    %444 = arith.addf %440, %443 : vector<8x128xf32>
    %445 = arith.index_cast %c5_i32 : i32 to index
    %c0_186 = arith.constant 0 : index
    %c0_187 = arith.constant 0 : index
    %446 = vector.load %arg12[%445, %c0_186, %c0_187] : memref<8x8x128xf32, #tpu.memory_space<vmem>>, vector<1x8x128xf32>
    %447 = vector.shape_cast %446 : vector<1x8x128xf32> to vector<8x128xf32>
    %448 = vector.shape_cast %444 : vector<8x128xf32> to vector<1x8x128xf32>
    tpu.vector_store %arg12[%445, %c0_186, %c0_187], %448 {strides = array<i32>} : memref<8x8x128xf32, #tpu.memory_space<vmem>>, vector<1x8x128xf32>,
    %c6_i32 = arith.constant 6 : i32
    %449 = arith.index_cast %c6_i32 : i32 to index
    %c0_188 = arith.constant 0 : index
    %c0_189 = arith.constant 0 : index
    %450 = vector.load %arg2[%449, %c0_188, %c0_189] : memref<8x8x384xf32, #tpu.memory_space<vmem>>, vector<1x8x384xf32>
    %451 = vector.shape_cast %450 : vector<1x8x384xf32> to vector<8x384xf32>
    %c0_190 = arith.constant 0 : index
    %c0_191 = arith.constant 0 : index
    %c0_192 = arith.constant 0 : index
    %452 = vector.load %arg5[%c0_190, %c0_191, %c0_192] : memref<2x128x256xf32, #tpu.memory_space<vmem>>, vector<1x128x256xf32>
    %453 = vector.shape_cast %452 : vector<1x128x256xf32> to vector<128x256xf32>
    %cst_193 = arith.constant dense<0.000000e+00> : vector<8x256xf32>
    %454 = tpu.matmul %409, %453, %cst_193 {dimension_numbers = #tpu.dot_dimension_numbers<[1], [0], [0], [1], [0, 0, 1, 1], [], []>} : vector<8x128xf32>, vector<128x256xf32>, vector<8x256xf32> -> vector<8x256xf32>
    %455 = vector.extract_strided_slice %451 {offsets = [0, 0], sizes = [8, 128], strides = [1, 1]} : vector<8x384xf32> to vector<8x128xf32>
    %456 = vector.extract_strided_slice %454 {offsets = [0, 0], sizes = [8, 128], strides = [1, 1]} : vector<8x256xf32> to vector<8x128xf32>
    %457 = arith.addf %455, %456 : vector<8x128xf32>
    %458 = arith.negf %457 : vector<8x128xf32>
    %459 = math.exp %458 : vector<8x128xf32>
    %cst_194 = arith.constant 1.000000e+00 : f32
    %460 = vector.broadcast %cst_194 : f32 to vector<8x128xf32>
    %461 = arith.addf %460, %459 : vector<8x128xf32>
    %462 = arith.divf %460, %461 : vector<8x128xf32>
    %463 = vector.extract_strided_slice %451 {offsets = [0, 128], sizes = [8, 128], strides = [1, 1]} : vector<8x384xf32> to vector<8x128xf32>
    %464 = vector.extract_strided_slice %454 {offsets = [0, 128], sizes = [8, 128], strides = [1, 1]} : vector<8x256xf32> to vector<8x128xf32>
    %465 = arith.addf %463, %464 : vector<8x128xf32>
    %466 = arith.negf %465 : vector<8x128xf32>
    %467 = math.exp %466 : vector<8x128xf32>
    %cst_195 = arith.constant 1.000000e+00 : f32
    %468 = vector.broadcast %cst_195 : f32 to vector<8x128xf32>
    %469 = arith.addf %468, %467 : vector<8x128xf32>
    %470 = arith.divf %468, %469 : vector<8x128xf32>
    %471 = vector.extract_strided_slice %451 {offsets = [0, 256], sizes = [8, 128], strides = [1, 1]} : vector<8x384xf32> to vector<8x128xf32>
    %472 = arith.mulf %470, %409 : vector<8x128xf32>
    %c0_196 = arith.constant 0 : index
    %c0_197 = arith.constant 0 : index
    %c0_198 = arith.constant 0 : index
    %473 = vector.load %arg6[%c0_196, %c0_197, %c0_198] : memref<2x128x128xf32, #tpu.memory_space<vmem>>, vector<1x128x128xf32>
    %474 = vector.shape_cast %473 : vector<1x128x128xf32> to vector<128x128xf32>
    %cst_199 = arith.constant dense<0.000000e+00> : vector<8x128xf32>
    %475 = tpu.matmul %472, %474, %cst_199 {dimension_numbers = #tpu.dot_dimension_numbers<[1], [0], [0], [1], [0, 0, 1, 1], [], []>} : vector<8x128xf32>, vector<128x128xf32>, vector<8x128xf32> -> vector<8x128xf32>
    %476 = arith.addf %471, %475 : vector<8x128xf32>
    %477 = math.tanh %476 : vector<8x128xf32>
    %478 = arith.mulf %462, %409 : vector<8x128xf32>
    %cst_200 = arith.constant 1.000000e+00 : f32
    %479 = vector.broadcast %cst_200 : f32 to vector<8x128xf32>
    %480 = arith.subf %479, %462 : vector<8x128xf32>
    %481 = arith.mulf %480, %477 : vector<8x128xf32>
    %482 = arith.addf %478, %481 : vector<8x128xf32>
    %c0_201 = arith.constant 0 : index
    %c0_202 = arith.constant 0 : index
    %c0_203 = arith.constant 0 : index
    %483 = vector.load %arg4[%c0_201, %c0_202, %c0_203] : memref<1x128x384xf32, #tpu.memory_space<vmem>>, vector<1x128x384xf32>
    %484 = vector.shape_cast %483 : vector<1x128x384xf32> to vector<128x384xf32>
    %cst_204 = arith.constant dense<0.000000e+00> : vector<8x384xf32>
    %485 = tpu.matmul %482, %484, %cst_204 {dimension_numbers = #tpu.dot_dimension_numbers<[1], [0], [0], [1], [0, 0, 1, 1], [], []>} : vector<8x128xf32>, vector<128x384xf32>, vector<8x384xf32> -> vector<8x384xf32>
    %486 = arith.addf %485, %10 : vector<8x384xf32>
    %c1_205 = arith.constant 1 : index
    %c0_206 = arith.constant 0 : index
    %c0_207 = arith.constant 0 : index
    %487 = vector.load %arg5[%c1_205, %c0_206, %c0_207] : memref<2x128x256xf32, #tpu.memory_space<vmem>>, vector<1x128x256xf32>
    %488 = vector.shape_cast %487 : vector<1x128x256xf32> to vector<128x256xf32>
    %cst_208 = arith.constant dense<0.000000e+00> : vector<8x256xf32>
    %489 = tpu.matmul %444, %488, %cst_208 {dimension_numbers = #tpu.dot_dimension_numbers<[1], [0], [0], [1], [0, 0, 1, 1], [], []>} : vector<8x128xf32>, vector<128x256xf32>, vector<8x256xf32> -> vector<8x256xf32>
    %490 = vector.extract_strided_slice %486 {offsets = [0, 0], sizes = [8, 128], strides = [1, 1]} : vector<8x384xf32> to vector<8x128xf32>
    %491 = vector.extract_strided_slice %489 {offsets = [0, 0], sizes = [8, 128], strides = [1, 1]} : vector<8x256xf32> to vector<8x128xf32>
    %492 = arith.addf %490, %491 : vector<8x128xf32>
    %493 = arith.negf %492 : vector<8x128xf32>
    %494 = math.exp %493 : vector<8x128xf32>
    %cst_209 = arith.constant 1.000000e+00 : f32
    %495 = vector.broadcast %cst_209 : f32 to vector<8x128xf32>
    %496 = arith.addf %495, %494 : vector<8x128xf32>
    %497 = arith.divf %495, %496 : vector<8x128xf32>
    %498 = vector.extract_strided_slice %486 {offsets = [0, 128], sizes = [8, 128], strides = [1, 1]} : vector<8x384xf32> to vector<8x128xf32>
    %499 = vector.extract_strided_slice %489 {offsets = [0, 128], sizes = [8, 128], strides = [1, 1]} : vector<8x256xf32> to vector<8x128xf32>
    %500 = arith.addf %498, %499 : vector<8x128xf32>
    %501 = arith.negf %500 : vector<8x128xf32>
    %502 = math.exp %501 : vector<8x128xf32>
    %cst_210 = arith.constant 1.000000e+00 : f32
    %503 = vector.broadcast %cst_210 : f32 to vector<8x128xf32>
    %504 = arith.addf %503, %502 : vector<8x128xf32>
    %505 = arith.divf %503, %504 : vector<8x128xf32>
    %506 = vector.extract_strided_slice %486 {offsets = [0, 256], sizes = [8, 128], strides = [1, 1]} : vector<8x384xf32> to vector<8x128xf32>
    %507 = arith.mulf %505, %444 : vector<8x128xf32>
    %c1_211 = arith.constant 1 : index
    %c0_212 = arith.constant 0 : index
    %c0_213 = arith.constant 0 : index
    %508 = vector.load %arg6[%c1_211, %c0_212, %c0_213] : memref<2x128x128xf32, #tpu.memory_space<vmem>>, vector<1x128x128xf32>
    %509 = vector.shape_cast %508 : vector<1x128x128xf32> to vector<128x128xf32>
    %cst_214 = arith.constant dense<0.000000e+00> : vector<8x128xf32>
    %510 = tpu.matmul %507, %509, %cst_214 {dimension_numbers = #tpu.dot_dimension_numbers<[1], [0], [0], [1], [0, 0, 1, 1], [], []>} : vector<8x128xf32>, vector<128x128xf32>, vector<8x128xf32> -> vector<8x128xf32>
    %511 = arith.addf %506, %510 : vector<8x128xf32>
    %512 = math.tanh %511 : vector<8x128xf32>
    %513 = arith.mulf %497, %444 : vector<8x128xf32>
    %cst_215 = arith.constant 1.000000e+00 : f32
    %514 = vector.broadcast %cst_215 : f32 to vector<8x128xf32>
    %515 = arith.subf %514, %497 : vector<8x128xf32>
    %516 = arith.mulf %515, %512 : vector<8x128xf32>
    %517 = arith.addf %513, %516 : vector<8x128xf32>
    %518 = arith.index_cast %c6_i32 : i32 to index
    %c0_216 = arith.constant 0 : index
    %c0_217 = arith.constant 0 : index
    %519 = vector.load %arg12[%518, %c0_216, %c0_217] : memref<8x8x128xf32, #tpu.memory_space<vmem>>, vector<1x8x128xf32>
    %520 = vector.shape_cast %519 : vector<1x8x128xf32> to vector<8x128xf32>
    %521 = vector.shape_cast %517 : vector<8x128xf32> to vector<1x8x128xf32>
    tpu.vector_store %arg12[%518, %c0_216, %c0_217], %521 {strides = array<i32>} : memref<8x8x128xf32, #tpu.memory_space<vmem>>, vector<1x8x128xf32>,
    %c7_i32 = arith.constant 7 : i32
    %522 = arith.index_cast %c7_i32 : i32 to index
    %c0_218 = arith.constant 0 : index
    %c0_219 = arith.constant 0 : index
    %523 = vector.load %arg2[%522, %c0_218, %c0_219] : memref<8x8x384xf32, #tpu.memory_space<vmem>>, vector<1x8x384xf32>
    %524 = vector.shape_cast %523 : vector<1x8x384xf32> to vector<8x384xf32>
    %c0_220 = arith.constant 0 : index
    %c0_221 = arith.constant 0 : index
    %c0_222 = arith.constant 0 : index
    %525 = vector.load %arg5[%c0_220, %c0_221, %c0_222] : memref<2x128x256xf32, #tpu.memory_space<vmem>>, vector<1x128x256xf32>
    %526 = vector.shape_cast %525 : vector<1x128x256xf32> to vector<128x256xf32>
    %cst_223 = arith.constant dense<0.000000e+00> : vector<8x256xf32>
    %527 = tpu.matmul %482, %526, %cst_223 {dimension_numbers = #tpu.dot_dimension_numbers<[1], [0], [0], [1], [0, 0, 1, 1], [], []>} : vector<8x128xf32>, vector<128x256xf32>, vector<8x256xf32> -> vector<8x256xf32>
    %528 = vector.extract_strided_slice %524 {offsets = [0, 0], sizes = [8, 128], strides = [1, 1]} : vector<8x384xf32> to vector<8x128xf32>
    %529 = vector.extract_strided_slice %527 {offsets = [0, 0], sizes = [8, 128], strides = [1, 1]} : vector<8x256xf32> to vector<8x128xf32>
    %530 = arith.addf %528, %529 : vector<8x128xf32>
    %531 = arith.negf %530 : vector<8x128xf32>
    %532 = math.exp %531 : vector<8x128xf32>
    %cst_224 = arith.constant 1.000000e+00 : f32
    %533 = vector.broadcast %cst_224 : f32 to vector<8x128xf32>
    %534 = arith.addf %533, %532 : vector<8x128xf32>
    %535 = arith.divf %533, %534 : vector<8x128xf32>
    %536 = vector.extract_strided_slice %524 {offsets = [0, 128], sizes = [8, 128], strides = [1, 1]} : vector<8x384xf32> to vector<8x128xf32>
    %537 = vector.extract_strided_slice %527 {offsets = [0, 128], sizes = [8, 128], strides = [1, 1]} : vector<8x256xf32> to vector<8x128xf32>
    %538 = arith.addf %536, %537 : vector<8x128xf32>
    %539 = arith.negf %538 : vector<8x128xf32>
    %540 = math.exp %539 : vector<8x128xf32>
    %cst_225 = arith.constant 1.000000e+00 : f32
    %541 = vector.broadcast %cst_225 : f32 to vector<8x128xf32>
    %542 = arith.addf %541, %540 : vector<8x128xf32>
    %543 = arith.divf %541, %542 : vector<8x128xf32>
    %544 = vector.extract_strided_slice %524 {offsets = [0, 256], sizes = [8, 128], strides = [1, 1]} : vector<8x384xf32> to vector<8x128xf32>
    %545 = arith.mulf %543, %482 : vector<8x128xf32>
    %c0_226 = arith.constant 0 : index
    %c0_227 = arith.constant 0 : index
    %c0_228 = arith.constant 0 : index
    %546 = vector.load %arg6[%c0_226, %c0_227, %c0_228] : memref<2x128x128xf32, #tpu.memory_space<vmem>>, vector<1x128x128xf32>
    %547 = vector.shape_cast %546 : vector<1x128x128xf32> to vector<128x128xf32>
    %cst_229 = arith.constant dense<0.000000e+00> : vector<8x128xf32>
    %548 = tpu.matmul %545, %547, %cst_229 {dimension_numbers = #tpu.dot_dimension_numbers<[1], [0], [0], [1], [0, 0, 1, 1], [], []>} : vector<8x128xf32>, vector<128x128xf32>, vector<8x128xf32> -> vector<8x128xf32>
    %549 = arith.addf %544, %548 : vector<8x128xf32>
    %550 = math.tanh %549 : vector<8x128xf32>
    %551 = arith.mulf %535, %482 : vector<8x128xf32>
    %cst_230 = arith.constant 1.000000e+00 : f32
    %552 = vector.broadcast %cst_230 : f32 to vector<8x128xf32>
    %553 = arith.subf %552, %535 : vector<8x128xf32>
    %554 = arith.mulf %553, %550 : vector<8x128xf32>
    %555 = arith.addf %551, %554 : vector<8x128xf32>
    %c0_231 = arith.constant 0 : index
    %c0_232 = arith.constant 0 : index
    %c0_233 = arith.constant 0 : index
    %556 = vector.load %arg4[%c0_231, %c0_232, %c0_233] : memref<1x128x384xf32, #tpu.memory_space<vmem>>, vector<1x128x384xf32>
    %557 = vector.shape_cast %556 : vector<1x128x384xf32> to vector<128x384xf32>
    %cst_234 = arith.constant dense<0.000000e+00> : vector<8x384xf32>
    %558 = tpu.matmul %555, %557, %cst_234 {dimension_numbers = #tpu.dot_dimension_numbers<[1], [0], [0], [1], [0, 0, 1, 1], [], []>} : vector<8x128xf32>, vector<128x384xf32>, vector<8x384xf32> -> vector<8x384xf32>
    %559 = arith.addf %558, %10 : vector<8x384xf32>
    %c1_235 = arith.constant 1 : index
    %c0_236 = arith.constant 0 : index
    %c0_237 = arith.constant 0 : index
    %560 = vector.load %arg5[%c1_235, %c0_236, %c0_237] : memref<2x128x256xf32, #tpu.memory_space<vmem>>, vector<1x128x256xf32>
    %561 = vector.shape_cast %560 : vector<1x128x256xf32> to vector<128x256xf32>
    %cst_238 = arith.constant dense<0.000000e+00> : vector<8x256xf32>
    %562 = tpu.matmul %517, %561, %cst_238 {dimension_numbers = #tpu.dot_dimension_numbers<[1], [0], [0], [1], [0, 0, 1, 1], [], []>} : vector<8x128xf32>, vector<128x256xf32>, vector<8x256xf32> -> vector<8x256xf32>
    %563 = vector.extract_strided_slice %559 {offsets = [0, 0], sizes = [8, 128], strides = [1, 1]} : vector<8x384xf32> to vector<8x128xf32>
    %564 = vector.extract_strided_slice %562 {offsets = [0, 0], sizes = [8, 128], strides = [1, 1]} : vector<8x256xf32> to vector<8x128xf32>
    %565 = arith.addf %563, %564 : vector<8x128xf32>
    %566 = arith.negf %565 : vector<8x128xf32>
    %567 = math.exp %566 : vector<8x128xf32>
    %cst_239 = arith.constant 1.000000e+00 : f32
    %568 = vector.broadcast %cst_239 : f32 to vector<8x128xf32>
    %569 = arith.addf %568, %567 : vector<8x128xf32>
    %570 = arith.divf %568, %569 : vector<8x128xf32>
    %571 = vector.extract_strided_slice %559 {offsets = [0, 128], sizes = [8, 128], strides = [1, 1]} : vector<8x384xf32> to vector<8x128xf32>
    %572 = vector.extract_strided_slice %562 {offsets = [0, 128], sizes = [8, 128], strides = [1, 1]} : vector<8x256xf32> to vector<8x128xf32>
    %573 = arith.addf %571, %572 : vector<8x128xf32>
    %574 = arith.negf %573 : vector<8x128xf32>
    %575 = math.exp %574 : vector<8x128xf32>
    %cst_240 = arith.constant 1.000000e+00 : f32
    %576 = vector.broadcast %cst_240 : f32 to vector<8x128xf32>
    %577 = arith.addf %576, %575 : vector<8x128xf32>
    %578 = arith.divf %576, %577 : vector<8x128xf32>
    %579 = vector.extract_strided_slice %559 {offsets = [0, 256], sizes = [8, 128], strides = [1, 1]} : vector<8x384xf32> to vector<8x128xf32>
    %580 = arith.mulf %578, %517 : vector<8x128xf32>
    %c1_241 = arith.constant 1 : index
    %c0_242 = arith.constant 0 : index
    %c0_243 = arith.constant 0 : index
    %581 = vector.load %arg6[%c1_241, %c0_242, %c0_243] : memref<2x128x128xf32, #tpu.memory_space<vmem>>, vector<1x128x128xf32>
    %582 = vector.shape_cast %581 : vector<1x128x128xf32> to vector<128x128xf32>
    %cst_244 = arith.constant dense<0.000000e+00> : vector<8x128xf32>
    %583 = tpu.matmul %580, %582, %cst_244 {dimension_numbers = #tpu.dot_dimension_numbers<[1], [0], [0], [1], [0, 0, 1, 1], [], []>} : vector<8x128xf32>, vector<128x128xf32>, vector<8x128xf32> -> vector<8x128xf32>
    %584 = arith.addf %579, %583 : vector<8x128xf32>
    %585 = math.tanh %584 : vector<8x128xf32>
    %586 = arith.mulf %570, %517 : vector<8x128xf32>
    %cst_245 = arith.constant 1.000000e+00 : f32
    %587 = vector.broadcast %cst_245 : f32 to vector<8x128xf32>
    %588 = arith.subf %587, %570 : vector<8x128xf32>
    %589 = arith.mulf %588, %585 : vector<8x128xf32>
    %590 = arith.addf %586, %589 : vector<8x128xf32>
    %591 = arith.index_cast %c7_i32 : i32 to index
    %c0_246 = arith.constant 0 : index
    %c0_247 = arith.constant 0 : index
    %592 = vector.load %arg12[%591, %c0_246, %c0_247] : memref<8x8x128xf32, #tpu.memory_space<vmem>>, vector<1x8x128xf32>
    %593 = vector.shape_cast %592 : vector<1x8x128xf32> to vector<8x128xf32>
    %594 = vector.shape_cast %590 : vector<8x128xf32> to vector<1x8x128xf32>
    tpu.vector_store %arg12[%591, %c0_246, %c0_247], %594 {strides = array<i32>} : memref<8x8x128xf32, #tpu.memory_space<vmem>>, vector<1x8x128xf32>,
    %c8_i32 = arith.constant 8 : i32
    %c0_248 = arith.constant 0 : index
    %c0_249 = arith.constant 0 : index
    %c0_250 = arith.constant 0 : index
    %595 = vector.load %arg11[%c0_248, %c0_249, %c0_250] : memref<2x8x128xf32, #tpu.memory_space<vmem>>, vector<1x8x128xf32>
    %596 = vector.shape_cast %595 : vector<1x8x128xf32> to vector<8x128xf32>
    %597 = vector.shape_cast %555 : vector<8x128xf32> to vector<1x8x128xf32>
    tpu.vector_store %arg11[%c0_248, %c0_249, %c0_250], %597 {strides = array<i32>} : memref<2x8x128xf32, #tpu.memory_space<vmem>>, vector<1x8x128xf32>,
    %c1_251 = arith.constant 1 : index
    %c0_252 = arith.constant 0 : index
    %c0_253 = arith.constant 0 : index
    %598 = vector.load %arg11[%c1_251, %c0_252, %c0_253] : memref<2x8x128xf32, #tpu.memory_space<vmem>>, vector<1x8x128xf32>
    %599 = vector.shape_cast %598 : vector<1x8x128xf32> to vector<8x128xf32>
    %600 = vector.shape_cast %590 : vector<8x128xf32> to vector<1x8x128xf32>
    tpu.vector_store %arg11[%c1_251, %c0_252, %c0_253], %600 {strides = array<i32>} : memref<2x8x128xf32, #tpu.memory_space<vmem>>, vector<1x8x128xf32>,
    %c0_254 = arith.constant 0 : index
    %c0_255 = arith.constant 0 : index
    %c0_256 = arith.constant 0 : index
    %601 = vector.load %arg12[%c0_254, %c0_255, %c0_256] : memref<8x8x128xf32, #tpu.memory_space<vmem>>, vector<8x8x128xf32>
    %602 = vector.shape_cast %601 : vector<8x8x128xf32> to vector<64x128xf32>
    %c0_257 = arith.constant 0 : index
    %c0_258 = arith.constant 0 : index
    %603 = vector.load %arg8[%c0_257, %c0_258] : memref<128x128xf32, #tpu.memory_space<vmem>>, vector<128x128xf32>
    %cst_259 = arith.constant dense<0.000000e+00> : vector<64x128xf32>
    %604 = tpu.matmul %602, %603, %cst_259 {dimension_numbers = #tpu.dot_dimension_numbers<[1], [0], [0], [1], [0, 0, 1, 1], [], []>} : vector<64x128xf32>, vector<128x128xf32>, vector<64x128xf32> -> vector<64x128xf32>
    %c0_260 = arith.constant 0 : index
    %c0_261 = arith.constant 0 : index
    %605 = vector.load %arg9[%c0_260, %c0_261] : memref<1x128xf32, #tpu.memory_space<vmem>>, vector<1x128xf32>
    %606 = vector.broadcast %605 : vector<1x128xf32> to vector<64x128xf32>
    %607 = arith.addf %604, %606 : vector<64x128xf32>
    %608 = vector.shape_cast %607 : vector<64x128xf32> to vector<8x8x128xf32>
    %c0_262 = arith.constant 0 : index
    %c0_263 = arith.constant 0 : index
    %c0_264 = arith.constant 0 : index
    %609 = vector.load %arg10[%c0_262, %c0_263, %c0_264] : memref<8x8x128xf32, #tpu.memory_space<vmem>>, vector<8x8x128xf32>
    tpu.vector_store %arg10[%c0_262, %c0_263, %c0_264], %608 {strides = array<i32>} : memref<8x8x128xf32, #tpu.memory_space<vmem>>, vector<8x8x128xf32>,
    return
  }
  func.func @transform_0(%arg0: i32, %arg1: i32) -> (i32, i32, i32) {
    %c0_i32 = arith.constant 0 : i32
    %c0_i32_0 = arith.constant 0 : i32
    return %arg1, %arg0, %c0_i32 : i32, i32, i32
  }
  func.func @transform_1(%arg0: i32, %arg1: i32) -> (i32, i32, i32) {
    %c0_i32 = arith.constant 0 : i32
    %c0_i32_0 = arith.constant 0 : i32
    %c0_i32_1 = arith.constant 0 : i32
    return %c0_i32, %arg0, %c0_i32_0 : i32, i32, i32
  }
  func.func @transform_2(%arg0: i32, %arg1: i32) -> (i32, i32, i32) {
    %c0_i32 = arith.constant 0 : i32
    %c0_i32_0 = arith.constant 0 : i32
    %c0_i32_1 = arith.constant 0 : i32
    %c0_i32_2 = arith.constant 0 : i32
    return %c0_i32, %c0_i32_0, %c0_i32_1 : i32, i32, i32
  }
  func.func @transform_3(%arg0: i32, %arg1: i32) -> (i32, i32, i32) {
    %c0_i32 = arith.constant 0 : i32
    %c0_i32_0 = arith.constant 0 : i32
    %c0_i32_1 = arith.constant 0 : i32
    %c0_i32_2 = arith.constant 0 : i32
    return %c0_i32, %c0_i32_0, %c0_i32_1 : i32, i32, i32
  }
  func.func @transform_4(%arg0: i32, %arg1: i32) -> (i32, i32, i32) {
    %c0_i32 = arith.constant 0 : i32
    %c0_i32_0 = arith.constant 0 : i32
    %c0_i32_1 = arith.constant 0 : i32
    %c0_i32_2 = arith.constant 0 : i32
    return %c0_i32, %c0_i32_0, %c0_i32_1 : i32, i32, i32
  }
  func.func @transform_5(%arg0: i32, %arg1: i32) -> (i32, i32, i32) {
    %c0_i32 = arith.constant 0 : i32
    %c0_i32_0 = arith.constant 0 : i32
    %c0_i32_1 = arith.constant 0 : i32
    %c0_i32_2 = arith.constant 0 : i32
    return %c0_i32, %c0_i32_0, %c0_i32_1 : i32, i32, i32
  }
  func.func @transform_6(%arg0: i32, %arg1: i32) -> (i32, i32) {
    %c0_i32 = arith.constant 0 : i32
    %c0_i32_0 = arith.constant 0 : i32
    %c0_i32_1 = arith.constant 0 : i32
    return %c0_i32, %c0_i32_0 : i32, i32
  }
  func.func @transform_7(%arg0: i32, %arg1: i32) -> (i32, i32) {
    %c0_i32 = arith.constant 0 : i32
    %c0_i32_0 = arith.constant 0 : i32
    %c0_i32_1 = arith.constant 0 : i32
    return %c0_i32, %c0_i32_0 : i32, i32
  }
  func.func @transform_8(%arg0: i32, %arg1: i32) -> (i32, i32, i32) {
    %c0_i32 = arith.constant 0 : i32
    %c0_i32_0 = arith.constant 0 : i32
    return %arg1, %arg0, %c0_i32 : i32, i32, i32
  }
  func.func @transform_9(%arg0: i32, %arg1: i32) -> (i32, i32, i32) {
    %c0_i32 = arith.constant 0 : i32
    %c0_i32_0 = arith.constant 0 : i32
    %c0_i32_1 = arith.constant 0 : i32
    return %c0_i32, %arg0, %c0_i32_0 : i32, i32, i32
  }
}

</mosaic_0001>

<llo_original>
// kernel: tpu_custom_call.1
$region0: #{tpu_custom_call.1}
  #allocation0 [shape = 'u32[]', space=smem, size = 0x4, offset = 0x4, fixed_abs, tag = 'smem constant byte address 0x4 - core index']
  #allocation1 [shape = 'u32[144,128]{1,0:T(1,128)}', space=vmem, size = 0x12000, scoped, tag = 'internal scratch']
  #allocation2 [shape = 'f32[8,8,128]{2,1,0:T(8,128)}', space=vmem, size = 0x8000, scoped, tag = 'scratch operand']
  %s0 = inlined_call_operand.hbm [shape: f32[8,8,384], index: 0, kind: input, shape index: {}]
  %s1 = inlined_call_operand.hbm [shape: f32[2,8,128], index: 1, kind: input, shape index: {}]
  %s2 = inlined_call_operand.hbm [shape: f32[1,128,384], index: 2, kind: input, shape index: {}]
  %s3 = inlined_call_operand.hbm [shape: f32[2,128,256], index: 3, kind: input, shape index: {}]
  %s4 = inlined_call_operand.hbm [shape: f32[2,128,128], index: 4, kind: input, shape index: {}]
  %s5 = inlined_call_operand.vmem [shape: f32[1,1,384], index: 5, kind: input, shape index: {}]
  %s6 = inlined_call_operand.hbm [shape: f32[128,128], index: 6, kind: input, shape index: {}]
  %s7 = inlined_call_operand.vmem [shape: f32[1,128], index: 7, kind: input, shape index: {}]
  %s8 = inlined_call_operand.hbm [shape: f32[8,8,128], index: 8, kind: output, shape index: {0}]
  %s9 = inlined_call_operand.hbm [shape: f32[2,8,128], index: 9, kind: output, shape index: {1}]
  %10 = xla_tuple %s8, %s9
  %s11 = sld [smem:[#allocation0]]
  $region78: #{tpu_custom_call.1} parent=0
    _
  %s13 = ssub.s32 1, %s11
  %s14 = scalar_select 0, %s13, %s11
  $region1: #{tpu_custom_call.1} parent=0
    #allocation3 [shape = 'u8[98304]{0}', space=vmem, size = 0x18000, scoped, tag = 'input window, operand 0, single buffered']
    #allocation4 [shape = 's32[1]{0}', space=sflag, size = 0x4, scoped, tag = 'scoped memory for tpu_custom_call.1']
    #allocation5 [shape = 's32[1]{0}', space=sflag, size = 0x4, scoped, tag = 'scoped memory for tpu_custom_call.1']
    #allocation6 [shape = 'u8[8192]{0}', space=vmem, size = 0x2000, scoped, tag = 'input window, operand 1, single buffered']
    #allocation7 [shape = 's32[1]{0}', space=sflag, size = 0x4, scoped, tag = 'scoped memory for tpu_custom_call.1']
    #allocation8 [shape = 'u8[196608]{0}', space=vmem, size = 0x30000, scoped, tag = 'input window, operand 2, single buffered']
    #allocation9 [shape = 'u8[262144]{0}', space=vmem, size = 0x40000, scoped, tag = 'input window, operand 3, single buffered']
    #allocation10 [shape = 's32[1]{0}', space=sflag, size = 0x4, scoped, tag = 'scoped memory for tpu_custom_call.1']
    #allocation11 [shape = 'u8[131072]{0}', space=vmem, size = 0x20000, scoped, tag = 'input window, operand 4, single buffered']
    #allocation12 [shape = 'u8[65536]{0}', space=vmem, size = 0x10000, scoped, tag = 'input window, operand 6, single buffered']
    #allocation13 [shape = 's32[1]{0}', space=sflag, size = 0x4, scoped, tag = 'scoped memory for tpu_custom_call.1']
    #allocation14 [shape = 'u8[32768]{0}', space=vmem, size = 0x8000, scoped, tag = 'output window, operand 0, single buffered']
    #allocation15 [shape = 'u8[8192]{0}', space=vmem, size = 0x2000, scoped, tag = 'output window, operand 1, single buffered']
    #allocation16 [shape = 's32[1]{0}', space=sflag, size = 0x4, scoped, tag = 'scoped memory for tpu_custom_call.1']
    %15 = vsyncpa [#allocation4], 0
    %16 = vsyncpa [#allocation7], 0
    %17 = vsyncpa [#allocation10], 0
    %18 = vsyncpa [#allocation13], 0
    %19 = vsyncpa [#allocation5], 0
    %20 = vsyncpa [#allocation16], 0
    // Predicated region
    $region2: #{tpu_custom_call.1} parent=1 // pred_check
      _
    $region3: #{tpu_custom_call.1} parent=1 // pred_check_branch
      %22 = sbr.rel (0) target = $region5
    $region4: #{tpu_custom_call.1} parent=1 // pred_region
      %s24 = ssub.s32 3072, 3072
      %25 = vsyncadd [#allocation4], %s24
      %s26 = sshll.u32 [#allocation3], 4
      %s27 = int_to_ptr.vmem [resolvable:$true] %s26
      %32 = dma.hbm_to_vmem [thread:$0]  %s0, 3072, %s27, [#allocation4], 384, 384, 24
    $region5: #{tpu_custom_call.1} parent=1 // pred_fallthru
      _
    // Predicated region
    $region6: #{tpu_custom_call.1} parent=1 // pred_check
      _
    $region7: #{tpu_custom_call.1} parent=1 // pred_check_branch
      %34 = sbr.rel (0) target = $region9
    $region8: #{tpu_custom_call.1} parent=1 // pred_region
      %s36 = ssub.s32 256, 256
      %37 = vsyncadd [#allocation7], %s36
      %s38 = sshll.u32 [#allocation6], 4
      %s39 = int_to_ptr.vmem [resolvable:$true] %s38
      %44 = dma.hbm_to_vmem [thread:$0]  %s1, 256, %s39, [#allocation7], 128, 128, 8
    $region9: #{tpu_custom_call.1} parent=1 // pred_fallthru
      _
    // Predicated region
    $region10: #{tpu_custom_call.1} parent=1 // pred_check
      _
    $region11: #{tpu_custom_call.1} parent=1 // pred_check_branch
      %46 = sbr.rel (0) target = $region13
    $region12: #{tpu_custom_call.1} parent=1 // pred_region
      %s48 = ssub.s32 6144, 6144
      %49 = vsyncadd [#allocation7], %s48
      %s50 = sshll.u32 [#allocation8], 4
      %s51 = int_to_ptr.vmem [resolvable:$true] %s50
      %56 = dma.hbm_to_vmem [thread:$0]  %s2, 6144, %s51, [#allocation7], 384, 384, 24
    $region13: #{tpu_custom_call.1} parent=1 // pred_fallthru
      _
    // Predicated region
    $region14: #{tpu_custom_call.1} parent=1 // pred_check
      _
    $region15: #{tpu_custom_call.1} parent=1 // pred_check_branch
      %58 = sbr.rel (0) target = $region17
    $region16: #{tpu_custom_call.1} parent=1 // pred_region
      %s60 = ssub.s32 8192, 8192
      %61 = vsyncadd [#allocation10], %s60
      %s62 = sshll.u32 [#allocation9], 4
      %s63 = int_to_ptr.vmem [resolvable:$true] %s62
      %68 = dma.hbm_to_vmem [thread:$0]  %s3, 8192, %s63, [#allocation10], 256, 256, 16
    $region17: #{tpu_custom_call.1} parent=1 // pred_fallthru
      _
    // Predicated region
    $region18: #{tpu_custom_call.1} parent=1 // pred_check
      _
    $region19: #{tpu_custom_call.1} parent=1 // pred_check_branch
      %70 = sbr.rel (0) target = $region21
    $region20: #{tpu_custom_call.1} parent=1 // pred_region
      %s72 = ssub.s32 4096, 4096
      %73 = vsyncadd [#allocation10], %s72
      %s74 = sshll.u32 [#allocation11], 4
      %s75 = int_to_ptr.vmem [resolvable:$true] %s74
      %80 = dma.hbm_to_vmem [thread:$0]  %s4, 4096, %s75, [#allocation10], 128, 128, 8
    $region21: #{tpu_custom_call.1} parent=1 // pred_fallthru
      _
    // Predicated region
    $region22: #{tpu_custom_call.1} parent=1 // pred_check
      _
    $region23: #{tpu_custom_call.1} parent=1 // pred_check_branch
      %82 = sbr.rel (0) target = $region25
    $region24: #{tpu_custom_call.1} parent=1 // pred_region
      _
    $region25: #{tpu_custom_call.1} parent=1 // pred_fallthru
      _
    // Predicated region
    $region26: #{tpu_custom_call.1} parent=1 // pred_check
      _
    $region27: #{tpu_custom_call.1} parent=1 // pred_check_branch
      %84 = sbr.rel (0) target = $region29
    $region28: #{tpu_custom_call.1} parent=1 // pred_region
      %s86 = ssub.s32 2048, 2048
      %87 = vsyncadd [#allocation13], %s86
      %s88 = sshll.u32 [#allocation12], 4
      %s89 = int_to_ptr.vmem [resolvable:$true] %s88
      %94 = dma.hbm_to_vmem [thread:$0]  %s6, 2048, %s89, [#allocation13], 128, 128, 8
    $region29: #{tpu_custom_call.1} parent=1 // pred_fallthru
      _
    // Predicated region
    $region30: #{tpu_custom_call.1} parent=1 // pred_check
      _
    $region31: #{tpu_custom_call.1} parent=1 // pred_check_branch
      %96 = sbr.rel (0) target = $region33
    $region32: #{tpu_custom_call.1} parent=1 // pred_region
      _
    $region33: #{tpu_custom_call.1} parent=1 // pred_fallthru
      _
    // Predicated region
    $region34: #{tpu_custom_call.1} parent=1 // pred_check
      _
    $region35: #{tpu_custom_call.1} parent=1 // pred_check_branch
      %98 = sbr.rel (0) target = $region37
    $region36: #{tpu_custom_call.1} parent=1 // pred_region
      %99 = dma.done [#allocation4], 3072
    $region37: #{tpu_custom_call.1} parent=1 // pred_fallthru
      _
    // Predicated region
    $region38: #{tpu_custom_call.1} parent=1 // pred_check
      _
    $region39: #{tpu_custom_call.1} parent=1 // pred_check_branch
      %101 = sbr.rel (0) target = $region41
    $region40: #{tpu_custom_call.1} parent=1 // pred_region
      %102 = dma.done [#allocation7], 256
    $region41: #{tpu_custom_call.1} parent=1 // pred_fallthru
      _
    // Predicated region
    $region42: #{tpu_custom_call.1} parent=1 // pred_check
      _
    $region43: #{tpu_custom_call.1} parent=1 // pred_check_branch
      %104 = sbr.rel (0) target = $region45
    $region44: #{tpu_custom_call.1} parent=1 // pred_region
      %105 = dma.done [#allocation7], 6144
    $region45: #{tpu_custom_call.1} parent=1 // pred_fallthru
      _
    // Predicated region
    $region46: #{tpu_custom_call.1} parent=1 // pred_check
      _
    $region47: #{tpu_custom_call.1} parent=1 // pred_check_branch
      %107 = sbr.rel (0) target = $region49
    $region48: #{tpu_custom_call.1} parent=1 // pred_region
      %108 = dma.done [#allocation10], 8192
    $region49: #{tpu_custom_call.1} parent=1 // pred_fallthru
      _
    // Predicated region
    $region50: #{tpu_custom_call.1} parent=1 // pred_check
      _
    $region51: #{tpu_custom_call.1} parent=1 // pred_check_branch
      %110 = sbr.rel (0) target = $region53
    $region52: #{tpu_custom_call.1} parent=1 // pred_region
      %111 = dma.done [#allocation10], 4096
    $region53: #{tpu_custom_call.1} parent=1 // pred_fallthru
      _
    // Predicated region
    $region54: #{tpu_custom_call.1} parent=1 // pred_check
      _
    $region55: #{tpu_custom_call.1} parent=1 // pred_check_branch
      %113 = sbr.rel (0) target = $region57
    $region56: #{tpu_custom_call.1} parent=1 // pred_region
      %114 = dma.done [#allocation13], 2048
    $region57: #{tpu_custom_call.1} parent=1 // pred_fallthru
      _
    %p115 = scmp.eq.s32.totalorder 0, 0
    // Predicated region
    $region58: #{tpu_custom_call.1} parent=1 // pred_check
      %p116 = pneg %p115
    $region59: #{tpu_custom_call.1} parent=1 // pred_check_branch
      %118 = sbr.rel (%p116) target = $region61
    $region60: #{tpu_custom_call.1} parent=1 // pred_region
      %v119 = vld [vmem:[#allocation6] sm:$0xff]
      %v120 = vld [vmem:[#allocation6 + $0x8] sm:$0xff]
      %121 = vst [vmem:[#allocation15] sm:$0xff] %v119
      %122 = vst [vmem:[#allocation15 + $0x8] sm:$0xff] %v120
    $region61: #{tpu_custom_call.1} parent=1 // pred_fallthru
      _
    %v123 = vld [vmem:[#allocation15] sm:$0xff]
    %s124 = scalar_lea.vmem [#allocation15], 8
    %v125 = vld [vmem:[%s124] sm:$0xff]
    %v126 = vld [vmem:[%s5] sm:$0x7]
    %v128 = vlaneseq
    %v129 = vshrl.u32 %v128, 7
    %v130 = vsub.s32 0, %v129
    %v131 = vrot.slane %v126, %v130
    %v132 = vlaneseq
    %v133 = vshrl.u32 %v132, 7
    %v134 = vsub.s32 1, %v133
    %v135 = vrot.slane %v126, %v134
    %v136 = vlaneseq
    %v137 = vshrl.u32 %v136, 7
    %v138 = vsub.s32 2, %v137
    %v139 = vrot.slane %v126, %v138
    %v143 = vld [vmem:[#allocation3] sm:$0xff]
    %v144 = vld [vmem:[#allocation3 + $0x8] sm:$0xff]
    %v145 = vld [vmem:[#allocation3 + $0x10] sm:$0xff]
    %v146 = vld [vmem:[#allocation9] sm:$0xff]
    %v147 = vld [vmem:[#allocation9 + $0x8] sm:$0xff]
    %v148 = vld [vmem:[#allocation9 + $0x10] sm:$0xff]
    %v149 = vld [vmem:[#allocation9 + $0x18] sm:$0xff]
    %v150 = vld [vmem:[#allocation9 + $0x20] sm:$0xff]
    %v151 = vld [vmem:[#allocation9 + $0x28] sm:$0xff]
    %v152 = vld [vmem:[#allocation9 + $0x30] sm:$0xff]
    %v153 = vld [vmem:[#allocation9 + $0x38] sm:$0xff]
    %v154 = vld [vmem:[#allocation9 + $0x40] sm:$0xff]
    %v155 = vld [vmem:[#allocation9 + $0x48] sm:$0xff]
    %v156 = vld [vmem:[#allocation9 + $0x50] sm:$0xff]
    %v157 = vld [vmem:[#allocation9 + $0x58] sm:$0xff]
    %v158 = vld [vmem:[#allocation9 + $0x60] sm:$0xff]
    %v159 = vld [vmem:[#allocation9 + $0x68] sm:$0xff]
    %v160 = vld [vmem:[#allocation9 + $0x70] sm:$0xff]
    %v161 = vld [vmem:[#allocation9 + $0x78] sm:$0xff]
    %v162 = vld [vmem:[#allocation9 + $0x80] sm:$0xff]
    %v163 = vld [vmem:[#allocation9 + $0x88] sm:$0xff]
    %v164 = vld [vmem:[#allocation9 + $0x90] sm:$0xff]
    %v165 = vld [vmem:[#allocation9 + $0x98] sm:$0xff]
    %v166 = vld [vmem:[#allocation9 + $0xa0] sm:$0xff]
    %v167 = vld [vmem:[#allocation9 + $0xa8] sm:$0xff]
    %v168 = vld [vmem:[#allocation9 + $0xb0] sm:$0xff]
    %v169 = vld [vmem:[#allocation9 + $0xb8] sm:$0xff]
    %v170 = vld [vmem:[#allocation9 + $0xc0] sm:$0xff]
    %v171 = vld [vmem:[#allocation9 + $0xc8] sm:$0xff]
    %v172 = vld [vmem:[#allocation9 + $0xd0] sm:$0xff]
    %v173 = vld [vmem:[#allocation9 + $0xd8] sm:$0xff]
    %v174 = vld [vmem:[#allocation9 + $0xe0] sm:$0xff]
    %v175 = vld [vmem:[#allocation9 + $0xe8] sm:$0xff]
    %v176 = vld [vmem:[#allocation9 + $0xf0] sm:$0xff]
    %v177 = vld [vmem:[#allocation9 + $0xf8] sm:$0xff]
    %178 = vmatprep.subr.mxu0 %v147
    %179 = vmatpush1.msra.mxu0 %v146
    %180 = vmatprep.subr.mxu0 %v149
    %181 = vmatpush1.msra.mxu0 %v148
    %182 = vmatprep.subr.mxu0 %v151
    %183 = vmatpush1.msra.mxu0 %v150
    %184 = vmatprep.subr.mxu0 %v153
    %185 = vmatpush1.msra.mxu0 %v152
    %186 = vmatprep.subr.mxu0 %v155
    %187 = vmatpush1.msra.mxu0 %v154
    %188 = vmatprep.subr.mxu0 %v157
    %189 = vmatpush1.msra.mxu0 %v156
    %190 = vmatprep.subr.mxu0 %v159
    %191 = vmatpush1.msra.mxu0 %v158
    %192 = vmatprep.subr.mxu0 %v161
    %193 = vmatpush1.msra.mxu0 %v160
    %194 = vmatprep.subr.mxu0 %v163
    %195 = vmatpush1.msra.mxu0 %v162
    %196 = vmatprep.subr.mxu0 %v165
    %197 = vmatpush1.msra.mxu0 %v164
    %198 = vmatprep.subr.mxu0 %v167
    %199 = vmatpush1.msra.mxu0 %v166
    %200 = vmatprep.subr.mxu0 %v169
    %201 = vmatpush1.msra.mxu0 %v168
    %202 = vmatprep.subr.mxu0 %v171
    %203 = vmatpush1.msra.mxu0 %v170
    %204 = vmatprep.subr.mxu0 %v173
    %205 = vmatpush1.msra.mxu0 %v172
    %206 = vmatprep.subr.mxu0 %v175
    %207 = vmatpush1.msra.mxu0 %v174
    %208 = vmatprep.subr.mxu0 %v177
    %209 = vmatpush1.msra.mxu0 %v176
    %210 = vmatprep.subr.mxu0 0.0
    %211 = vmatpush1.msra.mxu0 0.0
    %212 = vmatprep.subr.mxu0 0.0
    %213 = vmatpush1.msra.mxu0 0.0
    %214 = vmatprep.subr.mxu0 0.0
    %215 = vmatpush1.msra.mxu0 0.0
    %216 = vmatprep.subr.mxu0 0.0
    %217 = vmatpush1.msra.mxu0 0.0
    %218 = vmatprep.subr.mxu0 0.0
    %219 = vmatpush1.msra.mxu0 0.0
    %220 = vmatprep.subr.mxu0 0.0
    %221 = vmatpush1.msra.mxu0 0.0
    %222 = vmatprep.subr.mxu0 0.0
    %223 = vmatpush1.msra.mxu0 0.0
    %224 = vmatprep.subr.mxu0 0.0
    %225 = vmatpush1.msra.mxu0 0.0
    %226 = vmatprep.subr.mxu0 0.0
    %227 = vmatpush1.msra.mxu0 0.0
    %228 = vmatprep.subr.mxu0 0.0
    %229 = vmatpush1.msra.mxu0 0.0
    %230 = vmatprep.subr.mxu0 0.0
    %231 = vmatpush1.msra.mxu0 0.0
    %232 = vmatprep.subr.mxu0 0.0
    %233 = vmatpush1.msra.mxu0 0.0
    %234 = vmatprep.subr.mxu0 0.0
    %235 = vmatpush1.msra.mxu0 0.0
    %236 = vmatprep.subr.mxu0 0.0
    %237 = vmatpush1.msra.mxu0 0.0
    %238 = vmatprep.subr.mxu0 0.0
    %239 = vmatpush1.msra.mxu0 0.0
    %240 = vmatprep.subr.mxu0 0.0
    %241 = vmatpush1.msra.mxu0 0.0
    %242 = vmatprep.mubr.f32.mxu0 0.0
    %243 = vmatmul.mubr.f32.gmra.mrb[0].mxu0 %v123
    %v244 = vpop.f32.mrb[0].mxu0
    %v245 = vadd.f32 0.0, %v244
    %v246 = vpop.f32.mrb[0].mxu0
    %v247 = vadd.f32 0.0, %v246
    %248 = vdwg.mxu0
    %v249 = vadd.f32 %v143, %v245
    %v250 = vxor.u32 %v249, 2147483648
    %v251 = vmul.f32 %v250, 1.442695
    %v252 = vpow.pop %v251
    %v253 = vadd.f32 %v252, 1.0
    %v254 = vrcp.pop %v253
    %v255 = vmul.f32 1.0, %v254
    %v256 = vadd.f32 %v144, %v247
    %v257 = vxor.u32 %v256, 2147483648
    %v258 = vmul.f32 %v257, 1.442695
    %v259 = vpow.pop %v258
    %v260 = vadd.f32 %v259, 1.0
    %v261 = vrcp.pop %v260
    %v262 = vmul.f32 1.0, %v261
    %v263 = vmul.f32 %v262, %v123
    %v264 = vld [vmem:[#allocation11] sm:$0xff]
    %v265 = vld [vmem:[#allocation11 + $0x8] sm:$0xff]
    %v266 = vld [vmem:[#allocation11 + $0x10] sm:$0xff]
    %v267 = vld [vmem:[#allocation11 + $0x18] sm:$0xff]
    %v268 = vld [vmem:[#allocation11 + $0x20] sm:$0xff]
    %v269 = vld [vmem:[#allocation11 + $0x28] sm:$0xff]
    %v270 = vld [vmem:[#allocation11 + $0x30] sm:$0xff]
    %v271 = vld [vmem:[#allocation11 + $0x38] sm:$0xff]
    %v272 = vld [vmem:[#allocation11 + $0x40] sm:$0xff]
    %v273 = vld [vmem:[#allocation11 + $0x48] sm:$0xff]
    %v274 = vld [vmem:[#allocation11 + $0x50] sm:$0xff]
    %v275 = vld [vmem:[#allocation11 + $0x58] sm:$0xff]
    %v276 = vld [vmem:[#allocation11 + $0x60] sm:$0xff]
    %v277 = vld [vmem:[#allocation11 + $0x68] sm:$0xff]
    %v278 = vld [vmem:[#allocation11 + $0x70] sm:$0xff]
    %v279 = vld [vmem:[#allocation11 + $0x78] sm:$0xff]
    %280 = vmatprep.subr.mxu0 0.0
    %281 = vmatpush1.msra.mxu0 %v264
    %282 = vmatprep.subr.mxu0 0.0
    %283 = vmatpush1.msra.mxu0 %v265
    %284 = vmatprep.subr.mxu0 0.0
    %285 = vmatpush1.msra.mxu0 %v266
    %286 = vmatprep.subr.mxu0 0.0
    %287 = vmatpush1.msra.mxu0 %v267
    %288 = vmatprep.subr.mxu0 0.0
    %289 = vmatpush1.msra.mxu0 %v268
    %290 = vmatprep.subr.mxu0 0.0
    %291 = vmatpush1.msra.mxu0 %v269
    %292 = vmatprep.subr.mxu0 0.0
    %293 = vmatpush1.msra.mxu0 %v270
    %294 = vmatprep.subr.mxu0 0.0
    %295 = vmatpush1.msra.mxu0 %v271
    %296 = vmatprep.subr.mxu0 0.0
    %297 = vmatpush1.msra.mxu0 %v272
    %298 = vmatprep.subr.mxu0 0.0
    %299 = vmatpush1.msra.mxu0 %v273
    %300 = vmatprep.subr.mxu0 0.0
    %301 = vmatpush1.msra.mxu0 %v274
    %302 = vmatprep.subr.mxu0 0.0
    %303 = vmatpush1.msra.mxu0 %v275
    %304 = vmatprep.subr.mxu0 0.0
    %305 = vmatpush1.msra.mxu0 %v276
    %306 = vmatprep.subr.mxu0 0.0
    %307 = vmatpush1.msra.mxu0 %v277
    %308 = vmatprep.subr.mxu0 0.0
    %309 = vmatpush1.msra.mxu0 %v278
    %310 = vmatprep.subr.mxu0 0.0
    %311 = vmatpush1.msra.mxu0 %v279
    %312 = vmatprep.subr.mxu0 0.0
    %313 = vmatpush1.msra.mxu0 0.0
    %314 = vmatprep.subr.mxu0 0.0
    %315 = vmatpush1.msra.mxu0 0.0
    %316 = vmatprep.subr.mxu0 0.0
    %317 = vmatpush1.msra.mxu0 0.0
    %318 = vmatprep.subr.mxu0 0.0
    %319 = vmatpush1.msra.mxu0 0.0
    %320 = vmatprep.subr.mxu0 0.0
    %321 = vmatpush1.msra.mxu0 0.0
    %322 = vmatprep.subr.mxu0 0.0
    %323 = vmatpush1.msra.mxu0 0.0
    %324 = vmatprep.subr.mxu0 0.0
    %325 = vmatpush1.msra.mxu0 0.0
    %326 = vmatprep.subr.mxu0 0.0
    %327 = vmatpush1.msra.mxu0 0.0
    %328 = vmatprep.subr.mxu0 0.0
    %329 = vmatpush1.msra.mxu0 0.0
    %330 = vmatprep.subr.mxu0 0.0
    %331 = vmatpush1.msra.mxu0 0.0
    %332 = vmatprep.subr.mxu0 0.0
    %333 = vmatpush1.msra.mxu0 0.0
    %334 = vmatprep.subr.mxu0 0.0
    %335 = vmatpush1.msra.mxu0 0.0
    %336 = vmatprep.subr.mxu0 0.0
    %337 = vmatpush1.msra.mxu0 0.0
    %338 = vmatprep.subr.mxu0 0.0
    %339 = vmatpush1.msra.mxu0 0.0
    %340 = vmatprep.subr.mxu0 0.0
    %341 = vmatpush1.msra.mxu0 0.0
    %342 = vmatprep.subr.mxu0 0.0
    %343 = vmatpush1.msra.mxu0 0.0
    %344 = vmatprep.mubr.f32.mxu0 0.0
    %345 = vmatmul.mubr.f32.gmra.mrb[0].mxu0 %v263
    %v346 = vpop.f32.mrb[0].mxu0
    %v347 = vadd.f32 0.0, %v346
    %v348 = vpop.f32.mrb[0].mxu0
    %349 = vdwg.mxu0
    %v350 = vadd.f32 %v145, %v347
    %v351 = vtanh.pop %v350
    %v352 = vmul.f32 %v255, %v123
    %v353 = vsub.f32 1.0, %v255
    %v354 = vmul.f32 %v353, %v351
    %v355 = vadd.f32 %v352, %v354
    %v356 = vld [vmem:[#allocation8] sm:$0xff]
    %v357 = vld [vmem:[#allocation8 + $0x8] sm:$0xff]
    %v358 = vld [vmem:[#allocation8 + $0x10] sm:$0xff]
    %v359 = vld [vmem:[#allocation8 + $0x18] sm:$0xff]
    %v360 = vld [vmem:[#allocation8 + $0x20] sm:$0xff]
    %v361 = vld [vmem:[#allocation8 + $0x28] sm:$0xff]
    %v362 = vld [vmem:[#allocation8 + $0x30] sm:$0xff]
    %v363 = vld [vmem:[#allocation8 + $0x38] sm:$0xff]
    %v364 = vld [vmem:[#allocation8 + $0x40] sm:$0xff]
    %v365 = vld [vmem:[#allocation8 + $0x48] sm:$0xff]
    %v366 = vld [vmem:[#allocation8 + $0x50] sm:$0xff]
    %v367 = vld [vmem:[#allocation8 + $0x58] sm:$0xff]
    %v368 = vld [vmem:[#allocation8 + $0x60] sm:$0xff]
    %v369 = vld [vmem:[#allocation8 + $0x68] sm:$0xff]
    %v370 = vld [vmem:[#allocation8 + $0x70] sm:$0xff]
    %v371 = vld [vmem:[#allocation8 + $0x78] sm:$0xff]
    %v372 = vld [vmem:[#allocation8 + $0x80] sm:$0xff]
    %v373 = vld [vmem:[#allocation8 + $0x88] sm:$0xff]
    %v374 = vld [vmem:[#allocation8 + $0x90] sm:$0xff]
    %v375 = vld [vmem:[#allocation8 + $0x98] sm:$0xff]
    %v376 = vld [vmem:[#allocation8 + $0xa0] sm:$0xff]
    %v377 = vld [vmem:[#allocation8 + $0xa8] sm:$0xff]
    %v378 = vld [vmem:[#allocation8 + $0xb0] sm:$0xff]
    %v379 = vld [vmem:[#allocation8 + $0xb8] sm:$0xff]
    %v380 = vld [vmem:[#allocation8 + $0xc0] sm:$0xff]
    %v381 = vld [vmem:[#allocation8 + $0xc8] sm:$0xff]
    %v382 = vld [vmem:[#allocation8 + $0xd0] sm:$0xff]
    %v383 = vld [vmem:[#allocation8 + $0xd8] sm:$0xff]
    %v384 = vld [vmem:[#allocation8 + $0xe0] sm:$0xff]
    %v385 = vld [vmem:[#allocation8 + $0xe8] sm:$0xff]
    %v386 = vld [vmem:[#allocation8 + $0xf0] sm:$0xff]
    %v387 = vld [vmem:[#allocation8 + $0xf8] sm:$0xff]
    %v388 = vld [vmem:[#allocation8 + $0x100] sm:$0xff]
    %v389 = vld [vmem:[#allocation8 + $0x108] sm:$0xff]
    %v390 = vld [vmem:[#allocation8 + $0x110] sm:$0xff]
    %v391 = vld [vmem:[#allocation8 + $0x118] sm:$0xff]
    %v392 = vld [vmem:[#allocation8 + $0x120] sm:$0xff]
    %v393 = vld [vmem:[#allocation8 + $0x128] sm:$0xff]
    %v394 = vld [vmem:[#allocation8 + $0x130] sm:$0xff]
    %v395 = vld [vmem:[#allocation8 + $0x138] sm:$0xff]
    %v396 = vld [vmem:[#allocation8 + $0x140] sm:$0xff]
    %v397 = vld [vmem:[#allocation8 + $0x148] sm:$0xff]
    %v398 = vld [vmem:[#allocation8 + $0x150] sm:$0xff]
    %v399 = vld [vmem:[#allocation8 + $0x158] sm:$0xff]
    %v400 = vld [vmem:[#allocation8 + $0x160] sm:$0xff]
    %v401 = vld [vmem:[#allocation8 + $0x168] sm:$0xff]
    %v402 = vld [vmem:[#allocation8 + $0x170] sm:$0xff]
    %v403 = vld [vmem:[#allocation8 + $0x178] sm:$0xff]
    %404 = vmatprep.subr.mxu0 %v357
    %405 = vmatpush1.msra.mxu0 %v356
    %406 = vmatprep.subr.mxu0 %v360
    %407 = vmatpush1.msra.mxu0 %v359
    %408 = vmatprep.subr.mxu0 %v363
    %409 = vmatpush1.msra.mxu0 %v362
    %410 = vmatprep.subr.mxu0 %v366
    %411 = vmatpush1.msra.mxu0 %v365
    %412 = vmatprep.subr.mxu0 %v369
    %413 = vmatpush1.msra.mxu0 %v368
    %414 = vmatprep.subr.mxu0 %v372
    %415 = vmatpush1.msra.mxu0 %v371
    %416 = vmatprep.subr.mxu0 %v375
    %417 = vmatpush1.msra.mxu0 %v374
    %418 = vmatprep.subr.mxu0 %v378
    %419 = vmatpush1.msra.mxu0 %v377
    %420 = vmatprep.subr.mxu0 %v381
    %421 = vmatpush1.msra.mxu0 %v380
    %422 = vmatprep.subr.mxu0 %v384
    %423 = vmatpush1.msra.mxu0 %v383
    %424 = vmatprep.subr.mxu0 %v387
    %425 = vmatpush1.msra.mxu0 %v386
    %426 = vmatprep.subr.mxu0 %v390
    %427 = vmatpush1.msra.mxu0 %v389
    %428 = vmatprep.subr.mxu0 %v393
    %429 = vmatpush1.msra.mxu0 %v392
    %430 = vmatprep.subr.mxu0 %v396
    %431 = vmatpush1.msra.mxu0 %v395
    %432 = vmatprep.subr.mxu0 %v399
    %433 = vmatpush1.msra.mxu0 %v398
    %434 = vmatprep.subr.mxu0 %v402
    %435 = vmatpush1.msra.mxu0 %v401
    %436 = vmatprep.subr.mxu0 0.0
    %437 = vmatpush1.msra.mxu0 0.0
    %438 = vmatprep.subr.mxu0 0.0
    %439 = vmatpush1.msra.mxu0 0.0
    %440 = vmatprep.subr.mxu0 0.0
    %441 = vmatpush1.msra.mxu0 0.0
    %442 = vmatprep.subr.mxu0 0.0
    %443 = vmatpush1.msra.mxu0 0.0
    %444 = vmatprep.subr.mxu0 0.0
    %445 = vmatpush1.msra.mxu0 0.0
    %446 = vmatprep.subr.mxu0 0.0
    %447 = vmatpush1.msra.mxu0 0.0
    %448 = vmatprep.subr.mxu0 0.0
    %449 = vmatpush1.msra.mxu0 0.0
    %450 = vmatprep.subr.mxu0 0.0
    %451 = vmatpush1.msra.mxu0 0.0
    %452 = vmatprep.subr.mxu0 0.0
    %453 = vmatpush1.msra.mxu0 0.0
    %454 = vmatprep.subr.mxu0 0.0
    %455 = vmatpush1.msra.mxu0 0.0
    %456 = vmatprep.subr.mxu0 0.0
    %457 = vmatpush1.msra.mxu0 0.0
    %458 = vmatprep.subr.mxu0 0.0
    %459 = vmatpush1.msra.mxu0 0.0
    %460 = vmatprep.subr.mxu0 0.0
    %461 = vmatpush1.msra.mxu0 0.0
    %462 = vmatprep.subr.mxu0 0.0
    %463 = vmatpush1.msra.mxu0 0.0
    %464 = vmatprep.subr.mxu0 0.0
    %465 = vmatpush1.msra.mxu0 0.0
    %466 = vmatprep.subr.mxu0 0.0
    %467 = vmatpush1.msra.mxu0 0.0
    %468 = vmatprep.mubr.f32.mxu0 0.0
    %469 = vmatmul.mubr.f32.gmra.mrb[0].mxu0 %v355
    %v470 = vpop.f32.mrb[0].mxu0
    %v471 = vadd.f32 %v131, %v470
    %v472 = vpop.f32.mrb[0].mxu0
    %v473 = vadd.f32 %v135, %v472
    %474 = vdwg.mxu0
    %475 = vmatprep.subr.mxu0 0.0
    %476 = vmatpush1.msra.mxu0 %v358
    %477 = vmatprep.subr.mxu0 0.0
    %478 = vmatpush1.msra.mxu0 %v361
    %479 = vmatprep.subr.mxu0 0.0
    %480 = vmatpush1.msra.mxu0 %v364
    %481 = vmatprep.subr.mxu0 0.0
    %482 = vmatpush1.msra.mxu0 %v367
    %483 = vmatprep.subr.mxu0 0.0
    %484 = vmatpush1.msra.mxu0 %v370
    %485 = vmatprep.subr.mxu0 0.0
    %486 = vmatpush1.msra.mxu0 %v373
    %487 = vmatprep.subr.mxu0 0.0
    %488 = vmatpush1.msra.mxu0 %v376
    %489 = vmatprep.subr.mxu0 0.0
    %490 = vmatpush1.msra.mxu0 %v379
    %491 = vmatprep.subr.mxu0 0.0
    %492 = vmatpush1.msra.mxu0 %v382
    %493 = vmatprep.subr.mxu0 0.0
    %494 = vmatpush1.msra.mxu0 %v385
    %495 = vmatprep.subr.mxu0 0.0
    %496 = vmatpush1.msra.mxu0 %v388
    %497 = vmatprep.subr.mxu0 0.0
    %498 = vmatpush1.msra.mxu0 %v391
    %499 = vmatprep.subr.mxu0 0.0
    %500 = vmatpush1.msra.mxu0 %v394
    %501 = vmatprep.subr.mxu0 0.0
    %502 = vmatpush1.msra.mxu0 %v397
    %503 = vmatprep.subr.mxu0 0.0
    %504 = vmatpush1.msra.mxu0 %v400
    %505 = vmatprep.subr.mxu0 0.0
    %506 = vmatpush1.msra.mxu0 %v403
    %507 = vmatprep.subr.mxu0 0.0
    %508 = vmatpush1.msra.mxu0 0.0
    %509 = vmatprep.subr.mxu0 0.0
    %510 = vmatpush1.msra.mxu0 0.0
    %511 = vmatprep.subr.mxu0 0.0
    %512 = vmatpush1.msra.mxu0 0.0
    %513 = vmatprep.subr.mxu0 0.0
    %514 = vmatpush1.msra.mxu0 0.0
    %515 = vmatprep.subr.mxu0 0.0
    %516 = vmatpush1.msra.mxu0 0.0
    %517 = vmatprep.subr.mxu0 0.0
    %518 = vmatpush1.msra.mxu0 0.0
    %519 = vmatprep.subr.mxu0 0.0
    %520 = vmatpush1.msra.mxu0 0.0
    %521 = vmatprep.subr.mxu0 0.0
    %522 = vmatpush1.msra.mxu0 0.0
    %523 = vmatprep.subr.mxu0 0.0
    %524 = vmatpush1.msra.mxu0 0.0
    %525 = vmatprep.subr.mxu0 0.0
    %526 = vmatpush1.msra.mxu0 0.0
    %527 = vmatprep.subr.mxu0 0.0
    %528 = vmatpush1.msra.mxu0 0.0
    %529 = vmatprep.subr.mxu0 0.0
    %530 = vmatpush1.msra.mxu0 0.0
    %531 = vmatprep.subr.mxu0 0.0
    %532 = vmatpush1.msra.mxu0 0.0
    %533 = vmatprep.subr.mxu0 0.0
    %534 = vmatpush1.msra.mxu0 0.0
    %535 = vmatprep.subr.mxu0 0.0
    %536 = vmatpush1.msra.mxu0 0.0
    %537 = vmatprep.subr.mxu0 0.0
    %538 = vmatpush1.msra.mxu0 0.0
    %539 = vmatprep.mubr.f32.mxu0 0.0
    %540 = vmatmul.mubr.f32.gmra.mrb[0].mxu0 %v355
    %v541 = vpop.f32.mrb[0].mxu0
    %v542 = vadd.f32 %v139, %v541
    %v543 = vpop.f32.mrb[0].mxu0
    %544 = vdwg.mxu0
    %s545 = scalar_lea.vmem [#allocation9], 256
    %v546 = vld [vmem:[%s545] sm:$0xff]
    %v547 = vld [vmem:[%s545 + $0x8] sm:$0xff]
    %v548 = vld [vmem:[%s545 + $0x10] sm:$0xff]
    %v549 = vld [vmem:[%s545 + $0x18] sm:$0xff]
    %v550 = vld [vmem:[%s545 + $0x20] sm:$0xff]
    %v551 = vld [vmem:[%s545 + $0x28] sm:$0xff]
    %v552 = vld [vmem:[%s545 + $0x30] sm:$0xff]
    %v553 = vld [vmem:[%s545 + $0x38] sm:$0xff]
    %v554 = vld [vmem:[%s545 + $0x40] sm:$0xff]
    %v555 = vld [vmem:[%s545 + $0x48] sm:$0xff]
    %v556 = vld [vmem:[%s545 + $0x50] sm:$0xff]
    %v557 = vld [vmem:[%s545 + $0x58] sm:$0xff]
    %v558 = vld [vmem:[%s545 + $0x60] sm:$0xff]
    %v559 = vld [vmem:[%s545 + $0x68] sm:$0xff]
    %v560 = vld [vmem:[%s545 + $0x70] sm:$0xff]
    %v561 = vld [vmem:[%s545 + $0x78] sm:$0xff]
    %v562 = vld [vmem:[%s545 + $0x80] sm:$0xff]
    %v563 = vld [vmem:[%s545 + $0x88] sm:$0xff]
    %v564 = vld [vmem:[%s545 + $0x90] sm:$0xff]
    %v565 = vld [vmem:[%s545 + $0x98] sm:$0xff]
    %v566 = vld [vmem:[%s545 + $0xa0] sm:$0xff]
    %v567 = vld [vmem:[%s545 + $0xa8] sm:$0xff]
    %v568 = vld [vmem:[%s545 + $0xb0] sm:$0xff]
    %v569 = vld [vmem:[%s545 + $0xb8] sm:$0xff]
    %v570 = vld [vmem:[%s545 + $0xc0] sm:$0xff]
    %v571 = vld [vmem:[%s545 + $0xc8] sm:$0xff]
    %v572 = vld [vmem:[%s545 + $0xd0] sm:$0xff]
    %v573 = vld [vmem:[%s545 + $0xd8] sm:$0xff]
    %v574 = vld [vmem:[%s545 + $0xe0] sm:$0xff]
    %v575 = vld [vmem:[%s545 + $0xe8] sm:$0xff]
    %v576 = vld [vmem:[%s545 + $0xf0] sm:$0xff]
    %v577 = vld [vmem:[%s545 + $0xf8] sm:$0xff]
    %578 = vmatprep.subr.mxu0 %v547
    %579 = vmatpush1.msra.mxu0 %v546
    %580 = vmatprep.subr.mxu0 %v549
    %581 = vmatpush1.msra.mxu0 %v548
    %582 = vmatprep.subr.mxu0 %v551
    %583 = vmatpush1.msra.mxu0 %v550
    %584 = vmatprep.subr.mxu0 %v553
    %585 = vmatpush1.msra.mxu0 %v552
    %586 = vmatprep.subr.mxu0 %v555
    %587 = vmatpush1.msra.mxu0 %v554
    %588 = vmatprep.subr.mxu0 %v557
    %589 = vmatpush1.msra.mxu0 %v556
    %590 = vmatprep.subr.mxu0 %v559
    %591 = vmatpush1.msra.mxu0 %v558
    %592 = vmatprep.subr.mxu0 %v561
    %593 = vmatpush1.msra.mxu0 %v560
    %594 = vmatprep.subr.mxu0 %v563
    %595 = vmatpush1.msra.mxu0 %v562
    %596 = vmatprep.subr.mxu0 %v565
    %597 = vmatpush1.msra.mxu0 %v564
    %598 = vmatprep.subr.mxu0 %v567
    %599 = vmatpush1.msra.mxu0 %v566
    %600 = vmatprep.subr.mxu0 %v569
    %601 = vmatpush1.msra.mxu0 %v568
    %602 = vmatprep.subr.mxu0 %v571
    %603 = vmatpush1.msra.mxu0 %v570
    %604 = vmatprep.subr.mxu0 %v573
    %605 = vmatpush1.msra.mxu0 %v572
    %606 = vmatprep.subr.mxu0 %v575
    %607 = vmatpush1.msra.mxu0 %v574
    %608 = vmatprep.subr.mxu0 %v577
    %609 = vmatpush1.msra.mxu0 %v576
    %610 = vmatprep.subr.mxu0 0.0
    %611 = vmatpush1.msra.mxu0 0.0
    %612 = vmatprep.subr.mxu0 0.0
    %613 = vmatpush1.msra.mxu0 0.0
    %614 = vmatprep.subr.mxu0 0.0
    %615 = vmatpush1.msra.mxu0 0.0
    %616 = vmatprep.subr.mxu0 0.0
    %617 = vmatpush1.msra.mxu0 0.0
    %618 = vmatprep.subr.mxu0 0.0
    %619 = vmatpush1.msra.mxu0 0.0
    %620 = vmatprep.subr.mxu0 0.0
    %621 = vmatpush1.msra.mxu0 0.0
    %622 = vmatprep.subr.mxu0 0.0
    %623 = vmatpush1.msra.mxu0 0.0
    %624 = vmatprep.subr.mxu0 0.0
    %625 = vmatpush1.msra.mxu0 0.0
    %626 = vmatprep.subr.mxu0 0.0
    %627 = vmatpush1.msra.mxu0 0.0
    %628 = vmatprep.subr.mxu0 0.0
    %629 = vmatpush1.msra.mxu0 0.0
    %630 = vmatprep.subr.mxu0 0.0
    %631 = vmatpush1.msra.mxu0 0.0
    %632 = vmatprep.subr.mxu0 0.0
    %633 = vmatpush1.msra.mxu0 0.0
    %634 = vmatprep.subr.mxu0 0.0
    %635 = vmatpush1.msra.mxu0 0.0
    %636 = vmatprep.subr.mxu0 0.0
    %637 = vmatpush1.msra.mxu0 0.0
    %638 = vmatprep.subr.mxu0 0.0
    %639 = vmatpush1.msra.mxu0 0.0
    %640 = vmatprep.subr.mxu0 0.0
    %641 = vmatpush1.msra.mxu0 0.0
    %642 = vmatprep.mubr.f32.mxu0 0.0
    %643 = vmatmul.mubr.f32.gmra.mrb[0].mxu0 %v125
    %v644 = vpop.f32.mrb[0].mxu0
    %v645 = vadd.f32 0.0, %v644
    %v646 = vpop.f32.mrb[0].mxu0
    %v647 = vadd.f32 0.0, %v646
    %648 = vdwg.mxu0
    %v649 = vadd.f32 %v471, %v645
    %v650 = vxor.u32 %v649, 2147483648
    %v651 = vmul.f32 %v650, 1.442695
    %v652 = vpow.pop %v651
    %v653 = vadd.f32 %v652, 1.0
    %v654 = vrcp.pop %v653
    %v655 = vmul.f32 1.0, %v654
    %v656 = vadd.f32 %v473, %v647
    %v657 = vxor.u32 %v656, 2147483648
    %v658 = vmul.f32 %v657, 1.442695
    %v659 = vpow.pop %v658
    %v660 = vadd.f32 %v659, 1.0
    %v661 = vrcp.pop %v660
    %v662 = vmul.f32 1.0, %v661
    %v663 = vmul.f32 %v662, %v125
    %s664 = scalar_lea.vmem [#allocation11], 128
    %v665 = vld [vmem:[%s664] sm:$0xff]
    %v666 = vld [vmem:[%s664 + $0x8] sm:$0xff]
    %v667 = vld [vmem:[%s664 + $0x10] sm:$0xff]
    %v668 = vld [vmem:[%s664 + $0x18] sm:$0xff]
    %v669 = vld [vmem:[%s664 + $0x20] sm:$0xff]
    %v670 = vld [vmem:[%s664 + $0x28] sm:$0xff]
    %v671 = vld [vmem:[%s664 + $0x30] sm:$0xff]
    %v672 = vld [vmem:[%s664 + $0x38] sm:$0xff]
    %v673 = vld [vmem:[%s664 + $0x40] sm:$0xff]
    %v674 = vld [vmem:[%s664 + $0x48] sm:$0xff]
    %v675 = vld [vmem:[%s664 + $0x50] sm:$0xff]
    %v676 = vld [vmem:[%s664 + $0x58] sm:$0xff]
    %v677 = vld [vmem:[%s664 + $0x60] sm:$0xff]
    %v678 = vld [vmem:[%s664 + $0x68] sm:$0xff]
    %v679 = vld [vmem:[%s664 + $0x70] sm:$0xff]
    %v680 = vld [vmem:[%s664 + $0x78] sm:$0xff]
    %681 = vmatprep.subr.mxu0 0.0
    %682 = vmatpush1.msra.mxu0 %v665
    %683 = vmatprep.subr.mxu0 0.0
    %684 = vmatpush1.msra.mxu0 %v666
    %685 = vmatprep.subr.mxu0 0.0
    %686 = vmatpush1.msra.mxu0 %v667
    %687 = vmatprep.subr.mxu0 0.0
    %688 = vmatpush1.msra.mxu0 %v668
    %689 = vmatprep.subr.mxu0 0.0
    %690 = vmatpush1.msra.mxu0 %v669
    %691 = vmatprep.subr.mxu0 0.0
    %692 = vmatpush1.msra.mxu0 %v670
    %693 = vmatprep.subr.mxu0 0.0
    %694 = vmatpush1.msra.mxu0 %v671
    %695 = vmatprep.subr.mxu0 0.0
    %696 = vmatpush1.msra.mxu0 %v672
    %697 = vmatprep.subr.mxu0 0.0
    %698 = vmatpush1.msra.mxu0 %v673
    %699 = vmatprep.subr.mxu0 0.0
    %700 = vmatpush1.msra.mxu0 %v674
    %701 = vmatprep.subr.mxu0 0.0
    %702 = vmatpush1.msra.mxu0 %v675
    %703 = vmatprep.subr.mxu0 0.0
    %704 = vmatpush1.msra.mxu0 %v676
    %705 = vmatprep.subr.mxu0 0.0
    %706 = vmatpush1.msra.mxu0 %v677
    %707 = vmatprep.subr.mxu0 0.0
    %708 = vmatpush1.msra.mxu0 %v678
    %709 = vmatprep.subr.mxu0 0.0
    %710 = vmatpush1.msra.mxu0 %v679
    %711 = vmatprep.subr.mxu0 0.0
    %712 = vmatpush1.msra.mxu0 %v680
    %713 = vmatprep.subr.mxu0 0.0
    %714 = vmatpush1.msra.mxu0 0.0
    %715 = vmatprep.subr.mxu0 0.0
    %716 = vmatpush1.msra.mxu0 0.0
    %717 = vmatprep.subr.mxu0 0.0
    %718 = vmatpush1.msra.mxu0 0.0
    %719 = vmatprep.subr.mxu0 0.0
    %720 = vmatpush1.msra.mxu0 0.0
    %721 = vmatprep.subr.mxu0 0.0
    %722 = vmatpush1.msra.mxu0 0.0
    %723 = vmatprep.subr.mxu0 0.0
    %724 = vmatpush1.msra.mxu0 0.0
    %725 = vmatprep.subr.mxu0 0.0
    %726 = vmatpush1.msra.mxu0 0.0
    %727 = vmatprep.subr.mxu0 0.0
    %728 = vmatpush1.msra.mxu0 0.0
    %729 = vmatprep.subr.mxu0 0.0
    %730 = vmatpush1.msra.mxu0 0.0
    %731 = vmatprep.subr.mxu0 0.0
    %732 = vmatpush1.msra.mxu0 0.0
    %733 = vmatprep.subr.mxu0 0.0
    %734 = vmatpush1.msra.mxu0 0.0
    %735 = vmatprep.subr.mxu0 0.0
    %736 = vmatpush1.msra.mxu0 0.0
    %737 = vmatprep.subr.mxu0 0.0
    %738 = vmatpush1.msra.mxu0 0.0
    %739 = vmatprep.subr.mxu0 0.0
    %740 = vmatpush1.msra.mxu0 0.0
    %741 = vmatprep.subr.mxu0 0.0
    %742 = vmatpush1.msra.mxu0 0.0
    %743 = vmatprep.subr.mxu0 0.0
    %744 = vmatpush1.msra.mxu0 0.0
    %745 = vmatprep.mubr.f32.mxu0 0.0
    %746 = vmatmul.mubr.f32.gmra.mrb[0].mxu0 %v663
    %v747 = vpop.f32.mrb[0].mxu0
    %v748 = vadd.f32 0.0, %v747
    %v749 = vpop.f32.mrb[0].mxu0
    %750 = vdwg.mxu0
    %v751 = vadd.f32 %v542, %v748
    %v752 = vtanh.pop %v751
    %v753 = vmul.f32 %v655, %v125
    %v754 = vsub.f32 1.0, %v655
    %v755 = vmul.f32 %v754, %v752
    %v756 = vadd.f32 %v753, %v755
    %757 = vst [vmem:[#allocation2] sm:$0xff] %v756
    %s758 = scalar_lea.vmem [#allocation3], 24
    %v759 = vld [vmem:[%s758] sm:$0xff]
    %v760 = vld [vmem:[%s758 + $0x8] sm:$0xff]
    %v761 = vld [vmem:[%s758 + $0x10] sm:$0xff]
    %v762 = vld [vmem:[#allocation9] sm:$0xff]
    %v763 = vld [vmem:[#allocation9 + $0x8] sm:$0xff]
    %v764 = vld [vmem:[#allocation9 + $0x10] sm:$0xff]
    %v765 = vld [vmem:[#allocation9 + $0x18] sm:$0xff]
    %v766 = vld [vmem:[#allocation9 + $0x20] sm:$0xff]
    %v767 = vld [vmem:[#allocation9 + $0x28] sm:$0xff]
    %v768 = vld [vmem:[#allocation9 + $0x30] sm:$0xff]
    %v769 = vld [vmem:[#allocation9 + $0x38] sm:$0xff]
    %v770 = vld [vmem:[#allocation9 + $0x40] sm:$0xff]
    %v771 = vld [vmem:[#allocation9 + $0x48] sm:$0xff]
    %v772 = vld [vmem:[#allocation9 + $0x50] sm:$0xff]
    %v773 = vld [vmem:[#allocation9 + $0x58] sm:$0xff]
    %v774 = vld [vmem:[#allocation9 + $0x60] sm:$0xff]
    %v775 = vld [vmem:[#allocation9 + $0x68] sm:$0xff]
    %v776 = vld [vmem:[#allocation9 + $0x70] sm:$0xff]
    %v777 = vld [vmem:[#allocation9 + $0x78] sm:$0xff]
    %v778 = vld [vmem:[#allocation9 + $0x80] sm:$0xff]
    %v779 = vld [vmem:[#allocation9 + $0x88] sm:$0xff]
    %v780 = vld [vmem:[#allocation9 + $0x90] sm:$0xff]
    %v781 = vld [vmem:[#allocation9 + $0x98] sm:$0xff]
    %v782 = vld [vmem:[#allocation9 + $0xa0] sm:$0xff]
    %v783 = vld [vmem:[#allocation9 + $0xa8] sm:$0xff]
    %v784 = vld [vmem:[#allocation9 + $0xb0] sm:$0xff]
    %v785 = vld [vmem:[#allocation9 + $0xb8] sm:$0xff]
    %v786 = vld [vmem:[#allocation9 + $0xc0] sm:$0xff]
    %v787 = vld [vmem:[#allocation9 + $0xc8] sm:$0xff]
    %v788 = vld [vmem:[#allocation9 + $0xd0] sm:$0xff]
    %v789 = vld [vmem:[#allocation9 + $0xd8] sm:$0xff]
    %v790 = vld [vmem:[#allocation9 + $0xe0] sm:$0xff]
    %v791 = vld [vmem:[#allocation9 + $0xe8] sm:$0xff]
    %v792 = vld [vmem:[#allocation9 + $0xf0] sm:$0xff]
    %v793 = vld [vmem:[#allocation9 + $0xf8] sm:$0xff]
    %794 = vmatprep.subr.mxu0 %v763
    %795 = vmatpush1.msra.mxu0 %v762
    %796 = vmatprep.subr.mxu0 %v765
    %797 = vmatpush1.msra.mxu0 %v764
    %798 = vmatprep.subr.mxu0 %v767
    %799 = vmatpush1.msra.mxu0 %v766
    %800 = vmatprep.subr.mxu0 %v769
    %801 = vmatpush1.msra.mxu0 %v768
    %802 = vmatprep.subr.mxu0 %v771
    %803 = vmatpush1.msra.mxu0 %v770
    %804 = vmatprep.subr.mxu0 %v773
    %805 = vmatpush1.msra.mxu0 %v772
    %806 = vmatprep.subr.mxu0 %v775
    %807 = vmatpush1.msra.mxu0 %v774
    %808 = vmatprep.subr.mxu0 %v777
    %809 = vmatpush1.msra.mxu0 %v776
    %810 = vmatprep.subr.mxu0 %v779
    %811 = vmatpush1.msra.mxu0 %v778
    %812 = vmatprep.subr.mxu0 %v781
    %813 = vmatpush1.msra.mxu0 %v780
    %814 = vmatprep.subr.mxu0 %v783
    %815 = vmatpush1.msra.mxu0 %v782
    %816 = vmatprep.subr.mxu0 %v785
    %817 = vmatpush1.msra.mxu0 %v784
    %818 = vmatprep.subr.mxu0 %v787
    %819 = vmatpush1.msra.mxu0 %v786
    %820 = vmatprep.subr.mxu0 %v789
    %821 = vmatpush1.msra.mxu0 %v788
    %822 = vmatprep.subr.mxu0 %v791
    %823 = vmatpush1.msra.mxu0 %v790
    %824 = vmatprep.subr.mxu0 %v793
    %825 = vmatpush1.msra.mxu0 %v792
    %826 = vmatprep.subr.mxu0 0.0
    %827 = vmatpush1.msra.mxu0 0.0
    %828 = vmatprep.subr.mxu0 0.0
    %829 = vmatpush1.msra.mxu0 0.0
    %830 = vmatprep.subr.mxu0 0.0
    %831 = vmatpush1.msra.mxu0 0.0
    %832 = vmatprep.subr.mxu0 0.0
    %833 = vmatpush1.msra.mxu0 0.0
    %834 = vmatprep.subr.mxu0 0.0
    %835 = vmatpush1.msra.mxu0 0.0
    %836 = vmatprep.subr.mxu0 0.0
    %837 = vmatpush1.msra.mxu0 0.0
    %838 = vmatprep.subr.mxu0 0.0
    %839 = vmatpush1.msra.mxu0 0.0
    %840 = vmatprep.subr.mxu0 0.0
    %841 = vmatpush1.msra.mxu0 0.0
    %842 = vmatprep.subr.mxu0 0.0
    %843 = vmatpush1.msra.mxu0 0.0
    %844 = vmatprep.subr.mxu0 0.0
    %845 = vmatpush1.msra.mxu0 0.0
    %846 = vmatprep.subr.mxu0 0.0
    %847 = vmatpush1.msra.mxu0 0.0
    %848 = vmatprep.subr.mxu0 0.0
    %849 = vmatpush1.msra.mxu0 0.0
    %850 = vmatprep.subr.mxu0 0.0
    %851 = vmatpush1.msra.mxu0 0.0
    %852 = vmatprep.subr.mxu0 0.0
    %853 = vmatpush1.msra.mxu0 0.0
    %854 = vmatprep.subr.mxu0 0.0
    %855 = vmatpush1.msra.mxu0 0.0
    %856 = vmatprep.subr.mxu0 0.0
    %857 = vmatpush1.msra.mxu0 0.0
    %858 = vmatprep.mubr.f32.mxu0 0.0
    %859 = vmatmul.mubr.f32.gmra.mrb[0].mxu0 %v355
    %v860 = vpop.f32.mrb[0].mxu0
    %v861 = vadd.f32 0.0, %v860
    %v862 = vpop.f32.mrb[0].mxu0
    %v863 = vadd.f32 0.0, %v862
    %864 = vdwg.mxu0
    %v865 = vadd.f32 %v759, %v861
    %v866 = vxor.u32 %v865, 2147483648
    %v867 = vmul.f32 %v866, 1.442695
    %v868 = vpow.pop %v867
    %v869 = vadd.f32 %v868, 1.0
    %v870 = vrcp.pop %v869
    %v871 = vmul.f32 1.0, %v870
    %v872 = vadd.f32 %v760, %v863
    %v873 = vxor.u32 %v872, 2147483648
    %v874 = vmul.f32 %v873, 1.442695
    %v875 = vpow.pop %v874
    %v876 = vadd.f32 %v875, 1.0
    %v877 = vrcp.pop %v876
    %v878 = vmul.f32 1.0, %v877
    %v879 = vmul.f32 %v878, %v355
    %v880 = vld [vmem:[#allocation11] sm:$0xff]
    %v881 = vld [vmem:[#allocation11 + $0x8] sm:$0xff]
    %v882 = vld [vmem:[#allocation11 + $0x10] sm:$0xff]
    %v883 = vld [vmem:[#allocation11 + $0x18] sm:$0xff]
    %v884 = vld [vmem:[#allocation11 + $0x20] sm:$0xff]
    %v885 = vld [vmem:[#allocation11 + $0x28] sm:$0xff]
    %v886 = vld [vmem:[#allocation11 + $0x30] sm:$0xff]
    %v887 = vld [vmem:[#allocation11 + $0x38] sm:$0xff]
    %v888 = vld [vmem:[#allocation11 + $0x40] sm:$0xff]
    %v889 = vld [vmem:[#allocation11 + $0x48] sm:$0xff]
    %v890 = vld [vmem:[#allocation11 + $0x50] sm:$0xff]
    %v891 = vld [vmem:[#allocation11 + $0x58] sm:$0xff]
    %v892 = vld [vmem:[#allocation11 + $0x60] sm:$0xff]
    %v893 = vld [vmem:[#allocation11 + $0x68] sm:$0xff]
    %v894 = vld [vmem:[#allocation11 + $0x70] sm:$0xff]
    %v895 = vld [vmem:[#allocation11 + $0x78] sm:$0xff]
    %896 = vmatprep.subr.mxu0 0.0
    %897 = vmatpush1.msra.mxu0 %v880
    %898 = vmatprep.subr.mxu0 0.0
    %899 = vmatpush1.msra.mxu0 %v881
    %900 = vmatprep.subr.mxu0 0.0
    %901 = vmatpush1.msra.mxu0 %v882
    %902 = vmatprep.subr.mxu0 0.0
    %903 = vmatpush1.msra.mxu0 %v883
    %904 = vmatprep.subr.mxu0 0.0
    %905 = vmatpush1.msra.mxu0 %v884
    %906 = vmatprep.subr.mxu0 0.0
    %907 = vmatpush1.msra.mxu0 %v885
    %908 = vmatprep.subr.mxu0 0.0
    %909 = vmatpush1.msra.mxu0 %v886
    %910 = vmatprep.subr.mxu0 0.0
    %911 = vmatpush1.msra.mxu0 %v887
    %912 = vmatprep.subr.mxu0 0.0
    %913 = vmatpush1.msra.mxu0 %v888
    %914 = vmatprep.subr.mxu0 0.0
    %915 = vmatpush1.msra.mxu0 %v889
    %916 = vmatprep.subr.mxu0 0.0
    %917 = vmatpush1.msra.mxu0 %v890
    %918 = vmatprep.subr.mxu0 0.0
    %919 = vmatpush1.msra.mxu0 %v891
    %920 = vmatprep.subr.mxu0 0.0
    %921 = vmatpush1.msra.mxu0 %v892
    %922 = vmatprep.subr.mxu0 0.0
    %923 = vmatpush1.msra.mxu0 %v893
    %924 = vmatprep.subr.mxu0 0.0
    %925 = vmatpush1.msra.mxu0 %v894
    %926 = vmatprep.subr.mxu0 0.0
    %927 = vmatpush1.msra.mxu0 %v895
    %928 = vmatprep.subr.mxu0 0.0
    %929 = vmatpush1.msra.mxu0 0.0
    %930 = vmatprep.subr.mxu0 0.0
    %931 = vmatpush1.msra.mxu0 0.0
    %932 = vmatprep.subr.mxu0 0.0
    %933 = vmatpush1.msra.mxu0 0.0
    %934 = vmatprep.subr.mxu0 0.0
    %935 = vmatpush1.msra.mxu0 0.0
    %936 = vmatprep.subr.mxu0 0.0
    %937 = vmatpush1.msra.mxu0 0.0
    %938 = vmatprep.subr.mxu0 0.0
    %939 = vmatpush1.msra.mxu0 0.0
    %940 = vmatprep.subr.mxu0 0.0
    %941 = vmatpush1.msra.mxu0 0.0
    %942 = vmatprep.subr.mxu0 0.0
    %943 = vmatpush1.msra.mxu0 0.0
    %944 = vmatprep.subr.mxu0 0.0
    %945 = vmatpush1.msra.mxu0 0.0
    %946 = vmatprep.subr.mxu0 0.0
    %947 = vmatpush1.msra.mxu0 0.0
    %948 = vmatprep.subr.mxu0 0.0
    %949 = vmatpush1.msra.mxu0 0.0
    %950 = vmatprep.subr.mxu0 0.0
    %951 = vmatpush1.msra.mxu0 0.0
    %952 = vmatprep.subr.mxu0 0.0
    %953 = vmatpush1.msra.mxu0 0.0
    %954 = vmatprep.subr.mxu0 0.0
    %955 = vmatpush1.msra.mxu0 0.0
    %956 = vmatprep.subr.mxu0 0.0
    %957 = vmatpush1.msra.mxu0 0.0
    %958 = vmatprep.subr.mxu0 0.0
    %959 = vmatpush1.msra.mxu0 0.0
    %960 = vmatprep.mubr.f32.mxu0 0.0
    %961 = vmatmul.mubr.f32.gmra.mrb[0].mxu0 %v879
    %v962 = vpop.f32.mrb[0].mxu0
    %v963 = vadd.f32 0.0, %v962
    %v964 = vpop.f32.mrb[0].mxu0
    %965 = vdwg.mxu0
    %v966 = vadd.f32 %v761, %v963
    %v967 = vtanh.pop %v966
    %v968 = vmul.f32 %v871, %v355
    %v969 = vsub.f32 1.0, %v871
    %v970 = vmul.f32 %v969, %v967
    %v971 = vadd.f32 %v968, %v970
    %v972 = vld [vmem:[#allocation8] sm:$0xff]
    %v973 = vld [vmem:[#allocation8 + $0x8] sm:$0xff]
    %v974 = vld [vmem:[#allocation8 + $0x10] sm:$0xff]
    %v975 = vld [vmem:[#allocation8 + $0x18] sm:$0xff]
    %v976 = vld [vmem:[#allocation8 + $0x20] sm:$0xff]
    %v977 = vld [vmem:[#allocation8 + $0x28] sm:$0xff]
    %v978 = vld [vmem:[#allocation8 + $0x30] sm:$0xff]
    %v979 = vld [vmem:[#allocation8 + $0x38] sm:$0xff]
    %v980 = vld [vmem:[#allocation8 + $0x40] sm:$0xff]
    %v981 = vld [vmem:[#allocation8 + $0x48] sm:$0xff]
    %v982 = vld [vmem:[#allocation8 + $0x50] sm:$0xff]
    %v983 = vld [vmem:[#allocation8 + $0x58] sm:$0xff]
    %v984 = vld [vmem:[#allocation8 + $0x60] sm:$0xff]
    %v985 = vld [vmem:[#allocation8 + $0x68] sm:$0xff]
    %v986 = vld [vmem:[#allocation8 + $0x70] sm:$0xff]
    %v987 = vld [vmem:[#allocation8 + $0x78] sm:$0xff]
    %v988 = vld [vmem:[#allocation8 + $0x80] sm:$0xff]
    %v989 = vld [vmem:[#allocation8 + $0x88] sm:$0xff]
    %v990 = vld [vmem:[#allocation8 + $0x90] sm:$0xff]
    %v991 = vld [vmem:[#allocation8 + $0x98] sm:$0xff]
    %v992 = vld [vmem:[#allocation8 + $0xa0] sm:$0xff]
    %v993 = vld [vmem:[#allocation8 + $0xa8] sm:$0xff]
    %v994 = vld [vmem:[#allocation8 + $0xb0] sm:$0xff]
    %v995 = vld [vmem:[#allocation8 + $0xb8] sm:$0xff]
    %v996 = vld [vmem:[#allocation8 + $0xc0] sm:$0xff]
    %v997 = vld [vmem:[#allocation8 + $0xc8] sm:$0xff]
    %v998 = vld [vmem:[#allocation8 + $0xd0] sm:$0xff]
    %v999 = vld [vmem:[#allocation8 + $0xd8] sm:$0xff]
    %v1000 = vld [vmem:[#allocation8 + $0xe0] sm:$0xff]
    %v1001 = vld [vmem:[#allocation8 + $0xe8] sm:$0xff]
    %v1002 = vld [vmem:[#allocation8 + $0xf0] sm:$0xff]
    %v1003 = vld [vmem:[#allocation8 + $0xf8] sm:$0xff]
    %v1004 = vld [vmem:[#allocation8 + $0x100] sm:$0xff]
    %v1005 = vld [vmem:[#allocation8 + $0x108] sm:$0xff]
    %v1006 = vld [vmem:[#allocation8 + $0x110] sm:$0xff]
    %v1007 = vld [vmem:[#allocation8 + $0x118] sm:$0xff]
    %v1008 = vld [vmem:[#allocation8 + $0x120] sm:$0xff]
    %v1009 = vld [vmem:[#allocation8 + $0x128] sm:$0xff]
    %v1010 = vld [vmem:[#allocation8 + $0x130] sm:$0xff]
    %v1011 = vld [vmem:[#allocation8 + $0x138] sm:$0xff]
    %v1012 = vld [vmem:[#allocation8 + $0x140] sm:$0xff]
    %v1013 = vld [vmem:[#allocation8 + $0x148] sm:$0xff]
    %v1014 = vld [vmem:[#allocation8 + $0x150] sm:$0xff]
    %v1015 = vld [vmem:[#allocation8 + $0x158] sm:$0xff]
    %v1016 = vld [vmem:[#allocation8 + $0x160] sm:$0xff]
    %v1017 = vld [vmem:[#allocation8 + $0x168] sm:$0xff]
    %v1018 = vld [vmem:[#allocation8 + $0x170] sm:$0xff]
    %v1019 = vld [vmem:[#allocation8 + $0x178] sm:$0xff]
    %1020 = vmatprep.subr.mxu0 %v973
    %1021 = vmatpush1.msra.mxu0 %v972
    %1022 = vmatprep.subr.mxu0 %v976
    %1023 = vmatpush1.msra.mxu0 %v975
    %1024 = vmatprep.subr.mxu0 %v979
    %1025 = vmatpush1.msra.mxu0 %v978
    %1026 = vmatprep.subr.mxu0 %v982
    %1027 = vmatpush1.msra.mxu0 %v981
    %1028 = vmatprep.subr.mxu0 %v985
    %1029 = vmatpush1.msra.mxu0 %v984
    %1030 = vmatprep.subr.mxu0 %v988
    %1031 = vmatpush1.msra.mxu0 %v987
    %1032 = vmatprep.subr.mxu0 %v991
    %1033 = vmatpush1.msra.mxu0 %v990
    %1034 = vmatprep.subr.mxu0 %v994
    %1035 = vmatpush1.msra.mxu0 %v993
    %1036 = vmatprep.subr.mxu0 %v997
    %1037 = vmatpush1.msra.mxu0 %v996
    %1038 = vmatprep.subr.mxu0 %v1000
    %1039 = vmatpush1.msra.mxu0 %v999
    %1040 = vmatprep.subr.mxu0 %v1003
    %1041 = vmatpush1.msra.mxu0 %v1002
    %1042 = vmatprep.subr.mxu0 %v1006
    %1043 = vmatpush1.msra.mxu0 %v1005
    %1044 = vmatprep.subr.mxu0 %v1009
    %1045 = vmatpush1.msra.mxu0 %v1008
    %1046 = vmatprep.subr.mxu0 %v1012
    %1047 = vmatpush1.msra.mxu0 %v1011
    %1048 = vmatprep.subr.mxu0 %v1015
    %1049 = vmatpush1.msra.mxu0 %v1014
    %1050 = vmatprep.subr.mxu0 %v1018
    %1051 = vmatpush1.msra.mxu0 %v1017
    %1052 = vmatprep.subr.mxu0 0.0
    %1053 = vmatpush1.msra.mxu0 0.0
    %1054 = vmatprep.subr.mxu0 0.0
    %1055 = vmatpush1.msra.mxu0 0.0
    %1056 = vmatprep.subr.mxu0 0.0
    %1057 = vmatpush1.msra.mxu0 0.0
    %1058 = vmatprep.subr.mxu0 0.0
    %1059 = vmatpush1.msra.mxu0 0.0
    %1060 = vmatprep.subr.mxu0 0.0
    %1061 = vmatpush1.msra.mxu0 0.0
    %1062 = vmatprep.subr.mxu0 0.0
    %1063 = vmatpush1.msra.mxu0 0.0
    %1064 = vmatprep.subr.mxu0 0.0
    %1065 = vmatpush1.msra.mxu0 0.0
    %1066 = vmatprep.subr.mxu0 0.0
    %1067 = vmatpush1.msra.mxu0 0.0
    %1068 = vmatprep.subr.mxu0 0.0
    %1069 = vmatpush1.msra.mxu0 0.0
    %1070 = vmatprep.subr.mxu0 0.0
    %1071 = vmatpush1.msra.mxu0 0.0
    %1072 = vmatprep.subr.mxu0 0.0
    %1073 = vmatpush1.msra.mxu0 0.0
    %1074 = vmatprep.subr.mxu0 0.0
    %1075 = vmatpush1.msra.mxu0 0.0
    %1076 = vmatprep.subr.mxu0 0.0
    %1077 = vmatpush1.msra.mxu0 0.0
    %1078 = vmatprep.subr.mxu0 0.0
    %1079 = vmatpush1.msra.mxu0 0.0
    %1080 = vmatprep.subr.mxu0 0.0
    %1081 = vmatpush1.msra.mxu0 0.0
    %1082 = vmatprep.subr.mxu0 0.0
    %1083 = vmatpush1.msra.mxu0 0.0
    %1084 = vmatprep.mubr.f32.mxu0 0.0
    %1085 = vmatmul.mubr.f32.gmra.mrb[0].mxu0 %v971
    %v1086 = vpop.f32.mrb[0].mxu0
    %v1087 = vadd.f32 %v131, %v1086
    %v1088 = vpop.f32.mrb[0].mxu0
    %v1089 = vadd.f32 %v135, %v1088
    %1090 = vdwg.mxu0
    %1091 = vmatprep.subr.mxu0 0.0
    %1092 = vmatpush1.msra.mxu0 %v974
    %1093 = vmatprep.subr.mxu0 0.0
    %1094 = vmatpush1.msra.mxu0 %v977
    %1095 = vmatprep.subr.mxu0 0.0
    %1096 = vmatpush1.msra.mxu0 %v980
    %1097 = vmatprep.subr.mxu0 0.0
    %1098 = vmatpush1.msra.mxu0 %v983
    %1099 = vmatprep.subr.mxu0 0.0
    %1100 = vmatpush1.msra.mxu0 %v986
    %1101 = vmatprep.subr.mxu0 0.0
    %1102 = vmatpush1.msra.mxu0 %v989
    %1103 = vmatprep.subr.mxu0 0.0
    %1104 = vmatpush1.msra.mxu0 %v992
    %1105 = vmatprep.subr.mxu0 0.0
    %1106 = vmatpush1.msra.mxu0 %v995
    %1107 = vmatprep.subr.mxu0 0.0
    %1108 = vmatpush1.msra.mxu0 %v998
    %1109 = vmatprep.subr.mxu0 0.0
    %1110 = vmatpush1.msra.mxu0 %v1001
    %1111 = vmatprep.subr.mxu0 0.0
    %1112 = vmatpush1.msra.mxu0 %v1004
    %1113 = vmatprep.subr.mxu0 0.0
    %1114 = vmatpush1.msra.mxu0 %v1007
    %1115 = vmatprep.subr.mxu0 0.0
    %1116 = vmatpush1.msra.mxu0 %v1010
    %1117 = vmatprep.subr.mxu0 0.0
    %1118 = vmatpush1.msra.mxu0 %v1013
    %1119 = vmatprep.subr.mxu0 0.0
    %1120 = vmatpush1.msra.mxu0 %v1016
    %1121 = vmatprep.subr.mxu0 0.0
    %1122 = vmatpush1.msra.mxu0 %v1019
    %1123 = vmatprep.subr.mxu0 0.0
    %1124 = vmatpush1.msra.mxu0 0.0
    %1125 = vmatprep.subr.mxu0 0.0
    %1126 = vmatpush1.msra.mxu0 0.0
    %1127 = vmatprep.subr.mxu0 0.0
    %1128 = vmatpush1.msra.mxu0 0.0
    %1129 = vmatprep.subr.mxu0 0.0
    %1130 = vmatpush1.msra.mxu0 0.0
    %1131 = vmatprep.subr.mxu0 0.0
    %1132 = vmatpush1.msra.mxu0 0.0
    %1133 = vmatprep.subr.mxu0 0.0
    %1134 = vmatpush1.msra.mxu0 0.0
    %1135 = vmatprep.subr.mxu0 0.0
    %1136 = vmatpush1.msra.mxu0 0.0
    %1137 = vmatprep.subr.mxu0 0.0
    %1138 = vmatpush1.msra.mxu0 0.0
    %1139 = vmatprep.subr.mxu0 0.0
    %1140 = vmatpush1.msra.mxu0 0.0
    %1141 = vmatprep.subr.mxu0 0.0
    %1142 = vmatpush1.msra.mxu0 0.0
    %1143 = vmatprep.subr.mxu0 0.0
    %1144 = vmatpush1.msra.mxu0 0.0
    %1145 = vmatprep.subr.mxu0 0.0
    %1146 = vmatpush1.msra.mxu0 0.0
    %1147 = vmatprep.subr.mxu0 0.0
    %1148 = vmatpush1.msra.mxu0 0.0
    %1149 = vmatprep.subr.mxu0 0.0
    %1150 = vmatpush1.msra.mxu0 0.0
    %1151 = vmatprep.subr.mxu0 0.0
    %1152 = vmatpush1.msra.mxu0 0.0
    %1153 = vmatprep.subr.mxu0 0.0
    %1154 = vmatpush1.msra.mxu0 0.0
    %1155 = vmatprep.mubr.f32.mxu0 0.0
    %1156 = vmatmul.mubr.f32.gmra.mrb[0].mxu0 %v971
    %v1157 = vpop.f32.mrb[0].mxu0
    %v1158 = vadd.f32 %v139, %v1157
    %v1159 = vpop.f32.mrb[0].mxu0
    %1160 = vdwg.mxu0
    %v1161 = vld [vmem:[%s545] sm:$0xff]
    %v1162 = vld [vmem:[%s545 + $0x8] sm:$0xff]
    %v1163 = vld [vmem:[%s545 + $0x10] sm:$0xff]
    %v1164 = vld [vmem:[%s545 + $0x18] sm:$0xff]
    %v1165 = vld [vmem:[%s545 + $0x20] sm:$0xff]
    %v1166 = vld [vmem:[%s545 + $0x28] sm:$0xff]
    %v1167 = vld [vmem:[%s545 + $0x30] sm:$0xff]
    %v1168 = vld [vmem:[%s545 + $0x38] sm:$0xff]
    %v1169 = vld [vmem:[%s545 + $0x40] sm:$0xff]
    %v1170 = vld [vmem:[%s545 + $0x48] sm:$0xff]
    %v1171 = vld [vmem:[%s545 + $0x50] sm:$0xff]
    %v1172 = vld [vmem:[%s545 + $0x58] sm:$0xff]
    %v1173 = vld [vmem:[%s545 + $0x60] sm:$0xff]
    %v1174 = vld [vmem:[%s545 + $0x68] sm:$0xff]
    %v1175 = vld [vmem:[%s545 + $0x70] sm:$0xff]
    %v1176 = vld [vmem:[%s545 + $0x78] sm:$0xff]
    %v1177 = vld [vmem:[%s545 + $0x80] sm:$0xff]
    %v1178 = vld [vmem:[%s545 + $0x88] sm:$0xff]
    %v1179 = vld [vmem:[%s545 + $0x90] sm:$0xff]
    %v1180 = vld [vmem:[%s545 + $0x98] sm:$0xff]
    %v1181 = vld [vmem:[%s545 + $0xa0] sm:$0xff]
    %v1182 = vld [vmem:[%s545 + $0xa8] sm:$0xff]
    %v1183 = vld [vmem:[%s545 + $0xb0] sm:$0xff]
    %v1184 = vld [vmem:[%s545 + $0xb8] sm:$0xff]
    %v1185 = vld [vmem:[%s545 + $0xc0] sm:$0xff]
    %v1186 = vld [vmem:[%s545 + $0xc8] sm:$0xff]
    %v1187 = vld [vmem:[%s545 + $0xd0] sm:$0xff]
    %v1188 = vld [vmem:[%s545 + $0xd8] sm:$0xff]
    %v1189 = vld [vmem:[%s545 + $0xe0] sm:$0xff]
    %v1190 = vld [vmem:[%s545 + $0xe8] sm:$0xff]
    %v1191 = vld [vmem:[%s545 + $0xf0] sm:$0xff]
    %v1192 = vld [vmem:[%s545 + $0xf8] sm:$0xff]
    %1193 = vmatprep.subr.mxu0 %v1162
    %1194 = vmatpush1.msra.mxu0 %v1161
    %1195 = vmatprep.subr.mxu0 %v1164
    %1196 = vmatpush1.msra.mxu0 %v1163
    %1197 = vmatprep.subr.mxu0 %v1166
    %1198 = vmatpush1.msra.mxu0 %v1165
    %1199 = vmatprep.subr.mxu0 %v1168
    %1200 = vmatpush1.msra.mxu0 %v1167
    %1201 = vmatprep.subr.mxu0 %v1170
    %1202 = vmatpush1.msra.mxu0 %v1169
    %1203 = vmatprep.subr.mxu0 %v1172
    %1204 = vmatpush1.msra.mxu0 %v1171
    %1205 = vmatprep.subr.mxu0 %v1174
    %1206 = vmatpush1.msra.mxu0 %v1173
    %1207 = vmatprep.subr.mxu0 %v1176
    %1208 = vmatpush1.msra.mxu0 %v1175
    %1209 = vmatprep.subr.mxu0 %v1178
    %1210 = vmatpush1.msra.mxu0 %v1177
    %1211 = vmatprep.subr.mxu0 %v1180
    %1212 = vmatpush1.msra.mxu0 %v1179
    %1213 = vmatprep.subr.mxu0 %v1182
    %1214 = vmatpush1.msra.mxu0 %v1181
    %1215 = vmatprep.subr.mxu0 %v1184
    %1216 = vmatpush1.msra.mxu0 %v1183
    %1217 = vmatprep.subr.mxu0 %v1186
    %1218 = vmatpush1.msra.mxu0 %v1185
    %1219 = vmatprep.subr.mxu0 %v1188
    %1220 = vmatpush1.msra.mxu0 %v1187
    %1221 = vmatprep.subr.mxu0 %v1190
    %1222 = vmatpush1.msra.mxu0 %v1189
    %1223 = vmatprep.subr.mxu0 %v1192
    %1224 = vmatpush1.msra.mxu0 %v1191
    %1225 = vmatprep.subr.mxu0 0.0
    %1226 = vmatpush1.msra.mxu0 0.0
    %1227 = vmatprep.subr.mxu0 0.0
    %1228 = vmatpush1.msra.mxu0 0.0
    %1229 = vmatprep.subr.mxu0 0.0
    %1230 = vmatpush1.msra.mxu0 0.0
    %1231 = vmatprep.subr.mxu0 0.0
    %1232 = vmatpush1.msra.mxu0 0.0
    %1233 = vmatprep.subr.mxu0 0.0
    %1234 = vmatpush1.msra.mxu0 0.0
    %1235 = vmatprep.subr.mxu0 0.0
    %1236 = vmatpush1.msra.mxu0 0.0
    %1237 = vmatprep.subr.mxu0 0.0
    %1238 = vmatpush1.msra.mxu0 0.0
    %1239 = vmatprep.subr.mxu0 0.0
    %1240 = vmatpush1.msra.mxu0 0.0
    %1241 = vmatprep.subr.mxu0 0.0
    %1242 = vmatpush1.msra.mxu0 0.0
    %1243 = vmatprep.subr.mxu0 0.0
    %1244 = vmatpush1.msra.mxu0 0.0
    %1245 = vmatprep.subr.mxu0 0.0
    %1246 = vmatpush1.msra.mxu0 0.0
    %1247 = vmatprep.subr.mxu0 0.0
    %1248 = vmatpush1.msra.mxu0 0.0
    %1249 = vmatprep.subr.mxu0 0.0
    %1250 = vmatpush1.msra.mxu0 0.0
    %1251 = vmatprep.subr.mxu0 0.0
    %1252 = vmatpush1.msra.mxu0 0.0
    %1253 = vmatprep.subr.mxu0 0.0
    %1254 = vmatpush1.msra.mxu0 0.0
    %1255 = vmatprep.subr.mxu0 0.0
    %1256 = vmatpush1.msra.mxu0 0.0
    %1257 = vmatprep.mubr.f32.mxu0 0.0
    %1258 = vmatmul.mubr.f32.gmra.mrb[0].mxu0 %v756
    %v1259 = vpop.f32.mrb[0].mxu0
    %v1260 = vadd.f32 0.0, %v1259
    %v1261 = vpop.f32.mrb[0].mxu0
    %v1262 = vadd.f32 0.0, %v1261
    %1263 = vdwg.mxu0
    %v1264 = vadd.f32 %v1087, %v1260
    %v1265 = vxor.u32 %v1264, 2147483648
    %v1266 = vmul.f32 %v1265, 1.442695
    %v1267 = vpow.pop %v1266
    %v1268 = vadd.f32 %v1267, 1.0
    %v1269 = vrcp.pop %v1268
    %v1270 = vmul.f32 1.0, %v1269
    %v1271 = vadd.f32 %v1089, %v1262
    %v1272 = vxor.u32 %v1271, 2147483648
    %v1273 = vmul.f32 %v1272, 1.442695
    %v1274 = vpow.pop %v1273
    %v1275 = vadd.f32 %v1274, 1.0
    %v1276 = vrcp.pop %v1275
    %v1277 = vmul.f32 1.0, %v1276
    %v1278 = vmul.f32 %v1277, %v756
    %v1279 = vld [vmem:[%s664] sm:$0xff]
    %v1280 = vld [vmem:[%s664 + $0x8] sm:$0xff]
    %v1281 = vld [vmem:[%s664 + $0x10] sm:$0xff]
    %v1282 = vld [vmem:[%s664 + $0x18] sm:$0xff]
    %v1283 = vld [vmem:[%s664 + $0x20] sm:$0xff]
    %v1284 = vld [vmem:[%s664 + $0x28] sm:$0xff]
    %v1285 = vld [vmem:[%s664 + $0x30] sm:$0xff]
    %v1286 = vld [vmem:[%s664 + $0x38] sm:$0xff]
    %v1287 = vld [vmem:[%s664 + $0x40] sm:$0xff]
    %v1288 = vld [vmem:[%s664 + $0x48] sm:$0xff]
    %v1289 = vld [vmem:[%s664 + $0x50] sm:$0xff]
    %v1290 = vld [vmem:[%s664 + $0x58] sm:$0xff]
    %v1291 = vld [vmem:[%s664 + $0x60] sm:$0xff]
    %v1292 = vld [vmem:[%s664 + $0x68] sm:$0xff]
    %v1293 = vld [vmem:[%s664 + $0x70] sm:$0xff]
    %v1294 = vld [vmem:[%s664 + $0x78] sm:$0xff]
    %1295 = vmatprep.subr.mxu0 0.0
    %1296 = vmatpush1.msra.mxu0 %v1279
    %1297 = vmatprep.subr.mxu0 0.0
    %1298 = vmatpush1.msra.mxu0 %v1280
    %1299 = vmatprep.subr.mxu0 0.0
    %1300 = vmatpush1.msra.mxu0 %v1281
    %1301 = vmatprep.subr.mxu0 0.0
    %1302 = vmatpush1.msra.mxu0 %v1282
    %1303 = vmatprep.subr.mxu0 0.0
    %1304 = vmatpush1.msra.mxu0 %v1283
    %1305 = vmatprep.subr.mxu0 0.0
    %1306 = vmatpush1.msra.mxu0 %v1284
    %1307 = vmatprep.subr.mxu0 0.0
    %1308 = vmatpush1.msra.mxu0 %v1285
    %1309 = vmatprep.subr.mxu0 0.0
    %1310 = vmatpush1.msra.mxu0 %v1286
    %1311 = vmatprep.subr.mxu0 0.0
    %1312 = vmatpush1.msra.mxu0 %v1287
    %1313 = vmatprep.subr.mxu0 0.0
    %1314 = vmatpush1.msra.mxu0 %v1288
    %1315 = vmatprep.subr.mxu0 0.0
    %1316 = vmatpush1.msra.mxu0 %v1289
    %1317 = vmatprep.subr.mxu0 0.0
    %1318 = vmatpush1.msra.mxu0 %v1290
    %1319 = vmatprep.subr.mxu0 0.0
    %1320 = vmatpush1.msra.mxu0 %v1291
    %1321 = vmatprep.subr.mxu0 0.0
    %1322 = vmatpush1.msra.mxu0 %v1292
    %1323 = vmatprep.subr.mxu0 0.0
    %1324 = vmatpush1.msra.mxu0 %v1293
    %1325 = vmatprep.subr.mxu0 0.0
    %1326 = vmatpush1.msra.mxu0 %v1294
    %1327 = vmatprep.subr.mxu0 0.0
    %1328 = vmatpush1.msra.mxu0 0.0
    %1329 = vmatprep.subr.mxu0 0.0
    %1330 = vmatpush1.msra.mxu0 0.0
    %1331 = vmatprep.subr.mxu0 0.0
    %1332 = vmatpush1.msra.mxu0 0.0
    %1333 = vmatprep.subr.mxu0 0.0
    %1334 = vmatpush1.msra.mxu0 0.0
    %1335 = vmatprep.subr.mxu0 0.0
    %1336 = vmatpush1.msra.mxu0 0.0
    %1337 = vmatprep.subr.mxu0 0.0
    %1338 = vmatpush1.msra.mxu0 0.0
    %1339 = vmatprep.subr.mxu0 0.0
    %1340 = vmatpush1.msra.mxu0 0.0
    %1341 = vmatprep.subr.mxu0 0.0
    %1342 = vmatpush1.msra.mxu0 0.0
    %1343 = vmatprep.subr.mxu0 0.0
    %1344 = vmatpush1.msra.mxu0 0.0
    %1345 = vmatprep.subr.mxu0 0.0
    %1346 = vmatpush1.msra.mxu0 0.0
    %1347 = vmatprep.subr.mxu0 0.0
    %1348 = vmatpush1.msra.mxu0 0.0
    %1349 = vmatprep.subr.mxu0 0.0
    %1350 = vmatpush1.msra.mxu0 0.0
    %1351 = vmatprep.subr.mxu0 0.0
    %1352 = vmatpush1.msra.mxu0 0.0
    %1353 = vmatprep.subr.mxu0 0.0
    %1354 = vmatpush1.msra.mxu0 0.0
    %1355 = vmatprep.subr.mxu0 0.0
    %1356 = vmatpush1.msra.mxu0 0.0
    %1357 = vmatprep.subr.mxu0 0.0
    %1358 = vmatpush1.msra.mxu0 0.0
    %1359 = vmatprep.mubr.f32.mxu0 0.0
    %1360 = vmatmul.mubr.f32.gmra.mrb[0].mxu0 %v1278
    %v1361 = vpop.f32.mrb[0].mxu0
    %v1362 = vadd.f32 0.0, %v1361
    %v1363 = vpop.f32.mrb[0].mxu0
    %1364 = vdwg.mxu0
    %v1365 = vadd.f32 %v1158, %v1362
    %v1366 = vtanh.pop %v1365
    %v1367 = vmul.f32 %v1270, %v756
    %v1368 = vsub.f32 1.0, %v1270
    %v1369 = vmul.f32 %v1368, %v1366
    %v1370 = vadd.f32 %v1367, %v1369
    %s1371 = scalar_lea.vmem [#allocation2], 8
    %1372 = vst [vmem:[%s1371] sm:$0xff] %v1370
    %s1373 = scalar_lea.vmem [#allocation3], 48
    %v1374 = vld [vmem:[%s1373] sm:$0xff]
    %v1375 = vld [vmem:[%s1373 + $0x8] sm:$0xff]
    %v1376 = vld [vmem:[%s1373 + $0x10] sm:$0xff]
    %v1377 = vld [vmem:[#allocation9] sm:$0xff]
    %v1378 = vld [vmem:[#allocation9 + $0x8] sm:$0xff]
    %v1379 = vld [vmem:[#allocation9 + $0x10] sm:$0xff]
    %v1380 = vld [vmem:[#allocation9 + $0x18] sm:$0xff]
    %v1381 = vld [vmem:[#allocation9 + $0x20] sm:$0xff]
    %v1382 = vld [vmem:[#allocation9 + $0x28] sm:$0xff]
    %v1383 = vld [vmem:[#allocation9 + $0x30] sm:$0xff]
    %v1384 = vld [vmem:[#allocation9 + $0x38] sm:$0xff]
    %v1385 = vld [vmem:[#allocation9 + $0x40] sm:$0xff]
    %v1386 = vld [vmem:[#allocation9 + $0x48] sm:$0xff]
    %v1387 = vld [vmem:[#allocation9 + $0x50] sm:$0xff]
    %v1388 = vld [vmem:[#allocation9 + $0x58] sm:$0xff]
    %v1389 = vld [vmem:[#allocation9 + $0x60] sm:$0xff]
    %v1390 = vld [vmem:[#allocation9 + $0x68] sm:$0xff]
    %v1391 = vld [vmem:[#allocation9 + $0x70] sm:$0xff]
    %v1392 = vld [vmem:[#allocation9 + $0x78] sm:$0xff]
    %v1393 = vld [vmem:[#allocation9 + $0x80] sm:$0xff]
    %v1394 = vld [vmem:[#allocation9 + $0x88] sm:$0xff]
    %v1395 = vld [vmem:[#allocation9 + $0x90] sm:$0xff]
    %v1396 = vld [vmem:[#allocation9 + $0x98] sm:$0xff]
    %v1397 = vld [vmem:[#allocation9 + $0xa0] sm:$0xff]
    %v1398 = vld [vmem:[#allocation9 + $0xa8] sm:$0xff]
    %v1399 = vld [vmem:[#allocation9 + $0xb0] sm:$0xff]
    %v1400 = vld [vmem:[#allocation9 + $0xb8] sm:$0xff]
    %v1401 = vld [vmem:[#allocation9 + $0xc0] sm:$0xff]
    %v1402 = vld [vmem:[#allocation9 + $0xc8] sm:$0xff]
    %v1403 = vld [vmem:[#allocation9 + $0xd0] sm:$0xff]
    %v1404 = vld [vmem:[#allocation9 + $0xd8] sm:$0xff]
    %v1405 = vld [vmem:[#allocation9 + $0xe0] sm:$0xff]
    %v1406 = vld [vmem:[#allocation9 + $0xe8] sm:$0xff]
    %v1407 = vld [vmem:[#allocation9 + $0xf0] sm:$0xff]
    %v1408 = vld [vmem:[#allocation9 + $0xf8] sm:$0xff]
    %1409 = vmatprep.subr.mxu0 %v1378
    %1410 = vmatpush1.msra.mxu0 %v1377
    %1411 = vmatprep.subr.mxu0 %v1380
    %1412 = vmatpush1.msra.mxu0 %v1379
    %1413 = vmatprep.subr.mxu0 %v1382
    %1414 = vmatpush1.msra.mxu0 %v1381
    %1415 = vmatprep.subr.mxu0 %v1384
    %1416 = vmatpush1.msra.mxu0 %v1383
    %1417 = vmatprep.subr.mxu0 %v1386
    %1418 = vmatpush1.msra.mxu0 %v1385
    %1419 = vmatprep.subr.mxu0 %v1388
    %1420 = vmatpush1.msra.mxu0 %v1387
    %1421 = vmatprep.subr.mxu0 %v1390
    %1422 = vmatpush1.msra.mxu0 %v1389
    %1423 = vmatprep.subr.mxu0 %v1392
    %1424 = vmatpush1.msra.mxu0 %v1391
    %1425 = vmatprep.subr.mxu0 %v1394
    %1426 = vmatpush1.msra.mxu0 %v1393
    %1427 = vmatprep.subr.mxu0 %v1396
    %1428 = vmatpush1.msra.mxu0 %v1395
    %1429 = vmatprep.subr.mxu0 %v1398
    %1430 = vmatpush1.msra.mxu0 %v1397
    %1431 = vmatprep.subr.mxu0 %v1400
    %1432 = vmatpush1.msra.mxu0 %v1399
    %1433 = vmatprep.subr.mxu0 %v1402
    %1434 = vmatpush1.msra.mxu0 %v1401
    %1435 = vmatprep.subr.mxu0 %v1404
    %1436 = vmatpush1.msra.mxu0 %v1403
    %1437 = vmatprep.subr.mxu0 %v1406
    %1438 = vmatpush1.msra.mxu0 %v1405
    %1439 = vmatprep.subr.mxu0 %v1408
    %1440 = vmatpush1.msra.mxu0 %v1407
    %1441 = vmatprep.subr.mxu0 0.0
    %1442 = vmatpush1.msra.mxu0 0.0
    %1443 = vmatprep.subr.mxu0 0.0
    %1444 = vmatpush1.msra.mxu0 0.0
    %1445 = vmatprep.subr.mxu0 0.0
    %1446 = vmatpush1.msra.mxu0 0.0
    %1447 = vmatprep.subr.mxu0 0.0
    %1448 = vmatpush1.msra.mxu0 0.0
    %1449 = vmatprep.subr.mxu0 0.0
    %1450 = vmatpush1.msra.mxu0 0.0
    %1451 = vmatprep.subr.mxu0 0.0
    %1452 = vmatpush1.msra.mxu0 0.0
    %1453 = vmatprep.subr.mxu0 0.0
    %1454 = vmatpush1.msra.mxu0 0.0
    %1455 = vmatprep.subr.mxu0 0.0
    %1456 = vmatpush1.msra.mxu0 0.0
    %1457 = vmatprep.subr.mxu0 0.0
    %1458 = vmatpush1.msra.mxu0 0.0
    %1459 = vmatprep.subr.mxu0 0.0
    %1460 = vmatpush1.msra.mxu0 0.0
    %1461 = vmatprep.subr.mxu0 0.0
    %1462 = vmatpush1.msra.mxu0 0.0
    %1463 = vmatprep.subr.mxu0 0.0
    %1464 = vmatpush1.msra.mxu0 0.0
    %1465 = vmatprep.subr.mxu0 0.0
    %1466 = vmatpush1.msra.mxu0 0.0
    %1467 = vmatprep.subr.mxu0 0.0
    %1468 = vmatpush1.msra.mxu0 0.0
    %1469 = vmatprep.subr.mxu0 0.0
    %1470 = vmatpush1.msra.mxu0 0.0
    %1471 = vmatprep.subr.mxu0 0.0
    %1472 = vmatpush1.msra.mxu0 0.0
    %1473 = vmatprep.mubr.f32.mxu0 0.0
    %1474 = vmatmul.mubr.f32.gmra.mrb[0].mxu0 %v971
    %v1475 = vpop.f32.mrb[0].mxu0
    %v1476 = vadd.f32 0.0, %v1475
    %v1477 = vpop.f32.mrb[0].mxu0
    %v1478 = vadd.f32 0.0, %v1477
    %1479 = vdwg.mxu0
    %v1480 = vadd.f32 %v1374, %v1476
    %v1481 = vxor.u32 %v1480, 2147483648
    %v1482 = vmul.f32 %v1481, 1.442695
    %v1483 = vpow.pop %v1482
    %v1484 = vadd.f32 %v1483, 1.0
    %v1485 = vrcp.pop %v1484
    %v1486 = vmul.f32 1.0, %v1485
    %v1487 = vadd.f32 %v1375, %v1478
    %v1488 = vxor.u32 %v1487, 2147483648
    %v1489 = vmul.f32 %v1488, 1.442695
    %v1490 = vpow.pop %v1489
    %v1491 = vadd.f32 %v1490, 1.0
    %v1492 = vrcp.pop %v1491
    %v1493 = vmul.f32 1.0, %v1492
    %v1494 = vmul.f32 %v1493, %v971
    %v1495 = vld [vmem:[#allocation11] sm:$0xff]
    %v1496 = vld [vmem:[#allocation11 + $0x8] sm:$0xff]
    %v1497 = vld [vmem:[#allocation11 + $0x10] sm:$0xff]
    %v1498 = vld [vmem:[#allocation11 + $0x18] sm:$0xff]
    %v1499 = vld [vmem:[#allocation11 + $0x20] sm:$0xff]
    %v1500 = vld [vmem:[#allocation11 + $0x28] sm:$0xff]
    %v1501 = vld [vmem:[#allocation11 + $0x30] sm:$0xff]
    %v1502 = vld [vmem:[#allocation11 + $0x38] sm:$0xff]
    %v1503 = vld [vmem:[#allocation11 + $0x40] sm:$0xff]
    %v1504 = vld [vmem:[#allocation11 + $0x48] sm:$0xff]
    %v1505 = vld [vmem:[#allocation11 + $0x50] sm:$0xff]
    %v1506 = vld [vmem:[#allocation11 + $0x58] sm:$0xff]
    %v1507 = vld [vmem:[#allocation11 + $0x60] sm:$0xff]
    %v1508 = vld [vmem:[#allocation11 + $0x68] sm:$0xff]
    %v1509 = vld [vmem:[#allocation11 + $0x70] sm:$0xff]
    %v1510 = vld [vmem:[#allocation11 + $0x78] sm:$0xff]
    %1511 = vmatprep.subr.mxu0 0.0
    %1512 = vmatpush1.msra.mxu0 %v1495
    %1513 = vmatprep.subr.mxu0 0.0
    %1514 = vmatpush1.msra.mxu0 %v1496
    %1515 = vmatprep.subr.mxu0 0.0
    %1516 = vmatpush1.msra.mxu0 %v1497
    %1517 = vmatprep.subr.mxu0 0.0
    %1518 = vmatpush1.msra.mxu0 %v1498
    %1519 = vmatprep.subr.mxu0 0.0
    %1520 = vmatpush1.msra.mxu0 %v1499
    %1521 = vmatprep.subr.mxu0 0.0
    %1522 = vmatpush1.msra.mxu0 %v1500
    %1523 = vmatprep.subr.mxu0 0.0
    %1524 = vmatpush1.msra.mxu0 %v1501
    %1525 = vmatprep.subr.mxu0 0.0
    %1526 = vmatpush1.msra.mxu0 %v1502
    %1527 = vmatprep.subr.mxu0 0.0
    %1528 = vmatpush1.msra.mxu0 %v1503
    %1529 = vmatprep.subr.mxu0 0.0
    %1530 = vmatpush1.msra.mxu0 %v1504
    %1531 = vmatprep.subr.mxu0 0.0
    %1532 = vmatpush1.msra.mxu0 %v1505
    %1533 = vmatprep.subr.mxu0 0.0
    %1534 = vmatpush1.msra.mxu0 %v1506
    %1535 = vmatprep.subr.mxu0 0.0
    %1536 = vmatpush1.msra.mxu0 %v1507
    %1537 = vmatprep.subr.mxu0 0.0
    %1538 = vmatpush1.msra.mxu0 %v1508
    %1539 = vmatprep.subr.mxu0 0.0
    %1540 = vmatpush1.msra.mxu0 %v1509
    %1541 = vmatprep.subr.mxu0 0.0
    %1542 = vmatpush1.msra.mxu0 %v1510
    %1543 = vmatprep.subr.mxu0 0.0
    %1544 = vmatpush1.msra.mxu0 0.0
    %1545 = vmatprep.subr.mxu0 0.0
    %1546 = vmatpush1.msra.mxu0 0.0
    %1547 = vmatprep.subr.mxu0 0.0
    %1548 = vmatpush1.msra.mxu0 0.0
    %1549 = vmatprep.subr.mxu0 0.0
    %1550 = vmatpush1.msra.mxu0 0.0
    %1551 = vmatprep.subr.mxu0 0.0
    %1552 = vmatpush1.msra.mxu0 0.0
    %1553 = vmatprep.subr.mxu0 0.0
    %1554 = vmatpush1.msra.mxu0 0.0
    %1555 = vmatprep.subr.mxu0 0.0
    %1556 = vmatpush1.msra.mxu0 0.0
    %1557 = vmatprep.subr.mxu0 0.0
    %1558 = vmatpush1.msra.mxu0 0.0
    %1559 = vmatprep.subr.mxu0 0.0
    %1560 = vmatpush1.msra.mxu0 0.0
    %1561 = vmatprep.subr.mxu0 0.0
    %1562 = vmatpush1.msra.mxu0 0.0
    %1563 = vmatprep.subr.mxu0 0.0
    %1564 = vmatpush1.msra.mxu0 0.0
    %1565 = vmatprep.subr.mxu0 0.0
    %1566 = vmatpush1.msra.mxu0 0.0
    %1567 = vmatprep.subr.mxu0 0.0
    %1568 = vmatpush1.msra.mxu0 0.0
    %1569 = vmatprep.subr.mxu0 0.0
    %1570 = vmatpush1.msra.mxu0 0.0
    %1571 = vmatprep.subr.mxu0 0.0
    %1572 = vmatpush1.msra.mxu0 0.0
    %1573 = vmatprep.subr.mxu0 0.0
    %1574 = vmatpush1.msra.mxu0 0.0
    %1575 = vmatprep.mubr.f32.mxu0 0.0
    %1576 = vmatmul.mubr.f32.gmra.mrb[0].mxu0 %v1494
    %v1577 = vpop.f32.mrb[0].mxu0
    %v1578 = vadd.f32 0.0, %v1577
    %v1579 = vpop.f32.mrb[0].mxu0
    %1580 = vdwg.mxu0
    %v1581 = vadd.f32 %v1376, %v1578
    %v1582 = vtanh.pop %v1581
    %v1583 = vmul.f32 %v1486, %v971
    %v1584 = vsub.f32 1.0, %v1486
    %v1585 = vmul.f32 %v1584, %v1582
    %v1586 = vadd.f32 %v1583, %v1585
    %v1587 = vld [vmem:[#allocation8] sm:$0xff]
    %v1588 = vld [vmem:[#allocation8 + $0x8] sm:$0xff]
    %v1589 = vld [vmem:[#allocation8 + $0x10] sm:$0xff]
    %v1590 = vld [vmem:[#allocation8 + $0x18] sm:$0xff]
    %v1591 = vld [vmem:[#allocation8 + $0x20] sm:$0xff]
    %v1592 = vld [vmem:[#allocation8 + $0x28] sm:$0xff]
    %v1593 = vld [vmem:[#allocation8 + $0x30] sm:$0xff]
    %v1594 = vld [vmem:[#allocation8 + $0x38] sm:$0xff]
    %v1595 = vld [vmem:[#allocation8 + $0x40] sm:$0xff]
    %v1596 = vld [vmem:[#allocation8 + $0x48] sm:$0xff]
    %v1597 = vld [vmem:[#allocation8 + $0x50] sm:$0xff]
    %v1598 = vld [vmem:[#allocation8 + $0x58] sm:$0xff]
    %v1599 = vld [vmem:[#allocation8 + $0x60] sm:$0xff]
    %v1600 = vld [vmem:[#allocation8 + $0x68] sm:$0xff]
    %v1601 = vld [vmem:[#allocation8 + $0x70] sm:$0xff]
    %v1602 = vld [vmem:[#allocation8 + $0x78] sm:$0xff]
    %v1603 = vld [vmem:[#allocation8 + $0x80] sm:$0xff]
    %v1604 = vld [vmem:[#allocation8 + $0x88] sm:$0xff]
    %v1605 = vld [vmem:[#allocation8 + $0x90] sm:$0xff]
    %v1606 = vld [vmem:[#allocation8 + $0x98] sm:$0xff]
    %v1607 = vld [vmem:[#allocation8 + $0xa0] sm:$0xff]
    %v1608 = vld [vmem:[#allocation8 + $0xa8] sm:$0xff]
    %v1609 = vld [vmem:[#allocation8 + $0xb0] sm:$0xff]
    %v1610 = vld [vmem:[#allocation8 + $0xb8] sm:$0xff]
    %v1611 = vld [vmem:[#allocation8 + $0xc0] sm:$0xff]
    %v1612 = vld [vmem:[#allocation8 + $0xc8] sm:$0xff]
    %v1613 = vld [vmem:[#allocation8 + $0xd0] sm:$0xff]
    %v1614 = vld [vmem:[#allocation8 + $0xd8] sm:$0xff]
    %v1615 = vld [vmem:[#allocation8 + $0xe0] sm:$0xff]
    %v1616 = vld [vmem:[#allocation8 + $0xe8] sm:$0xff]
    %v1617 = vld [vmem:[#allocation8 + $0xf0] sm:$0xff]
    %v1618 = vld [vmem:[#allocation8 + $0xf8] sm:$0xff]
    %v1619 = vld [vmem:[#allocation8 + $0x100] sm:$0xff]
    %v1620 = vld [vmem:[#allocation8 + $0x108] sm:$0xff]
    %v1621 = vld [vmem:[#allocation8 + $0x110] sm:$0xff]
    %v1622 = vld [vmem:[#allocation8 + $0x118] sm:$0xff]
    %v1623 = vld [vmem:[#allocation8 + $0x120] sm:$0xff]
    %v1624 = vld [vmem:[#allocation8 + $0x128] sm:$0xff]
    %v1625 = vld [vmem:[#allocation8 + $0x130] sm:$0xff]
    %v1626 = vld [vmem:[#allocation8 + $0x138] sm:$0xff]
    %v1627 = vld [vmem:[#allocation8 + $0x140] sm:$0xff]
    %v1628 = vld [vmem:[#allocation8 + $0x148] sm:$0xff]
    %v1629 = vld [vmem:[#allocation8 + $0x150] sm:$0xff]
    %v1630 = vld [vmem:[#allocation8 + $0x158] sm:$0xff]
    %v1631 = vld [vmem:[#allocation8 + $0x160] sm:$0xff]
    %v1632 = vld [vmem:[#allocation8 + $0x168] sm:$0xff]
    %v1633 = vld [vmem:[#allocation8 + $0x170] sm:$0xff]
    %v1634 = vld [vmem:[#allocation8 + $0x178] sm:$0xff]
    %1635 = vmatprep.subr.mxu0 %v1588
    %1636 = vmatpush1.msra.mxu0 %v1587
    %1637 = vmatprep.subr.mxu0 %v1591
    %1638 = vmatpush1.msra.mxu0 %v1590
    %1639 = vmatprep.subr.mxu0 %v1594
    %1640 = vmatpush1.msra.mxu0 %v1593
    %1641 = vmatprep.subr.mxu0 %v1597
    %1642 = vmatpush1.msra.mxu0 %v1596
    %1643 = vmatprep.subr.mxu0 %v1600
    %1644 = vmatpush1.msra.mxu0 %v1599
    %1645 = vmatprep.subr.mxu0 %v1603
    %1646 = vmatpush1.msra.mxu0 %v1602
    %1647 = vmatprep.subr.mxu0 %v1606
    %1648 = vmatpush1.msra.mxu0 %v1605
    %1649 = vmatprep.subr.mxu0 %v1609
    %1650 = vmatpush1.msra.mxu0 %v1608
    %1651 = vmatprep.subr.mxu0 %v1612
    %1652 = vmatpush1.msra.mxu0 %v1611
    %1653 = vmatprep.subr.mxu0 %v1615
    %1654 = vmatpush1.msra.mxu0 %v1614
    %1655 = vmatprep.subr.mxu0 %v1618
    %1656 = vmatpush1.msra.mxu0 %v1617
    %1657 = vmatprep.subr.mxu0 %v1621
    %1658 = vmatpush1.msra.mxu0 %v1620
    %1659 = vmatprep.subr.mxu0 %v1624
    %1660 = vmatpush1.msra.mxu0 %v1623
    %1661 = vmatprep.subr.mxu0 %v1627
    %1662 = vmatpush1.msra.mxu0 %v1626
    %1663 = vmatprep.subr.mxu0 %v1630
    %1664 = vmatpush1.msra.mxu0 %v1629
    %1665 = vmatprep.subr.mxu0 %v1633
    %1666 = vmatpush1.msra.mxu0 %v1632
    %1667 = vmatprep.subr.mxu0 0.0
    %1668 = vmatpush1.msra.mxu0 0.0
    %1669 = vmatprep.subr.mxu0 0.0
    %1670 = vmatpush1.msra.mxu0 0.0
    %1671 = vmatprep.subr.mxu0 0.0
    %1672 = vmatpush1.msra.mxu0 0.0
    %1673 = vmatprep.subr.mxu0 0.0
    %1674 = vmatpush1.msra.mxu0 0.0
    %1675 = vmatprep.subr.mxu0 0.0
    %1676 = vmatpush1.msra.mxu0 0.0
    %1677 = vmatprep.subr.mxu0 0.0
    %1678 = vmatpush1.msra.mxu0 0.0
    %1679 = vmatprep.subr.mxu0 0.0
    %1680 = vmatpush1.msra.mxu0 0.0
    %1681 = vmatprep.subr.mxu0 0.0
    %1682 = vmatpush1.msra.mxu0 0.0
    %1683 = vmatprep.subr.mxu0 0.0
    %1684 = vmatpush1.msra.mxu0 0.0
    %1685 = vmatprep.subr.mxu0 0.0
    %1686 = vmatpush1.msra.mxu0 0.0
    %1687 = vmatprep.subr.mxu0 0.0
    %1688 = vmatpush1.msra.mxu0 0.0
    %1689 = vmatprep.subr.mxu0 0.0
    %1690 = vmatpush1.msra.mxu0 0.0
    %1691 = vmatprep.subr.mxu0 0.0
    %1692 = vmatpush1.msra.mxu0 0.0
    %1693 = vmatprep.subr.mxu0 0.0
    %1694 = vmatpush1.msra.mxu0 0.0
    %1695 = vmatprep.subr.mxu0 0.0
    %1696 = vmatpush1.msra.mxu0 0.0
    %1697 = vmatprep.subr.mxu0 0.0
    %1698 = vmatpush1.msra.mxu0 0.0
    %1699 = vmatprep.mubr.f32.mxu0 0.0
    %1700 = vmatmul.mubr.f32.gmra.mrb[0].mxu0 %v1586
    %v1701 = vpop.f32.mrb[0].mxu0
    %v1702 = vadd.f32 %v131, %v1701
    %v1703 = vpop.f32.mrb[0].mxu0
    %v1704 = vadd.f32 %v135, %v1703
    %1705 = vdwg.mxu0
    %1706 = vmatprep.subr.mxu0 0.0
    %1707 = vmatpush1.msra.mxu0 %v1589
    %1708 = vmatprep.subr.mxu0 0.0
    %1709 = vmatpush1.msra.mxu0 %v1592
    %1710 = vmatprep.subr.mxu0 0.0
    %1711 = vmatpush1.msra.mxu0 %v1595
    %1712 = vmatprep.subr.mxu0 0.0
    %1713 = vmatpush1.msra.mxu0 %v1598
    %1714 = vmatprep.subr.mxu0 0.0
    %1715 = vmatpush1.msra.mxu0 %v1601
    %1716 = vmatprep.subr.mxu0 0.0
    %1717 = vmatpush1.msra.mxu0 %v1604
    %1718 = vmatprep.subr.mxu0 0.0
    %1719 = vmatpush1.msra.mxu0 %v1607
    %1720 = vmatprep.subr.mxu0 0.0
    %1721 = vmatpush1.msra.mxu0 %v1610
    %1722 = vmatprep.subr.mxu0 0.0
    %1723 = vmatpush1.msra.mxu0 %v1613
    %1724 = vmatprep.subr.mxu0 0.0
    %1725 = vmatpush1.msra.mxu0 %v1616
    %1726 = vmatprep.subr.mxu0 0.0
    %1727 = vmatpush1.msra.mxu0 %v1619
    %1728 = vmatprep.subr.mxu0 0.0
    %1729 = vmatpush1.msra.mxu0 %v1622
    %1730 = vmatprep.subr.mxu0 0.0
    %1731 = vmatpush1.msra.mxu0 %v1625
    %1732 = vmatprep.subr.mxu0 0.0
    %1733 = vmatpush1.msra.mxu0 %v1628
    %1734 = vmatprep.subr.mxu0 0.0
    %1735 = vmatpush1.msra.mxu0 %v1631
    %1736 = vmatprep.subr.mxu0 0.0
    %1737 = vmatpush1.msra.mxu0 %v1634
    %1738 = vmatprep.subr.mxu0 0.0
    %1739 = vmatpush1.msra.mxu0 0.0
    %1740 = vmatprep.subr.mxu0 0.0
    %1741 = vmatpush1.msra.mxu0 0.0
    %1742 = vmatprep.subr.mxu0 0.0
    %1743 = vmatpush1.msra.mxu0 0.0
    %1744 = vmatprep.subr.mxu0 0.0
    %1745 = vmatpush1.msra.mxu0 0.0
    %1746 = vmatprep.subr.mxu0 0.0
    %1747 = vmatpush1.msra.mxu0 0.0
    %1748 = vmatprep.subr.mxu0 0.0
    %1749 = vmatpush1.msra.mxu0 0.0
    %1750 = vmatprep.subr.mxu0 0.0
    %1751 = vmatpush1.msra.mxu0 0.0
    %1752 = vmatprep.subr.mxu0 0.0
    %1753 = vmatpush1.msra.mxu0 0.0
    %1754 = vmatprep.subr.mxu0 0.0
    %1755 = vmatpush1.msra.mxu0 0.0
    %1756 = vmatprep.subr.mxu0 0.0
    %1757 = vmatpush1.msra.mxu0 0.0
    %1758 = vmatprep.subr.mxu0 0.0
    %1759 = vmatpush1.msra.mxu0 0.0
    %1760 = vmatprep.subr.mxu0 0.0
    %1761 = vmatpush1.msra.mxu0 0.0
    %1762 = vmatprep.subr.mxu0 0.0
    %1763 = vmatpush1.msra.mxu0 0.0
    %1764 = vmatprep.subr.mxu0 0.0
    %1765 = vmatpush1.msra.mxu0 0.0
    %1766 = vmatprep.subr.mxu0 0.0
    %1767 = vmatpush1.msra.mxu0 0.0
    %1768 = vmatprep.subr.mxu0 0.0
    %1769 = vmatpush1.msra.mxu0 0.0
    %1770 = vmatprep.mubr.f32.mxu0 0.0
    %1771 = vmatmul.mubr.f32.gmra.mrb[0].mxu0 %v1586
    %v1772 = vpop.f32.mrb[0].mxu0
    %v1773 = vadd.f32 %v139, %v1772
    %v1774 = vpop.f32.mrb[0].mxu0
    %1775 = vdwg.mxu0
    %v1776 = vld [vmem:[%s545] sm:$0xff]
    %v1777 = vld [vmem:[%s545 + $0x8] sm:$0xff]
    %v1778 = vld [vmem:[%s545 + $0x10] sm:$0xff]
    %v1779 = vld [vmem:[%s545 + $0x18] sm:$0xff]
    %v1780 = vld [vmem:[%s545 + $0x20] sm:$0xff]
    %v1781 = vld [vmem:[%s545 + $0x28] sm:$0xff]
    %v1782 = vld [vmem:[%s545 + $0x30] sm:$0xff]
    %v1783 = vld [vmem:[%s545 + $0x38] sm:$0xff]
    %v1784 = vld [vmem:[%s545 + $0x40] sm:$0xff]
    %v1785 = vld [vmem:[%s545 + $0x48] sm:$0xff]
    %v1786 = vld [vmem:[%s545 + $0x50] sm:$0xff]
    %v1787 = vld [vmem:[%s545 + $0x58] sm:$0xff]
    %v1788 = vld [vmem:[%s545 + $0x60] sm:$0xff]
    %v1789 = vld [vmem:[%s545 + $0x68] sm:$0xff]
    %v1790 = vld [vmem:[%s545 + $0x70] sm:$0xff]
    %v1791 = vld [vmem:[%s545 + $0x78] sm:$0xff]
    %v1792 = vld [vmem:[%s545 + $0x80] sm:$0xff]
    %v1793 = vld [vmem:[%s545 + $0x88] sm:$0xff]
    %v1794 = vld [vmem:[%s545 + $0x90] sm:$0xff]
    %v1795 = vld [vmem:[%s545 + $0x98] sm:$0xff]
    %v1796 = vld [vmem:[%s545 + $0xa0] sm:$0xff]
    %v1797 = vld [vmem:[%s545 + $0xa8] sm:$0xff]
    %v1798 = vld [vmem:[%s545 + $0xb0] sm:$0xff]
    %v1799 = vld [vmem:[%s545 + $0xb8] sm:$0xff]
    %v1800 = vld [vmem:[%s545 + $0xc0] sm:$0xff]
    %v1801 = vld [vmem:[%s545 + $0xc8] sm:$0xff]
    %v1802 = vld [vmem:[%s545 + $0xd0] sm:$0xff]
    %v1803 = vld [vmem:[%s545 + $0xd8] sm:$0xff]
    %v1804 = vld [vmem:[%s545 + $0xe0] sm:$0xff]
    %v1805 = vld [vmem:[%s545 + $0xe8] sm:$0xff]
    %v1806 = vld [vmem:[%s545 + $0xf0] sm:$0xff]
    %v1807 = vld [vmem:[%s545 + $0xf8] sm:$0xff]
    %1808 = vmatprep.subr.mxu0 %v1777
    %1809 = vmatpush1.msra.mxu0 %v1776
    %1810 = vmatprep.subr.mxu0 %v1779
    %1811 = vmatpush1.msra.mxu0 %v1778
    %1812 = vmatprep.subr.mxu0 %v1781
    %1813 = vmatpush1.msra.mxu0 %v1780
    %1814 = vmatprep.subr.mxu0 %v1783
    %1815 = vmatpush1.msra.mxu0 %v1782
    %1816 = vmatprep.subr.mxu0 %v1785
    %1817 = vmatpush1.msra.mxu0 %v1784
    %1818 = vmatprep.subr.mxu0 %v1787
    %1819 = vmatpush1.msra.mxu0 %v1786
    %1820 = vmatprep.subr.mxu0 %v1789
    %1821 = vmatpush1.msra.mxu0 %v1788
    %1822 = vmatprep.subr.mxu0 %v1791
    %1823 = vmatpush1.msra.mxu0 %v1790
    %1824 = vmatprep.subr.mxu0 %v1793
    %1825 = vmatpush1.msra.mxu0 %v1792
    %1826 = vmatprep.subr.mxu0 %v1795
    %1827 = vmatpush1.msra.mxu0 %v1794
    %1828 = vmatprep.subr.mxu0 %v1797
    %1829 = vmatpush1.msra.mxu0 %v1796
    %1830 = vmatprep.subr.mxu0 %v1799
    %1831 = vmatpush1.msra.mxu0 %v1798
    %1832 = vmatprep.subr.mxu0 %v1801
    %1833 = vmatpush1.msra.mxu0 %v1800
    %1834 = vmatprep.subr.mxu0 %v1803
    %1835 = vmatpush1.msra.mxu0 %v1802
    %1836 = vmatprep.subr.mxu0 %v1805
    %1837 = vmatpush1.msra.mxu0 %v1804
    %1838 = vmatprep.subr.mxu0 %v1807
    %1839 = vmatpush1.msra.mxu0 %v1806
    %1840 = vmatprep.subr.mxu0 0.0
    %1841 = vmatpush1.msra.mxu0 0.0
    %1842 = vmatprep.subr.mxu0 0.0
    %1843 = vmatpush1.msra.mxu0 0.0
    %1844 = vmatprep.subr.mxu0 0.0
    %1845 = vmatpush1.msra.mxu0 0.0
    %1846 = vmatprep.subr.mxu0 0.0
    %1847 = vmatpush1.msra.mxu0 0.0
    %1848 = vmatprep.subr.mxu0 0.0
    %1849 = vmatpush1.msra.mxu0 0.0
    %1850 = vmatprep.subr.mxu0 0.0
    %1851 = vmatpush1.msra.mxu0 0.0
    %1852 = vmatprep.subr.mxu0 0.0
    %1853 = vmatpush1.msra.mxu0 0.0
    %1854 = vmatprep.subr.mxu0 0.0
    %1855 = vmatpush1.msra.mxu0 0.0
    %1856 = vmatprep.subr.mxu0 0.0
    %1857 = vmatpush1.msra.mxu0 0.0
    %1858 = vmatprep.subr.mxu0 0.0
    %1859 = vmatpush1.msra.mxu0 0.0
    %1860 = vmatprep.subr.mxu0 0.0
    %1861 = vmatpush1.msra.mxu0 0.0
    %1862 = vmatprep.subr.mxu0 0.0
    %1863 = vmatpush1.msra.mxu0 0.0
    %1864 = vmatprep.subr.mxu0 0.0
    %1865 = vmatpush1.msra.mxu0 0.0
    %1866 = vmatprep.subr.mxu0 0.0
    %1867 = vmatpush1.msra.mxu0 0.0
    %1868 = vmatprep.subr.mxu0 0.0
    %1869 = vmatpush1.msra.mxu0 0.0
    %1870 = vmatprep.subr.mxu0 0.0
    %1871 = vmatpush1.msra.mxu0 0.0
    %1872 = vmatprep.mubr.f32.mxu0 0.0
    %1873 = vmatmul.mubr.f32.gmra.mrb[0].mxu0 %v1370
    %v1874 = vpop.f32.mrb[0].mxu0
    %v1875 = vadd.f32 0.0, %v1874
    %v1876 = vpop.f32.mrb[0].mxu0
    %v1877 = vadd.f32 0.0, %v1876
    %1878 = vdwg.mxu0
    %v1879 = vadd.f32 %v1702, %v1875
    %v1880 = vxor.u32 %v1879, 2147483648
    %v1881 = vmul.f32 %v1880, 1.442695
    %v1882 = vpow.pop %v1881
    %v1883 = vadd.f32 %v1882, 1.0
    %v1884 = vrcp.pop %v1883
    %v1885 = vmul.f32 1.0, %v1884
    %v1886 = vadd.f32 %v1704, %v1877
    %v1887 = vxor.u32 %v1886, 2147483648
    %v1888 = vmul.f32 %v1887, 1.442695
    %v1889 = vpow.pop %v1888
    %v1890 = vadd.f32 %v1889, 1.0
    %v1891 = vrcp.pop %v1890
    %v1892 = vmul.f32 1.0, %v1891
    %v1893 = vmul.f32 %v1892, %v1370
    %v1894 = vld [vmem:[%s664] sm:$0xff]
    %v1895 = vld [vmem:[%s664 + $0x8] sm:$0xff]
    %v1896 = vld [vmem:[%s664 + $0x10] sm:$0xff]
    %v1897 = vld [vmem:[%s664 + $0x18] sm:$0xff]
    %v1898 = vld [vmem:[%s664 + $0x20] sm:$0xff]
    %v1899 = vld [vmem:[%s664 + $0x28] sm:$0xff]
    %v1900 = vld [vmem:[%s664 + $0x30] sm:$0xff]
    %v1901 = vld [vmem:[%s664 + $0x38] sm:$0xff]
    %v1902 = vld [vmem:[%s664 + $0x40] sm:$0xff]
    %v1903 = vld [vmem:[%s664 + $0x48] sm:$0xff]
    %v1904 = vld [vmem:[%s664 + $0x50] sm:$0xff]
    %v1905 = vld [vmem:[%s664 + $0x58] sm:$0xff]
    %v1906 = vld [vmem:[%s664 + $0x60] sm:$0xff]
    %v1907 = vld [vmem:[%s664 + $0x68] sm:$0xff]
    %v1908 = vld [vmem:[%s664 + $0x70] sm:$0xff]
    %v1909 = vld [vmem:[%s664 + $0x78] sm:$0xff]
    %1910 = vmatprep.subr.mxu0 0.0
    %1911 = vmatpush1.msra.mxu0 %v1894
    %1912 = vmatprep.subr.mxu0 0.0
    %1913 = vmatpush1.msra.mxu0 %v1895
    %1914 = vmatprep.subr.mxu0 0.0
    %1915 = vmatpush1.msra.mxu0 %v1896
    %1916 = vmatprep.subr.mxu0 0.0
    %1917 = vmatpush1.msra.mxu0 %v1897
    %1918 = vmatprep.subr.mxu0 0.0
    %1919 = vmatpush1.msra.mxu0 %v1898
    %1920 = vmatprep.subr.mxu0 0.0
    %1921 = vmatpush1.msra.mxu0 %v1899
    %1922 = vmatprep.subr.mxu0 0.0
    %1923 = vmatpush1.msra.mxu0 %v1900
    %1924 = vmatprep.subr.mxu0 0.0
    %1925 = vmatpush1.msra.mxu0 %v1901
    %1926 = vmatprep.subr.mxu0 0.0
    %1927 = vmatpush1.msra.mxu0 %v1902
    %1928 = vmatprep.subr.mxu0 0.0
    %1929 = vmatpush1.msra.mxu0 %v1903
    %1930 = vmatprep.subr.mxu0 0.0
    %1931 = vmatpush1.msra.mxu0 %v1904
    %1932 = vmatprep.subr.mxu0 0.0
    %1933 = vmatpush1.msra.mxu0 %v1905
    %1934 = vmatprep.subr.mxu0 0.0
    %1935 = vmatpush1.msra.mxu0 %v1906
    %1936 = vmatprep.subr.mxu0 0.0
    %1937 = vmatpush1.msra.mxu0 %v1907
    %1938 = vmatprep.subr.mxu0 0.0
    %1939 = vmatpush1.msra.mxu0 %v1908
    %1940 = vmatprep.subr.mxu0 0.0
    %1941 = vmatpush1.msra.mxu0 %v1909
    %1942 = vmatprep.subr.mxu0 0.0
    %1943 = vmatpush1.msra.mxu0 0.0
    %1944 = vmatprep.subr.mxu0 0.0
    %1945 = vmatpush1.msra.mxu0 0.0
    %1946 = vmatprep.subr.mxu0 0.0
    %1947 = vmatpush1.msra.mxu0 0.0
    %1948 = vmatprep.subr.mxu0 0.0
    %1949 = vmatpush1.msra.mxu0 0.0
    %1950 = vmatprep.subr.mxu0 0.0
    %1951 = vmatpush1.msra.mxu0 0.0
    %1952 = vmatprep.subr.mxu0 0.0
    %1953 = vmatpush1.msra.mxu0 0.0
    %1954 = vmatprep.subr.mxu0 0.0
    %1955 = vmatpush1.msra.mxu0 0.0
    %1956 = vmatprep.subr.mxu0 0.0
    %1957 = vmatpush1.msra.mxu0 0.0
    %1958 = vmatprep.subr.mxu0 0.0
    %1959 = vmatpush1.msra.mxu0 0.0
    %1960 = vmatprep.subr.mxu0 0.0
    %1961 = vmatpush1.msra.mxu0 0.0
    %1962 = vmatprep.subr.mxu0 0.0
    %1963 = vmatpush1.msra.mxu0 0.0
    %1964 = vmatprep.subr.mxu0 0.0
    %1965 = vmatpush1.msra.mxu0 0.0
    %1966 = vmatprep.subr.mxu0 0.0
    %1967 = vmatpush1.msra.mxu0 0.0
    %1968 = vmatprep.subr.mxu0 0.0
    %1969 = vmatpush1.msra.mxu0 0.0
    %1970 = vmatprep.subr.mxu0 0.0
    %1971 = vmatpush1.msra.mxu0 0.0
    %1972 = vmatprep.subr.mxu0 0.0
    %1973 = vmatpush1.msra.mxu0 0.0
    %1974 = vmatprep.mubr.f32.mxu0 0.0
    %1975 = vmatmul.mubr.f32.gmra.mrb[0].mxu0 %v1893
    %v1976 = vpop.f32.mrb[0].mxu0
    %v1977 = vadd.f32 0.0, %v1976
    %v1978 = vpop.f32.mrb[0].mxu0
    %1979 = vdwg.mxu0
    %v1980 = vadd.f32 %v1773, %v1977
    %v1981 = vtanh.pop %v1980
    %v1982 = vmul.f32 %v1885, %v1370
    %v1983 = vsub.f32 1.0, %v1885
    %v1984 = vmul.f32 %v1983, %v1981
    %v1985 = vadd.f32 %v1982, %v1984
    %s1986 = scalar_lea.vmem [#allocation2], 16
    %1987 = vst [vmem:[%s1986] sm:$0xff] %v1985
    %s1988 = scalar_lea.vmem [#allocation3], 72
    %v1989 = vld [vmem:[%s1988] sm:$0xff]
    %v1990 = vld [vmem:[%s1988 + $0x8] sm:$0xff]
    %v1991 = vld [vmem:[%s1988 + $0x10] sm:$0xff]
    %v1992 = vld [vmem:[#allocation9] sm:$0xff]
    %v1993 = vld [vmem:[#allocation9 + $0x8] sm:$0xff]
    %v1994 = vld [vmem:[#allocation9 + $0x10] sm:$0xff]
    %v1995 = vld [vmem:[#allocation9 + $0x18] sm:$0xff]
    %v1996 = vld [vmem:[#allocation9 + $0x20] sm:$0xff]
    %v1997 = vld [vmem:[#allocation9 + $0x28] sm:$0xff]
    %v1998 = vld [vmem:[#allocation9 + $0x30] sm:$0xff]
    %v1999 = vld [vmem:[#allocation9 + $0x38] sm:$0xff]
    %v2000 = vld [vmem:[#allocation9 + $0x40] sm:$0xff]
    %v2001 = vld [vmem:[#allocation9 + $0x48] sm:$0xff]
    %v2002 = vld [vmem:[#allocation9 + $0x50] sm:$0xff]
    %v2003 = vld [vmem:[#allocation9 + $0x58] sm:$0xff]
    %v2004 = vld [vmem:[#allocation9 + $0x60] sm:$0xff]
    %v2005 = vld [vmem:[#allocation9 + $0x68] sm:$0xff]
    %v2006 = vld [vmem:[#allocation9 + $0x70] sm:$0xff]
    %v2007 = vld [vmem:[#allocation9 + $0x78] sm:$0xff]
    %v2008 = vld [vmem:[#allocation9 + $0x80] sm:$0xff]
    %v2009 = vld [vmem:[#allocation9 + $0x88] sm:$0xff]
    %v2010 = vld [vmem:[#allocation9 + $0x90] sm:$0xff]
    %v2011 = vld [vmem:[#allocation9 + $0x98] sm:$0xff]
    %v2012 = vld [vmem:[#allocation9 + $0xa0] sm:$0xff]
    %v2013 = vld [vmem:[#allocation9 + $0xa8] sm:$0xff]
    %v2014 = vld [vmem:[#allocation9 + $0xb0] sm:$0xff]
    %v2015 = vld [vmem:[#allocation9 + $0xb8] sm:$0xff]
    %v2016 = vld [vmem:[#allocation9 + $0xc0] sm:$0xff]
    %v2017 = vld [vmem:[#allocation9 + $0xc8] sm:$0xff]
    %v2018 = vld [vmem:[#allocation9 + $0xd0] sm:$0xff]
    %v2019 = vld [vmem:[#allocation9 + $0xd8] sm:$0xff]
    %v2020 = vld [vmem:[#allocation9 + $0xe0] sm:$0xff]
    %v2021 = vld [vmem:[#allocation9 + $0xe8] sm:$0xff]
    %v2022 = vld [vmem:[#allocation9 + $0xf0] sm:$0xff]
    %v2023 = vld [vmem:[#allocation9 + $0xf8] sm:$0xff]
    %2024 = vmatprep.subr.mxu0 %v1993
    %2025 = vmatpush1.msra.mxu0 %v1992
    %2026 = vmatprep.subr.mxu0 %v1995
    %2027 = vmatpush1.msra.mxu0 %v1994
    %2028 = vmatprep.subr.mxu0 %v1997
    %2029 = vmatpush1.msra.mxu0 %v1996
    %2030 = vmatprep.subr.mxu0 %v1999
    %2031 = vmatpush1.msra.mxu0 %v1998
    %2032 = vmatprep.subr.mxu0 %v2001
    %2033 = vmatpush1.msra.mxu0 %v2000
    %2034 = vmatprep.subr.mxu0 %v2003
    %2035 = vmatpush1.msra.mxu0 %v2002
    %2036 = vmatprep.subr.mxu0 %v2005
    %2037 = vmatpush1.msra.mxu0 %v2004
    %2038 = vmatprep.subr.mxu0 %v2007
    %2039 = vmatpush1.msra.mxu0 %v2006
    %2040 = vmatprep.subr.mxu0 %v2009
    %2041 = vmatpush1.msra.mxu0 %v2008
    %2042 = vmatprep.subr.mxu0 %v2011
    %2043 = vmatpush1.msra.mxu0 %v2010
    %2044 = vmatprep.subr.mxu0 %v2013
    %2045 = vmatpush1.msra.mxu0 %v2012
    %2046 = vmatprep.subr.mxu0 %v2015
    %2047 = vmatpush1.msra.mxu0 %v2014
    %2048 = vmatprep.subr.mxu0 %v2017
    %2049 = vmatpush1.msra.mxu0 %v2016
    %2050 = vmatprep.subr.mxu0 %v2019
    %2051 = vmatpush1.msra.mxu0 %v2018
    %2052 = vmatprep.subr.mxu0 %v2021
    %2053 = vmatpush1.msra.mxu0 %v2020
    %2054 = vmatprep.subr.mxu0 %v2023
    %2055 = vmatpush1.msra.mxu0 %v2022
    %2056 = vmatprep.subr.mxu0 0.0
    %2057 = vmatpush1.msra.mxu0 0.0
    %2058 = vmatprep.subr.mxu0 0.0
    %2059 = vmatpush1.msra.mxu0 0.0
    %2060 = vmatprep.subr.mxu0 0.0
    %2061 = vmatpush1.msra.mxu0 0.0
    %2062 = vmatprep.subr.mxu0 0.0
    %2063 = vmatpush1.msra.mxu0 0.0
    %2064 = vmatprep.subr.mxu0 0.0
    %2065 = vmatpush1.msra.mxu0 0.0
    %2066 = vmatprep.subr.mxu0 0.0
    %2067 = vmatpush1.msra.mxu0 0.0
    %2068 = vmatprep.subr.mxu0 0.0
    %2069 = vmatpush1.msra.mxu0 0.0
    %2070 = vmatprep.subr.mxu0 0.0
    %2071 = vmatpush1.msra.mxu0 0.0
    %2072 = vmatprep.subr.mxu0 0.0
    %2073 = vmatpush1.msra.mxu0 0.0
    %2074 = vmatprep.subr.mxu0 0.0
    %2075 = vmatpush1.msra.mxu0 0.0
    %2076 = vmatprep.subr.mxu0 0.0
    %2077 = vmatpush1.msra.mxu0 0.0
    %2078 = vmatprep.subr.mxu0 0.0
    %2079 = vmatpush1.msra.mxu0 0.0
    %2080 = vmatprep.subr.mxu0 0.0
    %2081 = vmatpush1.msra.mxu0 0.0
    %2082 = vmatprep.subr.mxu0 0.0
    %2083 = vmatpush1.msra.mxu0 0.0
    %2084 = vmatprep.subr.mxu0 0.0
    %2085 = vmatpush1.msra.mxu0 0.0
    %2086 = vmatprep.subr.mxu0 0.0
    %2087 = vmatpush1.msra.mxu0 0.0
    %2088 = vmatprep.mubr.f32.mxu0 0.0
    %2089 = vmatmul.mubr.f32.gmra.mrb[0].mxu0 %v1586
    %v2090 = vpop.f32.mrb[0].mxu0
    %v2091 = vadd.f32 0.0, %v2090
    %v2092 = vpop.f32.mrb[0].mxu0
    %v2093 = vadd.f32 0.0, %v2092
    %2094 = vdwg.mxu0
    %v2095 = vadd.f32 %v1989, %v2091
    %v2096 = vxor.u32 %v2095, 2147483648
    %v2097 = vmul.f32 %v2096, 1.442695
    %v2098 = vpow.pop %v2097
    %v2099 = vadd.f32 %v2098, 1.0
    %v2100 = vrcp.pop %v2099
    %v2101 = vmul.f32 1.0, %v2100
    %v2102 = vadd.f32 %v1990, %v2093
    %v2103 = vxor.u32 %v2102, 2147483648
    %v2104 = vmul.f32 %v2103, 1.442695
    %v2105 = vpow.pop %v2104
    %v2106 = vadd.f32 %v2105, 1.0
    %v2107 = vrcp.pop %v2106
    %v2108 = vmul.f32 1.0, %v2107
    %v2109 = vmul.f32 %v2108, %v1586
    %v2110 = vld [vmem:[#allocation11] sm:$0xff]
    %v2111 = vld [vmem:[#allocation11 + $0x8] sm:$0xff]
    %v2112 = vld [vmem:[#allocation11 + $0x10] sm:$0xff]
    %v2113 = vld [vmem:[#allocation11 + $0x18] sm:$0xff]
    %v2114 = vld [vmem:[#allocation11 + $0x20] sm:$0xff]
    %v2115 = vld [vmem:[#allocation11 + $0x28] sm:$0xff]
    %v2116 = vld [vmem:[#allocation11 + $0x30] sm:$0xff]
    %v2117 = vld [vmem:[#allocation11 + $0x38] sm:$0xff]
    %v2118 = vld [vmem:[#allocation11 + $0x40] sm:$0xff]
    %v2119 = vld [vmem:[#allocation11 + $0x48] sm:$0xff]
    %v2120 = vld [vmem:[#allocation11 + $0x50] sm:$0xff]
    %v2121 = vld [vmem:[#allocation11 + $0x58] sm:$0xff]
    %v2122 = vld [vmem:[#allocation11 + $0x60] sm:$0xff]
    %v2123 = vld [vmem:[#allocation11 + $0x68] sm:$0xff]
    %v2124 = vld [vmem:[#allocation11 + $0x70] sm:$0xff]
    %v2125 = vld [vmem:[#allocation11 + $0x78] sm:$0xff]
    %2126 = vmatprep.subr.mxu0 0.0
    %2127 = vmatpush1.msra.mxu0 %v2110
    %2128 = vmatprep.subr.mxu0 0.0
    %2129 = vmatpush1.msra.mxu0 %v2111
    %2130 = vmatprep.subr.mxu0 0.0
    %2131 = vmatpush1.msra.mxu0 %v2112
    %2132 = vmatprep.subr.mxu0 0.0
    %2133 = vmatpush1.msra.mxu0 %v2113
    %2134 = vmatprep.subr.mxu0 0.0
    %2135 = vmatpush1.msra.mxu0 %v2114
    %2136 = vmatprep.subr.mxu0 0.0
    %2137 = vmatpush1.msra.mxu0 %v2115
    %2138 = vmatprep.subr.mxu0 0.0
    %2139 = vmatpush1.msra.mxu0 %v2116
    %2140 = vmatprep.subr.mxu0 0.0
    %2141 = vmatpush1.msra.mxu0 %v2117
    %2142 = vmatprep.subr.mxu0 0.0
    %2143 = vmatpush1.msra.mxu0 %v2118
    %2144 = vmatprep.subr.mxu0 0.0
    %2145 = vmatpush1.msra.mxu0 %v2119
    %2146 = vmatprep.subr.mxu0 0.0
    %2147 = vmatpush1.msra.mxu0 %v2120
    %2148 = vmatprep.subr.mxu0 0.0
    %2149 = vmatpush1.msra.mxu0 %v2121
    %2150 = vmatprep.subr.mxu0 0.0
    %2151 = vmatpush1.msra.mxu0 %v2122
    %2152 = vmatprep.subr.mxu0 0.0
    %2153 = vmatpush1.msra.mxu0 %v2123
    %2154 = vmatprep.subr.mxu0 0.0
    %2155 = vmatpush1.msra.mxu0 %v2124
    %2156 = vmatprep.subr.mxu0 0.0
    %2157 = vmatpush1.msra.mxu0 %v2125
    %2158 = vmatprep.subr.mxu0 0.0
    %2159 = vmatpush1.msra.mxu0 0.0
    %2160 = vmatprep.subr.mxu0 0.0
    %2161 = vmatpush1.msra.mxu0 0.0
    %2162 = vmatprep.subr.mxu0 0.0
    %2163 = vmatpush1.msra.mxu0 0.0
    %2164 = vmatprep.subr.mxu0 0.0
    %2165 = vmatpush1.msra.mxu0 0.0
    %2166 = vmatprep.subr.mxu0 0.0
    %2167 = vmatpush1.msra.mxu0 0.0
    %2168 = vmatprep.subr.mxu0 0.0
    %2169 = vmatpush1.msra.mxu0 0.0
    %2170 = vmatprep.subr.mxu0 0.0
    %2171 = vmatpush1.msra.mxu0 0.0
    %2172 = vmatprep.subr.mxu0 0.0
    %2173 = vmatpush1.msra.mxu0 0.0
    %2174 = vmatprep.subr.mxu0 0.0
    %2175 = vmatpush1.msra.mxu0 0.0
    %2176 = vmatprep.subr.mxu0 0.0
    %2177 = vmatpush1.msra.mxu0 0.0
    %2178 = vmatprep.subr.mxu0 0.0
    %2179 = vmatpush1.msra.mxu0 0.0
    %2180 = vmatprep.subr.mxu0 0.0
    %2181 = vmatpush1.msra.mxu0 0.0
    %2182 = vmatprep.subr.mxu0 0.0
    %2183 = vmatpush1.msra.mxu0 0.0
    %2184 = vmatprep.subr.mxu0 0.0
    %2185 = vmatpush1.msra.mxu0 0.0
    %2186 = vmatprep.subr.mxu0 0.0
    %2187 = vmatpush1.msra.mxu0 0.0
    %2188 = vmatprep.subr.mxu0 0.0
    %2189 = vmatpush1.msra.mxu0 0.0
    %2190 = vmatprep.mubr.f32.mxu0 0.0
    %2191 = vmatmul.mubr.f32.gmra.mrb[0].mxu0 %v2109
    %v2192 = vpop.f32.mrb[0].mxu0
    %v2193 = vadd.f32 0.0, %v2192
    %v2194 = vpop.f32.mrb[0].mxu0
    %2195 = vdwg.mxu0
    %v2196 = vadd.f32 %v1991, %v2193
    %v2197 = vtanh.pop %v2196
    %v2198 = vmul.f32 %v2101, %v1586
    %v2199 = vsub.f32 1.0, %v2101
    %v2200 = vmul.f32 %v2199, %v2197
    %v2201 = vadd.f32 %v2198, %v2200
    %v2202 = vld [vmem:[#allocation8] sm:$0xff]
    %v2203 = vld [vmem:[#allocation8 + $0x8] sm:$0xff]
    %v2204 = vld [vmem:[#allocation8 + $0x10] sm:$0xff]
    %v2205 = vld [vmem:[#allocation8 + $0x18] sm:$0xff]
    %v2206 = vld [vmem:[#allocation8 + $0x20] sm:$0xff]
    %v2207 = vld [vmem:[#allocation8 + $0x28] sm:$0xff]
    %v2208 = vld [vmem:[#allocation8 + $0x30] sm:$0xff]
    %v2209 = vld [vmem:[#allocation8 + $0x38] sm:$0xff]
    %v2210 = vld [vmem:[#allocation8 + $0x40] sm:$0xff]
    %v2211 = vld [vmem:[#allocation8 + $0x48] sm:$0xff]
    %v2212 = vld [vmem:[#allocation8 + $0x50] sm:$0xff]
    %v2213 = vld [vmem:[#allocation8 + $0x58] sm:$0xff]
    %v2214 = vld [vmem:[#allocation8 + $0x60] sm:$0xff]
    %v2215 = vld [vmem:[#allocation8 + $0x68] sm:$0xff]
    %v2216 = vld [vmem:[#allocation8 + $0x70] sm:$0xff]
    %v2217 = vld [vmem:[#allocation8 + $0x78] sm:$0xff]
    %v2218 = vld [vmem:[#allocation8 + $0x80] sm:$0xff]
    %v2219 = vld [vmem:[#allocation8 + $0x88] sm:$0xff]
    %v2220 = vld [vmem:[#allocation8 + $0x90] sm:$0xff]
    %v2221 = vld [vmem:[#allocation8 + $0x98] sm:$0xff]
    %v2222 = vld [vmem:[#allocation8 + $0xa0] sm:$0xff]
    %v2223 = vld [vmem:[#allocation8 + $0xa8] sm:$0xff]
    %v2224 = vld [vmem:[#allocation8 + $0xb0] sm:$0xff]
    %v2225 = vld [vmem:[#allocation8 + $0xb8] sm:$0xff]
    %v2226 = vld [vmem:[#allocation8 + $0xc0] sm:$0xff]
    %v2227 = vld [vmem:[#allocation8 + $0xc8] sm:$0xff]
    %v2228 = vld [vmem:[#allocation8 + $0xd0] sm:$0xff]
    %v2229 = vld [vmem:[#allocation8 + $0xd8] sm:$0xff]
    %v2230 = vld [vmem:[#allocation8 + $0xe0] sm:$0xff]
    %v2231 = vld [vmem:[#allocation8 + $0xe8] sm:$0xff]
    %v2232 = vld [vmem:[#allocation8 + $0xf0] sm:$0xff]
    %v2233 = vld [vmem:[#allocation8 + $0xf8] sm:$0xff]
    %v2234 = vld [vmem:[#allocation8 + $0x100] sm:$0xff]
    %v2235 = vld [vmem:[#allocation8 + $0x108] sm:$0xff]
    %v2236 = vld [vmem:[#allocation8 + $0x110] sm:$0xff]
    %v2237 = vld [vmem:[#allocation8 + $0x118] sm:$0xff]
    %v2238 = vld [vmem:[#allocation8 + $0x120] sm:$0xff]
    %v2239 = vld [vmem:[#allocation8 + $0x128] sm:$0xff]
    %v2240 = vld [vmem:[#allocation8 + $0x130] sm:$0xff]
    %v2241 = vld [vmem:[#allocation8 + $0x138] sm:$0xff]
    %v2242 = vld [vmem:[#allocation8 + $0x140] sm:$0xff]
    %v2243 = vld [vmem:[#allocation8 + $0x148] sm:$0xff]
    %v2244 = vld [vmem:[#allocation8 + $0x150] sm:$0xff]
    %v2245 = vld [vmem:[#allocation8 + $0x158] sm:$0xff]
    %v2246 = vld [vmem:[#allocation8 + $0x160] sm:$0xff]
    %v2247 = vld [vmem:[#allocation8 + $0x168] sm:$0xff]
    %v2248 = vld [vmem:[#allocation8 + $0x170] sm:$0xff]
    %v2249 = vld [vmem:[#allocation8 + $0x178] sm:$0xff]
    %2250 = vmatprep.subr.mxu0 %v2203
    %2251 = vmatpush1.msra.mxu0 %v2202
    %2252 = vmatprep.subr.mxu0 %v2206
    %2253 = vmatpush1.msra.mxu0 %v2205
    %2254 = vmatprep.subr.mxu0 %v2209
    %2255 = vmatpush1.msra.mxu0 %v2208
    %2256 = vmatprep.subr.mxu0 %v2212
    %2257 = vmatpush1.msra.mxu0 %v2211
    %2258 = vmatprep.subr.mxu0 %v2215
    %2259 = vmatpush1.msra.mxu0 %v2214
    %2260 = vmatprep.subr.mxu0 %v2218
    %2261 = vmatpush1.msra.mxu0 %v2217
    %2262 = vmatprep.subr.mxu0 %v2221
    %2263 = vmatpush1.msra.mxu0 %v2220
    %2264 = vmatprep.subr.mxu0 %v2224
    %2265 = vmatpush1.msra.mxu0 %v2223
    %2266 = vmatprep.subr.mxu0 %v2227
    %2267 = vmatpush1.msra.mxu0 %v2226
    %2268 = vmatprep.subr.mxu0 %v2230
    %2269 = vmatpush1.msra.mxu0 %v2229
    %2270 = vmatprep.subr.mxu0 %v2233
    %2271 = vmatpush1.msra.mxu0 %v2232
    %2272 = vmatprep.subr.mxu0 %v2236
    %2273 = vmatpush1.msra.mxu0 %v2235
    %2274 = vmatprep.subr.mxu0 %v2239
    %2275 = vmatpush1.msra.mxu0 %v2238
    %2276 = vmatprep.subr.mxu0 %v2242
    %2277 = vmatpush1.msra.mxu0 %v2241
    %2278 = vmatprep.subr.mxu0 %v2245
    %2279 = vmatpush1.msra.mxu0 %v2244
    %2280 = vmatprep.subr.mxu0 %v2248
    %2281 = vmatpush1.msra.mxu0 %v2247
    %2282 = vmatprep.subr.mxu0 0.0
    %2283 = vmatpush1.msra.mxu0 0.0
    %2284 = vmatprep.subr.mxu0 0.0
    %2285 = vmatpush1.msra.mxu0 0.0
    %2286 = vmatprep.subr.mxu0 0.0
    %2287 = vmatpush1.msra.mxu0 0.0
    %2288 = vmatprep.subr.mxu0 0.0
    %2289 = vmatpush1.msra.mxu0 0.0
    %2290 = vmatprep.subr.mxu0 0.0
    %2291 = vmatpush1.msra.mxu0 0.0
    %2292 = vmatprep.subr.mxu0 0.0
    %2293 = vmatpush1.msra.mxu0 0.0
    %2294 = vmatprep.subr.mxu0 0.0
    %2295 = vmatpush1.msra.mxu0 0.0
    %2296 = vmatprep.subr.mxu0 0.0
    %2297 = vmatpush1.msra.mxu0 0.0
    %2298 = vmatprep.subr.mxu0 0.0
    %2299 = vmatpush1.msra.mxu0 0.0
    %2300 = vmatprep.subr.mxu0 0.0
    %2301 = vmatpush1.msra.mxu0 0.0
    %2302 = vmatprep.subr.mxu0 0.0
    %2303 = vmatpush1.msra.mxu0 0.0
    %2304 = vmatprep.subr.mxu0 0.0
    %2305 = vmatpush1.msra.mxu0 0.0
    %2306 = vmatprep.subr.mxu0 0.0
    %2307 = vmatpush1.msra.mxu0 0.0
    %2308 = vmatprep.subr.mxu0 0.0
    %2309 = vmatpush1.msra.mxu0 0.0
    %2310 = vmatprep.subr.mxu0 0.0
    %2311 = vmatpush1.msra.mxu0 0.0
    %2312 = vmatprep.subr.mxu0 0.0
    %2313 = vmatpush1.msra.mxu0 0.0
    %2314 = vmatprep.mubr.f32.mxu0 0.0
    %2315 = vmatmul.mubr.f32.gmra.mrb[0].mxu0 %v2201
    %v2316 = vpop.f32.mrb[0].mxu0
    %v2317 = vadd.f32 %v131, %v2316
    %v2318 = vpop.f32.mrb[0].mxu0
    %v2319 = vadd.f32 %v135, %v2318
    %2320 = vdwg.mxu0
    %2321 = vmatprep.subr.mxu0 0.0
    %2322 = vmatpush1.msra.mxu0 %v2204
    %2323 = vmatprep.subr.mxu0 0.0
    %2324 = vmatpush1.msra.mxu0 %v2207
    %2325 = vmatprep.subr.mxu0 0.0
    %2326 = vmatpush1.msra.mxu0 %v2210
    %2327 = vmatprep.subr.mxu0 0.0
    %2328 = vmatpush1.msra.mxu0 %v2213
    %2329 = vmatprep.subr.mxu0 0.0
    %2330 = vmatpush1.msra.mxu0 %v2216
    %2331 = vmatprep.subr.mxu0 0.0
    %2332 = vmatpush1.msra.mxu0 %v2219
    %2333 = vmatprep.subr.mxu0 0.0
    %2334 = vmatpush1.msra.mxu0 %v2222
    %2335 = vmatprep.subr.mxu0 0.0
    %2336 = vmatpush1.msra.mxu0 %v2225
    %2337 = vmatprep.subr.mxu0 0.0
    %2338 = vmatpush1.msra.mxu0 %v2228
    %2339 = vmatprep.subr.mxu0 0.0
    %2340 = vmatpush1.msra.mxu0 %v2231
    %2341 = vmatprep.subr.mxu0 0.0
    %2342 = vmatpush1.msra.mxu0 %v2234
    %2343 = vmatprep.subr.mxu0 0.0
    %2344 = vmatpush1.msra.mxu0 %v2237
    %2345 = vmatprep.subr.mxu0 0.0
    %2346 = vmatpush1.msra.mxu0 %v2240
    %2347 = vmatprep.subr.mxu0 0.0
    %2348 = vmatpush1.msra.mxu0 %v2243
    %2349 = vmatprep.subr.mxu0 0.0
    %2350 = vmatpush1.msra.mxu0 %v2246
    %2351 = vmatprep.subr.mxu0 0.0
    %2352 = vmatpush1.msra.mxu0 %v2249
    %2353 = vmatprep.subr.mxu0 0.0
    %2354 = vmatpush1.msra.mxu0 0.0
    %2355 = vmatprep.subr.mxu0 0.0
    %2356 = vmatpush1.msra.mxu0 0.0
    %2357 = vmatprep.subr.mxu0 0.0
    %2358 = vmatpush1.msra.mxu0 0.0
    %2359 = vmatprep.subr.mxu0 0.0
    %2360 = vmatpush1.msra.mxu0 0.0
    %2361 = vmatprep.subr.mxu0 0.0
    %2362 = vmatpush1.msra.mxu0 0.0
    %2363 = vmatprep.subr.mxu0 0.0
    %2364 = vmatpush1.msra.mxu0 0.0
    %2365 = vmatprep.subr.mxu0 0.0
    %2366 = vmatpush1.msra.mxu0 0.0
    %2367 = vmatprep.subr.mxu0 0.0
    %2368 = vmatpush1.msra.mxu0 0.0
    %2369 = vmatprep.subr.mxu0 0.0
    %2370 = vmatpush1.msra.mxu0 0.0
    %2371 = vmatprep.subr.mxu0 0.0
    %2372 = vmatpush1.msra.mxu0 0.0
    %2373 = vmatprep.subr.mxu0 0.0
    %2374 = vmatpush1.msra.mxu0 0.0
    %2375 = vmatprep.subr.mxu0 0.0
    %2376 = vmatpush1.msra.mxu0 0.0
    %2377 = vmatprep.subr.mxu0 0.0
    %2378 = vmatpush1.msra.mxu0 0.0
    %2379 = vmatprep.subr.mxu0 0.0
    %2380 = vmatpush1.msra.mxu0 0.0
    %2381 = vmatprep.subr.mxu0 0.0
    %2382 = vmatpush1.msra.mxu0 0.0
    %2383 = vmatprep.subr.mxu0 0.0
    %2384 = vmatpush1.msra.mxu0 0.0
    %2385 = vmatprep.mubr.f32.mxu0 0.0
    %2386 = vmatmul.mubr.f32.gmra.mrb[0].mxu0 %v2201
    %v2387 = vpop.f32.mrb[0].mxu0
    %v2388 = vadd.f32 %v139, %v2387
    %v2389 = vpop.f32.mrb[0].mxu0
    %2390 = vdwg.mxu0
    %v2391 = vld [vmem:[%s545] sm:$0xff]
    %v2392 = vld [vmem:[%s545 + $0x8] sm:$0xff]
    %v2393 = vld [vmem:[%s545 + $0x10] sm:$0xff]
    %v2394 = vld [vmem:[%s545 + $0x18] sm:$0xff]
    %v2395 = vld [vmem:[%s545 + $0x20] sm:$0xff]
    %v2396 = vld [vmem:[%s545 + $0x28] sm:$0xff]
    %v2397 = vld [vmem:[%s545 + $0x30] sm:$0xff]
    %v2398 = vld [vmem:[%s545 + $0x38] sm:$0xff]
    %v2399 = vld [vmem:[%s545 + $0x40] sm:$0xff]
    %v2400 = vld [vmem:[%s545 + $0x48] sm:$0xff]
    %v2401 = vld [vmem:[%s545 + $0x50] sm:$0xff]
    %v2402 = vld [vmem:[%s545 + $0x58] sm:$0xff]
    %v2403 = vld [vmem:[%s545 + $0x60] sm:$0xff]
    %v2404 = vld [vmem:[%s545 + $0x68] sm:$0xff]
    %v2405 = vld [vmem:[%s545 + $0x70] sm:$0xff]
    %v2406 = vld [vmem:[%s545 + $0x78] sm:$0xff]
    %v2407 = vld [vmem:[%s545 + $0x80] sm:$0xff]
    %v2408 = vld [vmem:[%s545 + $0x88] sm:$0xff]
    %v2409 = vld [vmem:[%s545 + $0x90] sm:$0xff]
    %v2410 = vld [vmem:[%s545 + $0x98] sm:$0xff]
    %v2411 = vld [vmem:[%s545 + $0xa0] sm:$0xff]
    %v2412 = vld [vmem:[%s545 + $0xa8] sm:$0xff]
    %v2413 = vld [vmem:[%s545 + $0xb0] sm:$0xff]
    %v2414 = vld [vmem:[%s545 + $0xb8] sm:$0xff]
    %v2415 = vld [vmem:[%s545 + $0xc0] sm:$0xff]
    %v2416 = vld [vmem:[%s545 + $0xc8] sm:$0xff]
    %v2417 = vld [vmem:[%s545 + $0xd0] sm:$0xff]
    %v2418 = vld [vmem:[%s545 + $0xd8] sm:$0xff]
    %v2419 = vld [vmem:[%s545 + $0xe0] sm:$0xff]
    %v2420 = vld [vmem:[%s545 + $0xe8] sm:$0xff]
    %v2421 = vld [vmem:[%s545 + $0xf0] sm:$0xff]
    %v2422 = vld [vmem:[%s545 + $0xf8] sm:$0xff]
    %2423 = vmatprep.subr.mxu0 %v2392
    %2424 = vmatpush1.msra.mxu0 %v2391
    %2425 = vmatprep.subr.mxu0 %v2394
    %2426 = vmatpush1.msra.mxu0 %v2393
    %2427 = vmatprep.subr.mxu0 %v2396
    %2428 = vmatpush1.msra.mxu0 %v2395
    %2429 = vmatprep.subr.mxu0 %v2398
    %2430 = vmatpush1.msra.mxu0 %v2397
    %2431 = vmatprep.subr.mxu0 %v2400
    %2432 = vmatpush1.msra.mxu0 %v2399
    %2433 = vmatprep.subr.mxu0 %v2402
    %2434 = vmatpush1.msra.mxu0 %v2401
    %2435 = vmatprep.subr.mxu0 %v2404
    %2436 = vmatpush1.msra.mxu0 %v2403
    %2437 = vmatprep.subr.mxu0 %v2406
    %2438 = vmatpush1.msra.mxu0 %v2405
    %2439 = vmatprep.subr.mxu0 %v2408
    %2440 = vmatpush1.msra.mxu0 %v2407
    %2441 = vmatprep.subr.mxu0 %v2410
    %2442 = vmatpush1.msra.mxu0 %v2409
    %2443 = vmatprep.subr.mxu0 %v2412
    %2444 = vmatpush1.msra.mxu0 %v2411
    %2445 = vmatprep.subr.mxu0 %v2414
    %2446 = vmatpush1.msra.mxu0 %v2413
    %2447 = vmatprep.subr.mxu0 %v2416
    %2448 = vmatpush1.msra.mxu0 %v2415
    %2449 = vmatprep.subr.mxu0 %v2418
    %2450 = vmatpush1.msra.mxu0 %v2417
    %2451 = vmatprep.subr.mxu0 %v2420
    %2452 = vmatpush1.msra.mxu0 %v2419
    %2453 = vmatprep.subr.mxu0 %v2422
    %2454 = vmatpush1.msra.mxu0 %v2421
    %2455 = vmatprep.subr.mxu0 0.0
    %2456 = vmatpush1.msra.mxu0 0.0
    %2457 = vmatprep.subr.mxu0 0.0
    %2458 = vmatpush1.msra.mxu0 0.0
    %2459 = vmatprep.subr.mxu0 0.0
    %2460 = vmatpush1.msra.mxu0 0.0
    %2461 = vmatprep.subr.mxu0 0.0
    %2462 = vmatpush1.msra.mxu0 0.0
    %2463 = vmatprep.subr.mxu0 0.0
    %2464 = vmatpush1.msra.mxu0 0.0
    %2465 = vmatprep.subr.mxu0 0.0
    %2466 = vmatpush1.msra.mxu0 0.0
    %2467 = vmatprep.subr.mxu0 0.0
    %2468 = vmatpush1.msra.mxu0 0.0
    %2469 = vmatprep.subr.mxu0 0.0
    %2470 = vmatpush1.msra.mxu0 0.0
    %2471 = vmatprep.subr.mxu0 0.0
    %2472 = vmatpush1.msra.mxu0 0.0
    %2473 = vmatprep.subr.mxu0 0.0
    %2474 = vmatpush1.msra.mxu0 0.0
    %2475 = vmatprep.subr.mxu0 0.0
    %2476 = vmatpush1.msra.mxu0 0.0
    %2477 = vmatprep.subr.mxu0 0.0
    %2478 = vmatpush1.msra.mxu0 0.0
    %2479 = vmatprep.subr.mxu0 0.0
    %2480 = vmatpush1.msra.mxu0 0.0
    %2481 = vmatprep.subr.mxu0 0.0
    %2482 = vmatpush1.msra.mxu0 0.0
    %2483 = vmatprep.subr.mxu0 0.0
    %2484 = vmatpush1.msra.mxu0 0.0
    %2485 = vmatprep.subr.mxu0 0.0
    %2486 = vmatpush1.msra.mxu0 0.0
    %2487 = vmatprep.mubr.f32.mxu0 0.0
    %2488 = vmatmul.mubr.f32.gmra.mrb[0].mxu0 %v1985
    %v2489 = vpop.f32.mrb[0].mxu0
    %v2490 = vadd.f32 0.0, %v2489
    %v2491 = vpop.f32.mrb[0].mxu0
    %v2492 = vadd.f32 0.0, %v2491
    %2493 = vdwg.mxu0
    %v2494 = vadd.f32 %v2317, %v2490
    %v2495 = vxor.u32 %v2494, 2147483648
    %v2496 = vmul.f32 %v2495, 1.442695
    %v2497 = vpow.pop %v2496
    %v2498 = vadd.f32 %v2497, 1.0
    %v2499 = vrcp.pop %v2498
    %v2500 = vmul.f32 1.0, %v2499
    %v2501 = vadd.f32 %v2319, %v2492
    %v2502 = vxor.u32 %v2501, 2147483648
    %v2503 = vmul.f32 %v2502, 1.442695
    %v2504 = vpow.pop %v2503
    %v2505 = vadd.f32 %v2504, 1.0
    %v2506 = vrcp.pop %v2505
    %v2507 = vmul.f32 1.0, %v2506
    %v2508 = vmul.f32 %v2507, %v1985
    %v2509 = vld [vmem:[%s664] sm:$0xff]
    %v2510 = vld [vmem:[%s664 + $0x8] sm:$0xff]
    %v2511 = vld [vmem:[%s664 + $0x10] sm:$0xff]
    %v2512 = vld [vmem:[%s664 + $0x18] sm:$0xff]
    %v2513 = vld [vmem:[%s664 + $0x20] sm:$0xff]
    %v2514 = vld [vmem:[%s664 + $0x28] sm:$0xff]
    %v2515 = vld [vmem:[%s664 + $0x30] sm:$0xff]
    %v2516 = vld [vmem:[%s664 + $0x38] sm:$0xff]
    %v2517 = vld [vmem:[%s664 + $0x40] sm:$0xff]
    %v2518 = vld [vmem:[%s664 + $0x48] sm:$0xff]
    %v2519 = vld [vmem:[%s664 + $0x50] sm:$0xff]
    %v2520 = vld [vmem:[%s664 + $0x58] sm:$0xff]
    %v2521 = vld [vmem:[%s664 + $0x60] sm:$0xff]
    %v2522 = vld [vmem:[%s664 + $0x68] sm:$0xff]
    %v2523 = vld [vmem:[%s664 + $0x70] sm:$0xff]
    %v2524 = vld [vmem:[%s664 + $0x78] sm:$0xff]
    %2525 = vmatprep.subr.mxu0 0.0
    %2526 = vmatpush1.msra.mxu0 %v2509
    %2527 = vmatprep.subr.mxu0 0.0
    %2528 = vmatpush1.msra.mxu0 %v2510
    %2529 = vmatprep.subr.mxu0 0.0
    %2530 = vmatpush1.msra.mxu0 %v2511
    %2531 = vmatprep.subr.mxu0 0.0
    %2532 = vmatpush1.msra.mxu0 %v2512
    %2533 = vmatprep.subr.mxu0 0.0
    %2534 = vmatpush1.msra.mxu0 %v2513
    %2535 = vmatprep.subr.mxu0 0.0
    %2536 = vmatpush1.msra.mxu0 %v2514
    %2537 = vmatprep.subr.mxu0 0.0
    %2538 = vmatpush1.msra.mxu0 %v2515
    %2539 = vmatprep.subr.mxu0 0.0
    %2540 = vmatpush1.msra.mxu0 %v2516
    %2541 = vmatprep.subr.mxu0 0.0
    %2542 = vmatpush1.msra.mxu0 %v2517
    %2543 = vmatprep.subr.mxu0 0.0
    %2544 = vmatpush1.msra.mxu0 %v2518
    %2545 = vmatprep.subr.mxu0 0.0
    %2546 = vmatpush1.msra.mxu0 %v2519
    %2547 = vmatprep.subr.mxu0 0.0
    %2548 = vmatpush1.msra.mxu0 %v2520
    %2549 = vmatprep.subr.mxu0 0.0
    %2550 = vmatpush1.msra.mxu0 %v2521
    %2551 = vmatprep.subr.mxu0 0.0
    %2552 = vmatpush1.msra.mxu0 %v2522
    %2553 = vmatprep.subr.mxu0 0.0
    %2554 = vmatpush1.msra.mxu0 %v2523
    %2555 = vmatprep.subr.mxu0 0.0
    %2556 = vmatpush1.msra.mxu0 %v2524
    %2557 = vmatprep.subr.mxu0 0.0
    %2558 = vmatpush1.msra.mxu0 0.0
    %2559 = vmatprep.subr.mxu0 0.0
    %2560 = vmatpush1.msra.mxu0 0.0
    %2561 = vmatprep.subr.mxu0 0.0
    %2562 = vmatpush1.msra.mxu0 0.0
    %2563 = vmatprep.subr.mxu0 0.0
    %2564 = vmatpush1.msra.mxu0 0.0
    %2565 = vmatprep.subr.mxu0 0.0
    %2566 = vmatpush1.msra.mxu0 0.0
    %2567 = vmatprep.subr.mxu0 0.0
    %2568 = vmatpush1.msra.mxu0 0.0
    %2569 = vmatprep.subr.mxu0 0.0
    %2570 = vmatpush1.msra.mxu0 0.0
    %2571 = vmatprep.subr.mxu0 0.0
    %2572 = vmatpush1.msra.mxu0 0.0
    %2573 = vmatprep.subr.mxu0 0.0
    %2574 = vmatpush1.msra.mxu0 0.0
    %2575 = vmatprep.subr.mxu0 0.0
    %2576 = vmatpush1.msra.mxu0 0.0
    %2577 = vmatprep.subr.mxu0 0.0
    %2578 = vmatpush1.msra.mxu0 0.0
    %2579 = vmatprep.subr.mxu0 0.0
    %2580 = vmatpush1.msra.mxu0 0.0
    %2581 = vmatprep.subr.mxu0 0.0
    %2582 = vmatpush1.msra.mxu0 0.0
    %2583 = vmatprep.subr.mxu0 0.0
    %2584 = vmatpush1.msra.mxu0 0.0
    %2585 = vmatprep.subr.mxu0 0.0
    %2586 = vmatpush1.msra.mxu0 0.0
    %2587 = vmatprep.subr.mxu0 0.0
    %2588 = vmatpush1.msra.mxu0 0.0
    %2589 = vmatprep.mubr.f32.mxu0 0.0
    %2590 = vmatmul.mubr.f32.gmra.mrb[0].mxu0 %v2508
    %v2591 = vpop.f32.mrb[0].mxu0
    %v2592 = vadd.f32 0.0, %v2591
    %v2593 = vpop.f32.mrb[0].mxu0
    %2594 = vdwg.mxu0
    %v2595 = vadd.f32 %v2388, %v2592
    %v2596 = vtanh.pop %v2595
    %v2597 = vmul.f32 %v2500, %v1985
    %v2598 = vsub.f32 1.0, %v2500
    %v2599 = vmul.f32 %v2598, %v2596
    %v2600 = vadd.f32 %v2597, %v2599
    %s2601 = scalar_lea.vmem [#allocation2], 24
    %2602 = vst [vmem:[%s2601] sm:$0xff] %v2600
    %s2603 = scalar_lea.vmem [#allocation3], 96
    %v2604 = vld [vmem:[%s2603] sm:$0xff]
    %v2605 = vld [vmem:[%s2603 + $0x8] sm:$0xff]
    %v2606 = vld [vmem:[%s2603 + $0x10] sm:$0xff]
    %v2607 = vld [vmem:[#allocation9] sm:$0xff]
    %v2608 = vld [vmem:[#allocation9 + $0x8] sm:$0xff]
    %v2609 = vld [vmem:[#allocation9 + $0x10] sm:$0xff]
    %v2610 = vld [vmem:[#allocation9 + $0x18] sm:$0xff]
    %v2611 = vld [vmem:[#allocation9 + $0x20] sm:$0xff]
    %v2612 = vld [vmem:[#allocation9 + $0x28] sm:$0xff]
    %v2613 = vld [vmem:[#allocation9 + $0x30] sm:$0xff]
    %v2614 = vld [vmem:[#allocation9 + $0x38] sm:$0xff]
    %v2615 = vld [vmem:[#allocation9 + $0x40] sm:$0xff]
    %v2616 = vld [vmem:[#allocation9 + $0x48] sm:$0xff]
    %v2617 = vld [vmem:[#allocation9 + $0x50] sm:$0xff]
    %v2618 = vld [vmem:[#allocation9 + $0x58] sm:$0xff]
    %v2619 = vld [vmem:[#allocation9 + $0x60] sm:$0xff]
    %v2620 = vld [vmem:[#allocation9 + $0x68] sm:$0xff]
    %v2621 = vld [vmem:[#allocation9 + $0x70] sm:$0xff]
    %v2622 = vld [vmem:[#allocation9 + $0x78] sm:$0xff]
    %v2623 = vld [vmem:[#allocation9 + $0x80] sm:$0xff]
    %v2624 = vld [vmem:[#allocation9 + $0x88] sm:$0xff]
    %v2625 = vld [vmem:[#allocation9 + $0x90] sm:$0xff]
    %v2626 = vld [vmem:[#allocation9 + $0x98] sm:$0xff]
    %v2627 = vld [vmem:[#allocation9 + $0xa0] sm:$0xff]
    %v2628 = vld [vmem:[#allocation9 + $0xa8] sm:$0xff]
    %v2629 = vld [vmem:[#allocation9 + $0xb0] sm:$0xff]
    %v2630 = vld [vmem:[#allocation9 + $0xb8] sm:$0xff]
    %v2631 = vld [vmem:[#allocation9 + $0xc0] sm:$0xff]
    %v2632 = vld [vmem:[#allocation9 + $0xc8] sm:$0xff]
    %v2633 = vld [vmem:[#allocation9 + $0xd0] sm:$0xff]
    %v2634 = vld [vmem:[#allocation9 + $0xd8] sm:$0xff]
    %v2635 = vld [vmem:[#allocation9 + $0xe0] sm:$0xff]
    %v2636 = vld [vmem:[#allocation9 + $0xe8] sm:$0xff]
    %v2637 = vld [vmem:[#allocation9 + $0xf0] sm:$0xff]
    %v2638 = vld [vmem:[#allocation9 + $0xf8] sm:$0xff]
    %2639 = vmatprep.subr.mxu0 %v2608
    %2640 = vmatpush1.msra.mxu0 %v2607
    %2641 = vmatprep.subr.mxu0 %v2610
    %2642 = vmatpush1.msra.mxu0 %v2609
    %2643 = vmatprep.subr.mxu0 %v2612
    %2644 = vmatpush1.msra.mxu0 %v2611
    %2645 = vmatprep.subr.mxu0 %v2614
    %2646 = vmatpush1.msra.mxu0 %v2613
    %2647 = vmatprep.subr.mxu0 %v2616
    %2648 = vmatpush1.msra.mxu0 %v2615
    %2649 = vmatprep.subr.mxu0 %v2618
    %2650 = vmatpush1.msra.mxu0 %v2617
    %2651 = vmatprep.subr.mxu0 %v2620
    %2652 = vmatpush1.msra.mxu0 %v2619
    %2653 = vmatprep.subr.mxu0 %v2622
    %2654 = vmatpush1.msra.mxu0 %v2621
    %2655 = vmatprep.subr.mxu0 %v2624
    %2656 = vmatpush1.msra.mxu0 %v2623
    %2657 = vmatprep.subr.mxu0 %v2626
    %2658 = vmatpush1.msra.mxu0 %v2625
    %2659 = vmatprep.subr.mxu0 %v2628
    %2660 = vmatpush1.msra.mxu0 %v2627
    %2661 = vmatprep.subr.mxu0 %v2630
    %2662 = vmatpush1.msra.mxu0 %v2629
    %2663 = vmatprep.subr.mxu0 %v2632
    %2664 = vmatpush1.msra.mxu0 %v2631
    %2665 = vmatprep.subr.mxu0 %v2634
    %2666 = vmatpush1.msra.mxu0 %v2633
    %2667 = vmatprep.subr.mxu0 %v2636
    %2668 = vmatpush1.msra.mxu0 %v2635
    %2669 = vmatprep.subr.mxu0 %v2638
    %2670 = vmatpush1.msra.mxu0 %v2637
    %2671 = vmatprep.subr.mxu0 0.0
    %2672 = vmatpush1.msra.mxu0 0.0
    %2673 = vmatprep.subr.mxu0 0.0
    %2674 = vmatpush1.msra.mxu0 0.0
    %2675 = vmatprep.subr.mxu0 0.0
    %2676 = vmatpush1.msra.mxu0 0.0
    %2677 = vmatprep.subr.mxu0 0.0
    %2678 = vmatpush1.msra.mxu0 0.0
    %2679 = vmatprep.subr.mxu0 0.0
    %2680 = vmatpush1.msra.mxu0 0.0
    %2681 = vmatprep.subr.mxu0 0.0
    %2682 = vmatpush1.msra.mxu0 0.0
    %2683 = vmatprep.subr.mxu0 0.0
    %2684 = vmatpush1.msra.mxu0 0.0
    %2685 = vmatprep.subr.mxu0 0.0
    %2686 = vmatpush1.msra.mxu0 0.0
    %2687 = vmatprep.subr.mxu0 0.0
    %2688 = vmatpush1.msra.mxu0 0.0
    %2689 = vmatprep.subr.mxu0 0.0
    %2690 = vmatpush1.msra.mxu0 0.0
    %2691 = vmatprep.subr.mxu0 0.0
    %2692 = vmatpush1.msra.mxu0 0.0
    %2693 = vmatprep.subr.mxu0 0.0
    %2694 = vmatpush1.msra.mxu0 0.0
    %2695 = vmatprep.subr.mxu0 0.0
    %2696 = vmatpush1.msra.mxu0 0.0
    %2697 = vmatprep.subr.mxu0 0.0
    %2698 = vmatpush1.msra.mxu0 0.0
    %2699 = vmatprep.subr.mxu0 0.0
    %2700 = vmatpush1.msra.mxu0 0.0
    %2701 = vmatprep.subr.mxu0 0.0
    %2702 = vmatpush1.msra.mxu0 0.0
    %2703 = vmatprep.mubr.f32.mxu0 0.0
    %2704 = vmatmul.mubr.f32.gmra.mrb[0].mxu0 %v2201
    %v2705 = vpop.f32.mrb[0].mxu0
    %v2706 = vadd.f32 0.0, %v2705
    %v2707 = vpop.f32.mrb[0].mxu0
    %v2708 = vadd.f32 0.0, %v2707
    %2709 = vdwg.mxu0
    %v2710 = vadd.f32 %v2604, %v2706
    %v2711 = vxor.u32 %v2710, 2147483648
    %v2712 = vmul.f32 %v2711, 1.442695
    %v2713 = vpow.pop %v2712
    %v2714 = vadd.f32 %v2713, 1.0
    %v2715 = vrcp.pop %v2714
    %v2716 = vmul.f32 1.0, %v2715
    %v2717 = vadd.f32 %v2605, %v2708
    %v2718 = vxor.u32 %v2717, 2147483648
    %v2719 = vmul.f32 %v2718, 1.442695
    %v2720 = vpow.pop %v2719
    %v2721 = vadd.f32 %v2720, 1.0
    %v2722 = vrcp.pop %v2721
    %v2723 = vmul.f32 1.0, %v2722
    %v2724 = vmul.f32 %v2723, %v2201
    %v2725 = vld [vmem:[#allocation11] sm:$0xff]
    %v2726 = vld [vmem:[#allocation11 + $0x8] sm:$0xff]
    %v2727 = vld [vmem:[#allocation11 + $0x10] sm:$0xff]
    %v2728 = vld [vmem:[#allocation11 + $0x18] sm:$0xff]
    %v2729 = vld [vmem:[#allocation11 + $0x20] sm:$0xff]
    %v2730 = vld [vmem:[#allocation11 + $0x28] sm:$0xff]
    %v2731 = vld [vmem:[#allocation11 + $0x30] sm:$0xff]
    %v2732 = vld [vmem:[#allocation11 + $0x38] sm:$0xff]
    %v2733 = vld [vmem:[#allocation11 + $0x40] sm:$0xff]
    %v2734 = vld [vmem:[#allocation11 + $0x48] sm:$0xff]
    %v2735 = vld [vmem:[#allocation11 + $0x50] sm:$0xff]
    %v2736 = vld [vmem:[#allocation11 + $0x58] sm:$0xff]
    %v2737 = vld [vmem:[#allocation11 + $0x60] sm:$0xff]
    %v2738 = vld [vmem:[#allocation11 + $0x68] sm:$0xff]
    %v2739 = vld [vmem:[#allocation11 + $0x70] sm:$0xff]
    %v2740 = vld [vmem:[#allocation11 + $0x78] sm:$0xff]
    %2741 = vmatprep.subr.mxu0 0.0
    %2742 = vmatpush1.msra.mxu0 %v2725
    %2743 = vmatprep.subr.mxu0 0.0
    %2744 = vmatpush1.msra.mxu0 %v2726
    %2745 = vmatprep.subr.mxu0 0.0
    %2746 = vmatpush1.msra.mxu0 %v2727
    %2747 = vmatprep.subr.mxu0 0.0
    %2748 = vmatpush1.msra.mxu0 %v2728
    %2749 = vmatprep.subr.mxu0 0.0
    %2750 = vmatpush1.msra.mxu0 %v2729
    %2751 = vmatprep.subr.mxu0 0.0
    %2752 = vmatpush1.msra.mxu0 %v2730
    %2753 = vmatprep.subr.mxu0 0.0
    %2754 = vmatpush1.msra.mxu0 %v2731
    %2755 = vmatprep.subr.mxu0 0.0
    %2756 = vmatpush1.msra.mxu0 %v2732
    %2757 = vmatprep.subr.mxu0 0.0
    %2758 = vmatpush1.msra.mxu0 %v2733
    %2759 = vmatprep.subr.mxu0 0.0
    %2760 = vmatpush1.msra.mxu0 %v2734
    %2761 = vmatprep.subr.mxu0 0.0
    %2762 = vmatpush1.msra.mxu0 %v2735
    %2763 = vmatprep.subr.mxu0 0.0
    %2764 = vmatpush1.msra.mxu0 %v2736
    %2765 = vmatprep.subr.mxu0 0.0
    %2766 = vmatpush1.msra.mxu0 %v2737
    %2767 = vmatprep.subr.mxu0 0.0
    %2768 = vmatpush1.msra.mxu0 %v2738
    %2769 = vmatprep.subr.mxu0 0.0
    %2770 = vmatpush1.msra.mxu0 %v2739
    %2771 = vmatprep.subr.mxu0 0.0
    %2772 = vmatpush1.msra.mxu0 %v2740
    %2773 = vmatprep.subr.mxu0 0.0
    %2774 = vmatpush1.msra.mxu0 0.0
    %2775 = vmatprep.subr.mxu0 0.0
    %2776 = vmatpush1.msra.mxu0 0.0
    %2777 = vmatprep.subr.mxu0 0.0
    %2778 = vmatpush1.msra.mxu0 0.0
    %2779 = vmatprep.subr.mxu0 0.0
    %2780 = vmatpush1.msra.mxu0 0.0
    %2781 = vmatprep.subr.mxu0 0.0
    %2782 = vmatpush1.msra.mxu0 0.0
    %2783 = vmatprep.subr.mxu0 0.0
    %2784 = vmatpush1.msra.mxu0 0.0
    %2785 = vmatprep.subr.mxu0 0.0
    %2786 = vmatpush1.msra.mxu0 0.0
    %2787 = vmatprep.subr.mxu0 0.0
    %2788 = vmatpush1.msra.mxu0 0.0
    %2789 = vmatprep.subr.mxu0 0.0
    %2790 = vmatpush1.msra.mxu0 0.0
    %2791 = vmatprep.subr.mxu0 0.0
    %2792 = vmatpush1.msra.mxu0 0.0
    %2793 = vmatprep.subr.mxu0 0.0
    %2794 = vmatpush1.msra.mxu0 0.0
    %2795 = vmatprep.subr.mxu0 0.0
    %2796 = vmatpush1.msra.mxu0 0.0
    %2797 = vmatprep.subr.mxu0 0.0
    %2798 = vmatpush1.msra.mxu0 0.0
    %2799 = vmatprep.subr.mxu0 0.0
    %2800 = vmatpush1.msra.mxu0 0.0
    %2801 = vmatprep.subr.mxu0 0.0
    %2802 = vmatpush1.msra.mxu0 0.0
    %2803 = vmatprep.subr.mxu0 0.0
    %2804 = vmatpush1.msra.mxu0 0.0
    %2805 = vmatprep.mubr.f32.mxu0 0.0
    %2806 = vmatmul.mubr.f32.gmra.mrb[0].mxu0 %v2724
    %v2807 = vpop.f32.mrb[0].mxu0
    %v2808 = vadd.f32 0.0, %v2807
    %v2809 = vpop.f32.mrb[0].mxu0
    %2810 = vdwg.mxu0
    %v2811 = vadd.f32 %v2606, %v2808
    %v2812 = vtanh.pop %v2811
    %v2813 = vmul.f32 %v2716, %v2201
    %v2814 = vsub.f32 1.0, %v2716
    %v2815 = vmul.f32 %v2814, %v2812
    %v2816 = vadd.f32 %v2813, %v2815
    %v2817 = vld [vmem:[#allocation8] sm:$0xff]
    %v2818 = vld [vmem:[#allocation8 + $0x8] sm:$0xff]
    %v2819 = vld [vmem:[#allocation8 + $0x10] sm:$0xff]
    %v2820 = vld [vmem:[#allocation8 + $0x18] sm:$0xff]
    %v2821 = vld [vmem:[#allocation8 + $0x20] sm:$0xff]
    %v2822 = vld [vmem:[#allocation8 + $0x28] sm:$0xff]
    %v2823 = vld [vmem:[#allocation8 + $0x30] sm:$0xff]
    %v2824 = vld [vmem:[#allocation8 + $0x38] sm:$0xff]
    %v2825 = vld [vmem:[#allocation8 + $0x40] sm:$0xff]
    %v2826 = vld [vmem:[#allocation8 + $0x48] sm:$0xff]
    %v2827 = vld [vmem:[#allocation8 + $0x50] sm:$0xff]
    %v2828 = vld [vmem:[#allocation8 + $0x58] sm:$0xff]
    %v2829 = vld [vmem:[#allocation8 + $0x60] sm:$0xff]
    %v2830 = vld [vmem:[#allocation8 + $0x68] sm:$0xff]
    %v2831 = vld [vmem:[#allocation8 + $0x70] sm:$0xff]
    %v2832 = vld [vmem:[#allocation8 + $0x78] sm:$0xff]
    %v2833 = vld [vmem:[#allocation8 + $0x80] sm:$0xff]
    %v2834 = vld [vmem:[#allocation8 + $0x88] sm:$0xff]
    %v2835 = vld [vmem:[#allocation8 + $0x90] sm:$0xff]
    %v2836 = vld [vmem:[#allocation8 + $0x98] sm:$0xff]
    %v2837 = vld [vmem:[#allocation8 + $0xa0] sm:$0xff]
    %v2838 = vld [vmem:[#allocation8 + $0xa8] sm:$0xff]
    %v2839 = vld [vmem:[#allocation8 + $0xb0] sm:$0xff]
    %v2840 = vld [vmem:[#allocation8 + $0xb8] sm:$0xff]
    %v2841 = vld [vmem:[#allocation8 + $0xc0] sm:$0xff]
    %v2842 = vld [vmem:[#allocation8 + $0xc8] sm:$0xff]
    %v2843 = vld [vmem:[#allocation8 + $0xd0] sm:$0xff]
    %v2844 = vld [vmem:[#allocation8 + $0xd8] sm:$0xff]
    %v2845 = vld [vmem:[#allocation8 + $0xe0] sm:$0xff]
    %v2846 = vld [vmem:[#allocation8 + $0xe8] sm:$0xff]
    %v2847 = vld [vmem:[#allocation8 + $0xf0] sm:$0xff]
    %v2848 = vld [vmem:[#allocation8 + $0xf8] sm:$0xff]
    %v2849 = vld [vmem:[#allocation8 + $0x100] sm:$0xff]
    %v2850 = vld [vmem:[#allocation8 + $0x108] sm:$0xff]
    %v2851 = vld [vmem:[#allocation8 + $0x110] sm:$0xff]
    %v2852 = vld [vmem:[#allocation8 + $0x118] sm:$0xff]
    %v2853 = vld [vmem:[#allocation8 + $0x120] sm:$0xff]
    %v2854 = vld [vmem:[#allocation8 + $0x128] sm:$0xff]
    %v2855 = vld [vmem:[#allocation8 + $0x130] sm:$0xff]
    %v2856 = vld [vmem:[#allocation8 + $0x138] sm:$0xff]
    %v2857 = vld [vmem:[#allocation8 + $0x140] sm:$0xff]
    %v2858 = vld [vmem:[#allocation8 + $0x148] sm:$0xff]
    %v2859 = vld [vmem:[#allocation8 + $0x150] sm:$0xff]
    %v2860 = vld [vmem:[#allocation8 + $0x158] sm:$0xff]
    %v2861 = vld [vmem:[#allocation8 + $0x160] sm:$0xff]
    %v2862 = vld [vmem:[#allocation8 + $0x168] sm:$0xff]
    %v2863 = vld [vmem:[#allocation8 + $0x170] sm:$0xff]
    %v2864 = vld [vmem:[#allocation8 + $0x178] sm:$0xff]
    %2865 = vmatprep.subr.mxu0 %v2818
    %2866 = vmatpush1.msra.mxu0 %v2817
    %2867 = vmatprep.subr.mxu0 %v2821
    %2868 = vmatpush1.msra.mxu0 %v2820
    %2869 = vmatprep.subr.mxu0 %v2824
    %2870 = vmatpush1.msra.mxu0 %v2823
    %2871 = vmatprep.subr.mxu0 %v2827
    %2872 = vmatpush1.msra.mxu0 %v2826
    %2873 = vmatprep.subr.mxu0 %v2830
    %2874 = vmatpush1.msra.mxu0 %v2829
    %2875 = vmatprep.subr.mxu0 %v2833
    %2876 = vmatpush1.msra.mxu0 %v2832
    %2877 = vmatprep.subr.mxu0 %v2836
    %2878 = vmatpush1.msra.mxu0 %v2835
    %2879 = vmatprep.subr.mxu0 %v2839
    %2880 = vmatpush1.msra.mxu0 %v2838
    %2881 = vmatprep.subr.mxu0 %v2842
    %2882 = vmatpush1.msra.mxu0 %v2841
    %2883 = vmatprep.subr.mxu0 %v2845
    %2884 = vmatpush1.msra.mxu0 %v2844
    %2885 = vmatprep.subr.mxu0 %v2848
    %2886 = vmatpush1.msra.mxu0 %v2847
    %2887 = vmatprep.subr.mxu0 %v2851
    %2888 = vmatpush1.msra.mxu0 %v2850
    %2889 = vmatprep.subr.mxu0 %v2854
    %2890 = vmatpush1.msra.mxu0 %v2853
    %2891 = vmatprep.subr.mxu0 %v2857
    %2892 = vmatpush1.msra.mxu0 %v2856
    %2893 = vmatprep.subr.mxu0 %v2860
    %2894 = vmatpush1.msra.mxu0 %v2859
    %2895 = vmatprep.subr.mxu0 %v2863
    %2896 = vmatpush1.msra.mxu0 %v2862
    %2897 = vmatprep.subr.mxu0 0.0
    %2898 = vmatpush1.msra.mxu0 0.0
    %2899 = vmatprep.subr.mxu0 0.0
    %2900 = vmatpush1.msra.mxu0 0.0
    %2901 = vmatprep.subr.mxu0 0.0
    %2902 = vmatpush1.msra.mxu0 0.0
    %2903 = vmatprep.subr.mxu0 0.0
    %2904 = vmatpush1.msra.mxu0 0.0
    %2905 = vmatprep.subr.mxu0 0.0
    %2906 = vmatpush1.msra.mxu0 0.0
    %2907 = vmatprep.subr.mxu0 0.0
    %2908 = vmatpush1.msra.mxu0 0.0
    %2909 = vmatprep.subr.mxu0 0.0
    %2910 = vmatpush1.msra.mxu0 0.0
    %2911 = vmatprep.subr.mxu0 0.0
    %2912 = vmatpush1.msra.mxu0 0.0
    %2913 = vmatprep.subr.mxu0 0.0
    %2914 = vmatpush1.msra.mxu0 0.0
    %2915 = vmatprep.subr.mxu0 0.0
    %2916 = vmatpush1.msra.mxu0 0.0
    %2917 = vmatprep.subr.mxu0 0.0
    %2918 = vmatpush1.msra.mxu0 0.0
    %2919 = vmatprep.subr.mxu0 0.0
    %2920 = vmatpush1.msra.mxu0 0.0
    %2921 = vmatprep.subr.mxu0 0.0
    %2922 = vmatpush1.msra.mxu0 0.0
    %2923 = vmatprep.subr.mxu0 0.0
    %2924 = vmatpush1.msra.mxu0 0.0
    %2925 = vmatprep.subr.mxu0 0.0
    %2926 = vmatpush1.msra.mxu0 0.0
    %2927 = vmatprep.subr.mxu0 0.0
    %2928 = vmatpush1.msra.mxu0 0.0
    %2929 = vmatprep.mubr.f32.mxu0 0.0
    %2930 = vmatmul.mubr.f32.gmra.mrb[0].mxu0 %v2816
    %v2931 = vpop.f32.mrb[0].mxu0
    %v2932 = vadd.f32 %v131, %v2931
    %v2933 = vpop.f32.mrb[0].mxu0
    %v2934 = vadd.f32 %v135, %v2933
    %2935 = vdwg.mxu0
    %2936 = vmatprep.subr.mxu0 0.0
    %2937 = vmatpush1.msra.mxu0 %v2819
    %2938 = vmatprep.subr.mxu0 0.0
    %2939 = vmatpush1.msra.mxu0 %v2822
    %2940 = vmatprep.subr.mxu0 0.0
    %2941 = vmatpush1.msra.mxu0 %v2825
    %2942 = vmatprep.subr.mxu0 0.0
    %2943 = vmatpush1.msra.mxu0 %v2828
    %2944 = vmatprep.subr.mxu0 0.0
    %2945 = vmatpush1.msra.mxu0 %v2831
    %2946 = vmatprep.subr.mxu0 0.0
    %2947 = vmatpush1.msra.mxu0 %v2834
    %2948 = vmatprep.subr.mxu0 0.0
    %2949 = vmatpush1.msra.mxu0 %v2837
    %2950 = vmatprep.subr.mxu0 0.0
    %2951 = vmatpush1.msra.mxu0 %v2840
    %2952 = vmatprep.subr.mxu0 0.0
    %2953 = vmatpush1.msra.mxu0 %v2843
    %2954 = vmatprep.subr.mxu0 0.0
    %2955 = vmatpush1.msra.mxu0 %v2846
    %2956 = vmatprep.subr.mxu0 0.0
    %2957 = vmatpush1.msra.mxu0 %v2849
    %2958 = vmatprep.subr.mxu0 0.0
    %2959 = vmatpush1.msra.mxu0 %v2852
    %2960 = vmatprep.subr.mxu0 0.0
    %2961 = vmatpush1.msra.mxu0 %v2855
    %2962 = vmatprep.subr.mxu0 0.0
    %2963 = vmatpush1.msra.mxu0 %v2858
    %2964 = vmatprep.subr.mxu0 0.0
    %2965 = vmatpush1.msra.mxu0 %v2861
    %2966 = vmatprep.subr.mxu0 0.0
    %2967 = vmatpush1.msra.mxu0 %v2864
    %2968 = vmatprep.subr.mxu0 0.0
    %2969 = vmatpush1.msra.mxu0 0.0
    %2970 = vmatprep.subr.mxu0 0.0
    %2971 = vmatpush1.msra.mxu0 0.0
    %2972 = vmatprep.subr.mxu0 0.0
    %2973 = vmatpush1.msra.mxu0 0.0
    %2974 = vmatprep.subr.mxu0 0.0
    %2975 = vmatpush1.msra.mxu0 0.0
    %2976 = vmatprep.subr.mxu0 0.0
    %2977 = vmatpush1.msra.mxu0 0.0
    %2978 = vmatprep.subr.mxu0 0.0
    %2979 = vmatpush1.msra.mxu0 0.0
    %2980 = vmatprep.subr.mxu0 0.0
    %2981 = vmatpush1.msra.mxu0 0.0
    %2982 = vmatprep.subr.mxu0 0.0
    %2983 = vmatpush1.msra.mxu0 0.0
    %2984 = vmatprep.subr.mxu0 0.0
    %2985 = vmatpush1.msra.mxu0 0.0
    %2986 = vmatprep.subr.mxu0 0.0
    %2987 = vmatpush1.msra.mxu0 0.0
    %2988 = vmatprep.subr.mxu0 0.0
    %2989 = vmatpush1.msra.mxu0 0.0
    %2990 = vmatprep.subr.mxu0 0.0
    %2991 = vmatpush1.msra.mxu0 0.0
    %2992 = vmatprep.subr.mxu0 0.0
    %2993 = vmatpush1.msra.mxu0 0.0
    %2994 = vmatprep.subr.mxu0 0.0
    %2995 = vmatpush1.msra.mxu0 0.0
    %2996 = vmatprep.subr.mxu0 0.0
    %2997 = vmatpush1.msra.mxu0 0.0
    %2998 = vmatprep.subr.mxu0 0.0
    %2999 = vmatpush1.msra.mxu0 0.0
    %3000 = vmatprep.mubr.f32.mxu0 0.0
    %3001 = vmatmul.mubr.f32.gmra.mrb[0].mxu0 %v2816
    %v3002 = vpop.f32.mrb[0].mxu0
    %v3003 = vadd.f32 %v139, %v3002
    %v3004 = vpop.f32.mrb[0].mxu0
    %3005 = vdwg.mxu0
    %v3006 = vld [vmem:[%s545] sm:$0xff]
    %v3007 = vld [vmem:[%s545 + $0x8] sm:$0xff]
    %v3008 = vld [vmem:[%s545 + $0x10] sm:$0xff]
    %v3009 = vld [vmem:[%s545 + $0x18] sm:$0xff]
    %v3010 = vld [vmem:[%s545 + $0x20] sm:$0xff]
    %v3011 = vld [vmem:[%s545 + $0x28] sm:$0xff]
    %v3012 = vld [vmem:[%s545 + $0x30] sm:$0xff]
    %v3013 = vld [vmem:[%s545 + $0x38] sm:$0xff]
    %v3014 = vld [vmem:[%s545 + $0x40] sm:$0xff]
    %v3015 = vld [vmem:[%s545 + $0x48] sm:$0xff]
    %v3016 = vld [vmem:[%s545 + $0x50] sm:$0xff]
    %v3017 = vld [vmem:[%s545 + $0x58] sm:$0xff]
    %v3018 = vld [vmem:[%s545 + $0x60] sm:$0xff]
    %v3019 = vld [vmem:[%s545 + $0x68] sm:$0xff]
    %v3020 = vld [vmem:[%s545 + $0x70] sm:$0xff]
    %v3021 = vld [vmem:[%s545 + $0x78] sm:$0xff]
    %v3022 = vld [vmem:[%s545 + $0x80] sm:$0xff]
    %v3023 = vld [vmem:[%s545 + $0x88] sm:$0xff]
    %v3024 = vld [vmem:[%s545 + $0x90] sm:$0xff]
    %v3025 = vld [vmem:[%s545 + $0x98] sm:$0xff]
    %v3026 = vld [vmem:[%s545 + $0xa0] sm:$0xff]
    %v3027 = vld [vmem:[%s545 + $0xa8] sm:$0xff]
    %v3028 = vld [vmem:[%s545 + $0xb0] sm:$0xff]
    %v3029 = vld [vmem:[%s545 + $0xb8] sm:$0xff]
    %v3030 = vld [vmem:[%s545 + $0xc0] sm:$0xff]
    %v3031 = vld [vmem:[%s545 + $0xc8] sm:$0xff]
    %v3032 = vld [vmem:[%s545 + $0xd0] sm:$0xff]
    %v3033 = vld [vmem:[%s545 + $0xd8] sm:$0xff]
    %v3034 = vld [vmem:[%s545 + $0xe0] sm:$0xff]
    %v3035 = vld [vmem:[%s545 + $0xe8] sm:$0xff]
    %v3036 = vld [vmem:[%s545 + $0xf0] sm:$0xff]
    %v3037 = vld [vmem:[%s545 + $0xf8] sm:$0xff]
    %3038 = vmatprep.subr.mxu0 %v3007
    %3039 = vmatpush1.msra.mxu0 %v3006
    %3040 = vmatprep.subr.mxu0 %v3009
    %3041 = vmatpush1.msra.mxu0 %v3008
    %3042 = vmatprep.subr.mxu0 %v3011
    %3043 = vmatpush1.msra.mxu0 %v3010
    %3044 = vmatprep.subr.mxu0 %v3013
    %3045 = vmatpush1.msra.mxu0 %v3012
    %3046 = vmatprep.subr.mxu0 %v3015
    %3047 = vmatpush1.msra.mxu0 %v3014
    %3048 = vmatprep.subr.mxu0 %v3017
    %3049 = vmatpush1.msra.mxu0 %v3016
    %3050 = vmatprep.subr.mxu0 %v3019
    %3051 = vmatpush1.msra.mxu0 %v3018
    %3052 = vmatprep.subr.mxu0 %v3021
    %3053 = vmatpush1.msra.mxu0 %v3020
    %3054 = vmatprep.subr.mxu0 %v3023
    %3055 = vmatpush1.msra.mxu0 %v3022
    %3056 = vmatprep.subr.mxu0 %v3025
    %3057 = vmatpush1.msra.mxu0 %v3024
    %3058 = vmatprep.subr.mxu0 %v3027
    %3059 = vmatpush1.msra.mxu0 %v3026
    %3060 = vmatprep.subr.mxu0 %v3029
    %3061 = vmatpush1.msra.mxu0 %v3028
    %3062 = vmatprep.subr.mxu0 %v3031
    %3063 = vmatpush1.msra.mxu0 %v3030
    %3064 = vmatprep.subr.mxu0 %v3033
    %3065 = vmatpush1.msra.mxu0 %v3032
    %3066 = vmatprep.subr.mxu0 %v3035
    %3067 = vmatpush1.msra.mxu0 %v3034
    %3068 = vmatprep.subr.mxu0 %v3037
    %3069 = vmatpush1.msra.mxu0 %v3036
    %3070 = vmatprep.subr.mxu0 0.0
    %3071 = vmatpush1.msra.mxu0 0.0
    %3072 = vmatprep.subr.mxu0 0.0
    %3073 = vmatpush1.msra.mxu0 0.0
    %3074 = vmatprep.subr.mxu0 0.0
    %3075 = vmatpush1.msra.mxu0 0.0
    %3076 = vmatprep.subr.mxu0 0.0
    %3077 = vmatpush1.msra.mxu0 0.0
    %3078 = vmatprep.subr.mxu0 0.0
    %3079 = vmatpush1.msra.mxu0 0.0
    %3080 = vmatprep.subr.mxu0 0.0
    %3081 = vmatpush1.msra.mxu0 0.0
    %3082 = vmatprep.subr.mxu0 0.0
    %3083 = vmatpush1.msra.mxu0 0.0
    %3084 = vmatprep.subr.mxu0 0.0
    %3085 = vmatpush1.msra.mxu0 0.0
    %3086 = vmatprep.subr.mxu0 0.0
    %3087 = vmatpush1.msra.mxu0 0.0
    %3088 = vmatprep.subr.mxu0 0.0
    %3089 = vmatpush1.msra.mxu0 0.0
    %3090 = vmatprep.subr.mxu0 0.0
    %3091 = vmatpush1.msra.mxu0 0.0
    %3092 = vmatprep.subr.mxu0 0.0
    %3093 = vmatpush1.msra.mxu0 0.0
    %3094 = vmatprep.subr.mxu0 0.0
    %3095 = vmatpush1.msra.mxu0 0.0
    %3096 = vmatprep.subr.mxu0 0.0
    %3097 = vmatpush1.msra.mxu0 0.0
    %3098 = vmatprep.subr.mxu0 0.0
    %3099 = vmatpush1.msra.mxu0 0.0
    %3100 = vmatprep.subr.mxu0 0.0
    %3101 = vmatpush1.msra.mxu0 0.0
    %3102 = vmatprep.mubr.f32.mxu0 0.0
    %3103 = vmatmul.mubr.f32.gmra.mrb[0].mxu0 %v2600
    %v3104 = vpop.f32.mrb[0].mxu0
    %v3105 = vadd.f32 0.0, %v3104
    %v3106 = vpop.f32.mrb[0].mxu0
    %v3107 = vadd.f32 0.0, %v3106
    %3108 = vdwg.mxu0
    %v3109 = vadd.f32 %v2932, %v3105
    %v3110 = vxor.u32 %v3109, 2147483648
    %v3111 = vmul.f32 %v3110, 1.442695
    %v3112 = vpow.pop %v3111
    %v3113 = vadd.f32 %v3112, 1.0
    %v3114 = vrcp.pop %v3113
    %v3115 = vmul.f32 1.0, %v3114
    %v3116 = vadd.f32 %v2934, %v3107
    %v3117 = vxor.u32 %v3116, 2147483648
    %v3118 = vmul.f32 %v3117, 1.442695
    %v3119 = vpow.pop %v3118
    %v3120 = vadd.f32 %v3119, 1.0
    %v3121 = vrcp.pop %v3120
    %v3122 = vmul.f32 1.0, %v3121
    %v3123 = vmul.f32 %v3122, %v2600
    %v3124 = vld [vmem:[%s664] sm:$0xff]
    %v3125 = vld [vmem:[%s664 + $0x8] sm:$0xff]
    %v3126 = vld [vmem:[%s664 + $0x10] sm:$0xff]
    %v3127 = vld [vmem:[%s664 + $0x18] sm:$0xff]
    %v3128 = vld [vmem:[%s664 + $0x20] sm:$0xff]
    %v3129 = vld [vmem:[%s664 + $0x28] sm:$0xff]
    %v3130 = vld [vmem:[%s664 + $0x30] sm:$0xff]
    %v3131 = vld [vmem:[%s664 + $0x38] sm:$0xff]
    %v3132 = vld [vmem:[%s664 + $0x40] sm:$0xff]
    %v3133 = vld [vmem:[%s664 + $0x48] sm:$0xff]
    %v3134 = vld [vmem:[%s664 + $0x50] sm:$0xff]
    %v3135 = vld [vmem:[%s664 + $0x58] sm:$0xff]
    %v3136 = vld [vmem:[%s664 + $0x60] sm:$0xff]
    %v3137 = vld [vmem:[%s664 + $0x68] sm:$0xff]
    %v3138 = vld [vmem:[%s664 + $0x70] sm:$0xff]
    %v3139 = vld [vmem:[%s664 + $0x78] sm:$0xff]
    %3140 = vmatprep.subr.mxu0 0.0
    %3141 = vmatpush1.msra.mxu0 %v3124
    %3142 = vmatprep.subr.mxu0 0.0
    %3143 = vmatpush1.msra.mxu0 %v3125
    %3144 = vmatprep.subr.mxu0 0.0
    %3145 = vmatpush1.msra.mxu0 %v3126
    %3146 = vmatprep.subr.mxu0 0.0
    %3147 = vmatpush1.msra.mxu0 %v3127
    %3148 = vmatprep.subr.mxu0 0.0
    %3149 = vmatpush1.msra.mxu0 %v3128
    %3150 = vmatprep.subr.mxu0 0.0
    %3151 = vmatpush1.msra.mxu0 %v3129
    %3152 = vmatprep.subr.mxu0 0.0
    %3153 = vmatpush1.msra.mxu0 %v3130
    %3154 = vmatprep.subr.mxu0 0.0
    %3155 = vmatpush1.msra.mxu0 %v3131
    %3156 = vmatprep.subr.mxu0 0.0
    %3157 = vmatpush1.msra.mxu0 %v3132
    %3158 = vmatprep.subr.mxu0 0.0
    %3159 = vmatpush1.msra.mxu0 %v3133
    %3160 = vmatprep.subr.mxu0 0.0
    %3161 = vmatpush1.msra.mxu0 %v3134
    %3162 = vmatprep.subr.mxu0 0.0
    %3163 = vmatpush1.msra.mxu0 %v3135
    %3164 = vmatprep.subr.mxu0 0.0
    %3165 = vmatpush1.msra.mxu0 %v3136
    %3166 = vmatprep.subr.mxu0 0.0
    %3167 = vmatpush1.msra.mxu0 %v3137
    %3168 = vmatprep.subr.mxu0 0.0
    %3169 = vmatpush1.msra.mxu0 %v3138
    %3170 = vmatprep.subr.mxu0 0.0
    %3171 = vmatpush1.msra.mxu0 %v3139
    %3172 = vmatprep.subr.mxu0 0.0
    %3173 = vmatpush1.msra.mxu0 0.0
    %3174 = vmatprep.subr.mxu0 0.0
    %3175 = vmatpush1.msra.mxu0 0.0
    %3176 = vmatprep.subr.mxu0 0.0
    %3177 = vmatpush1.msra.mxu0 0.0
    %3178 = vmatprep.subr.mxu0 0.0
    %3179 = vmatpush1.msra.mxu0 0.0
    %3180 = vmatprep.subr.mxu0 0.0
    %3181 = vmatpush1.msra.mxu0 0.0
    %3182 = vmatprep.subr.mxu0 0.0
    %3183 = vmatpush1.msra.mxu0 0.0
    %3184 = vmatprep.subr.mxu0 0.0
    %3185 = vmatpush1.msra.mxu0 0.0
    %3186 = vmatprep.subr.mxu0 0.0
    %3187 = vmatpush1.msra.mxu0 0.0
    %3188 = vmatprep.subr.mxu0 0.0
    %3189 = vmatpush1.msra.mxu0 0.0
    %3190 = vmatprep.subr.mxu0 0.0
    %3191 = vmatpush1.msra.mxu0 0.0
    %3192 = vmatprep.subr.mxu0 0.0
    %3193 = vmatpush1.msra.mxu0 0.0
    %3194 = vmatprep.subr.mxu0 0.0
    %3195 = vmatpush1.msra.mxu0 0.0
    %3196 = vmatprep.subr.mxu0 0.0
    %3197 = vmatpush1.msra.mxu0 0.0
    %3198 = vmatprep.subr.mxu0 0.0
    %3199 = vmatpush1.msra.mxu0 0.0
    %3200 = vmatprep.subr.mxu0 0.0
    %3201 = vmatpush1.msra.mxu0 0.0
    %3202 = vmatprep.subr.mxu0 0.0
    %3203 = vmatpush1.msra.mxu0 0.0
    %3204 = vmatprep.mubr.f32.mxu0 0.0
    %3205 = vmatmul.mubr.f32.gmra.mrb[0].mxu0 %v3123
    %v3206 = vpop.f32.mrb[0].mxu0
    %v3207 = vadd.f32 0.0, %v3206
    %v3208 = vpop.f32.mrb[0].mxu0
    %3209 = vdwg.mxu0
    %v3210 = vadd.f32 %v3003, %v3207
    %v3211 = vtanh.pop %v3210
    %v3212 = vmul.f32 %v3115, %v2600
    %v3213 = vsub.f32 1.0, %v3115
    %v3214 = vmul.f32 %v3213, %v3211
    %v3215 = vadd.f32 %v3212, %v3214
    %s3216 = scalar_lea.vmem [#allocation2], 32
    %3217 = vst [vmem:[%s3216] sm:$0xff] %v3215
    %s3218 = scalar_lea.vmem [#allocation3], 120
    %v3219 = vld [vmem:[%s3218] sm:$0xff]
    %v3220 = vld [vmem:[%s3218 + $0x8] sm:$0xff]
    %v3221 = vld [vmem:[%s3218 + $0x10] sm:$0xff]
    %v3222 = vld [vmem:[#allocation9] sm:$0xff]
    %v3223 = vld [vmem:[#allocation9 + $0x8] sm:$0xff]
    %v3224 = vld [vmem:[#allocation9 + $0x10] sm:$0xff]
    %v3225 = vld [vmem:[#allocation9 + $0x18] sm:$0xff]
    %v3226 = vld [vmem:[#allocation9 + $0x20] sm:$0xff]
    %v3227 = vld [vmem:[#allocation9 + $0x28] sm:$0xff]
    %v3228 = vld [vmem:[#allocation9 + $0x30] sm:$0xff]
    %v3229 = vld [vmem:[#allocation9 + $0x38] sm:$0xff]
    %v3230 = vld [vmem:[#allocation9 + $0x40] sm:$0xff]
    %v3231 = vld [vmem:[#allocation9 + $0x48] sm:$0xff]
    %v3232 = vld [vmem:[#allocation9 + $0x50] sm:$0xff]
    %v3233 = vld [vmem:[#allocation9 + $0x58] sm:$0xff]
    %v3234 = vld [vmem:[#allocation9 + $0x60] sm:$0xff]
    %v3235 = vld [vmem:[#allocation9 + $0x68] sm:$0xff]
    %v3236 = vld [vmem:[#allocation9 + $0x70] sm:$0xff]
    %v3237 = vld [vmem:[#allocation9 + $0x78] sm:$0xff]
    %v3238 = vld [vmem:[#allocation9 + $0x80] sm:$0xff]
    %v3239 = vld [vmem:[#allocation9 + $0x88] sm:$0xff]
    %v3240 = vld [vmem:[#allocation9 + $0x90] sm:$0xff]
    %v3241 = vld [vmem:[#allocation9 + $0x98] sm:$0xff]
    %v3242 = vld [vmem:[#allocation9 + $0xa0] sm:$0xff]
    %v3243 = vld [vmem:[#allocation9 + $0xa8] sm:$0xff]
    %v3244 = vld [vmem:[#allocation9 + $0xb0] sm:$0xff]
    %v3245 = vld [vmem:[#allocation9 + $0xb8] sm:$0xff]
    %v3246 = vld [vmem:[#allocation9 + $0xc0] sm:$0xff]
    %v3247 = vld [vmem:[#allocation9 + $0xc8] sm:$0xff]
    %v3248 = vld [vmem:[#allocation9 + $0xd0] sm:$0xff]
    %v3249 = vld [vmem:[#allocation9 + $0xd8] sm:$0xff]
    %v3250 = vld [vmem:[#allocation9 + $0xe0] sm:$0xff]
    %v3251 = vld [vmem:[#allocation9 + $0xe8] sm:$0xff]
    %v3252 = vld [vmem:[#allocation9 + $0xf0] sm:$0xff]
    %v3253 = vld [vmem:[#allocation9 + $0xf8] sm:$0xff]
    %3254 = vmatprep.subr.mxu0 %v3223
    %3255 = vmatpush1.msra.mxu0 %v3222
    %3256 = vmatprep.subr.mxu0 %v3225
    %3257 = vmatpush1.msra.mxu0 %v3224
    %3258 = vmatprep.subr.mxu0 %v3227
    %3259 = vmatpush1.msra.mxu0 %v3226
    %3260 = vmatprep.subr.mxu0 %v3229
    %3261 = vmatpush1.msra.mxu0 %v3228
    %3262 = vmatprep.subr.mxu0 %v3231
    %3263 = vmatpush1.msra.mxu0 %v3230
    %3264 = vmatprep.subr.mxu0 %v3233
    %3265 = vmatpush1.msra.mxu0 %v3232
    %3266 = vmatprep.subr.mxu0 %v3235
    %3267 = vmatpush1.msra.mxu0 %v3234
    %3268 = vmatprep.subr.mxu0 %v3237
    %3269 = vmatpush1.msra.mxu0 %v3236
    %3270 = vmatprep.subr.mxu0 %v3239
    %3271 = vmatpush1.msra.mxu0 %v3238
    %3272 = vmatprep.subr.mxu0 %v3241
    %3273 = vmatpush1.msra.mxu0 %v3240
    %3274 = vmatprep.subr.mxu0 %v3243
    %3275 = vmatpush1.msra.mxu0 %v3242
    %3276 = vmatprep.subr.mxu0 %v3245
    %3277 = vmatpush1.msra.mxu0 %v3244
    %3278 = vmatprep.subr.mxu0 %v3247
    %3279 = vmatpush1.msra.mxu0 %v3246
    %3280 = vmatprep.subr.mxu0 %v3249
    %3281 = vmatpush1.msra.mxu0 %v3248
    %3282 = vmatprep.subr.mxu0 %v3251
    %3283 = vmatpush1.msra.mxu0 %v3250
    %3284 = vmatprep.subr.mxu0 %v3253
    %3285 = vmatpush1.msra.mxu0 %v3252
    %3286 = vmatprep.subr.mxu0 0.0
    %3287 = vmatpush1.msra.mxu0 0.0
    %3288 = vmatprep.subr.mxu0 0.0
    %3289 = vmatpush1.msra.mxu0 0.0
    %3290 = vmatprep.subr.mxu0 0.0
    %3291 = vmatpush1.msra.mxu0 0.0
    %3292 = vmatprep.subr.mxu0 0.0
    %3293 = vmatpush1.msra.mxu0 0.0
    %3294 = vmatprep.subr.mxu0 0.0
    %3295 = vmatpush1.msra.mxu0 0.0
    %3296 = vmatprep.subr.mxu0 0.0
    %3297 = vmatpush1.msra.mxu0 0.0
    %3298 = vmatprep.subr.mxu0 0.0
    %3299 = vmatpush1.msra.mxu0 0.0
    %3300 = vmatprep.subr.mxu0 0.0
    %3301 = vmatpush1.msra.mxu0 0.0
    %3302 = vmatprep.subr.mxu0 0.0
    %3303 = vmatpush1.msra.mxu0 0.0
    %3304 = vmatprep.subr.mxu0 0.0
    %3305 = vmatpush1.msra.mxu0 0.0
    %3306 = vmatprep.subr.mxu0 0.0
    %3307 = vmatpush1.msra.mxu0 0.0
    %3308 = vmatprep.subr.mxu0 0.0
    %3309 = vmatpush1.msra.mxu0 0.0
    %3310 = vmatprep.subr.mxu0 0.0
    %3311 = vmatpush1.msra.mxu0 0.0
    %3312 = vmatprep.subr.mxu0 0.0
    %3313 = vmatpush1.msra.mxu0 0.0
    %3314 = vmatprep.subr.mxu0 0.0
    %3315 = vmatpush1.msra.mxu0 0.0
    %3316 = vmatprep.subr.mxu0 0.0
    %3317 = vmatpush1.msra.mxu0 0.0
    %3318 = vmatprep.mubr.f32.mxu0 0.0
    %3319 = vmatmul.mubr.f32.gmra.mrb[0].mxu0 %v2816
    %v3320 = vpop.f32.mrb[0].mxu0
    %v3321 = vadd.f32 0.0, %v3320
    %v3322 = vpop.f32.mrb[0].mxu0
    %v3323 = vadd.f32 0.0, %v3322
    %3324 = vdwg.mxu0
    %v3325 = vadd.f32 %v3219, %v3321
    %v3326 = vxor.u32 %v3325, 2147483648
    %v3327 = vmul.f32 %v3326, 1.442695
    %v3328 = vpow.pop %v3327
    %v3329 = vadd.f32 %v3328, 1.0
    %v3330 = vrcp.pop %v3329
    %v3331 = vmul.f32 1.0, %v3330
    %v3332 = vadd.f32 %v3220, %v3323
    %v3333 = vxor.u32 %v3332, 2147483648
    %v3334 = vmul.f32 %v3333, 1.442695
    %v3335 = vpow.pop %v3334
    %v3336 = vadd.f32 %v3335, 1.0
    %v3337 = vrcp.pop %v3336
    %v3338 = vmul.f32 1.0, %v3337
    %v3339 = vmul.f32 %v3338, %v2816
    %v3340 = vld [vmem:[#allocation11] sm:$0xff]
    %v3341 = vld [vmem:[#allocation11 + $0x8] sm:$0xff]
    %v3342 = vld [vmem:[#allocation11 + $0x10] sm:$0xff]
    %v3343 = vld [vmem:[#allocation11 + $0x18] sm:$0xff]
    %v3344 = vld [vmem:[#allocation11 + $0x20] sm:$0xff]
    %v3345 = vld [vmem:[#allocation11 + $0x28] sm:$0xff]
    %v3346 = vld [vmem:[#allocation11 + $0x30] sm:$0xff]
    %v3347 = vld [vmem:[#allocation11 + $0x38] sm:$0xff]
    %v3348 = vld [vmem:[#allocation11 + $0x40] sm:$0xff]
    %v3349 = vld [vmem:[#allocation11 + $0x48] sm:$0xff]
    %v3350 = vld [vmem:[#allocation11 + $0x50] sm:$0xff]
    %v3351 = vld [vmem:[#allocation11 + $0x58] sm:$0xff]
    %v3352 = vld [vmem:[#allocation11 + $0x60] sm:$0xff]
    %v3353 = vld [vmem:[#allocation11 + $0x68] sm:$0xff]
    %v3354 = vld [vmem:[#allocation11 + $0x70] sm:$0xff]
    %v3355 = vld [vmem:[#allocation11 + $0x78] sm:$0xff]
    %3356 = vmatprep.subr.mxu0 0.0
    %3357 = vmatpush1.msra.mxu0 %v3340
    %3358 = vmatprep.subr.mxu0 0.0
    %3359 = vmatpush1.msra.mxu0 %v3341
    %3360 = vmatprep.subr.mxu0 0.0
    %3361 = vmatpush1.msra.mxu0 %v3342
    %3362 = vmatprep.subr.mxu0 0.0
    %3363 = vmatpush1.msra.mxu0 %v3343
    %3364 = vmatprep.subr.mxu0 0.0
    %3365 = vmatpush1.msra.mxu0 %v3344
    %3366 = vmatprep.subr.mxu0 0.0
    %3367 = vmatpush1.msra.mxu0 %v3345
    %3368 = vmatprep.subr.mxu0 0.0
    %3369 = vmatpush1.msra.mxu0 %v3346
    %3370 = vmatprep.subr.mxu0 0.0
    %3371 = vmatpush1.msra.mxu0 %v3347
    %3372 = vmatprep.subr.mxu0 0.0
    %3373 = vmatpush1.msra.mxu0 %v3348
    %3374 = vmatprep.subr.mxu0 0.0
    %3375 = vmatpush1.msra.mxu0 %v3349
    %3376 = vmatprep.subr.mxu0 0.0
    %3377 = vmatpush1.msra.mxu0 %v3350
    %3378 = vmatprep.subr.mxu0 0.0
    %3379 = vmatpush1.msra.mxu0 %v3351
    %3380 = vmatprep.subr.mxu0 0.0
    %3381 = vmatpush1.msra.mxu0 %v3352
    %3382 = vmatprep.subr.mxu0 0.0
    %3383 = vmatpush1.msra.mxu0 %v3353
    %3384 = vmatprep.subr.mxu0 0.0
    %3385 = vmatpush1.msra.mxu0 %v3354
    %3386 = vmatprep.subr.mxu0 0.0
    %3387 = vmatpush1.msra.mxu0 %v3355
    %3388 = vmatprep.subr.mxu0 0.0
    %3389 = vmatpush1.msra.mxu0 0.0
    %3390 = vmatprep.subr.mxu0 0.0
    %3391 = vmatpush1.msra.mxu0 0.0
    %3392 = vmatprep.subr.mxu0 0.0
    %3393 = vmatpush1.msra.mxu0 0.0
    %3394 = vmatprep.subr.mxu0 0.0
    %3395 = vmatpush1.msra.mxu0 0.0
    %3396 = vmatprep.subr.mxu0 0.0
    %3397 = vmatpush1.msra.mxu0 0.0
    %3398 = vmatprep.subr.mxu0 0.0
    %3399 = vmatpush1.msra.mxu0 0.0
    %3400 = vmatprep.subr.mxu0 0.0
    %3401 = vmatpush1.msra.mxu0 0.0
    %3402 = vmatprep.subr.mxu0 0.0
    %3403 = vmatpush1.msra.mxu0 0.0
    %3404 = vmatprep.subr.mxu0 0.0
    %3405 = vmatpush1.msra.mxu0 0.0
    %3406 = vmatprep.subr.mxu0 0.0
    %3407 = vmatpush1.msra.mxu0 0.0
    %3408 = vmatprep.subr.mxu0 0.0
    %3409 = vmatpush1.msra.mxu0 0.0
    %3410 = vmatprep.subr.mxu0 0.0
    %3411 = vmatpush1.msra.mxu0 0.0
    %3412 = vmatprep.subr.mxu0 0.0
    %3413 = vmatpush1.msra.mxu0 0.0
    %3414 = vmatprep.subr.mxu0 0.0
    %3415 = vmatpush1.msra.mxu0 0.0
    %3416 = vmatprep.subr.mxu0 0.0
    %3417 = vmatpush1.msra.mxu0 0.0
    %3418 = vmatprep.subr.mxu0 0.0
    %3419 = vmatpush1.msra.mxu0 0.0
    %3420 = vmatprep.mubr.f32.mxu0 0.0
    %3421 = vmatmul.mubr.f32.gmra.mrb[0].mxu0 %v3339
    %v3422 = vpop.f32.mrb[0].mxu0
    %v3423 = vadd.f32 0.0, %v3422
    %v3424 = vpop.f32.mrb[0].mxu0
    %3425 = vdwg.mxu0
    %v3426 = vadd.f32 %v3221, %v3423
    %v3427 = vtanh.pop %v3426
    %v3428 = vmul.f32 %v3331, %v2816
    %v3429 = vsub.f32 1.0, %v3331
    %v3430 = vmul.f32 %v3429, %v3427
    %v3431 = vadd.f32 %v3428, %v3430
    %v3432 = vld [vmem:[#allocation8] sm:$0xff]
    %v3433 = vld [vmem:[#allocation8 + $0x8] sm:$0xff]
    %v3434 = vld [vmem:[#allocation8 + $0x10] sm:$0xff]
    %v3435 = vld [vmem:[#allocation8 + $0x18] sm:$0xff]
    %v3436 = vld [vmem:[#allocation8 + $0x20] sm:$0xff]
    %v3437 = vld [vmem:[#allocation8 + $0x28] sm:$0xff]
    %v3438 = vld [vmem:[#allocation8 + $0x30] sm:$0xff]
    %v3439 = vld [vmem:[#allocation8 + $0x38] sm:$0xff]
    %v3440 = vld [vmem:[#allocation8 + $0x40] sm:$0xff]
    %v3441 = vld [vmem:[#allocation8 + $0x48] sm:$0xff]
    %v3442 = vld [vmem:[#allocation8 + $0x50] sm:$0xff]
    %v3443 = vld [vmem:[#allocation8 + $0x58] sm:$0xff]
    %v3444 = vld [vmem:[#allocation8 + $0x60] sm:$0xff]
    %v3445 = vld [vmem:[#allocation8 + $0x68] sm:$0xff]
    %v3446 = vld [vmem:[#allocation8 + $0x70] sm:$0xff]
    %v3447 = vld [vmem:[#allocation8 + $0x78] sm:$0xff]
    %v3448 = vld [vmem:[#allocation8 + $0x80] sm:$0xff]
    %v3449 = vld [vmem:[#allocation8 + $0x88] sm:$0xff]
    %v3450 = vld [vmem:[#allocation8 + $0x90] sm:$0xff]
    %v3451 = vld [vmem:[#allocation8 + $0x98] sm:$0xff]
    %v3452 = vld [vmem:[#allocation8 + $0xa0] sm:$0xff]
    %v3453 = vld [vmem:[#allocation8 + $0xa8] sm:$0xff]
    %v3454 = vld [vmem:[#allocation8 + $0xb0] sm:$0xff]
    %v3455 = vld [vmem:[#allocation8 + $0xb8] sm:$0xff]
    %v3456 = vld [vmem:[#allocation8 + $0xc0] sm:$0xff]
    %v3457 = vld [vmem:[#allocation8 + $0xc8] sm:$0xff]
    %v3458 = vld [vmem:[#allocation8 + $0xd0] sm:$0xff]
    %v3459 = vld [vmem:[#allocation8 + $0xd8] sm:$0xff]
    %v3460 = vld [vmem:[#allocation8 + $0xe0] sm:$0xff]
    %v3461 = vld [vmem:[#allocation8 + $0xe8] sm:$0xff]
    %v3462 = vld [vmem:[#allocation8 + $0xf0] sm:$0xff]
    %v3463 = vld [vmem:[#allocation8 + $0xf8] sm:$0xff]
    %v3464 = vld [vmem:[#allocation8 + $0x100] sm:$0xff]
    %v3465 = vld [vmem:[#allocation8 + $0x108] sm:$0xff]
    %v3466 = vld [vmem:[#allocation8 + $0x110] sm:$0xff]
    %v3467 = vld [vmem:[#allocation8 + $0x118] sm:$0xff]
    %v3468 = vld [vmem:[#allocation8 + $0x120] sm:$0xff]
    %v3469 = vld [vmem:[#allocation8 + $0x128] sm:$0xff]
    %v3470 = vld [vmem:[#allocation8 + $0x130] sm:$0xff]
    %v3471 = vld [vmem:[#allocation8 + $0x138] sm:$0xff]
    %v3472 = vld [vmem:[#allocation8 + $0x140] sm:$0xff]
    %v3473 = vld [vmem:[#allocation8 + $0x148] sm:$0xff]
    %v3474 = vld [vmem:[#allocation8 + $0x150] sm:$0xff]
    %v3475 = vld [vmem:[#allocation8 + $0x158] sm:$0xff]
    %v3476 = vld [vmem:[#allocation8 + $0x160] sm:$0xff]
    %v3477 = vld [vmem:[#allocation8 + $0x168] sm:$0xff]
    %v3478 = vld [vmem:[#allocation8 + $0x170] sm:$0xff]
    %v3479 = vld [vmem:[#allocation8 + $0x178] sm:$0xff]
    %3480 = vmatprep.subr.mxu0 %v3433
    %3481 = vmatpush1.msra.mxu0 %v3432
    %3482 = vmatprep.subr.mxu0 %v3436
    %3483 = vmatpush1.msra.mxu0 %v3435
    %3484 = vmatprep.subr.mxu0 %v3439
    %3485 = vmatpush1.msra.mxu0 %v3438
    %3486 = vmatprep.subr.mxu0 %v3442
    %3487 = vmatpush1.msra.mxu0 %v3441
    %3488 = vmatprep.subr.mxu0 %v3445
    %3489 = vmatpush1.msra.mxu0 %v3444
    %3490 = vmatprep.subr.mxu0 %v3448
    %3491 = vmatpush1.msra.mxu0 %v3447
    %3492 = vmatprep.subr.mxu0 %v3451
    %3493 = vmatpush1.msra.mxu0 %v3450
    %3494 = vmatprep.subr.mxu0 %v3454
    %3495 = vmatpush1.msra.mxu0 %v3453
    %3496 = vmatprep.subr.mxu0 %v3457
    %3497 = vmatpush1.msra.mxu0 %v3456
    %3498 = vmatprep.subr.mxu0 %v3460
    %3499 = vmatpush1.msra.mxu0 %v3459
    %3500 = vmatprep.subr.mxu0 %v3463
    %3501 = vmatpush1.msra.mxu0 %v3462
    %3502 = vmatprep.subr.mxu0 %v3466
    %3503 = vmatpush1.msra.mxu0 %v3465
    %3504 = vmatprep.subr.mxu0 %v3469
    %3505 = vmatpush1.msra.mxu0 %v3468
    %3506 = vmatprep.subr.mxu0 %v3472
    %3507 = vmatpush1.msra.mxu0 %v3471
    %3508 = vmatprep.subr.mxu0 %v3475
    %3509 = vmatpush1.msra.mxu0 %v3474
    %3510 = vmatprep.subr.mxu0 %v3478
    %3511 = vmatpush1.msra.mxu0 %v3477
    %3512 = vmatprep.subr.mxu0 0.0
    %3513 = vmatpush1.msra.mxu0 0.0
    %3514 = vmatprep.subr.mxu0 0.0
    %3515 = vmatpush1.msra.mxu0 0.0
    %3516 = vmatprep.subr.mxu0 0.0
    %3517 = vmatpush1.msra.mxu0 0.0
    %3518 = vmatprep.subr.mxu0 0.0
    %3519 = vmatpush1.msra.mxu0 0.0
    %3520 = vmatprep.subr.mxu0 0.0
    %3521 = vmatpush1.msra.mxu0 0.0
    %3522 = vmatprep.subr.mxu0 0.0
    %3523 = vmatpush1.msra.mxu0 0.0
    %3524 = vmatprep.subr.mxu0 0.0
    %3525 = vmatpush1.msra.mxu0 0.0
    %3526 = vmatprep.subr.mxu0 0.0
    %3527 = vmatpush1.msra.mxu0 0.0
    %3528 = vmatprep.subr.mxu0 0.0
    %3529 = vmatpush1.msra.mxu0 0.0
    %3530 = vmatprep.subr.mxu0 0.0
    %3531 = vmatpush1.msra.mxu0 0.0
    %3532 = vmatprep.subr.mxu0 0.0
    %3533 = vmatpush1.msra.mxu0 0.0
    %3534 = vmatprep.subr.mxu0 0.0
    %3535 = vmatpush1.msra.mxu0 0.0
    %3536 = vmatprep.subr.mxu0 0.0
    %3537 = vmatpush1.msra.mxu0 0.0
    %3538 = vmatprep.subr.mxu0 0.0
    %3539 = vmatpush1.msra.mxu0 0.0
    %3540 = vmatprep.subr.mxu0 0.0
    %3541 = vmatpush1.msra.mxu0 0.0
    %3542 = vmatprep.subr.mxu0 0.0
    %3543 = vmatpush1.msra.mxu0 0.0
    %3544 = vmatprep.mubr.f32.mxu0 0.0
    %3545 = vmatmul.mubr.f32.gmra.mrb[0].mxu0 %v3431
    %v3546 = vpop.f32.mrb[0].mxu0
    %v3547 = vadd.f32 %v131, %v3546
    %v3548 = vpop.f32.mrb[0].mxu0
    %v3549 = vadd.f32 %v135, %v3548
    %3550 = vdwg.mxu0
    %3551 = vmatprep.subr.mxu0 0.0
    %3552 = vmatpush1.msra.mxu0 %v3434
    %3553 = vmatprep.subr.mxu0 0.0
    %3554 = vmatpush1.msra.mxu0 %v3437
    %3555 = vmatprep.subr.mxu0 0.0
    %3556 = vmatpush1.msra.mxu0 %v3440
    %3557 = vmatprep.subr.mxu0 0.0
    %3558 = vmatpush1.msra.mxu0 %v3443
    %3559 = vmatprep.subr.mxu0 0.0
    %3560 = vmatpush1.msra.mxu0 %v3446
    %3561 = vmatprep.subr.mxu0 0.0
    %3562 = vmatpush1.msra.mxu0 %v3449
    %3563 = vmatprep.subr.mxu0 0.0
    %3564 = vmatpush1.msra.mxu0 %v3452
    %3565 = vmatprep.subr.mxu0 0.0
    %3566 = vmatpush1.msra.mxu0 %v3455
    %3567 = vmatprep.subr.mxu0 0.0
    %3568 = vmatpush1.msra.mxu0 %v3458
    %3569 = vmatprep.subr.mxu0 0.0
    %3570 = vmatpush1.msra.mxu0 %v3461
    %3571 = vmatprep.subr.mxu0 0.0
    %3572 = vmatpush1.msra.mxu0 %v3464
    %3573 = vmatprep.subr.mxu0 0.0
    %3574 = vmatpush1.msra.mxu0 %v3467
    %3575 = vmatprep.subr.mxu0 0.0
    %3576 = vmatpush1.msra.mxu0 %v3470
    %3577 = vmatprep.subr.mxu0 0.0
    %3578 = vmatpush1.msra.mxu0 %v3473
    %3579 = vmatprep.subr.mxu0 0.0
    %3580 = vmatpush1.msra.mxu0 %v3476
    %3581 = vmatprep.subr.mxu0 0.0
    %3582 = vmatpush1.msra.mxu0 %v3479
    %3583 = vmatprep.subr.mxu0 0.0
    %3584 = vmatpush1.msra.mxu0 0.0
    %3585 = vmatprep.subr.mxu0 0.0
    %3586 = vmatpush1.msra.mxu0 0.0
    %3587 = vmatprep.subr.mxu0 0.0
    %3588 = vmatpush1.msra.mxu0 0.0
    %3589 = vmatprep.subr.mxu0 0.0
    %3590 = vmatpush1.msra.mxu0 0.0
    %3591 = vmatprep.subr.mxu0 0.0
    %3592 = vmatpush1.msra.mxu0 0.0
    %3593 = vmatprep.subr.mxu0 0.0
    %3594 = vmatpush1.msra.mxu0 0.0
    %3595 = vmatprep.subr.mxu0 0.0
    %3596 = vmatpush1.msra.mxu0 0.0
    %3597 = vmatprep.subr.mxu0 0.0
    %3598 = vmatpush1.msra.mxu0 0.0
    %3599 = vmatprep.subr.mxu0 0.0
    %3600 = vmatpush1.msra.mxu0 0.0
    %3601 = vmatprep.subr.mxu0 0.0
    %3602 = vmatpush1.msra.mxu0 0.0
    %3603 = vmatprep.subr.mxu0 0.0
    %3604 = vmatpush1.msra.mxu0 0.0
    %3605 = vmatprep.subr.mxu0 0.0
    %3606 = vmatpush1.msra.mxu0 0.0
    %3607 = vmatprep.subr.mxu0 0.0
    %3608 = vmatpush1.msra.mxu0 0.0
    %3609 = vmatprep.subr.mxu0 0.0
    %3610 = vmatpush1.msra.mxu0 0.0
    %3611 = vmatprep.subr.mxu0 0.0
    %3612 = vmatpush1.msra.mxu0 0.0
    %3613 = vmatprep.subr.mxu0 0.0
    %3614 = vmatpush1.msra.mxu0 0.0
    %3615 = vmatprep.mubr.f32.mxu0 0.0
    %3616 = vmatmul.mubr.f32.gmra.mrb[0].mxu0 %v3431
    %v3617 = vpop.f32.mrb[0].mxu0
    %v3618 = vadd.f32 %v139, %v3617
    %v3619 = vpop.f32.mrb[0].mxu0
    %3620 = vdwg.mxu0
    %v3621 = vld [vmem:[%s545] sm:$0xff]
    %v3622 = vld [vmem:[%s545 + $0x8] sm:$0xff]
    %v3623 = vld [vmem:[%s545 + $0x10] sm:$0xff]
    %v3624 = vld [vmem:[%s545 + $0x18] sm:$0xff]
    %v3625 = vld [vmem:[%s545 + $0x20] sm:$0xff]
    %v3626 = vld [vmem:[%s545 + $0x28] sm:$0xff]
    %v3627 = vld [vmem:[%s545 + $0x30] sm:$0xff]
    %v3628 = vld [vmem:[%s545 + $0x38] sm:$0xff]
    %v3629 = vld [vmem:[%s545 + $0x40] sm:$0xff]
    %v3630 = vld [vmem:[%s545 + $0x48] sm:$0xff]
    %v3631 = vld [vmem:[%s545 + $0x50] sm:$0xff]
    %v3632 = vld [vmem:[%s545 + $0x58] sm:$0xff]
    %v3633 = vld [vmem:[%s545 + $0x60] sm:$0xff]
    %v3634 = vld [vmem:[%s545 + $0x68] sm:$0xff]
    %v3635 = vld [vmem:[%s545 + $0x70] sm:$0xff]
    %v3636 = vld [vmem:[%s545 + $0x78] sm:$0xff]
    %v3637 = vld [vmem:[%s545 + $0x80] sm:$0xff]
    %v3638 = vld [vmem:[%s545 + $0x88] sm:$0xff]
    %v3639 = vld [vmem:[%s545 + $0x90] sm:$0xff]
    %v3640 = vld [vmem:[%s545 + $0x98] sm:$0xff]
    %v3641 = vld [vmem:[%s545 + $0xa0] sm:$0xff]
    %v3642 = vld [vmem:[%s545 + $0xa8] sm:$0xff]
    %v3643 = vld [vmem:[%s545 + $0xb0] sm:$0xff]
    %v3644 = vld [vmem:[%s545 + $0xb8] sm:$0xff]
    %v3645 = vld [vmem:[%s545 + $0xc0] sm:$0xff]
    %v3646 = vld [vmem:[%s545 + $0xc8] sm:$0xff]
    %v3647 = vld [vmem:[%s545 + $0xd0] sm:$0xff]
    %v3648 = vld [vmem:[%s545 + $0xd8] sm:$0xff]
    %v3649 = vld [vmem:[%s545 + $0xe0] sm:$0xff]
    %v3650 = vld [vmem:[%s545 + $0xe8] sm:$0xff]
    %v3651 = vld [vmem:[%s545 + $0xf0] sm:$0xff]
    %v3652 = vld [vmem:[%s545 + $0xf8] sm:$0xff]
    %3653 = vmatprep.subr.mxu0 %v3622
    %3654 = vmatpush1.msra.mxu0 %v3621
    %3655 = vmatprep.subr.mxu0 %v3624
    %3656 = vmatpush1.msra.mxu0 %v3623
    %3657 = vmatprep.subr.mxu0 %v3626
    %3658 = vmatpush1.msra.mxu0 %v3625
    %3659 = vmatprep.subr.mxu0 %v3628
    %3660 = vmatpush1.msra.mxu0 %v3627
    %3661 = vmatprep.subr.mxu0 %v3630
    %3662 = vmatpush1.msra.mxu0 %v3629
    %3663 = vmatprep.subr.mxu0 %v3632
    %3664 = vmatpush1.msra.mxu0 %v3631
    %3665 = vmatprep.subr.mxu0 %v3634
    %3666 = vmatpush1.msra.mxu0 %v3633
    %3667 = vmatprep.subr.mxu0 %v3636
    %3668 = vmatpush1.msra.mxu0 %v3635
    %3669 = vmatprep.subr.mxu0 %v3638
    %3670 = vmatpush1.msra.mxu0 %v3637
    %3671 = vmatprep.subr.mxu0 %v3640
    %3672 = vmatpush1.msra.mxu0 %v3639
    %3673 = vmatprep.subr.mxu0 %v3642
    %3674 = vmatpush1.msra.mxu0 %v3641
    %3675 = vmatprep.subr.mxu0 %v3644
    %3676 = vmatpush1.msra.mxu0 %v3643
    %3677 = vmatprep.subr.mxu0 %v3646
    %3678 = vmatpush1.msra.mxu0 %v3645
    %3679 = vmatprep.subr.mxu0 %v3648
    %3680 = vmatpush1.msra.mxu0 %v3647
    %3681 = vmatprep.subr.mxu0 %v3650
    %3682 = vmatpush1.msra.mxu0 %v3649
    %3683 = vmatprep.subr.mxu0 %v3652
    %3684 = vmatpush1.msra.mxu0 %v3651
    %3685 = vmatprep.subr.mxu0 0.0
    %3686 = vmatpush1.msra.mxu0 0.0
    %3687 = vmatprep.subr.mxu0 0.0
    %3688 = vmatpush1.msra.mxu0 0.0
    %3689 = vmatprep.subr.mxu0 0.0
    %3690 = vmatpush1.msra.mxu0 0.0
    %3691 = vmatprep.subr.mxu0 0.0
    %3692 = vmatpush1.msra.mxu0 0.0
    %3693 = vmatprep.subr.mxu0 0.0
    %3694 = vmatpush1.msra.mxu0 0.0
    %3695 = vmatprep.subr.mxu0 0.0
    %3696 = vmatpush1.msra.mxu0 0.0
    %3697 = vmatprep.subr.mxu0 0.0
    %3698 = vmatpush1.msra.mxu0 0.0
    %3699 = vmatprep.subr.mxu0 0.0
    %3700 = vmatpush1.msra.mxu0 0.0
    %3701 = vmatprep.subr.mxu0 0.0
    %3702 = vmatpush1.msra.mxu0 0.0
    %3703 = vmatprep.subr.mxu0 0.0
    %3704 = vmatpush1.msra.mxu0 0.0
    %3705 = vmatprep.subr.mxu0 0.0
    %3706 = vmatpush1.msra.mxu0 0.0
    %3707 = vmatprep.subr.mxu0 0.0
    %3708 = vmatpush1.msra.mxu0 0.0
    %3709 = vmatprep.subr.mxu0 0.0
    %3710 = vmatpush1.msra.mxu0 0.0
    %3711 = vmatprep.subr.mxu0 0.0
    %3712 = vmatpush1.msra.mxu0 0.0
    %3713 = vmatprep.subr.mxu0 0.0
    %3714 = vmatpush1.msra.mxu0 0.0
    %3715 = vmatprep.subr.mxu0 0.0
    %3716 = vmatpush1.msra.mxu0 0.0
    %3717 = vmatprep.mubr.f32.mxu0 0.0
    %3718 = vmatmul.mubr.f32.gmra.mrb[0].mxu0 %v3215
    %v3719 = vpop.f32.mrb[0].mxu0
    %v3720 = vadd.f32 0.0, %v3719
    %v3721 = vpop.f32.mrb[0].mxu0
    %v3722 = vadd.f32 0.0, %v3721
    %3723 = vdwg.mxu0
    %v3724 = vadd.f32 %v3547, %v3720
    %v3725 = vxor.u32 %v3724, 2147483648
    %v3726 = vmul.f32 %v3725, 1.442695
    %v3727 = vpow.pop %v3726
    %v3728 = vadd.f32 %v3727, 1.0
    %v3729 = vrcp.pop %v3728
    %v3730 = vmul.f32 1.0, %v3729
    %v3731 = vadd.f32 %v3549, %v3722
    %v3732 = vxor.u32 %v3731, 2147483648
    %v3733 = vmul.f32 %v3732, 1.442695
    %v3734 = vpow.pop %v3733
    %v3735 = vadd.f32 %v3734, 1.0
    %v3736 = vrcp.pop %v3735
    %v3737 = vmul.f32 1.0, %v3736
    %v3738 = vmul.f32 %v3737, %v3215
    %v3739 = vld [vmem:[%s664] sm:$0xff]
    %v3740 = vld [vmem:[%s664 + $0x8] sm:$0xff]
    %v3741 = vld [vmem:[%s664 + $0x10] sm:$0xff]
    %v3742 = vld [vmem:[%s664 + $0x18] sm:$0xff]
    %v3743 = vld [vmem:[%s664 + $0x20] sm:$0xff]
    %v3744 = vld [vmem:[%s664 + $0x28] sm:$0xff]
    %v3745 = vld [vmem:[%s664 + $0x30] sm:$0xff]
    %v3746 = vld [vmem:[%s664 + $0x38] sm:$0xff]
    %v3747 = vld [vmem:[%s664 + $0x40] sm:$0xff]
    %v3748 = vld [vmem:[%s664 + $0x48] sm:$0xff]
    %v3749 = vld [vmem:[%s664 + $0x50] sm:$0xff]
    %v3750 = vld [vmem:[%s664 + $0x58] sm:$0xff]
    %v3751 = vld [vmem:[%s664 + $0x60] sm:$0xff]
    %v3752 = vld [vmem:[%s664 + $0x68] sm:$0xff]
    %v3753 = vld [vmem:[%s664 + $0x70] sm:$0xff]
    %v3754 = vld [vmem:[%s664 + $0x78] sm:$0xff]
    %3755 = vmatprep.subr.mxu0 0.0
    %3756 = vmatpush1.msra.mxu0 %v3739
    %3757 = vmatprep.subr.mxu0 0.0
    %3758 = vmatpush1.msra.mxu0 %v3740
    %3759 = vmatprep.subr.mxu0 0.0
    %3760 = vmatpush1.msra.mxu0 %v3741
    %3761 = vmatprep.subr.mxu0 0.0
    %3762 = vmatpush1.msra.mxu0 %v3742
    %3763 = vmatprep.subr.mxu0 0.0
    %3764 = vmatpush1.msra.mxu0 %v3743
    %3765 = vmatprep.subr.mxu0 0.0
    %3766 = vmatpush1.msra.mxu0 %v3744
    %3767 = vmatprep.subr.mxu0 0.0
    %3768 = vmatpush1.msra.mxu0 %v3745
    %3769 = vmatprep.subr.mxu0 0.0
    %3770 = vmatpush1.msra.mxu0 %v3746
    %3771 = vmatprep.subr.mxu0 0.0
    %3772 = vmatpush1.msra.mxu0 %v3747
    %3773 = vmatprep.subr.mxu0 0.0
    %3774 = vmatpush1.msra.mxu0 %v3748
    %3775 = vmatprep.subr.mxu0 0.0
    %3776 = vmatpush1.msra.mxu0 %v3749
    %3777 = vmatprep.subr.mxu0 0.0
    %3778 = vmatpush1.msra.mxu0 %v3750
    %3779 = vmatprep.subr.mxu0 0.0
    %3780 = vmatpush1.msra.mxu0 %v3751
    %3781 = vmatprep.subr.mxu0 0.0
    %3782 = vmatpush1.msra.mxu0 %v3752
    %3783 = vmatprep.subr.mxu0 0.0
    %3784 = vmatpush1.msra.mxu0 %v3753
    %3785 = vmatprep.subr.mxu0 0.0
    %3786 = vmatpush1.msra.mxu0 %v3754
    %3787 = vmatprep.subr.mxu0 0.0
    %3788 = vmatpush1.msra.mxu0 0.0
    %3789 = vmatprep.subr.mxu0 0.0
    %3790 = vmatpush1.msra.mxu0 0.0
    %3791 = vmatprep.subr.mxu0 0.0
    %3792 = vmatpush1.msra.mxu0 0.0
    %3793 = vmatprep.subr.mxu0 0.0
    %3794 = vmatpush1.msra.mxu0 0.0
    %3795 = vmatprep.subr.mxu0 0.0
    %3796 = vmatpush1.msra.mxu0 0.0
    %3797 = vmatprep.subr.mxu0 0.0
    %3798 = vmatpush1.msra.mxu0 0.0
    %3799 = vmatprep.subr.mxu0 0.0
    %3800 = vmatpush1.msra.mxu0 0.0
    %3801 = vmatprep.subr.mxu0 0.0
    %3802 = vmatpush1.msra.mxu0 0.0
    %3803 = vmatprep.subr.mxu0 0.0
    %3804 = vmatpush1.msra.mxu0 0.0
    %3805 = vmatprep.subr.mxu0 0.0
    %3806 = vmatpush1.msra.mxu0 0.0
    %3807 = vmatprep.subr.mxu0 0.0
    %3808 = vmatpush1.msra.mxu0 0.0
    %3809 = vmatprep.subr.mxu0 0.0
    %3810 = vmatpush1.msra.mxu0 0.0
    %3811 = vmatprep.subr.mxu0 0.0
    %3812 = vmatpush1.msra.mxu0 0.0
    %3813 = vmatprep.subr.mxu0 0.0
    %3814 = vmatpush1.msra.mxu0 0.0
    %3815 = vmatprep.subr.mxu0 0.0
    %3816 = vmatpush1.msra.mxu0 0.0
    %3817 = vmatprep.subr.mxu0 0.0
    %3818 = vmatpush1.msra.mxu0 0.0
    %3819 = vmatprep.mubr.f32.mxu0 0.0
    %3820 = vmatmul.mubr.f32.gmra.mrb[0].mxu0 %v3738
    %v3821 = vpop.f32.mrb[0].mxu0
    %v3822 = vadd.f32 0.0, %v3821
    %v3823 = vpop.f32.mrb[0].mxu0
    %3824 = vdwg.mxu0
    %v3825 = vadd.f32 %v3618, %v3822
    %v3826 = vtanh.pop %v3825
    %v3827 = vmul.f32 %v3730, %v3215
    %v3828 = vsub.f32 1.0, %v3730
    %v3829 = vmul.f32 %v3828, %v3826
    %v3830 = vadd.f32 %v3827, %v3829
    %s3831 = scalar_lea.vmem [#allocation2], 40
    %3832 = vst [vmem:[%s3831] sm:$0xff] %v3830
    %s3833 = scalar_lea.vmem [#allocation3], 144
    %v3834 = vld [vmem:[%s3833] sm:$0xff]
    %v3835 = vld [vmem:[%s3833 + $0x8] sm:$0xff]
    %v3836 = vld [vmem:[%s3833 + $0x10] sm:$0xff]
    %v3837 = vld [vmem:[#allocation9] sm:$0xff]
    %v3838 = vld [vmem:[#allocation9 + $0x8] sm:$0xff]
    %v3839 = vld [vmem:[#allocation9 + $0x10] sm:$0xff]
    %v3840 = vld [vmem:[#allocation9 + $0x18] sm:$0xff]
    %v3841 = vld [vmem:[#allocation9 + $0x20] sm:$0xff]
    %v3842 = vld [vmem:[#allocation9 + $0x28] sm:$0xff]
    %v3843 = vld [vmem:[#allocation9 + $0x30] sm:$0xff]
    %v3844 = vld [vmem:[#allocation9 + $0x38] sm:$0xff]
    %v3845 = vld [vmem:[#allocation9 + $0x40] sm:$0xff]
    %v3846 = vld [vmem:[#allocation9 + $0x48] sm:$0xff]
    %v3847 = vld [vmem:[#allocation9 + $0x50] sm:$0xff]
    %v3848 = vld [vmem:[#allocation9 + $0x58] sm:$0xff]
    %v3849 = vld [vmem:[#allocation9 + $0x60] sm:$0xff]
    %v3850 = vld [vmem:[#allocation9 + $0x68] sm:$0xff]
    %v3851 = vld [vmem:[#allocation9 + $0x70] sm:$0xff]
    %v3852 = vld [vmem:[#allocation9 + $0x78] sm:$0xff]
    %v3853 = vld [vmem:[#allocation9 + $0x80] sm:$0xff]
    %v3854 = vld [vmem:[#allocation9 + $0x88] sm:$0xff]
    %v3855 = vld [vmem:[#allocation9 + $0x90] sm:$0xff]
    %v3856 = vld [vmem:[#allocation9 + $0x98] sm:$0xff]
    %v3857 = vld [vmem:[#allocation9 + $0xa0] sm:$0xff]
    %v3858 = vld [vmem:[#allocation9 + $0xa8] sm:$0xff]
    %v3859 = vld [vmem:[#allocation9 + $0xb0] sm:$0xff]
    %v3860 = vld [vmem:[#allocation9 + $0xb8] sm:$0xff]
    %v3861 = vld [vmem:[#allocation9 + $0xc0] sm:$0xff]
    %v3862 = vld [vmem:[#allocation9 + $0xc8] sm:$0xff]
    %v3863 = vld [vmem:[#allocation9 + $0xd0] sm:$0xff]
    %v3864 = vld [vmem:[#allocation9 + $0xd8] sm:$0xff]
    %v3865 = vld [vmem:[#allocation9 + $0xe0] sm:$0xff]
    %v3866 = vld [vmem:[#allocation9 + $0xe8] sm:$0xff]
    %v3867 = vld [vmem:[#allocation9 + $0xf0] sm:$0xff]
    %v3868 = vld [vmem:[#allocation9 + $0xf8] sm:$0xff]
    %3869 = vmatprep.subr.mxu0 %v3838
    %3870 = vmatpush1.msra.mxu0 %v3837
    %3871 = vmatprep.subr.mxu0 %v3840
    %3872 = vmatpush1.msra.mxu0 %v3839
    %3873 = vmatprep.subr.mxu0 %v3842
    %3874 = vmatpush1.msra.mxu0 %v3841
    %3875 = vmatprep.subr.mxu0 %v3844
    %3876 = vmatpush1.msra.mxu0 %v3843
    %3877 = vmatprep.subr.mxu0 %v3846
    %3878 = vmatpush1.msra.mxu0 %v3845
    %3879 = vmatprep.subr.mxu0 %v3848
    %3880 = vmatpush1.msra.mxu0 %v3847
    %3881 = vmatprep.subr.mxu0 %v3850
    %3882 = vmatpush1.msra.mxu0 %v3849
    %3883 = vmatprep.subr.mxu0 %v3852
    %3884 = vmatpush1.msra.mxu0 %v3851
    %3885 = vmatprep.subr.mxu0 %v3854
    %3886 = vmatpush1.msra.mxu0 %v3853
    %3887 = vmatprep.subr.mxu0 %v3856
    %3888 = vmatpush1.msra.mxu0 %v3855
    %3889 = vmatprep.subr.mxu0 %v3858
    %3890 = vmatpush1.msra.mxu0 %v3857
    %3891 = vmatprep.subr.mxu0 %v3860
    %3892 = vmatpush1.msra.mxu0 %v3859
    %3893 = vmatprep.subr.mxu0 %v3862
    %3894 = vmatpush1.msra.mxu0 %v3861
    %3895 = vmatprep.subr.mxu0 %v3864
    %3896 = vmatpush1.msra.mxu0 %v3863
    %3897 = vmatprep.subr.mxu0 %v3866
    %3898 = vmatpush1.msra.mxu0 %v3865
    %3899 = vmatprep.subr.mxu0 %v3868
    %3900 = vmatpush1.msra.mxu0 %v3867
    %3901 = vmatprep.subr.mxu0 0.0
    %3902 = vmatpush1.msra.mxu0 0.0
    %3903 = vmatprep.subr.mxu0 0.0
    %3904 = vmatpush1.msra.mxu0 0.0
    %3905 = vmatprep.subr.mxu0 0.0
    %3906 = vmatpush1.msra.mxu0 0.0
    %3907 = vmatprep.subr.mxu0 0.0
    %3908 = vmatpush1.msra.mxu0 0.0
    %3909 = vmatprep.subr.mxu0 0.0
    %3910 = vmatpush1.msra.mxu0 0.0
    %3911 = vmatprep.subr.mxu0 0.0
    %3912 = vmatpush1.msra.mxu0 0.0
    %3913 = vmatprep.subr.mxu0 0.0
    %3914 = vmatpush1.msra.mxu0 0.0
    %3915 = vmatprep.subr.mxu0 0.0
    %3916 = vmatpush1.msra.mxu0 0.0
    %3917 = vmatprep.subr.mxu0 0.0
    %3918 = vmatpush1.msra.mxu0 0.0
    %3919 = vmatprep.subr.mxu0 0.0
    %3920 = vmatpush1.msra.mxu0 0.0
    %3921 = vmatprep.subr.mxu0 0.0
    %3922 = vmatpush1.msra.mxu0 0.0
    %3923 = vmatprep.subr.mxu0 0.0
    %3924 = vmatpush1.msra.mxu0 0.0
    %3925 = vmatprep.subr.mxu0 0.0
    %3926 = vmatpush1.msra.mxu0 0.0
    %3927 = vmatprep.subr.mxu0 0.0
    %3928 = vmatpush1.msra.mxu0 0.0
    %3929 = vmatprep.subr.mxu0 0.0
    %3930 = vmatpush1.msra.mxu0 0.0
    %3931 = vmatprep.subr.mxu0 0.0
    %3932 = vmatpush1.msra.mxu0 0.0
    %3933 = vmatprep.mubr.f32.mxu0 0.0
    %3934 = vmatmul.mubr.f32.gmra.mrb[0].mxu0 %v3431
    %v3935 = vpop.f32.mrb[0].mxu0
    %v3936 = vadd.f32 0.0, %v3935
    %v3937 = vpop.f32.mrb[0].mxu0
    %v3938 = vadd.f32 0.0, %v3937
    %3939 = vdwg.mxu0
    %v3940 = vadd.f32 %v3834, %v3936
    %v3941 = vxor.u32 %v3940, 2147483648
    %v3942 = vmul.f32 %v3941, 1.442695
    %v3943 = vpow.pop %v3942
    %v3944 = vadd.f32 %v3943, 1.0
    %v3945 = vrcp.pop %v3944
    %v3946 = vmul.f32 1.0, %v3945
    %v3947 = vadd.f32 %v3835, %v3938
    %v3948 = vxor.u32 %v3947, 2147483648
    %v3949 = vmul.f32 %v3948, 1.442695
    %v3950 = vpow.pop %v3949
    %v3951 = vadd.f32 %v3950, 1.0
    %v3952 = vrcp.pop %v3951
    %v3953 = vmul.f32 1.0, %v3952
    %v3954 = vmul.f32 %v3953, %v3431
    %v3955 = vld [vmem:[#allocation11] sm:$0xff]
    %v3956 = vld [vmem:[#allocation11 + $0x8] sm:$0xff]
    %v3957 = vld [vmem:[#allocation11 + $0x10] sm:$0xff]
    %v3958 = vld [vmem:[#allocation11 + $0x18] sm:$0xff]
    %v3959 = vld [vmem:[#allocation11 + $0x20] sm:$0xff]
    %v3960 = vld [vmem:[#allocation11 + $0x28] sm:$0xff]
    %v3961 = vld [vmem:[#allocation11 + $0x30] sm:$0xff]
    %v3962 = vld [vmem:[#allocation11 + $0x38] sm:$0xff]
    %v3963 = vld [vmem:[#allocation11 + $0x40] sm:$0xff]
    %v3964 = vld [vmem:[#allocation11 + $0x48] sm:$0xff]
    %v3965 = vld [vmem:[#allocation11 + $0x50] sm:$0xff]
    %v3966 = vld [vmem:[#allocation11 + $0x58] sm:$0xff]
    %v3967 = vld [vmem:[#allocation11 + $0x60] sm:$0xff]
    %v3968 = vld [vmem:[#allocation11 + $0x68] sm:$0xff]
    %v3969 = vld [vmem:[#allocation11 + $0x70] sm:$0xff]
    %v3970 = vld [vmem:[#allocation11 + $0x78] sm:$0xff]
    %3971 = vmatprep.subr.mxu0 0.0
    %3972 = vmatpush1.msra.mxu0 %v3955
    %3973 = vmatprep.subr.mxu0 0.0
    %3974 = vmatpush1.msra.mxu0 %v3956
    %3975 = vmatprep.subr.mxu0 0.0
    %3976 = vmatpush1.msra.mxu0 %v3957
    %3977 = vmatprep.subr.mxu0 0.0
    %3978 = vmatpush1.msra.mxu0 %v3958
    %3979 = vmatprep.subr.mxu0 0.0
    %3980 = vmatpush1.msra.mxu0 %v3959
    %3981 = vmatprep.subr.mxu0 0.0
    %3982 = vmatpush1.msra.mxu0 %v3960
    %3983 = vmatprep.subr.mxu0 0.0
    %3984 = vmatpush1.msra.mxu0 %v3961
    %3985 = vmatprep.subr.mxu0 0.0
    %3986 = vmatpush1.msra.mxu0 %v3962
    %3987 = vmatprep.subr.mxu0 0.0
    %3988 = vmatpush1.msra.mxu0 %v3963
    %3989 = vmatprep.subr.mxu0 0.0
    %3990 = vmatpush1.msra.mxu0 %v3964
    %3991 = vmatprep.subr.mxu0 0.0
    %3992 = vmatpush1.msra.mxu0 %v3965
    %3993 = vmatprep.subr.mxu0 0.0
    %3994 = vmatpush1.msra.mxu0 %v3966
    %3995 = vmatprep.subr.mxu0 0.0
    %3996 = vmatpush1.msra.mxu0 %v3967
    %3997 = vmatprep.subr.mxu0 0.0
    %3998 = vmatpush1.msra.mxu0 %v3968
    %3999 = vmatprep.subr.mxu0 0.0
    %4000 = vmatpush1.msra.mxu0 %v3969
    %4001 = vmatprep.subr.mxu0 0.0
    %4002 = vmatpush1.msra.mxu0 %v3970
    %4003 = vmatprep.subr.mxu0 0.0
    %4004 = vmatpush1.msra.mxu0 0.0
    %4005 = vmatprep.subr.mxu0 0.0
    %4006 = vmatpush1.msra.mxu0 0.0
    %4007 = vmatprep.subr.mxu0 0.0
    %4008 = vmatpush1.msra.mxu0 0.0
    %4009 = vmatprep.subr.mxu0 0.0
    %4010 = vmatpush1.msra.mxu0 0.0
    %4011 = vmatprep.subr.mxu0 0.0
    %4012 = vmatpush1.msra.mxu0 0.0
    %4013 = vmatprep.subr.mxu0 0.0
    %4014 = vmatpush1.msra.mxu0 0.0
    %4015 = vmatprep.subr.mxu0 0.0
    %4016 = vmatpush1.msra.mxu0 0.0
    %4017 = vmatprep.subr.mxu0 0.0
    %4018 = vmatpush1.msra.mxu0 0.0
    %4019 = vmatprep.subr.mxu0 0.0
    %4020 = vmatpush1.msra.mxu0 0.0
    %4021 = vmatprep.subr.mxu0 0.0
    %4022 = vmatpush1.msra.mxu0 0.0
    %4023 = vmatprep.subr.mxu0 0.0
    %4024 = vmatpush1.msra.mxu0 0.0
    %4025 = vmatprep.subr.mxu0 0.0
    %4026 = vmatpush1.msra.mxu0 0.0
    %4027 = vmatprep.subr.mxu0 0.0
    %4028 = vmatpush1.msra.mxu0 0.0
    %4029 = vmatprep.subr.mxu0 0.0
    %4030 = vmatpush1.msra.mxu0 0.0
    %4031 = vmatprep.subr.mxu0 0.0
    %4032 = vmatpush1.msra.mxu0 0.0
    %4033 = vmatprep.subr.mxu0 0.0
    %4034 = vmatpush1.msra.mxu0 0.0
    %4035 = vmatprep.mubr.f32.mxu0 0.0
    %4036 = vmatmul.mubr.f32.gmra.mrb[0].mxu0 %v3954
    %v4037 = vpop.f32.mrb[0].mxu0
    %v4038 = vadd.f32 0.0, %v4037
    %v4039 = vpop.f32.mrb[0].mxu0
    %4040 = vdwg.mxu0
    %v4041 = vadd.f32 %v3836, %v4038
    %v4042 = vtanh.pop %v4041
    %v4043 = vmul.f32 %v3946, %v3431
    %v4044 = vsub.f32 1.0, %v3946
    %v4045 = vmul.f32 %v4044, %v4042
    %v4046 = vadd.f32 %v4043, %v4045
    %v4047 = vld [vmem:[#allocation8] sm:$0xff]
    %v4048 = vld [vmem:[#allocation8 + $0x8] sm:$0xff]
    %v4049 = vld [vmem:[#allocation8 + $0x10] sm:$0xff]
    %v4050 = vld [vmem:[#allocation8 + $0x18] sm:$0xff]
    %v4051 = vld [vmem:[#allocation8 + $0x20] sm:$0xff]
    %v4052 = vld [vmem:[#allocation8 + $0x28] sm:$0xff]
    %v4053 = vld [vmem:[#allocation8 + $0x30] sm:$0xff]
    %v4054 = vld [vmem:[#allocation8 + $0x38] sm:$0xff]
    %v4055 = vld [vmem:[#allocation8 + $0x40] sm:$0xff]
    %v4056 = vld [vmem:[#allocation8 + $0x48] sm:$0xff]
    %v4057 = vld [vmem:[#allocation8 + $0x50] sm:$0xff]
    %v4058 = vld [vmem:[#allocation8 + $0x58] sm:$0xff]
    %v4059 = vld [vmem:[#allocation8 + $0x60] sm:$0xff]
    %v4060 = vld [vmem:[#allocation8 + $0x68] sm:$0xff]
    %v4061 = vld [vmem:[#allocation8 + $0x70] sm:$0xff]
    %v4062 = vld [vmem:[#allocation8 + $0x78] sm:$0xff]
    %v4063 = vld [vmem:[#allocation8 + $0x80] sm:$0xff]
    %v4064 = vld [vmem:[#allocation8 + $0x88] sm:$0xff]
    %v4065 = vld [vmem:[#allocation8 + $0x90] sm:$0xff]
    %v4066 = vld [vmem:[#allocation8 + $0x98] sm:$0xff]
    %v4067 = vld [vmem:[#allocation8 + $0xa0] sm:$0xff]
    %v4068 = vld [vmem:[#allocation8 + $0xa8] sm:$0xff]
    %v4069 = vld [vmem:[#allocation8 + $0xb0] sm:$0xff]
    %v4070 = vld [vmem:[#allocation8 + $0xb8] sm:$0xff]
    %v4071 = vld [vmem:[#allocation8 + $0xc0] sm:$0xff]
    %v4072 = vld [vmem:[#allocation8 + $0xc8] sm:$0xff]
    %v4073 = vld [vmem:[#allocation8 + $0xd0] sm:$0xff]
    %v4074 = vld [vmem:[#allocation8 + $0xd8] sm:$0xff]
    %v4075 = vld [vmem:[#allocation8 + $0xe0] sm:$0xff]
    %v4076 = vld [vmem:[#allocation8 + $0xe8] sm:$0xff]
    %v4077 = vld [vmem:[#allocation8 + $0xf0] sm:$0xff]
    %v4078 = vld [vmem:[#allocation8 + $0xf8] sm:$0xff]
    %v4079 = vld [vmem:[#allocation8 + $0x100] sm:$0xff]
    %v4080 = vld [vmem:[#allocation8 + $0x108] sm:$0xff]
    %v4081 = vld [vmem:[#allocation8 + $0x110] sm:$0xff]
    %v4082 = vld [vmem:[#allocation8 + $0x118] sm:$0xff]
    %v4083 = vld [vmem:[#allocation8 + $0x120] sm:$0xff]
    %v4084 = vld [vmem:[#allocation8 + $0x128] sm:$0xff]
    %v4085 = vld [vmem:[#allocation8 + $0x130] sm:$0xff]
    %v4086 = vld [vmem:[#allocation8 + $0x138] sm:$0xff]
    %v4087 = vld [vmem:[#allocation8 + $0x140] sm:$0xff]
    %v4088 = vld [vmem:[#allocation8 + $0x148] sm:$0xff]
    %v4089 = vld [vmem:[#allocation8 + $0x150] sm:$0xff]
    %v4090 = vld [vmem:[#allocation8 + $0x158] sm:$0xff]
    %v4091 = vld [vmem:[#allocation8 + $0x160] sm:$0xff]
    %v4092 = vld [vmem:[#allocation8 + $0x168] sm:$0xff]
    %v4093 = vld [vmem:[#allocation8 + $0x170] sm:$0xff]
    %v4094 = vld [vmem:[#allocation8 + $0x178] sm:$0xff]
    %4095 = vmatprep.subr.mxu0 %v4048
    %4096 = vmatpush1.msra.mxu0 %v4047
    %4097 = vmatprep.subr.mxu0 %v4051
    %4098 = vmatpush1.msra.mxu0 %v4050
    %4099 = vmatprep.subr.mxu0 %v4054
    %4100 = vmatpush1.msra.mxu0 %v4053
    %4101 = vmatprep.subr.mxu0 %v4057
    %4102 = vmatpush1.msra.mxu0 %v4056
    %4103 = vmatprep.subr.mxu0 %v4060
    %4104 = vmatpush1.msra.mxu0 %v4059
    %4105 = vmatprep.subr.mxu0 %v4063
    %4106 = vmatpush1.msra.mxu0 %v4062
    %4107 = vmatprep.subr.mxu0 %v4066
    %4108 = vmatpush1.msra.mxu0 %v4065
    %4109 = vmatprep.subr.mxu0 %v4069
    %4110 = vmatpush1.msra.mxu0 %v4068
    %4111 = vmatprep.subr.mxu0 %v4072
    %4112 = vmatpush1.msra.mxu0 %v4071
    %4113 = vmatprep.subr.mxu0 %v4075
    %4114 = vmatpush1.msra.mxu0 %v4074
    %4115 = vmatprep.subr.mxu0 %v4078
    %4116 = vmatpush1.msra.mxu0 %v4077
    %4117 = vmatprep.subr.mxu0 %v4081
    %4118 = vmatpush1.msra.mxu0 %v4080
    %4119 = vmatprep.subr.mxu0 %v4084
    %4120 = vmatpush1.msra.mxu0 %v4083
    %4121 = vmatprep.subr.mxu0 %v4087
    %4122 = vmatpush1.msra.mxu0 %v4086
    %4123 = vmatprep.subr.mxu0 %v4090
    %4124 = vmatpush1.msra.mxu0 %v4089
    %4125 = vmatprep.subr.mxu0 %v4093
    %4126 = vmatpush1.msra.mxu0 %v4092
    %4127 = vmatprep.subr.mxu0 0.0
    %4128 = vmatpush1.msra.mxu0 0.0
    %4129 = vmatprep.subr.mxu0 0.0
    %4130 = vmatpush1.msra.mxu0 0.0
    %4131 = vmatprep.subr.mxu0 0.0
    %4132 = vmatpush1.msra.mxu0 0.0
    %4133 = vmatprep.subr.mxu0 0.0
    %4134 = vmatpush1.msra.mxu0 0.0
    %4135 = vmatprep.subr.mxu0 0.0
    %4136 = vmatpush1.msra.mxu0 0.0
    %4137 = vmatprep.subr.mxu0 0.0
    %4138 = vmatpush1.msra.mxu0 0.0
    %4139 = vmatprep.subr.mxu0 0.0
    %4140 = vmatpush1.msra.mxu0 0.0
    %4141 = vmatprep.subr.mxu0 0.0
    %4142 = vmatpush1.msra.mxu0 0.0
    %4143 = vmatprep.subr.mxu0 0.0
    %4144 = vmatpush1.msra.mxu0 0.0
    %4145 = vmatprep.subr.mxu0 0.0
    %4146 = vmatpush1.msra.mxu0 0.0
    %4147 = vmatprep.subr.mxu0 0.0
    %4148 = vmatpush1.msra.mxu0 0.0
    %4149 = vmatprep.subr.mxu0 0.0
    %4150 = vmatpush1.msra.mxu0 0.0
    %4151 = vmatprep.subr.mxu0 0.0
    %4152 = vmatpush1.msra.mxu0 0.0
    %4153 = vmatprep.subr.mxu0 0.0
    %4154 = vmatpush1.msra.mxu0 0.0
    %4155 = vmatprep.subr.mxu0 0.0
    %4156 = vmatpush1.msra.mxu0 0.0
    %4157 = vmatprep.subr.mxu0 0.0
    %4158 = vmatpush1.msra.mxu0 0.0
    %4159 = vmatprep.mubr.f32.mxu0 0.0
    %4160 = vmatmul.mubr.f32.gmra.mrb[0].mxu0 %v4046
    %v4161 = vpop.f32.mrb[0].mxu0
    %v4162 = vadd.f32 %v131, %v4161
    %v4163 = vpop.f32.mrb[0].mxu0
    %v4164 = vadd.f32 %v135, %v4163
    %4165 = vdwg.mxu0
    %4166 = vmatprep.subr.mxu0 0.0
    %4167 = vmatpush1.msra.mxu0 %v4049
    %4168 = vmatprep.subr.mxu0 0.0
    %4169 = vmatpush1.msra.mxu0 %v4052
    %4170 = vmatprep.subr.mxu0 0.0
    %4171 = vmatpush1.msra.mxu0 %v4055
    %4172 = vmatprep.subr.mxu0 0.0
    %4173 = vmatpush1.msra.mxu0 %v4058
    %4174 = vmatprep.subr.mxu0 0.0
    %4175 = vmatpush1.msra.mxu0 %v4061
    %4176 = vmatprep.subr.mxu0 0.0
    %4177 = vmatpush1.msra.mxu0 %v4064
    %4178 = vmatprep.subr.mxu0 0.0
    %4179 = vmatpush1.msra.mxu0 %v4067
    %4180 = vmatprep.subr.mxu0 0.0
    %4181 = vmatpush1.msra.mxu0 %v4070
    %4182 = vmatprep.subr.mxu0 0.0
    %4183 = vmatpush1.msra.mxu0 %v4073
    %4184 = vmatprep.subr.mxu0 0.0
    %4185 = vmatpush1.msra.mxu0 %v4076
    %4186 = vmatprep.subr.mxu0 0.0
    %4187 = vmatpush1.msra.mxu0 %v4079
    %4188 = vmatprep.subr.mxu0 0.0
    %4189 = vmatpush1.msra.mxu0 %v4082
    %4190 = vmatprep.subr.mxu0 0.0
    %4191 = vmatpush1.msra.mxu0 %v4085
    %4192 = vmatprep.subr.mxu0 0.0
    %4193 = vmatpush1.msra.mxu0 %v4088
    %4194 = vmatprep.subr.mxu0 0.0
    %4195 = vmatpush1.msra.mxu0 %v4091
    %4196 = vmatprep.subr.mxu0 0.0
    %4197 = vmatpush1.msra.mxu0 %v4094
    %4198 = vmatprep.subr.mxu0 0.0
    %4199 = vmatpush1.msra.mxu0 0.0
    %4200 = vmatprep.subr.mxu0 0.0
    %4201 = vmatpush1.msra.mxu0 0.0
    %4202 = vmatprep.subr.mxu0 0.0
    %4203 = vmatpush1.msra.mxu0 0.0
    %4204 = vmatprep.subr.mxu0 0.0
    %4205 = vmatpush1.msra.mxu0 0.0
    %4206 = vmatprep.subr.mxu0 0.0
    %4207 = vmatpush1.msra.mxu0 0.0
    %4208 = vmatprep.subr.mxu0 0.0
    %4209 = vmatpush1.msra.mxu0 0.0
    %4210 = vmatprep.subr.mxu0 0.0
    %4211 = vmatpush1.msra.mxu0 0.0
    %4212 = vmatprep.subr.mxu0 0.0
    %4213 = vmatpush1.msra.mxu0 0.0
    %4214 = vmatprep.subr.mxu0 0.0
    %4215 = vmatpush1.msra.mxu0 0.0
    %4216 = vmatprep.subr.mxu0 0.0
    %4217 = vmatpush1.msra.mxu0 0.0
    %4218 = vmatprep.subr.mxu0 0.0
    %4219 = vmatpush1.msra.mxu0 0.0
    %4220 = vmatprep.subr.mxu0 0.0
    %4221 = vmatpush1.msra.mxu0 0.0
    %4222 = vmatprep.subr.mxu0 0.0
    %4223 = vmatpush1.msra.mxu0 0.0
    %4224 = vmatprep.subr.mxu0 0.0
    %4225 = vmatpush1.msra.mxu0 0.0
    %4226 = vmatprep.subr.mxu0 0.0
    %4227 = vmatpush1.msra.mxu0 0.0
    %4228 = vmatprep.subr.mxu0 0.0
    %4229 = vmatpush1.msra.mxu0 0.0
    %4230 = vmatprep.mubr.f32.mxu0 0.0
    %4231 = vmatmul.mubr.f32.gmra.mrb[0].mxu0 %v4046
    %v4232 = vpop.f32.mrb[0].mxu0
    %v4233 = vadd.f32 %v139, %v4232
    %v4234 = vpop.f32.mrb[0].mxu0
    %4235 = vdwg.mxu0
    %v4236 = vld [vmem:[%s545] sm:$0xff]
    %v4237 = vld [vmem:[%s545 + $0x8] sm:$0xff]
    %v4238 = vld [vmem:[%s545 + $0x10] sm:$0xff]
    %v4239 = vld [vmem:[%s545 + $0x18] sm:$0xff]
    %v4240 = vld [vmem:[%s545 + $0x20] sm:$0xff]
    %v4241 = vld [vmem:[%s545 + $0x28] sm:$0xff]
    %v4242 = vld [vmem:[%s545 + $0x30] sm:$0xff]
    %v4243 = vld [vmem:[%s545 + $0x38] sm:$0xff]
    %v4244 = vld [vmem:[%s545 + $0x40] sm:$0xff]
    %v4245 = vld [vmem:[%s545 + $0x48] sm:$0xff]
    %v4246 = vld [vmem:[%s545 + $0x50] sm:$0xff]
    %v4247 = vld [vmem:[%s545 + $0x58] sm:$0xff]
    %v4248 = vld [vmem:[%s545 + $0x60] sm:$0xff]
    %v4249 = vld [vmem:[%s545 + $0x68] sm:$0xff]
    %v4250 = vld [vmem:[%s545 + $0x70] sm:$0xff]
    %v4251 = vld [vmem:[%s545 + $0x78] sm:$0xff]
    %v4252 = vld [vmem:[%s545 + $0x80] sm:$0xff]
    %v4253 = vld [vmem:[%s545 + $0x88] sm:$0xff]
    %v4254 = vld [vmem:[%s545 + $0x90] sm:$0xff]
    %v4255 = vld [vmem:[%s545 + $0x98] sm:$0xff]
    %v4256 = vld [vmem:[%s545 + $0xa0] sm:$0xff]
    %v4257 = vld [vmem:[%s545 + $0xa8] sm:$0xff]
    %v4258 = vld [vmem:[%s545 + $0xb0] sm:$0xff]
    %v4259 = vld [vmem:[%s545 + $0xb8] sm:$0xff]
    %v4260 = vld [vmem:[%s545 + $0xc0] sm:$0xff]
    %v4261 = vld [vmem:[%s545 + $0xc8] sm:$0xff]
    %v4262 = vld [vmem:[%s545 + $0xd0] sm:$0xff]
    %v4263 = vld [vmem:[%s545 + $0xd8] sm:$0xff]
    %v4264 = vld [vmem:[%s545 + $0xe0] sm:$0xff]
    %v4265 = vld [vmem:[%s545 + $0xe8] sm:$0xff]
    %v4266 = vld [vmem:[%s545 + $0xf0] sm:$0xff]
    %v4267 = vld [vmem:[%s545 + $0xf8] sm:$0xff]
    %4268 = vmatprep.subr.mxu0 %v4237
    %4269 = vmatpush1.msra.mxu0 %v4236
    %4270 = vmatprep.subr.mxu0 %v4239
    %4271 = vmatpush1.msra.mxu0 %v4238
    %4272 = vmatprep.subr.mxu0 %v4241
    %4273 = vmatpush1.msra.mxu0 %v4240
    %4274 = vmatprep.subr.mxu0 %v4243
    %4275 = vmatpush1.msra.mxu0 %v4242
    %4276 = vmatprep.subr.mxu0 %v4245
    %4277 = vmatpush1.msra.mxu0 %v4244
    %4278 = vmatprep.subr.mxu0 %v4247
    %4279 = vmatpush1.msra.mxu0 %v4246
    %4280 = vmatprep.subr.mxu0 %v4249
    %4281 = vmatpush1.msra.mxu0 %v4248
    %4282 = vmatprep.subr.mxu0 %v4251
    %4283 = vmatpush1.msra.mxu0 %v4250
    %4284 = vmatprep.subr.mxu0 %v4253
    %4285 = vmatpush1.msra.mxu0 %v4252
    %4286 = vmatprep.subr.mxu0 %v4255
    %4287 = vmatpush1.msra.mxu0 %v4254
    %4288 = vmatprep.subr.mxu0 %v4257
    %4289 = vmatpush1.msra.mxu0 %v4256
    %4290 = vmatprep.subr.mxu0 %v4259
    %4291 = vmatpush1.msra.mxu0 %v4258
    %4292 = vmatprep.subr.mxu0 %v4261
    %4293 = vmatpush1.msra.mxu0 %v4260
    %4294 = vmatprep.subr.mxu0 %v4263
    %4295 = vmatpush1.msra.mxu0 %v4262
    %4296 = vmatprep.subr.mxu0 %v4265
    %4297 = vmatpush1.msra.mxu0 %v4264
    %4298 = vmatprep.subr.mxu0 %v4267
    %4299 = vmatpush1.msra.mxu0 %v4266
    %4300 = vmatprep.subr.mxu0 0.0
    %4301 = vmatpush1.msra.mxu0 0.0
    %4302 = vmatprep.subr.mxu0 0.0
    %4303 = vmatpush1.msra.mxu0 0.0
    %4304 = vmatprep.subr.mxu0 0.0
    %4305 = vmatpush1.msra.mxu0 0.0
    %4306 = vmatprep.subr.mxu0 0.0
    %4307 = vmatpush1.msra.mxu0 0.0
    %4308 = vmatprep.subr.mxu0 0.0
    %4309 = vmatpush1.msra.mxu0 0.0
    %4310 = vmatprep.subr.mxu0 0.0
    %4311 = vmatpush1.msra.mxu0 0.0
    %4312 = vmatprep.subr.mxu0 0.0
    %4313 = vmatpush1.msra.mxu0 0.0
    %4314 = vmatprep.subr.mxu0 0.0
    %4315 = vmatpush1.msra.mxu0 0.0
    %4316 = vmatprep.subr.mxu0 0.0
    %4317 = vmatpush1.msra.mxu0 0.0
    %4318 = vmatprep.subr.mxu0 0.0
    %4319 = vmatpush1.msra.mxu0 0.0
    %4320 = vmatprep.subr.mxu0 0.0
    %4321 = vmatpush1.msra.mxu0 0.0
    %4322 = vmatprep.subr.mxu0 0.0
    %4323 = vmatpush1.msra.mxu0 0.0
    %4324 = vmatprep.subr.mxu0 0.0
    %4325 = vmatpush1.msra.mxu0 0.0
    %4326 = vmatprep.subr.mxu0 0.0
    %4327 = vmatpush1.msra.mxu0 0.0
    %4328 = vmatprep.subr.mxu0 0.0
    %4329 = vmatpush1.msra.mxu0 0.0
    %4330 = vmatprep.subr.mxu0 0.0
    %4331 = vmatpush1.msra.mxu0 0.0
    %4332 = vmatprep.mubr.f32.mxu0 0.0
    %4333 = vmatmul.mubr.f32.gmra.mrb[0].mxu0 %v3830
    %v4334 = vpop.f32.mrb[0].mxu0
    %v4335 = vadd.f32 0.0, %v4334
    %v4336 = vpop.f32.mrb[0].mxu0
    %v4337 = vadd.f32 0.0, %v4336
    %4338 = vdwg.mxu0
    %v4339 = vadd.f32 %v4162, %v4335
    %v4340 = vxor.u32 %v4339, 2147483648
    %v4341 = vmul.f32 %v4340, 1.442695
    %v4342 = vpow.pop %v4341
    %v4343 = vadd.f32 %v4342, 1.0
    %v4344 = vrcp.pop %v4343
    %v4345 = vmul.f32 1.0, %v4344
    %v4346 = vadd.f32 %v4164, %v4337
    %v4347 = vxor.u32 %v4346, 2147483648
    %v4348 = vmul.f32 %v4347, 1.442695
    %v4349 = vpow.pop %v4348
    %v4350 = vadd.f32 %v4349, 1.0
    %v4351 = vrcp.pop %v4350
    %v4352 = vmul.f32 1.0, %v4351
    %v4353 = vmul.f32 %v4352, %v3830
    %v4354 = vld [vmem:[%s664] sm:$0xff]
    %v4355 = vld [vmem:[%s664 + $0x8] sm:$0xff]
    %v4356 = vld [vmem:[%s664 + $0x10] sm:$0xff]
    %v4357 = vld [vmem:[%s664 + $0x18] sm:$0xff]
    %v4358 = vld [vmem:[%s664 + $0x20] sm:$0xff]
    %v4359 = vld [vmem:[%s664 + $0x28] sm:$0xff]
    %v4360 = vld [vmem:[%s664 + $0x30] sm:$0xff]
    %v4361 = vld [vmem:[%s664 + $0x38] sm:$0xff]
    %v4362 = vld [vmem:[%s664 + $0x40] sm:$0xff]
    %v4363 = vld [vmem:[%s664 + $0x48] sm:$0xff]
    %v4364 = vld [vmem:[%s664 + $0x50] sm:$0xff]
    %v4365 = vld [vmem:[%s664 + $0x58] sm:$0xff]
    %v4366 = vld [vmem:[%s664 + $0x60] sm:$0xff]
    %v4367 = vld [vmem:[%s664 + $0x68] sm:$0xff]
    %v4368 = vld [vmem:[%s664 + $0x70] sm:$0xff]
    %v4369 = vld [vmem:[%s664 + $0x78] sm:$0xff]
    %4370 = vmatprep.subr.mxu0 0.0
    %4371 = vmatpush1.msra.mxu0 %v4354
    %4372 = vmatprep.subr.mxu0 0.0
    %4373 = vmatpush1.msra.mxu0 %v4355
    %4374 = vmatprep.subr.mxu0 0.0
    %4375 = vmatpush1.msra.mxu0 %v4356
    %4376 = vmatprep.subr.mxu0 0.0
    %4377 = vmatpush1.msra.mxu0 %v4357
    %4378 = vmatprep.subr.mxu0 0.0
    %4379 = vmatpush1.msra.mxu0 %v4358
    %4380 = vmatprep.subr.mxu0 0.0
    %4381 = vmatpush1.msra.mxu0 %v4359
    %4382 = vmatprep.subr.mxu0 0.0
    %4383 = vmatpush1.msra.mxu0 %v4360
    %4384 = vmatprep.subr.mxu0 0.0
    %4385 = vmatpush1.msra.mxu0 %v4361
    %4386 = vmatprep.subr.mxu0 0.0
    %4387 = vmatpush1.msra.mxu0 %v4362
    %4388 = vmatprep.subr.mxu0 0.0
    %4389 = vmatpush1.msra.mxu0 %v4363
    %4390 = vmatprep.subr.mxu0 0.0
    %4391 = vmatpush1.msra.mxu0 %v4364
    %4392 = vmatprep.subr.mxu0 0.0
    %4393 = vmatpush1.msra.mxu0 %v4365
    %4394 = vmatprep.subr.mxu0 0.0
    %4395 = vmatpush1.msra.mxu0 %v4366
    %4396 = vmatprep.subr.mxu0 0.0
    %4397 = vmatpush1.msra.mxu0 %v4367
    %4398 = vmatprep.subr.mxu0 0.0
    %4399 = vmatpush1.msra.mxu0 %v4368
    %4400 = vmatprep.subr.mxu0 0.0
    %4401 = vmatpush1.msra.mxu0 %v4369
    %4402 = vmatprep.subr.mxu0 0.0
    %4403 = vmatpush1.msra.mxu0 0.0
    %4404 = vmatprep.subr.mxu0 0.0
    %4405 = vmatpush1.msra.mxu0 0.0
    %4406 = vmatprep.subr.mxu0 0.0
    %4407 = vmatpush1.msra.mxu0 0.0
    %4408 = vmatprep.subr.mxu0 0.0
    %4409 = vmatpush1.msra.mxu0 0.0
    %4410 = vmatprep.subr.mxu0 0.0
    %4411 = vmatpush1.msra.mxu0 0.0
    %4412 = vmatprep.subr.mxu0 0.0
    %4413 = vmatpush1.msra.mxu0 0.0
    %4414 = vmatprep.subr.mxu0 0.0
    %4415 = vmatpush1.msra.mxu0 0.0
    %4416 = vmatprep.subr.mxu0 0.0
    %4417 = vmatpush1.msra.mxu0 0.0
    %4418 = vmatprep.subr.mxu0 0.0
    %4419 = vmatpush1.msra.mxu0 0.0
    %4420 = vmatprep.subr.mxu0 0.0
    %4421 = vmatpush1.msra.mxu0 0.0
    %4422 = vmatprep.subr.mxu0 0.0
    %4423 = vmatpush1.msra.mxu0 0.0
    %4424 = vmatprep.subr.mxu0 0.0
    %4425 = vmatpush1.msra.mxu0 0.0
    %4426 = vmatprep.subr.mxu0 0.0
    %4427 = vmatpush1.msra.mxu0 0.0
    %4428 = vmatprep.subr.mxu0 0.0
    %4429 = vmatpush1.msra.mxu0 0.0
    %4430 = vmatprep.subr.mxu0 0.0
    %4431 = vmatpush1.msra.mxu0 0.0
    %4432 = vmatprep.subr.mxu0 0.0
    %4433 = vmatpush1.msra.mxu0 0.0
    %4434 = vmatprep.mubr.f32.mxu0 0.0
    %4435 = vmatmul.mubr.f32.gmra.mrb[0].mxu0 %v4353
    %v4436 = vpop.f32.mrb[0].mxu0
    %v4437 = vadd.f32 0.0, %v4436
    %v4438 = vpop.f32.mrb[0].mxu0
    %4439 = vdwg.mxu0
    %v4440 = vadd.f32 %v4233, %v4437
    %v4441 = vtanh.pop %v4440
    %v4442 = vmul.f32 %v4345, %v3830
    %v4443 = vsub.f32 1.0, %v4345
    %v4444 = vmul.f32 %v4443, %v4441
    %v4445 = vadd.f32 %v4442, %v4444
    %s4446 = scalar_lea.vmem [#allocation2], 48
    %4447 = vst [vmem:[%s4446] sm:$0xff] %v4445
    %s4448 = scalar_lea.vmem [#allocation3], 168
    %v4449 = vld [vmem:[%s4448] sm:$0xff]
    %v4450 = vld [vmem:[%s4448 + $0x8] sm:$0xff]
    %v4451 = vld [vmem:[%s4448 + $0x10] sm:$0xff]
    %v4452 = vld [vmem:[#allocation9] sm:$0xff]
    %v4453 = vld [vmem:[#allocation9 + $0x8] sm:$0xff]
    %v4454 = vld [vmem:[#allocation9 + $0x10] sm:$0xff]
    %v4455 = vld [vmem:[#allocation9 + $0x18] sm:$0xff]
    %v4456 = vld [vmem:[#allocation9 + $0x20] sm:$0xff]
    %v4457 = vld [vmem:[#allocation9 + $0x28] sm:$0xff]
    %v4458 = vld [vmem:[#allocation9 + $0x30] sm:$0xff]
    %v4459 = vld [vmem:[#allocation9 + $0x38] sm:$0xff]
    %v4460 = vld [vmem:[#allocation9 + $0x40] sm:$0xff]
    %v4461 = vld [vmem:[#allocation9 + $0x48] sm:$0xff]
    %v4462 = vld [vmem:[#allocation9 + $0x50] sm:$0xff]
    %v4463 = vld [vmem:[#allocation9 + $0x58] sm:$0xff]
    %v4464 = vld [vmem:[#allocation9 + $0x60] sm:$0xff]
    %v4465 = vld [vmem:[#allocation9 + $0x68] sm:$0xff]
    %v4466 = vld [vmem:[#allocation9 + $0x70] sm:$0xff]
    %v4467 = vld [vmem:[#allocation9 + $0x78] sm:$0xff]
    %v4468 = vld [vmem:[#allocation9 + $0x80] sm:$0xff]
    %v4469 = vld [vmem:[#allocation9 + $0x88] sm:$0xff]
    %v4470 = vld [vmem:[#allocation9 + $0x90] sm:$0xff]
    %v4471 = vld [vmem:[#allocation9 + $0x98] sm:$0xff]
    %v4472 = vld [vmem:[#allocation9 + $0xa0] sm:$0xff]
    %v4473 = vld [vmem:[#allocation9 + $0xa8] sm:$0xff]
    %v4474 = vld [vmem:[#allocation9 + $0xb0] sm:$0xff]
    %v4475 = vld [vmem:[#allocation9 + $0xb8] sm:$0xff]
    %v4476 = vld [vmem:[#allocation9 + $0xc0] sm:$0xff]
    %v4477 = vld [vmem:[#allocation9 + $0xc8] sm:$0xff]
    %v4478 = vld [vmem:[#allocation9 + $0xd0] sm:$0xff]
    %v4479 = vld [vmem:[#allocation9 + $0xd8] sm:$0xff]
    %v4480 = vld [vmem:[#allocation9 + $0xe0] sm:$0xff]
    %v4481 = vld [vmem:[#allocation9 + $0xe8] sm:$0xff]
    %v4482 = vld [vmem:[#allocation9 + $0xf0] sm:$0xff]
    %v4483 = vld [vmem:[#allocation9 + $0xf8] sm:$0xff]
    %4484 = vmatprep.subr.mxu0 %v4453
    %4485 = vmatpush1.msra.mxu0 %v4452
    %4486 = vmatprep.subr.mxu0 %v4455
    %4487 = vmatpush1.msra.mxu0 %v4454
    %4488 = vmatprep.subr.mxu0 %v4457
    %4489 = vmatpush1.msra.mxu0 %v4456
    %4490 = vmatprep.subr.mxu0 %v4459
    %4491 = vmatpush1.msra.mxu0 %v4458
    %4492 = vmatprep.subr.mxu0 %v4461
    %4493 = vmatpush1.msra.mxu0 %v4460
    %4494 = vmatprep.subr.mxu0 %v4463
    %4495 = vmatpush1.msra.mxu0 %v4462
    %4496 = vmatprep.subr.mxu0 %v4465
    %4497 = vmatpush1.msra.mxu0 %v4464
    %4498 = vmatprep.subr.mxu0 %v4467
    %4499 = vmatpush1.msra.mxu0 %v4466
    %4500 = vmatprep.subr.mxu0 %v4469
    %4501 = vmatpush1.msra.mxu0 %v4468
    %4502 = vmatprep.subr.mxu0 %v4471
    %4503 = vmatpush1.msra.mxu0 %v4470
    %4504 = vmatprep.subr.mxu0 %v4473
    %4505 = vmatpush1.msra.mxu0 %v4472
    %4506 = vmatprep.subr.mxu0 %v4475
    %4507 = vmatpush1.msra.mxu0 %v4474
    %4508 = vmatprep.subr.mxu0 %v4477
    %4509 = vmatpush1.msra.mxu0 %v4476
    %4510 = vmatprep.subr.mxu0 %v4479
    %4511 = vmatpush1.msra.mxu0 %v4478
    %4512 = vmatprep.subr.mxu0 %v4481
    %4513 = vmatpush1.msra.mxu0 %v4480
    %4514 = vmatprep.subr.mxu0 %v4483
    %4515 = vmatpush1.msra.mxu0 %v4482
    %4516 = vmatprep.subr.mxu0 0.0
    %4517 = vmatpush1.msra.mxu0 0.0
    %4518 = vmatprep.subr.mxu0 0.0
    %4519 = vmatpush1.msra.mxu0 0.0
    %4520 = vmatprep.subr.mxu0 0.0
    %4521 = vmatpush1.msra.mxu0 0.0
    %4522 = vmatprep.subr.mxu0 0.0
    %4523 = vmatpush1.msra.mxu0 0.0
    %4524 = vmatprep.subr.mxu0 0.0
    %4525 = vmatpush1.msra.mxu0 0.0
    %4526 = vmatprep.subr.mxu0 0.0
    %4527 = vmatpush1.msra.mxu0 0.0
    %4528 = vmatprep.subr.mxu0 0.0
    %4529 = vmatpush1.msra.mxu0 0.0
    %4530 = vmatprep.subr.mxu0 0.0
    %4531 = vmatpush1.msra.mxu0 0.0
    %4532 = vmatprep.subr.mxu0 0.0
    %4533 = vmatpush1.msra.mxu0 0.0
    %4534 = vmatprep.subr.mxu0 0.0
    %4535 = vmatpush1.msra.mxu0 0.0
    %4536 = vmatprep.subr.mxu0 0.0
    %4537 = vmatpush1.msra.mxu0 0.0
    %4538 = vmatprep.subr.mxu0 0.0
    %4539 = vmatpush1.msra.mxu0 0.0
    %4540 = vmatprep.subr.mxu0 0.0
    %4541 = vmatpush1.msra.mxu0 0.0
    %4542 = vmatprep.subr.mxu0 0.0
    %4543 = vmatpush1.msra.mxu0 0.0
    %4544 = vmatprep.subr.mxu0 0.0
    %4545 = vmatpush1.msra.mxu0 0.0
    %4546 = vmatprep.subr.mxu0 0.0
    %4547 = vmatpush1.msra.mxu0 0.0
    %4548 = vmatprep.mubr.f32.mxu0 0.0
    %4549 = vmatmul.mubr.f32.gmra.mrb[0].mxu0 %v4046
    %v4550 = vpop.f32.mrb[0].mxu0
    %v4551 = vadd.f32 0.0, %v4550
    %v4552 = vpop.f32.mrb[0].mxu0
    %v4553 = vadd.f32 0.0, %v4552
    %4554 = vdwg.mxu0
    %v4555 = vadd.f32 %v4449, %v4551
    %v4556 = vxor.u32 %v4555, 2147483648
    %v4557 = vmul.f32 %v4556, 1.442695
    %v4558 = vpow.pop %v4557
    %v4559 = vadd.f32 %v4558, 1.0
    %v4560 = vrcp.pop %v4559
    %v4561 = vmul.f32 1.0, %v4560
    %v4562 = vadd.f32 %v4450, %v4553
    %v4563 = vxor.u32 %v4562, 2147483648
    %v4564 = vmul.f32 %v4563, 1.442695
    %v4565 = vpow.pop %v4564
    %v4566 = vadd.f32 %v4565, 1.0
    %v4567 = vrcp.pop %v4566
    %v4568 = vmul.f32 1.0, %v4567
    %v4569 = vmul.f32 %v4568, %v4046
    %v4570 = vld [vmem:[#allocation11] sm:$0xff]
    %v4571 = vld [vmem:[#allocation11 + $0x8] sm:$0xff]
    %v4572 = vld [vmem:[#allocation11 + $0x10] sm:$0xff]
    %v4573 = vld [vmem:[#allocation11 + $0x18] sm:$0xff]
    %v4574 = vld [vmem:[#allocation11 + $0x20] sm:$0xff]
    %v4575 = vld [vmem:[#allocation11 + $0x28] sm:$0xff]
    %v4576 = vld [vmem:[#allocation11 + $0x30] sm:$0xff]
    %v4577 = vld [vmem:[#allocation11 + $0x38] sm:$0xff]
    %v4578 = vld [vmem:[#allocation11 + $0x40] sm:$0xff]
    %v4579 = vld [vmem:[#allocation11 + $0x48] sm:$0xff]
    %v4580 = vld [vmem:[#allocation11 + $0x50] sm:$0xff]
    %v4581 = vld [vmem:[#allocation11 + $0x58] sm:$0xff]
    %v4582 = vld [vmem:[#allocation11 + $0x60] sm:$0xff]
    %v4583 = vld [vmem:[#allocation11 + $0x68] sm:$0xff]
    %v4584 = vld [vmem:[#allocation11 + $0x70] sm:$0xff]
    %v4585 = vld [vmem:[#allocation11 + $0x78] sm:$0xff]
    %4586 = vmatprep.subr.mxu0 0.0
    %4587 = vmatpush1.msra.mxu0 %v4570
    %4588 = vmatprep.subr.mxu0 0.0
    %4589 = vmatpush1.msra.mxu0 %v4571
    %4590 = vmatprep.subr.mxu0 0.0
    %4591 = vmatpush1.msra.mxu0 %v4572
    %4592 = vmatprep.subr.mxu0 0.0
    %4593 = vmatpush1.msra.mxu0 %v4573
    %4594 = vmatprep.subr.mxu0 0.0
    %4595 = vmatpush1.msra.mxu0 %v4574
    %4596 = vmatprep.subr.mxu0 0.0
    %4597 = vmatpush1.msra.mxu0 %v4575
    %4598 = vmatprep.subr.mxu0 0.0
    %4599 = vmatpush1.msra.mxu0 %v4576
    %4600 = vmatprep.subr.mxu0 0.0
    %4601 = vmatpush1.msra.mxu0 %v4577
    %4602 = vmatprep.subr.mxu0 0.0
    %4603 = vmatpush1.msra.mxu0 %v4578
    %4604 = vmatprep.subr.mxu0 0.0
    %4605 = vmatpush1.msra.mxu0 %v4579
    %4606 = vmatprep.subr.mxu0 0.0
    %4607 = vmatpush1.msra.mxu0 %v4580
    %4608 = vmatprep.subr.mxu0 0.0
    %4609 = vmatpush1.msra.mxu0 %v4581
    %4610 = vmatprep.subr.mxu0 0.0
    %4611 = vmatpush1.msra.mxu0 %v4582
    %4612 = vmatprep.subr.mxu0 0.0
    %4613 = vmatpush1.msra.mxu0 %v4583
    %4614 = vmatprep.subr.mxu0 0.0
    %4615 = vmatpush1.msra.mxu0 %v4584
    %4616 = vmatprep.subr.mxu0 0.0
    %4617 = vmatpush1.msra.mxu0 %v4585
    %4618 = vmatprep.subr.mxu0 0.0
    %4619 = vmatpush1.msra.mxu0 0.0
    %4620 = vmatprep.subr.mxu0 0.0
    %4621 = vmatpush1.msra.mxu0 0.0
    %4622 = vmatprep.subr.mxu0 0.0
    %4623 = vmatpush1.msra.mxu0 0.0
    %4624 = vmatprep.subr.mxu0 0.0
    %4625 = vmatpush1.msra.mxu0 0.0
    %4626 = vmatprep.subr.mxu0 0.0
    %4627 = vmatpush1.msra.mxu0 0.0
    %4628 = vmatprep.subr.mxu0 0.0
    %4629 = vmatpush1.msra.mxu0 0.0
    %4630 = vmatprep.subr.mxu0 0.0
    %4631 = vmatpush1.msra.mxu0 0.0
    %4632 = vmatprep.subr.mxu0 0.0
    %4633 = vmatpush1.msra.mxu0 0.0
    %4634 = vmatprep.subr.mxu0 0.0
    %4635 = vmatpush1.msra.mxu0 0.0
    %4636 = vmatprep.subr.mxu0 0.0
    %4637 = vmatpush1.msra.mxu0 0.0
    %4638 = vmatprep.subr.mxu0 0.0
    %4639 = vmatpush1.msra.mxu0 0.0
    %4640 = vmatprep.subr.mxu0 0.0
    %4641 = vmatpush1.msra.mxu0 0.0
    %4642 = vmatprep.subr.mxu0 0.0
    %4643 = vmatpush1.msra.mxu0 0.0
    %4644 = vmatprep.subr.mxu0 0.0
    %4645 = vmatpush1.msra.mxu0 0.0
    %4646 = vmatprep.subr.mxu0 0.0
    %4647 = vmatpush1.msra.mxu0 0.0
    %4648 = vmatprep.subr.mxu0 0.0
    %4649 = vmatpush1.msra.mxu0 0.0
    %4650 = vmatprep.mubr.f32.mxu0 0.0
    %4651 = vmatmul.mubr.f32.gmra.mrb[0].mxu0 %v4569
    %v4652 = vpop.f32.mrb[0].mxu0
    %v4653 = vadd.f32 0.0, %v4652
    %v4654 = vpop.f32.mrb[0].mxu0
    %4655 = vdwg.mxu0
    %v4656 = vadd.f32 %v4451, %v4653
    %v4657 = vtanh.pop %v4656
    %v4658 = vmul.f32 %v4561, %v4046
    %v4659 = vsub.f32 1.0, %v4561
    %v4660 = vmul.f32 %v4659, %v4657
    %v4661 = vadd.f32 %v4658, %v4660
    %v4662 = vld [vmem:[#allocation8] sm:$0xff]
    %v4663 = vld [vmem:[#allocation8 + $0x8] sm:$0xff]
    %v4664 = vld [vmem:[#allocation8 + $0x10] sm:$0xff]
    %v4665 = vld [vmem:[#allocation8 + $0x18] sm:$0xff]
    %v4666 = vld [vmem:[#allocation8 + $0x20] sm:$0xff]
    %v4667 = vld [vmem:[#allocation8 + $0x28] sm:$0xff]
    %v4668 = vld [vmem:[#allocation8 + $0x30] sm:$0xff]
    %v4669 = vld [vmem:[#allocation8 + $0x38] sm:$0xff]
    %v4670 = vld [vmem:[#allocation8 + $0x40] sm:$0xff]
    %v4671 = vld [vmem:[#allocation8 + $0x48] sm:$0xff]
    %v4672 = vld [vmem:[#allocation8 + $0x50] sm:$0xff]
    %v4673 = vld [vmem:[#allocation8 + $0x58] sm:$0xff]
    %v4674 = vld [vmem:[#allocation8 + $0x60] sm:$0xff]
    %v4675 = vld [vmem:[#allocation8 + $0x68] sm:$0xff]
    %v4676 = vld [vmem:[#allocation8 + $0x70] sm:$0xff]
    %v4677 = vld [vmem:[#allocation8 + $0x78] sm:$0xff]
    %v4678 = vld [vmem:[#allocation8 + $0x80] sm:$0xff]
    %v4679 = vld [vmem:[#allocation8 + $0x88] sm:$0xff]
    %v4680 = vld [vmem:[#allocation8 + $0x90] sm:$0xff]
    %v4681 = vld [vmem:[#allocation8 + $0x98] sm:$0xff]
    %v4682 = vld [vmem:[#allocation8 + $0xa0] sm:$0xff]
    %v4683 = vld [vmem:[#allocation8 + $0xa8] sm:$0xff]
    %v4684 = vld [vmem:[#allocation8 + $0xb0] sm:$0xff]
    %v4685 = vld [vmem:[#allocation8 + $0xb8] sm:$0xff]
    %v4686 = vld [vmem:[#allocation8 + $0xc0] sm:$0xff]
    %v4687 = vld [vmem:[#allocation8 + $0xc8] sm:$0xff]
    %v4688 = vld [vmem:[#allocation8 + $0xd0] sm:$0xff]
    %v4689 = vld [vmem:[#allocation8 + $0xd8] sm:$0xff]
    %v4690 = vld [vmem:[#allocation8 + $0xe0] sm:$0xff]
    %v4691 = vld [vmem:[#allocation8 + $0xe8] sm:$0xff]
    %v4692 = vld [vmem:[#allocation8 + $0xf0] sm:$0xff]
    %v4693 = vld [vmem:[#allocation8 + $0xf8] sm:$0xff]
    %v4694 = vld [vmem:[#allocation8 + $0x100] sm:$0xff]
    %v4695 = vld [vmem:[#allocation8 + $0x108] sm:$0xff]
    %v4696 = vld [vmem:[#allocation8 + $0x110] sm:$0xff]
    %v4697 = vld [vmem:[#allocation8 + $0x118] sm:$0xff]
    %v4698 = vld [vmem:[#allocation8 + $0x120] sm:$0xff]
    %v4699 = vld [vmem:[#allocation8 + $0x128] sm:$0xff]
    %v4700 = vld [vmem:[#allocation8 + $0x130] sm:$0xff]
    %v4701 = vld [vmem:[#allocation8 + $0x138] sm:$0xff]
    %v4702 = vld [vmem:[#allocation8 + $0x140] sm:$0xff]
    %v4703 = vld [vmem:[#allocation8 + $0x148] sm:$0xff]
    %v4704 = vld [vmem:[#allocation8 + $0x150] sm:$0xff]
    %v4705 = vld [vmem:[#allocation8 + $0x158] sm:$0xff]
    %v4706 = vld [vmem:[#allocation8 + $0x160] sm:$0xff]
    %v4707 = vld [vmem:[#allocation8 + $0x168] sm:$0xff]
    %v4708 = vld [vmem:[#allocation8 + $0x170] sm:$0xff]
    %v4709 = vld [vmem:[#allocation8 + $0x178] sm:$0xff]
    %4710 = vmatprep.subr.mxu0 %v4663
    %4711 = vmatpush1.msra.mxu0 %v4662
    %4712 = vmatprep.subr.mxu0 %v4666
    %4713 = vmatpush1.msra.mxu0 %v4665
    %4714 = vmatprep.subr.mxu0 %v4669
    %4715 = vmatpush1.msra.mxu0 %v4668
    %4716 = vmatprep.subr.mxu0 %v4672
    %4717 = vmatpush1.msra.mxu0 %v4671
    %4718 = vmatprep.subr.mxu0 %v4675
    %4719 = vmatpush1.msra.mxu0 %v4674
    %4720 = vmatprep.subr.mxu0 %v4678
    %4721 = vmatpush1.msra.mxu0 %v4677
    %4722 = vmatprep.subr.mxu0 %v4681
    %4723 = vmatpush1.msra.mxu0 %v4680
    %4724 = vmatprep.subr.mxu0 %v4684
    %4725 = vmatpush1.msra.mxu0 %v4683
    %4726 = vmatprep.subr.mxu0 %v4687
    %4727 = vmatpush1.msra.mxu0 %v4686
    %4728 = vmatprep.subr.mxu0 %v4690
    %4729 = vmatpush1.msra.mxu0 %v4689
    %4730 = vmatprep.subr.mxu0 %v4693
    %4731 = vmatpush1.msra.mxu0 %v4692
    %4732 = vmatprep.subr.mxu0 %v4696
    %4733 = vmatpush1.msra.mxu0 %v4695
    %4734 = vmatprep.subr.mxu0 %v4699
    %4735 = vmatpush1.msra.mxu0 %v4698
    %4736 = vmatprep.subr.mxu0 %v4702
    %4737 = vmatpush1.msra.mxu0 %v4701
    %4738 = vmatprep.subr.mxu0 %v4705
    %4739 = vmatpush1.msra.mxu0 %v4704
    %4740 = vmatprep.subr.mxu0 %v4708
    %4741 = vmatpush1.msra.mxu0 %v4707
    %4742 = vmatprep.subr.mxu0 0.0
    %4743 = vmatpush1.msra.mxu0 0.0
    %4744 = vmatprep.subr.mxu0 0.0
    %4745 = vmatpush1.msra.mxu0 0.0
    %4746 = vmatprep.subr.mxu0 0.0
    %4747 = vmatpush1.msra.mxu0 0.0
    %4748 = vmatprep.subr.mxu0 0.0
    %4749 = vmatpush1.msra.mxu0 0.0
    %4750 = vmatprep.subr.mxu0 0.0
    %4751 = vmatpush1.msra.mxu0 0.0
    %4752 = vmatprep.subr.mxu0 0.0
    %4753 = vmatpush1.msra.mxu0 0.0
    %4754 = vmatprep.subr.mxu0 0.0
    %4755 = vmatpush1.msra.mxu0 0.0
    %4756 = vmatprep.subr.mxu0 0.0
    %4757 = vmatpush1.msra.mxu0 0.0
    %4758 = vmatprep.subr.mxu0 0.0
    %4759 = vmatpush1.msra.mxu0 0.0
    %4760 = vmatprep.subr.mxu0 0.0
    %4761 = vmatpush1.msra.mxu0 0.0
    %4762 = vmatprep.subr.mxu0 0.0
    %4763 = vmatpush1.msra.mxu0 0.0
    %4764 = vmatprep.subr.mxu0 0.0
    %4765 = vmatpush1.msra.mxu0 0.0
    %4766 = vmatprep.subr.mxu0 0.0
    %4767 = vmatpush1.msra.mxu0 0.0
    %4768 = vmatprep.subr.mxu0 0.0
    %4769 = vmatpush1.msra.mxu0 0.0
    %4770 = vmatprep.subr.mxu0 0.0
    %4771 = vmatpush1.msra.mxu0 0.0
    %4772 = vmatprep.subr.mxu0 0.0
    %4773 = vmatpush1.msra.mxu0 0.0
    %4774 = vmatprep.mubr.f32.mxu0 0.0
    %4775 = vmatmul.mubr.f32.gmra.mrb[0].mxu0 %v4661
    %v4776 = vpop.f32.mrb[0].mxu0
    %v4777 = vadd.f32 %v131, %v4776
    %v4778 = vpop.f32.mrb[0].mxu0
    %v4779 = vadd.f32 %v135, %v4778
    %4780 = vdwg.mxu0
    %4781 = vmatprep.subr.mxu0 0.0
    %4782 = vmatpush1.msra.mxu0 %v4664
    %4783 = vmatprep.subr.mxu0 0.0
    %4784 = vmatpush1.msra.mxu0 %v4667
    %4785 = vmatprep.subr.mxu0 0.0
    %4786 = vmatpush1.msra.mxu0 %v4670
    %4787 = vmatprep.subr.mxu0 0.0
    %4788 = vmatpush1.msra.mxu0 %v4673
    %4789 = vmatprep.subr.mxu0 0.0
    %4790 = vmatpush1.msra.mxu0 %v4676
    %4791 = vmatprep.subr.mxu0 0.0
    %4792 = vmatpush1.msra.mxu0 %v4679
    %4793 = vmatprep.subr.mxu0 0.0
    %4794 = vmatpush1.msra.mxu0 %v4682
    %4795 = vmatprep.subr.mxu0 0.0
    %4796 = vmatpush1.msra.mxu0 %v4685
    %4797 = vmatprep.subr.mxu0 0.0
    %4798 = vmatpush1.msra.mxu0 %v4688
    %4799 = vmatprep.subr.mxu0 0.0
    %4800 = vmatpush1.msra.mxu0 %v4691
    %4801 = vmatprep.subr.mxu0 0.0
    %4802 = vmatpush1.msra.mxu0 %v4694
    %4803 = vmatprep.subr.mxu0 0.0
    %4804 = vmatpush1.msra.mxu0 %v4697
    %4805 = vmatprep.subr.mxu0 0.0
    %4806 = vmatpush1.msra.mxu0 %v4700
    %4807 = vmatprep.subr.mxu0 0.0
    %4808 = vmatpush1.msra.mxu0 %v4703
    %4809 = vmatprep.subr.mxu0 0.0
    %4810 = vmatpush1.msra.mxu0 %v4706
    %4811 = vmatprep.subr.mxu0 0.0
    %4812 = vmatpush1.msra.mxu0 %v4709
    %4813 = vmatprep.subr.mxu0 0.0
    %4814 = vmatpush1.msra.mxu0 0.0
    %4815 = vmatprep.subr.mxu0 0.0
    %4816 = vmatpush1.msra.mxu0 0.0
    %4817 = vmatprep.subr.mxu0 0.0
    %4818 = vmatpush1.msra.mxu0 0.0
    %4819 = vmatprep.subr.mxu0 0.0
    %4820 = vmatpush1.msra.mxu0 0.0
    %4821 = vmatprep.subr.mxu0 0.0
    %4822 = vmatpush1.msra.mxu0 0.0
    %4823 = vmatprep.subr.mxu0 0.0
    %4824 = vmatpush1.msra.mxu0 0.0
    %4825 = vmatprep.subr.mxu0 0.0
    %4826 = vmatpush1.msra.mxu0 0.0
    %4827 = vmatprep.subr.mxu0 0.0
    %4828 = vmatpush1.msra.mxu0 0.0
    %4829 = vmatprep.subr.mxu0 0.0
    %4830 = vmatpush1.msra.mxu0 0.0
    %4831 = vmatprep.subr.mxu0 0.0
    %4832 = vmatpush1.msra.mxu0 0.0
    %4833 = vmatprep.subr.mxu0 0.0
    %4834 = vmatpush1.msra.mxu0 0.0
    %4835 = vmatprep.subr.mxu0 0.0
    %4836 = vmatpush1.msra.mxu0 0.0
    %4837 = vmatprep.subr.mxu0 0.0
    %4838 = vmatpush1.msra.mxu0 0.0
    %4839 = vmatprep.subr.mxu0 0.0
    %4840 = vmatpush1.msra.mxu0 0.0
    %4841 = vmatprep.subr.mxu0 0.0
    %4842 = vmatpush1.msra.mxu0 0.0
    %4843 = vmatprep.subr.mxu0 0.0
    %4844 = vmatpush1.msra.mxu0 0.0
    %4845 = vmatprep.mubr.f32.mxu0 0.0
    %4846 = vmatmul.mubr.f32.gmra.mrb[0].mxu0 %v4661
    %v4847 = vpop.f32.mrb[0].mxu0
    %v4848 = vadd.f32 %v139, %v4847
    %v4849 = vpop.f32.mrb[0].mxu0
    %4850 = vdwg.mxu0
    %v4851 = vld [vmem:[%s545] sm:$0xff]
    %v4852 = vld [vmem:[%s545 + $0x8] sm:$0xff]
    %v4853 = vld [vmem:[%s545 + $0x10] sm:$0xff]
    %v4854 = vld [vmem:[%s545 + $0x18] sm:$0xff]
    %v4855 = vld [vmem:[%s545 + $0x20] sm:$0xff]
    %v4856 = vld [vmem:[%s545 + $0x28] sm:$0xff]
    %v4857 = vld [vmem:[%s545 + $0x30] sm:$0xff]
    %v4858 = vld [vmem:[%s545 + $0x38] sm:$0xff]
    %v4859 = vld [vmem:[%s545 + $0x40] sm:$0xff]
    %v4860 = vld [vmem:[%s545 + $0x48] sm:$0xff]
    %v4861 = vld [vmem:[%s545 + $0x50] sm:$0xff]
    %v4862 = vld [vmem:[%s545 + $0x58] sm:$0xff]
    %v4863 = vld [vmem:[%s545 + $0x60] sm:$0xff]
    %v4864 = vld [vmem:[%s545 + $0x68] sm:$0xff]
    %v4865 = vld [vmem:[%s545 + $0x70] sm:$0xff]
    %v4866 = vld [vmem:[%s545 + $0x78] sm:$0xff]
    %v4867 = vld [vmem:[%s545 + $0x80] sm:$0xff]
    %v4868 = vld [vmem:[%s545 + $0x88] sm:$0xff]
    %v4869 = vld [vmem:[%s545 + $0x90] sm:$0xff]
    %v4870 = vld [vmem:[%s545 + $0x98] sm:$0xff]
    %v4871 = vld [vmem:[%s545 + $0xa0] sm:$0xff]
    %v4872 = vld [vmem:[%s545 + $0xa8] sm:$0xff]
    %v4873 = vld [vmem:[%s545 + $0xb0] sm:$0xff]
    %v4874 = vld [vmem:[%s545 + $0xb8] sm:$0xff]
    %v4875 = vld [vmem:[%s545 + $0xc0] sm:$0xff]
    %v4876 = vld [vmem:[%s545 + $0xc8] sm:$0xff]
    %v4877 = vld [vmem:[%s545 + $0xd0] sm:$0xff]
    %v4878 = vld [vmem:[%s545 + $0xd8] sm:$0xff]
    %v4879 = vld [vmem:[%s545 + $0xe0] sm:$0xff]
    %v4880 = vld [vmem:[%s545 + $0xe8] sm:$0xff]
    %v4881 = vld [vmem:[%s545 + $0xf0] sm:$0xff]
    %v4882 = vld [vmem:[%s545 + $0xf8] sm:$0xff]
    %4883 = vmatprep.subr.mxu0 %v4852
    %4884 = vmatpush1.msra.mxu0 %v4851
    %4885 = vmatprep.subr.mxu0 %v4854
    %4886 = vmatpush1.msra.mxu0 %v4853
    %4887 = vmatprep.subr.mxu0 %v4856
    %4888 = vmatpush1.msra.mxu0 %v4855
    %4889 = vmatprep.subr.mxu0 %v4858
    %4890 = vmatpush1.msra.mxu0 %v4857
    %4891 = vmatprep.subr.mxu0 %v4860
    %4892 = vmatpush1.msra.mxu0 %v4859
    %4893 = vmatprep.subr.mxu0 %v4862
    %4894 = vmatpush1.msra.mxu0 %v4861
    %4895 = vmatprep.subr.mxu0 %v4864
    %4896 = vmatpush1.msra.mxu0 %v4863
    %4897 = vmatprep.subr.mxu0 %v4866
    %4898 = vmatpush1.msra.mxu0 %v4865
    %4899 = vmatprep.subr.mxu0 %v4868
    %4900 = vmatpush1.msra.mxu0 %v4867
    %4901 = vmatprep.subr.mxu0 %v4870
    %4902 = vmatpush1.msra.mxu0 %v4869
    %4903 = vmatprep.subr.mxu0 %v4872
    %4904 = vmatpush1.msra.mxu0 %v4871
    %4905 = vmatprep.subr.mxu0 %v4874
    %4906 = vmatpush1.msra.mxu0 %v4873
    %4907 = vmatprep.subr.mxu0 %v4876
    %4908 = vmatpush1.msra.mxu0 %v4875
    %4909 = vmatprep.subr.mxu0 %v4878
    %4910 = vmatpush1.msra.mxu0 %v4877
    %4911 = vmatprep.subr.mxu0 %v4880
    %4912 = vmatpush1.msra.mxu0 %v4879
    %4913 = vmatprep.subr.mxu0 %v4882
    %4914 = vmatpush1.msra.mxu0 %v4881
    %4915 = vmatprep.subr.mxu0 0.0
    %4916 = vmatpush1.msra.mxu0 0.0
    %4917 = vmatprep.subr.mxu0 0.0
    %4918 = vmatpush1.msra.mxu0 0.0
    %4919 = vmatprep.subr.mxu0 0.0
    %4920 = vmatpush1.msra.mxu0 0.0
    %4921 = vmatprep.subr.mxu0 0.0
    %4922 = vmatpush1.msra.mxu0 0.0
    %4923 = vmatprep.subr.mxu0 0.0
    %4924 = vmatpush1.msra.mxu0 0.0
    %4925 = vmatprep.subr.mxu0 0.0
    %4926 = vmatpush1.msra.mxu0 0.0
    %4927 = vmatprep.subr.mxu0 0.0
    %4928 = vmatpush1.msra.mxu0 0.0
    %4929 = vmatprep.subr.mxu0 0.0
    %4930 = vmatpush1.msra.mxu0 0.0
    %4931 = vmatprep.subr.mxu0 0.0
    %4932 = vmatpush1.msra.mxu0 0.0
    %4933 = vmatprep.subr.mxu0 0.0
    %4934 = vmatpush1.msra.mxu0 0.0
    %4935 = vmatprep.subr.mxu0 0.0
    %4936 = vmatpush1.msra.mxu0 0.0
    %4937 = vmatprep.subr.mxu0 0.0
    %4938 = vmatpush1.msra.mxu0 0.0
    %4939 = vmatprep.subr.mxu0 0.0
    %4940 = vmatpush1.msra.mxu0 0.0
    %4941 = vmatprep.subr.mxu0 0.0
    %4942 = vmatpush1.msra.mxu0 0.0
    %4943 = vmatprep.subr.mxu0 0.0
    %4944 = vmatpush1.msra.mxu0 0.0
    %4945 = vmatprep.subr.mxu0 0.0
    %4946 = vmatpush1.msra.mxu0 0.0
    %4947 = vmatprep.mubr.f32.mxu0 0.0
    %4948 = vmatmul.mubr.f32.gmra.mrb[0].mxu0 %v4445
    %v4949 = vpop.f32.mrb[0].mxu0
    %v4950 = vadd.f32 0.0, %v4949
    %v4951 = vpop.f32.mrb[0].mxu0
    %v4952 = vadd.f32 0.0, %v4951
    %4953 = vdwg.mxu0
    %v4954 = vadd.f32 %v4777, %v4950
    %v4955 = vxor.u32 %v4954, 2147483648
    %v4956 = vmul.f32 %v4955, 1.442695
    %v4957 = vpow.pop %v4956
    %v4958 = vadd.f32 %v4957, 1.0
    %v4959 = vrcp.pop %v4958
    %v4960 = vmul.f32 1.0, %v4959
    %v4961 = vadd.f32 %v4779, %v4952
    %v4962 = vxor.u32 %v4961, 2147483648
    %v4963 = vmul.f32 %v4962, 1.442695
    %v4964 = vpow.pop %v4963
    %v4965 = vadd.f32 %v4964, 1.0
    %v4966 = vrcp.pop %v4965
    %v4967 = vmul.f32 1.0, %v4966
    %v4968 = vmul.f32 %v4967, %v4445
    %v4969 = vld [vmem:[%s664] sm:$0xff]
    %v4970 = vld [vmem:[%s664 + $0x8] sm:$0xff]
    %v4971 = vld [vmem:[%s664 + $0x10] sm:$0xff]
    %v4972 = vld [vmem:[%s664 + $0x18] sm:$0xff]
    %v4973 = vld [vmem:[%s664 + $0x20] sm:$0xff]
    %v4974 = vld [vmem:[%s664 + $0x28] sm:$0xff]
    %v4975 = vld [vmem:[%s664 + $0x30] sm:$0xff]
    %v4976 = vld [vmem:[%s664 + $0x38] sm:$0xff]
    %v4977 = vld [vmem:[%s664 + $0x40] sm:$0xff]
    %v4978 = vld [vmem:[%s664 + $0x48] sm:$0xff]
    %v4979 = vld [vmem:[%s664 + $0x50] sm:$0xff]
    %v4980 = vld [vmem:[%s664 + $0x58] sm:$0xff]
    %v4981 = vld [vmem:[%s664 + $0x60] sm:$0xff]
    %v4982 = vld [vmem:[%s664 + $0x68] sm:$0xff]
    %v4983 = vld [vmem:[%s664 + $0x70] sm:$0xff]
    %v4984 = vld [vmem:[%s664 + $0x78] sm:$0xff]
    %4985 = vmatprep.subr.mxu0 0.0
    %4986 = vmatpush1.msra.mxu0 %v4969
    %4987 = vmatprep.subr.mxu0 0.0
    %4988 = vmatpush1.msra.mxu0 %v4970
    %4989 = vmatprep.subr.mxu0 0.0
    %4990 = vmatpush1.msra.mxu0 %v4971
    %4991 = vmatprep.subr.mxu0 0.0
    %4992 = vmatpush1.msra.mxu0 %v4972
    %4993 = vmatprep.subr.mxu0 0.0
    %4994 = vmatpush1.msra.mxu0 %v4973
    %4995 = vmatprep.subr.mxu0 0.0
    %4996 = vmatpush1.msra.mxu0 %v4974
    %4997 = vmatprep.subr.mxu0 0.0
    %4998 = vmatpush1.msra.mxu0 %v4975
    %4999 = vmatprep.subr.mxu0 0.0
    %5000 = vmatpush1.msra.mxu0 %v4976
    %5001 = vmatprep.subr.mxu0 0.0
    %5002 = vmatpush1.msra.mxu0 %v4977
    %5003 = vmatprep.subr.mxu0 0.0
    %5004 = vmatpush1.msra.mxu0 %v4978
    %5005 = vmatprep.subr.mxu0 0.0
    %5006 = vmatpush1.msra.mxu0 %v4979
    %5007 = vmatprep.subr.mxu0 0.0
    %5008 = vmatpush1.msra.mxu0 %v4980
    %5009 = vmatprep.subr.mxu0 0.0
    %5010 = vmatpush1.msra.mxu0 %v4981
    %5011 = vmatprep.subr.mxu0 0.0
    %5012 = vmatpush1.msra.mxu0 %v4982
    %5013 = vmatprep.subr.mxu0 0.0
    %5014 = vmatpush1.msra.mxu0 %v4983
    %5015 = vmatprep.subr.mxu0 0.0
    %5016 = vmatpush1.msra.mxu0 %v4984
    %5017 = vmatprep.subr.mxu0 0.0
    %5018 = vmatpush1.msra.mxu0 0.0
    %5019 = vmatprep.subr.mxu0 0.0
    %5020 = vmatpush1.msra.mxu0 0.0
    %5021 = vmatprep.subr.mxu0 0.0
    %5022 = vmatpush1.msra.mxu0 0.0
    %5023 = vmatprep.subr.mxu0 0.0
    %5024 = vmatpush1.msra.mxu0 0.0
    %5025 = vmatprep.subr.mxu0 0.0
    %5026 = vmatpush1.msra.mxu0 0.0
    %5027 = vmatprep.subr.mxu0 0.0
    %5028 = vmatpush1.msra.mxu0 0.0
    %5029 = vmatprep.subr.mxu0 0.0
    %5030 = vmatpush1.msra.mxu0 0.0
    %5031 = vmatprep.subr.mxu0 0.0
    %5032 = vmatpush1.msra.mxu0 0.0
    %5033 = vmatprep.subr.mxu0 0.0
    %5034 = vmatpush1.msra.mxu0 0.0
    %5035 = vmatprep.subr.mxu0 0.0
    %5036 = vmatpush1.msra.mxu0 0.0
    %5037 = vmatprep.subr.mxu0 0.0
    %5038 = vmatpush1.msra.mxu0 0.0
    %5039 = vmatprep.subr.mxu0 0.0
    %5040 = vmatpush1.msra.mxu0 0.0
    %5041 = vmatprep.subr.mxu0 0.0
    %5042 = vmatpush1.msra.mxu0 0.0
    %5043 = vmatprep.subr.mxu0 0.0
    %5044 = vmatpush1.msra.mxu0 0.0
    %5045 = vmatprep.subr.mxu0 0.0
    %5046 = vmatpush1.msra.mxu0 0.0
    %5047 = vmatprep.subr.mxu0 0.0
    %5048 = vmatpush1.msra.mxu0 0.0
    %5049 = vmatprep.mubr.f32.mxu0 0.0
    %5050 = vmatmul.mubr.f32.gmra.mrb[0].mxu0 %v4968
    %v5051 = vpop.f32.mrb[0].mxu0
    %v5052 = vadd.f32 0.0, %v5051
    %v5053 = vpop.f32.mrb[0].mxu0
    %5054 = vdwg.mxu0
    %v5055 = vadd.f32 %v4848, %v5052
    %v5056 = vtanh.pop %v5055
    %v5057 = vmul.f32 %v4960, %v4445
    %v5058 = vsub.f32 1.0, %v4960
    %v5059 = vmul.f32 %v5058, %v5056
    %v5060 = vadd.f32 %v5057, %v5059
    %s5061 = scalar_lea.vmem [#allocation2], 56
    %5062 = vst [vmem:[%s5061] sm:$0xff] %v5060
    %5063 = vst [vmem:[#allocation15] sm:$0xff] %v4661
    %5064 = vst [vmem:[%s124] sm:$0xff] %v5060
    %v5065 = vld [vmem:[#allocation2] sm:$0xff]
    %v5066 = vld [vmem:[#allocation2 + $0x8] sm:$0xff]
    %v5067 = vld [vmem:[#allocation2 + $0x10] sm:$0xff]
    %v5068 = vld [vmem:[#allocation2 + $0x18] sm:$0xff]
    %v5069 = vld [vmem:[#allocation2 + $0x20] sm:$0xff]
    %v5070 = vld [vmem:[#allocation2 + $0x28] sm:$0xff]
    %v5071 = vld [vmem:[#allocation2 + $0x30] sm:$0xff]
    %v5072 = vld [vmem:[#allocation2 + $0x38] sm:$0xff]
    %v5073 = vld [vmem:[#allocation12] sm:$0xff]
    %v5074 = vld [vmem:[#allocation12 + $0x8] sm:$0xff]
    %v5075 = vld [vmem:[#allocation12 + $0x10] sm:$0xff]
    %v5076 = vld [vmem:[#allocation12 + $0x18] sm:$0xff]
    %v5077 = vld [vmem:[#allocation12 + $0x20] sm:$0xff]
    %v5078 = vld [vmem:[#allocation12 + $0x28] sm:$0xff]
    %v5079 = vld [vmem:[#allocation12 + $0x30] sm:$0xff]
    %v5080 = vld [vmem:[#allocation12 + $0x38] sm:$0xff]
    %v5081 = vld [vmem:[#allocation12 + $0x40] sm:$0xff]
    %v5082 = vld [vmem:[#allocation12 + $0x48] sm:$0xff]
    %v5083 = vld [vmem:[#allocation12 + $0x50] sm:$0xff]
    %v5084 = vld [vmem:[#allocation12 + $0x58] sm:$0xff]
    %v5085 = vld [vmem:[#allocation12 + $0x60] sm:$0xff]
    %v5086 = vld [vmem:[#allocation12 + $0x68] sm:$0xff]
    %v5087 = vld [vmem:[#allocation12 + $0x70] sm:$0xff]
    %v5088 = vld [vmem:[#allocation12 + $0x78] sm:$0xff]
    %v5089 = vld [vmem:[%s7] sm:$0x1]
    %v5091 = vlaneseq
    %v5092 = vshrl.u32 %v5091, 7
    %v5093 = vsub.s32 0, %v5092
    %v5094 = vrot.slane %v5089, %v5093
    %5096 = vmatprep.subr.mxu0 0.0
    %5097 = vmatpush1.msra.mxu0 %v5073
    %5098 = vmatprep.subr.mxu0 0.0
    %5099 = vmatpush1.msra.mxu0 %v5074
    %5100 = vmatprep.subr.mxu0 0.0
    %5101 = vmatpush1.msra.mxu0 %v5075
    %5102 = vmatprep.subr.mxu0 0.0
    %5103 = vmatpush1.msra.mxu0 %v5076
    %5104 = vmatprep.subr.mxu0 0.0
    %5105 = vmatpush1.msra.mxu0 %v5077
    %5106 = vmatprep.subr.mxu0 0.0
    %5107 = vmatpush1.msra.mxu0 %v5078
    %5108 = vmatprep.subr.mxu0 0.0
    %5109 = vmatpush1.msra.mxu0 %v5079
    %5110 = vmatprep.subr.mxu0 0.0
    %5111 = vmatpush1.msra.mxu0 %v5080
    %5112 = vmatprep.subr.mxu0 0.0
    %5113 = vmatpush1.msra.mxu0 %v5081
    %5114 = vmatprep.subr.mxu0 0.0
    %5115 = vmatpush1.msra.mxu0 %v5082
    %5116 = vmatprep.subr.mxu0 0.0
    %5117 = vmatpush1.msra.mxu0 %v5083
    %5118 = vmatprep.subr.mxu0 0.0
    %5119 = vmatpush1.msra.mxu0 %v5084
    %5120 = vmatprep.subr.mxu0 0.0
    %5121 = vmatpush1.msra.mxu0 %v5085
    %5122 = vmatprep.subr.mxu0 0.0
    %5123 = vmatpush1.msra.mxu0 %v5086
    %5124 = vmatprep.subr.mxu0 0.0
    %5125 = vmatpush1.msra.mxu0 %v5087
    %5126 = vmatprep.subr.mxu0 0.0
    %5127 = vmatpush1.msra.mxu0 %v5088
    %5128 = vmatprep.subr.mxu0 0.0
    %5129 = vmatpush1.msra.mxu0 0.0
    %5130 = vmatprep.subr.mxu0 0.0
    %5131 = vmatpush1.msra.mxu0 0.0
    %5132 = vmatprep.subr.mxu0 0.0
    %5133 = vmatpush1.msra.mxu0 0.0
    %5134 = vmatprep.subr.mxu0 0.0
    %5135 = vmatpush1.msra.mxu0 0.0
    %5136 = vmatprep.subr.mxu0 0.0
    %5137 = vmatpush1.msra.mxu0 0.0
    %5138 = vmatprep.subr.mxu0 0.0
    %5139 = vmatpush1.msra.mxu0 0.0
    %5140 = vmatprep.subr.mxu0 0.0
    %5141 = vmatpush1.msra.mxu0 0.0
    %5142 = vmatprep.subr.mxu0 0.0
    %5143 = vmatpush1.msra.mxu0 0.0
    %5144 = vmatprep.subr.mxu0 0.0
    %5145 = vmatpush1.msra.mxu0 0.0
    %5146 = vmatprep.subr.mxu0 0.0
    %5147 = vmatpush1.msra.mxu0 0.0
    %5148 = vmatprep.subr.mxu0 0.0
    %5149 = vmatpush1.msra.mxu0 0.0
    %5150 = vmatprep.subr.mxu0 0.0
    %5151 = vmatpush1.msra.mxu0 0.0
    %5152 = vmatprep.subr.mxu0 0.0
    %5153 = vmatpush1.msra.mxu0 0.0
    %5154 = vmatprep.subr.mxu0 0.0
    %5155 = vmatpush1.msra.mxu0 0.0
    %5156 = vmatprep.subr.mxu0 0.0
    %5157 = vmatpush1.msra.mxu0 0.0
    %5158 = vmatprep.subr.mxu0 0.0
    %5159 = vmatpush1.msra.mxu0 0.0
    %5160 = vmatprep.mubr.f32.mxu0 0.0
    %5161 = vmatmul.mubr.f32.gmra.mrb[0].mxu0 %v5065
    %v5162 = vpop.f32.mrb[0].mxu0
    %v5163 = vadd.f32 %v5094, %v5162
    %v5164 = vpop.f32.mrb[0].mxu0
    %5165 = vmatprep.mubr.f32.mxu0 0.0
    %5166 = vmatmul.mubr.f32.gmra.mrb[0].mxu0 %v5066
    %v5167 = vpop.f32.mrb[0].mxu0
    %v5168 = vadd.f32 %v5094, %v5167
    %v5169 = vpop.f32.mrb[0].mxu0
    %5170 = vmatprep.mubr.f32.mxu0 0.0
    %5171 = vmatmul.mubr.f32.gmra.mrb[0].mxu0 %v5067
    %v5172 = vpop.f32.mrb[0].mxu0
    %v5173 = vadd.f32 %v5094, %v5172
    %v5174 = vpop.f32.mrb[0].mxu0
    %5175 = vmatprep.mubr.f32.mxu0 0.0
    %5176 = vmatmul.mubr.f32.gmra.mrb[0].mxu0 %v5068
    %v5177 = vpop.f32.mrb[0].mxu0
    %v5178 = vadd.f32 %v5094, %v5177
    %v5179 = vpop.f32.mrb[0].mxu0
    %5180 = vmatprep.mubr.f32.mxu0 0.0
    %5181 = vmatmul.mubr.f32.gmra.mrb[0].mxu0 %v5069
    %v5182 = vpop.f32.mrb[0].mxu0
    %v5183 = vadd.f32 %v5094, %v5182
    %v5184 = vpop.f32.mrb[0].mxu0
    %5185 = vmatprep.mubr.f32.mxu0 0.0
    %5186 = vmatmul.mubr.f32.gmra.mrb[0].mxu0 %v5070
    %v5187 = vpop.f32.mrb[0].mxu0
    %v5188 = vadd.f32 %v5094, %v5187
    %v5189 = vpop.f32.mrb[0].mxu0
    %5190 = vmatprep.mubr.f32.mxu0 0.0
    %5191 = vmatmul.mubr.f32.gmra.mrb[0].mxu0 %v5071
    %v5192 = vpop.f32.mrb[0].mxu0
    %v5193 = vadd.f32 %v5094, %v5192
    %v5194 = vpop.f32.mrb[0].mxu0
    %5195 = vmatprep.mubr.f32.mxu0 0.0
    %5196 = vmatmul.mubr.f32.gmra.mrb[0].mxu0 %v5072
    %v5197 = vpop.f32.mrb[0].mxu0
    %v5198 = vadd.f32 %v5094, %v5197
    %v5199 = vpop.f32.mrb[0].mxu0
    %5200 = vdwg.mxu0
    %5201 = vst [vmem:[#allocation14] sm:$0xff] %v5163
    %5202 = vst [vmem:[#allocation14 + $0x8] sm:$0xff] %v5168
    %5203 = vst [vmem:[#allocation14 + $0x10] sm:$0xff] %v5173
    %5204 = vst [vmem:[#allocation14 + $0x18] sm:$0xff] %v5178
    %5205 = vst [vmem:[#allocation14 + $0x20] sm:$0xff] %v5183
    %5206 = vst [vmem:[#allocation14 + $0x28] sm:$0xff] %v5188
    %5207 = vst [vmem:[#allocation14 + $0x30] sm:$0xff] %v5193
    %5208 = vst [vmem:[#allocation14 + $0x38] sm:$0xff] %v5198
    // Predicated region
    $region62: #{tpu_custom_call.1} parent=1 // pred_check
      _
    $region63: #{tpu_custom_call.1} parent=1 // pred_check_branch
      %5210 = sbr.rel (0) target = $region65
    $region64: #{tpu_custom_call.1} parent=1 // pred_region
      %s5212 = ssub.s32 1024, 1024
      %5213 = vsyncadd [#allocation5], %s5212
      %s5214 = sshll.u32 [#allocation14], 4
      %s5215 = int_to_ptr.vmem [resolvable:$true] %s5214
      %5220 = dma.vmem_to_hbm [thread:$0]  %s5215, 1024, %s8, [#allocation5], 128, 128, 8
    $region65: #{tpu_custom_call.1} parent=1 // pred_fallthru
      _
    // Predicated region
    $region66: #{tpu_custom_call.1} parent=1 // pred_check
      _
    $region67: #{tpu_custom_call.1} parent=1 // pred_check_branch
      %5222 = sbr.rel (0) target = $region69
    $region68: #{tpu_custom_call.1} parent=1 // pred_region
      %s5224 = ssub.s32 256, 256
      %5225 = vsyncadd [#allocation16], %s5224
      %s5226 = sshll.u32 [#allocation15], 4
      %s5227 = int_to_ptr.vmem [resolvable:$true] %s5226
      %5232 = dma.vmem_to_hbm [thread:$0]  %s5227, 256, %s9, [#allocation16], 128, 128, 8
    $region69: #{tpu_custom_call.1} parent=1 // pred_fallthru
      _
    // Predicated region
    $region70: #{tpu_custom_call.1} parent=1 // pred_check
      _
    $region71: #{tpu_custom_call.1} parent=1 // pred_check_branch
      %5234 = sbr.rel (0) target = $region73
    $region72: #{tpu_custom_call.1} parent=1 // pred_region
      %5235 = dma.done [#allocation5], 1024
    $region73: #{tpu_custom_call.1} parent=1 // pred_fallthru
      _
    // Predicated region
    $region74: #{tpu_custom_call.1} parent=1 // pred_check
      _
    $region75: #{tpu_custom_call.1} parent=1 // pred_check_branch
      %5237 = sbr.rel (0) target = $region77
    $region76: #{tpu_custom_call.1} parent=1 // pred_region
      %5238 = dma.done [#allocation16], 256
    $region77: #{tpu_custom_call.1} parent=1 // pred_fallthru
      _
    %5239 = vsyncpa [#allocation4], 1
    %5240 = vsyncpa [#allocation7], 1
    %5241 = vsyncpa [#allocation10], 1
    %5242 = vsyncpa [#allocation13], 1
    %5243 = vsyncpa [#allocation5], 1
    %5244 = vsyncpa [#allocation16], 1

</llo_original>
